<compile_context>
chip_gen: v5e
topology: v5e:2x2
jax: 0.10.0
libtpu: 0.0.40
codegen_flags: <defaults>
</compile_context>

<pallas_src>
import jax
import jax.numpy as jnp
from jax import lax
from jax.experimental import pallas as pl
from jax.experimental.pallas import tpu as pltpu


# ----------------------------------------------------------------------------
# Fused kernel: whole HGAM forward in one invocation.
# ----------------------------------------------------------------------------
def hgam_kernel(x_ref, adj_ref, pw_ref,
                whh0_ref, wih0_ref, b0_ref,
                whh1_ref, wih1_ref, b1_ref,
                wgatT_ref, a1_ref, a2T_ref,
                woutT_ref, wpT_ref, boutT_ref,
                out_ref):
    f32 = jnp.float32
    bf16 = jnp.bfloat16

    N = pw_ref.shape[1]          # batch * stock  (lane axis)
    S = adj_ref.shape[0]
    B = N // S
    H = whh0_ref.shape[1]        # rnn_unit
    T = x_ref.shape[1] // N

    whh0 = whh0_ref[...]
    whh1 = whh1_ref[...]
    wih1 = wih1_ref[...]
    b1 = b1_ref[...]

    # ---- hoisted layer-0 input projection: ONE lane-dense matmul for all T ----
    # x_ref: (F, T*N) bf16, column index = t*N + n.  Bias folded in once.
    gx0 = jnp.dot(wih0_ref[...], x_ref[...],
                  preferred_element_type=f32) + b0_ref[...]           # (4H, T*N)

    def gates_to_hc(g, c):
        # PyTorch gate order i | f | g | o ; sublane slices at 0/H/2H/3H (8-aligned).
        i = jax.nn.sigmoid(g[0 * H:1 * H])
        f = jax.nn.sigmoid(g[1 * H:2 * H])
        gg = jnp.tanh(g[2 * H:3 * H])
        o = jax.nn.sigmoid(g[3 * H:4 * H])
        c_new = f * c + i * gg
        return o * jnp.tanh(c_new), c_new

    zeros = jnp.zeros((H, N), f32)
    h0, c0, h1, c1 = zeros, zeros, zeros, zeros
    # T is small & static: fully unroll so layer0(t+1) can overlap layer1(t).
    for t in range(T):
        g0 = (jnp.dot(whh0, h0.astype(bf16), preferred_element_type=f32)
              + gx0[:, t * N:(t + 1) * N])
        h0, c0 = gates_to_hc(g0, c0)
        g1 = (jnp.dot(whh1, h1.astype(bf16), preferred_element_type=f32)
              + jnp.dot(wih1, h0.astype(bf16), preferred_element_type=f32)
              + b1)
        h1, c1 = gates_to_hc(g1, c1)
    # h1: (H, N) == transposed last-timestep hidden of the top LSTM layer.

    # ---- HGAT (stand-in): single GAT layer, computed per batch block (B x (S,S)). ----
    # TODO(synk): HGAT internals were not provided in HGAM/models.py; a canonical
    # single-layer GAT (LeakyReLU(0.2) attention, masked softmax, ELU) stands in.
    WhT = jnp.dot(wgatT_ref[...], h1.astype(bf16),
                  preferred_element_type=f32)                         # (n_hid, N) f32
    # f1 as a column / f2 as a row without any explicit transposes.
    f1_col = lax.dot_general(WhT, a1_ref[...], (((0,), (0,)), ((), ())),
                             preferred_element_type=f32)              # (N, 1)
    f2_row = jnp.dot(a2T_ref[...], WhT, preferred_element_type=f32)   # (1, N)
    neighbor = adj_ref[...] > 0.0                                     # (S, S), once

    woutT = woutT_ref[...]
    wpT = wpT_ref[...]
    boutT = boutT_ref[...]
    pw = pw_ref[...]

    rows = []
    for b in range(B):                 # B is small & static -> unrolled
        lo = b * S
        e = f1_col[lo:lo + S, :] + f2_row[:, lo:lo + S]               # (S, S)
        e = jnp.where(e > 0, e, 0.2 * e)                              # LeakyReLU(0.2)
        e = jnp.where(neighbor, e, -9e15)                             # adjacency mask
        e = e - jnp.max(e, axis=-1, keepdims=True)
        pe = jnp.exp(e)
        att = pe / jnp.sum(pe, axis=-1, keepdims=True)                # (S, S)
        # (att @ Wh_b)^T without materializing att^T (NT contraction).
        hT_b = lax.dot_general(WhT[:, lo:lo + S], att,
                               (((1,), (1,)), ((), ())),
                               preferred_element_type=f32)            # (n_hid, S)
        hT_b = jnp.where(hT_b > 0, hT_b,
                         jnp.exp(jnp.minimum(hT_b, 0.0)) - 1.0)       # ELU
        # both heads for this batch in ONE matmul; previous_w column added explicitly.
        z = (jnp.dot(woutT, hT_b, preferred_element_type=f32)
             + wpT * pw[:, lo:lo + S] + boutT)                        # (2, S)
        z = z - jnp.max(z, axis=-1, keepdims=True)
        pz = jnp.exp(z)
        pz = pz / jnp.sum(pz, axis=-1, keepdims=True)
        rows.append(2.0 * pz[0:1, :] - pz[1:2, :])                    # (1, S)

    out_ref[...] = jnp.concatenate(rows, axis=0).astype(out_ref.dtype)  # (B, S)


def hgam_pallas_call(x, adj, pw_row, pk):
    S = adj.shape[0]
    N = pw_row.shape[1]
    B = N // S
    args = (x, adj, pw_row,
            pk["whh0"], pk["wih0"], pk["b0"],
            pk["whh1"], pk["wih1"], pk["b1"],
            pk["wgatT"], pk["a1"], pk["a2T"],
            pk["woutT"], pk["wpT"], pk["boutT"])
    in_specs = [pl.BlockSpec(a.shape, lambda i, nd=a.ndim: (0,) * nd) for a in args]
    return pl.pallas_call(
        hgam_kernel,
        grid=(1,),
        in_specs=in_specs,
        out_specs=pl.BlockSpec((B, S), lambda i: (0, 0)),
        out_shape=jax.ShapeDtypeStruct((B, S), jnp.float32),
        compiler_params=pltpu.CompilerParams(
            dimension_semantics=("arbitrary",)),
    )(*args)


@jax.jit
def hgam_forward(src_seq, adj, previous_w, packed):
    B, S, T, F = src_seq.shape
    N = B * S
    # Host-side (XLA) relayout of the tiny input to the kernel's (F, T*N) layout:
    # column index = t*N + (b*S + s).  bf16 halves the input DMA.
    x = jnp.transpose(src_seq, (3, 2, 0, 1)).reshape(F, T * N).astype(jnp.bfloat16)
    pw_row = previous_w.reshape(1, N)
    out2d = hgam_pallas_call(x, adj, pw_row, packed)     # (B, S)
    return out2d.reshape(B, 1, S)                        # == out.permute(0, 2, 1)


# ----------------------------------------------------------------------------
# Parameters: deterministic synthetic init in "math" orientation, then packed
# once (offline) into the transposed / bf16 operands the kernel consumes.
# ----------------------------------------------------------------------------
def init_params(key, feature, rnn_unit, n_hid):
    ks = jax.random.split(key, 14)
    s = 1.0 / jnp.sqrt(jnp.float32(rnn_unit))

    def u(k, shape, scale):
        return jax.random.uniform(k, shape, jnp.float32, -scale, scale)

    return {
        # LSTM layer 0 (feature -> rnn_unit), gates packed [i|f|g|o]
        "wih0": u(ks[0], (feature, 4 * rnn_unit), s),
        "whh0": u(ks[1], (rnn_unit, 4 * rnn_unit), s),
        "b0":   u(ks[2], (1, 4 * rnn_unit), s),
        # LSTM layer 1 (rnn_unit -> rnn_unit)
        "wih1": u(ks[3], (rnn_unit, 4 * rnn_unit), s),
        "whh1": u(ks[4], (rnn_unit, 4 * rnn_unit), s),
        "b1":   u(ks[5], (1, 4 * rnn_unit), s),
        # HGAT stand-in (single GAT layer): W (rnn_unit -> n_hid), att vecs a1, a2
        "wgat": u(ks[6], (rnn_unit, n_hid), 1.0 / jnp.sqrt(jnp.float32(rnn_unit))),
        "a1":   u(ks[7], (n_hid, 1), 1.0 / jnp.sqrt(jnp.float32(n_hid))),
        "a2":   u(ks[8], (n_hid, 1), 1.0 / jnp.sqrt(jnp.float32(n_hid))),
        # linear_out: (n_hid + 1) -> 1, split into [n_hid rows | previous_w row]
        "w1h":  u(ks[9], (n_hid, 1), 1.0 / jnp.sqrt(jnp.float32(n_hid + 1))),
        "w1p":  u(ks[10], (1, 1), 1.0 / jnp.sqrt(jnp.float32(n_hid + 1))),
        "b1o":  jnp.zeros((1, 1), jnp.float32),
        # linear_out2
        "w2h":  u(ks[11], (n_hid, 1), 1.0 / jnp.sqrt(jnp.float32(n_hid + 1))),
        "w2p":  u(ks[12], (1, 1), 1.0 / jnp.sqrt(jnp.float32(n_hid + 1))),
        "b2o":  jnp.zeros((1, 1), jnp.float32),
    }


def pack_params(p):
    """One-time offline packing into kernel-ready (transposed, bf16) operands."""
    bf16 = jnp.bfloat16
    return {
        # LSTM, transposed so gates^T = W^T @ activation; matmul weights in bf16
        # (f32 accumulation in-kernel), biases kept f32.
        # TODO(synk): a real nn.LSTM checkpoint has b_ih + b_hh per layer; sum them here.
        "whh0": p["whh0"].T.astype(bf16),   # (4H, H)
        "wih0": p["wih0"].T.astype(bf16),   # (4H, F)
        "b0":   p["b0"].T,                  # (4H, 1)
        "whh1": p["whh1"].T.astype(bf16),   # (4H, H)
        "wih1": p["wih1"].T.astype(bf16),   # (4H, H)
        "b1":   p["b1"].T,                  # (4H, 1)
        # GAT stand-in
        "wgatT": p["wgat"].T.astype(bf16),  # (n_hid, H)
        "a1":    p["a1"],                   # (n_hid, 1) f32 (softmax logits stay f32)
        "a2T":   p["a2"].T,                 # (1, n_hid)  f32
        # both output heads merged
        "woutT": jnp.concatenate([p["w1h"], p["w2h"]], axis=1).T,    # (2, n_hid)
        "wpT":   jnp.concatenate([p["w1p"], p["w2p"]], axis=1).T,    # (2, 1)
        "boutT": jnp.concatenate([p["b1o"], p["b2o"]], axis=1).T,    # (2, 1)
    }


if __name__ == "__main__":
    B, S, T, F = 2, 8, 8, 4          # batch, stocks, seq_len, feature
    rnn_unit, n_hid = 32, 16

    key = jax.random.PRNGKey(0)
    k_src, k_adj, k_pw, k_par = jax.random.split(key, 4)

    src_seq = jax.random.normal(k_src, (B, S, T, F), jnp.float32)
    a = jax.random.bernoulli(k_adj, 0.5, (S, S)).astype(jnp.float32)
    adj = ((a + a.T + jnp.eye(S, dtype=jnp.float32)) > 0).astype(jnp.float32)
    previous_w = jax.nn.softmax(
        jax.random.normal(k_pw, (B, 1, S), jnp.float32), axis=-1)

    params = init_params(k_par, F, rnn_unit, n_hid)
    packed = pack_params(params)     # done once, outside the jitted forward

    out = hgam_forward(src_seq, adj, previous_w, packed)
    out = jax.block_until_ready(out)
    assert out.shape == (B, 1, S), out.shape
    assert bool(jnp.all(jnp.isfinite(out)))
    print("KERNEL_OK")
</pallas_src>

<mosaic_0001>
module attributes {stable_mosaic.version = 11 : i64} {
  func.func @hgam_kernel(%arg0: i32, %arg1: memref<4x128xbf16, #tpu.memory_space<vmem>>, %arg2: memref<8x8xf32, #tpu.memory_space<vmem>>, %arg3: memref<1x16xf32, #tpu.memory_space<vmem>>, %arg4: memref<128x32xbf16, #tpu.memory_space<vmem>>, %arg5: memref<128x4xbf16, #tpu.memory_space<vmem>>, %arg6: memref<128x1xf32, #tpu.memory_space<vmem>>, %arg7: memref<128x32xbf16, #tpu.memory_space<vmem>>, %arg8: memref<128x32xbf16, #tpu.memory_space<vmem>>, %arg9: memref<128x1xf32, #tpu.memory_space<vmem>>, %arg10: memref<16x32xbf16, #tpu.memory_space<vmem>>, %arg11: memref<16x1xf32, #tpu.memory_space<vmem>>, %arg12: memref<1x16xf32, #tpu.memory_space<vmem>>, %arg13: memref<2x16xf32, #tpu.memory_space<vmem>>, %arg14: memref<2x1xf32, #tpu.memory_space<vmem>>, %arg15: memref<2x1xf32, #tpu.memory_space<vmem>>, %arg16: memref<2x8xf32, #tpu.memory_space<vmem>>) attributes {dimension_semantics = [#tpu.dimension_semantics<arbitrary>], iteration_bounds = array<i64: 1>, scalar_prefetch = 0 : i64, scratch_operands = 0 : i64, tpu.core_type = #tpu.core_type<tc>, window_params = [{pipeline_mode = #tpu.pipeline_mode<synchronous>, transform_indices = @transform_0, window_bounds = array<i64: 4, 128>}, {pipeline_mode = #tpu.pipeline_mode<synchronous>, transform_indices = @transform_1, window_bounds = array<i64: 8, 8>}, {pipeline_mode = #tpu.pipeline_mode<synchronous>, transform_indices = @transform_2, window_bounds = array<i64: 1, 16>}, {pipeline_mode = #tpu.pipeline_mode<synchronous>, transform_indices = @transform_3, window_bounds = array<i64: 128, 32>}, {pipeline_mode = #tpu.pipeline_mode<synchronous>, transform_indices = @transform_4, window_bounds = array<i64: 128, 4>}, {pipeline_mode = #tpu.pipeline_mode<synchronous>, transform_indices = @transform_5, window_bounds = array<i64: 128, 1>}, {pipeline_mode = #tpu.pipeline_mode<synchronous>, transform_indices = @transform_6, window_bounds = array<i64: 128, 32>}, {pipeline_mode = #tpu.pipeline_mode<synchronous>, transform_indices = @transform_7, window_bounds = array<i64: 128, 32>}, {pipeline_mode = #tpu.pipeline_mode<synchronous>, transform_indices = @transform_8, window_bounds = array<i64: 128, 1>}, {pipeline_mode = #tpu.pipeline_mode<synchronous>, transform_indices = @transform_9, window_bounds = array<i64: 16, 32>}, {pipeline_mode = #tpu.pipeline_mode<synchronous>, transform_indices = @transform_10, window_bounds = array<i64: 16, 1>}, {pipeline_mode = #tpu.pipeline_mode<synchronous>, transform_indices = @transform_11, window_bounds = array<i64: 1, 16>}, {pipeline_mode = #tpu.pipeline_mode<synchronous>, transform_indices = @transform_12, window_bounds = array<i64: 2, 16>}, {pipeline_mode = #tpu.pipeline_mode<synchronous>, transform_indices = @transform_13, window_bounds = array<i64: 2, 1>}, {pipeline_mode = #tpu.pipeline_mode<synchronous>, transform_indices = @transform_14, window_bounds = array<i64: 2, 1>}, {pipeline_mode = #tpu.pipeline_mode<synchronous>, transform_indices = @transform_15, window_bounds = array<i64: 2, 8>}]} {
    %c0 = arith.constant 0 : index
    %c0_0 = arith.constant 0 : index
    %0 = vector.load %arg4[%c0, %c0_0] : memref<128x32xbf16, #tpu.memory_space<vmem>>, vector<128x32xbf16>
    %c0_1 = arith.constant 0 : index
    %c0_2 = arith.constant 0 : index
    %1 = vector.load %arg7[%c0_1, %c0_2] : memref<128x32xbf16, #tpu.memory_space<vmem>>, vector<128x32xbf16>
    %c0_3 = arith.constant 0 : index
    %c0_4 = arith.constant 0 : index
    %2 = vector.load %arg8[%c0_3, %c0_4] : memref<128x32xbf16, #tpu.memory_space<vmem>>, vector<128x32xbf16>
    %c0_5 = arith.constant 0 : index
    %c0_6 = arith.constant 0 : index
    %3 = vector.load %arg9[%c0_5, %c0_6] : memref<128x1xf32, #tpu.memory_space<vmem>>, vector<128x1xf32>
    %c0_7 = arith.constant 0 : index
    %c0_8 = arith.constant 0 : index
    %4 = vector.load %arg5[%c0_7, %c0_8] : memref<128x4xbf16, #tpu.memory_space<vmem>>, vector<128x4xbf16>
    %c0_9 = arith.constant 0 : index
    %c0_10 = arith.constant 0 : index
    %5 = vector.load %arg1[%c0_9, %c0_10] : memref<4x128xbf16, #tpu.memory_space<vmem>>, vector<4x128xbf16>
    %cst = arith.constant dense<0.000000e+00> : vector<128x128xf32>
    %6 = tpu.matmul %4, %5, %cst {dimension_numbers = #tpu.dot_dimension_numbers<[1], [0], [0], [1], [0, 0, 1, 1], [], []>} : vector<128x4xbf16>, vector<4x128xbf16>, vector<128x128xf32> -> vector<128x128xf32>
    %c0_11 = arith.constant 0 : index
    %c0_12 = arith.constant 0 : index
    %7 = vector.load %arg6[%c0_11, %c0_12] : memref<128x1xf32, #tpu.memory_space<vmem>>, vector<128x1xf32>
    %8 = vector.broadcast %7 : vector<128x1xf32> to vector<128x128xf32>
    %9 = arith.addf %6, %8 : vector<128x128xf32>
    %cst_13 = arith.constant 0.000000e+00 : f32
    %10 = vector.broadcast %cst_13 : f32 to vector<32x16xf32>
    %11 = arith.truncf %10 : vector<32x16xf32> to vector<32x16xbf16>
    %cst_14 = arith.constant dense<0.000000e+00> : vector<128x16xf32>
    %12 = tpu.matmul %0, %11, %cst_14 {dimension_numbers = #tpu.dot_dimension_numbers<[1], [0], [0], [1], [0, 0, 1, 1], [], []>} : vector<128x32xbf16>, vector<32x16xbf16>, vector<128x16xf32> -> vector<128x16xf32>
    %13 = vector.extract_strided_slice %9 {offsets = [0, 0], sizes = [128, 16], strides = [1, 1]} : vector<128x128xf32> to vector<128x16xf32>
    %14 = arith.addf %12, %13 : vector<128x16xf32>
    %15 = vector.extract_strided_slice %14 {offsets = [0, 0], sizes = [32, 16], strides = [1, 1]} : vector<128x16xf32> to vector<32x16xf32>
    %16 = arith.negf %15 : vector<32x16xf32>
    %17 = math.exp %16 : vector<32x16xf32>
    %cst_15 = arith.constant 1.000000e+00 : f32
    %18 = vector.broadcast %cst_15 : f32 to vector<32x16xf32>
    %19 = arith.addf %18, %17 : vector<32x16xf32>
    %20 = arith.divf %18, %19 : vector<32x16xf32>
    %21 = vector.extract_strided_slice %14 {offsets = [32, 0], sizes = [32, 16], strides = [1, 1]} : vector<128x16xf32> to vector<32x16xf32>
    %22 = arith.negf %21 : vector<32x16xf32>
    %23 = math.exp %22 : vector<32x16xf32>
    %cst_16 = arith.constant 1.000000e+00 : f32
    %24 = vector.broadcast %cst_16 : f32 to vector<32x16xf32>
    %25 = arith.addf %24, %23 : vector<32x16xf32>
    %26 = arith.divf %24, %25 : vector<32x16xf32>
    %27 = vector.extract_strided_slice %14 {offsets = [64, 0], sizes = [32, 16], strides = [1, 1]} : vector<128x16xf32> to vector<32x16xf32>
    %28 = math.tanh %27 : vector<32x16xf32>
    %29 = vector.extract_strided_slice %14 {offsets = [96, 0], sizes = [32, 16], strides = [1, 1]} : vector<128x16xf32> to vector<32x16xf32>
    %30 = arith.negf %29 : vector<32x16xf32>
    %31 = math.exp %30 : vector<32x16xf32>
    %cst_17 = arith.constant 1.000000e+00 : f32
    %32 = vector.broadcast %cst_17 : f32 to vector<32x16xf32>
    %33 = arith.addf %32, %31 : vector<32x16xf32>
    %34 = arith.divf %32, %33 : vector<32x16xf32>
    %35 = arith.mulf %26, %10 : vector<32x16xf32>
    %36 = arith.mulf %20, %28 : vector<32x16xf32>
    %37 = arith.addf %35, %36 : vector<32x16xf32>
    %38 = math.tanh %37 : vector<32x16xf32>
    %39 = arith.mulf %34, %38 : vector<32x16xf32>
    %40 = arith.truncf %10 : vector<32x16xf32> to vector<32x16xbf16>
    %cst_18 = arith.constant dense<0.000000e+00> : vector<128x16xf32>
    %41 = tpu.matmul %1, %40, %cst_18 {dimension_numbers = #tpu.dot_dimension_numbers<[1], [0], [0], [1], [0, 0, 1, 1], [], []>} : vector<128x32xbf16>, vector<32x16xbf16>, vector<128x16xf32> -> vector<128x16xf32>
    %42 = arith.truncf %39 : vector<32x16xf32> to vector<32x16xbf16>
    %cst_19 = arith.constant dense<0.000000e+00> : vector<128x16xf32>
    %43 = tpu.matmul %2, %42, %cst_19 {dimension_numbers = #tpu.dot_dimension_numbers<[1], [0], [0], [1], [0, 0, 1, 1], [], []>} : vector<128x32xbf16>, vector<32x16xbf16>, vector<128x16xf32> -> vector<128x16xf32>
    %44 = arith.addf %41, %43 : vector<128x16xf32>
    %45 = vector.broadcast %3 : vector<128x1xf32> to vector<128x16xf32>
    %46 = arith.addf %44, %45 : vector<128x16xf32>
    %47 = vector.extract_strided_slice %46 {offsets = [0, 0], sizes = [32, 16], strides = [1, 1]} : vector<128x16xf32> to vector<32x16xf32>
    %48 = arith.negf %47 : vector<32x16xf32>
    %49 = math.exp %48 : vector<32x16xf32>
    %cst_20 = arith.constant 1.000000e+00 : f32
    %50 = vector.broadcast %cst_20 : f32 to vector<32x16xf32>
    %51 = arith.addf %50, %49 : vector<32x16xf32>
    %52 = arith.divf %50, %51 : vector<32x16xf32>
    %53 = vector.extract_strided_slice %46 {offsets = [32, 0], sizes = [32, 16], strides = [1, 1]} : vector<128x16xf32> to vector<32x16xf32>
    %54 = arith.negf %53 : vector<32x16xf32>
    %55 = math.exp %54 : vector<32x16xf32>
    %cst_21 = arith.constant 1.000000e+00 : f32
    %56 = vector.broadcast %cst_21 : f32 to vector<32x16xf32>
    %57 = arith.addf %56, %55 : vector<32x16xf32>
    %58 = arith.divf %56, %57 : vector<32x16xf32>
    %59 = vector.extract_strided_slice %46 {offsets = [64, 0], sizes = [32, 16], strides = [1, 1]} : vector<128x16xf32> to vector<32x16xf32>
    %60 = math.tanh %59 : vector<32x16xf32>
    %61 = vector.extract_strided_slice %46 {offsets = [96, 0], sizes = [32, 16], strides = [1, 1]} : vector<128x16xf32> to vector<32x16xf32>
    %62 = arith.negf %61 : vector<32x16xf32>
    %63 = math.exp %62 : vector<32x16xf32>
    %cst_22 = arith.constant 1.000000e+00 : f32
    %64 = vector.broadcast %cst_22 : f32 to vector<32x16xf32>
    %65 = arith.addf %64, %63 : vector<32x16xf32>
    %66 = arith.divf %64, %65 : vector<32x16xf32>
    %67 = arith.mulf %58, %10 : vector<32x16xf32>
    %68 = arith.mulf %52, %60 : vector<32x16xf32>
    %69 = arith.addf %67, %68 : vector<32x16xf32>
    %70 = math.tanh %69 : vector<32x16xf32>
    %71 = arith.mulf %66, %70 : vector<32x16xf32>
    %72 = arith.truncf %39 : vector<32x16xf32> to vector<32x16xbf16>
    %cst_23 = arith.constant dense<0.000000e+00> : vector<128x16xf32>
    %73 = tpu.matmul %0, %72, %cst_23 {dimension_numbers = #tpu.dot_dimension_numbers<[1], [0], [0], [1], [0, 0, 1, 1], [], []>} : vector<128x32xbf16>, vector<32x16xbf16>, vector<128x16xf32> -> vector<128x16xf32>
    %74 = vector.extract_strided_slice %9 {offsets = [0, 16], sizes = [128, 16], strides = [1, 1]} : vector<128x128xf32> to vector<128x16xf32>
    %75 = arith.addf %73, %74 : vector<128x16xf32>
    %76 = vector.extract_strided_slice %75 {offsets = [0, 0], sizes = [32, 16], strides = [1, 1]} : vector<128x16xf32> to vector<32x16xf32>
    %77 = arith.negf %76 : vector<32x16xf32>
    %78 = math.exp %77 : vector<32x16xf32>
    %cst_24 = arith.constant 1.000000e+00 : f32
    %79 = vector.broadcast %cst_24 : f32 to vector<32x16xf32>
    %80 = arith.addf %79, %78 : vector<32x16xf32>
    %81 = arith.divf %79, %80 : vector<32x16xf32>
    %82 = vector.extract_strided_slice %75 {offsets = [32, 0], sizes = [32, 16], strides = [1, 1]} : vector<128x16xf32> to vector<32x16xf32>
    %83 = arith.negf %82 : vector<32x16xf32>
    %84 = math.exp %83 : vector<32x16xf32>
    %cst_25 = arith.constant 1.000000e+00 : f32
    %85 = vector.broadcast %cst_25 : f32 to vector<32x16xf32>
    %86 = arith.addf %85, %84 : vector<32x16xf32>
    %87 = arith.divf %85, %86 : vector<32x16xf32>
    %88 = vector.extract_strided_slice %75 {offsets = [64, 0], sizes = [32, 16], strides = [1, 1]} : vector<128x16xf32> to vector<32x16xf32>
    %89 = math.tanh %88 : vector<32x16xf32>
    %90 = vector.extract_strided_slice %75 {offsets = [96, 0], sizes = [32, 16], strides = [1, 1]} : vector<128x16xf32> to vector<32x16xf32>
    %91 = arith.negf %90 : vector<32x16xf32>
    %92 = math.exp %91 : vector<32x16xf32>
    %cst_26 = arith.constant 1.000000e+00 : f32
    %93 = vector.broadcast %cst_26 : f32 to vector<32x16xf32>
    %94 = arith.addf %93, %92 : vector<32x16xf32>
    %95 = arith.divf %93, %94 : vector<32x16xf32>
    %96 = arith.mulf %87, %37 : vector<32x16xf32>
    %97 = arith.mulf %81, %89 : vector<32x16xf32>
    %98 = arith.addf %96, %97 : vector<32x16xf32>
    %99 = math.tanh %98 : vector<32x16xf32>
    %100 = arith.mulf %95, %99 : vector<32x16xf32>
    %101 = arith.truncf %71 : vector<32x16xf32> to vector<32x16xbf16>
    %cst_27 = arith.constant dense<0.000000e+00> : vector<128x16xf32>
    %102 = tpu.matmul %1, %101, %cst_27 {dimension_numbers = #tpu.dot_dimension_numbers<[1], [0], [0], [1], [0, 0, 1, 1], [], []>} : vector<128x32xbf16>, vector<32x16xbf16>, vector<128x16xf32> -> vector<128x16xf32>
    %103 = arith.truncf %100 : vector<32x16xf32> to vector<32x16xbf16>
    %cst_28 = arith.constant dense<0.000000e+00> : vector<128x16xf32>
    %104 = tpu.matmul %2, %103, %cst_28 {dimension_numbers = #tpu.dot_dimension_numbers<[1], [0], [0], [1], [0, 0, 1, 1], [], []>} : vector<128x32xbf16>, vector<32x16xbf16>, vector<128x16xf32> -> vector<128x16xf32>
    %105 = arith.addf %102, %104 : vector<128x16xf32>
    %106 = vector.broadcast %3 : vector<128x1xf32> to vector<128x16xf32>
    %107 = arith.addf %105, %106 : vector<128x16xf32>
    %108 = vector.extract_strided_slice %107 {offsets = [0, 0], sizes = [32, 16], strides = [1, 1]} : vector<128x16xf32> to vector<32x16xf32>
    %109 = arith.negf %108 : vector<32x16xf32>
    %110 = math.exp %109 : vector<32x16xf32>
    %cst_29 = arith.constant 1.000000e+00 : f32
    %111 = vector.broadcast %cst_29 : f32 to vector<32x16xf32>
    %112 = arith.addf %111, %110 : vector<32x16xf32>
    %113 = arith.divf %111, %112 : vector<32x16xf32>
    %114 = vector.extract_strided_slice %107 {offsets = [32, 0], sizes = [32, 16], strides = [1, 1]} : vector<128x16xf32> to vector<32x16xf32>
    %115 = arith.negf %114 : vector<32x16xf32>
    %116 = math.exp %115 : vector<32x16xf32>
    %cst_30 = arith.constant 1.000000e+00 : f32
    %117 = vector.broadcast %cst_30 : f32 to vector<32x16xf32>
    %118 = arith.addf %117, %116 : vector<32x16xf32>
    %119 = arith.divf %117, %118 : vector<32x16xf32>
    %120 = vector.extract_strided_slice %107 {offsets = [64, 0], sizes = [32, 16], strides = [1, 1]} : vector<128x16xf32> to vector<32x16xf32>
    %121 = math.tanh %120 : vector<32x16xf32>
    %122 = vector.extract_strided_slice %107 {offsets = [96, 0], sizes = [32, 16], strides = [1, 1]} : vector<128x16xf32> to vector<32x16xf32>
    %123 = arith.negf %122 : vector<32x16xf32>
    %124 = math.exp %123 : vector<32x16xf32>
    %cst_31 = arith.constant 1.000000e+00 : f32
    %125 = vector.broadcast %cst_31 : f32 to vector<32x16xf32>
    %126 = arith.addf %125, %124 : vector<32x16xf32>
    %127 = arith.divf %125, %126 : vector<32x16xf32>
    %128 = arith.mulf %119, %69 : vector<32x16xf32>
    %129 = arith.mulf %113, %121 : vector<32x16xf32>
    %130 = arith.addf %128, %129 : vector<32x16xf32>
    %131 = math.tanh %130 : vector<32x16xf32>
    %132 = arith.mulf %127, %131 : vector<32x16xf32>
    %133 = arith.truncf %100 : vector<32x16xf32> to vector<32x16xbf16>
    %cst_32 = arith.constant dense<0.000000e+00> : vector<128x16xf32>
    %134 = tpu.matmul %0, %133, %cst_32 {dimension_numbers = #tpu.dot_dimension_numbers<[1], [0], [0], [1], [0, 0, 1, 1], [], []>} : vector<128x32xbf16>, vector<32x16xbf16>, vector<128x16xf32> -> vector<128x16xf32>
    %135 = vector.extract_strided_slice %9 {offsets = [0, 32], sizes = [128, 16], strides = [1, 1]} : vector<128x128xf32> to vector<128x16xf32>
    %136 = arith.addf %134, %135 : vector<128x16xf32>
    %137 = vector.extract_strided_slice %136 {offsets = [0, 0], sizes = [32, 16], strides = [1, 1]} : vector<128x16xf32> to vector<32x16xf32>
    %138 = arith.negf %137 : vector<32x16xf32>
    %139 = math.exp %138 : vector<32x16xf32>
    %cst_33 = arith.constant 1.000000e+00 : f32
    %140 = vector.broadcast %cst_33 : f32 to vector<32x16xf32>
    %141 = arith.addf %140, %139 : vector<32x16xf32>
    %142 = arith.divf %140, %141 : vector<32x16xf32>
    %143 = vector.extract_strided_slice %136 {offsets = [32, 0], sizes = [32, 16], strides = [1, 1]} : vector<128x16xf32> to vector<32x16xf32>
    %144 = arith.negf %143 : vector<32x16xf32>
    %145 = math.exp %144 : vector<32x16xf32>
    %cst_34 = arith.constant 1.000000e+00 : f32
    %146 = vector.broadcast %cst_34 : f32 to vector<32x16xf32>
    %147 = arith.addf %146, %145 : vector<32x16xf32>
    %148 = arith.divf %146, %147 : vector<32x16xf32>
    %149 = vector.extract_strided_slice %136 {offsets = [64, 0], sizes = [32, 16], strides = [1, 1]} : vector<128x16xf32> to vector<32x16xf32>
    %150 = math.tanh %149 : vector<32x16xf32>
    %151 = vector.extract_strided_slice %136 {offsets = [96, 0], sizes = [32, 16], strides = [1, 1]} : vector<128x16xf32> to vector<32x16xf32>
    %152 = arith.negf %151 : vector<32x16xf32>
    %153 = math.exp %152 : vector<32x16xf32>
    %cst_35 = arith.constant 1.000000e+00 : f32
    %154 = vector.broadcast %cst_35 : f32 to vector<32x16xf32>
    %155 = arith.addf %154, %153 : vector<32x16xf32>
    %156 = arith.divf %154, %155 : vector<32x16xf32>
    %157 = arith.mulf %148, %98 : vector<32x16xf32>
    %158 = arith.mulf %142, %150 : vector<32x16xf32>
    %159 = arith.addf %157, %158 : vector<32x16xf32>
    %160 = math.tanh %159 : vector<32x16xf32>
    %161 = arith.mulf %156, %160 : vector<32x16xf32>
    %162 = arith.truncf %132 : vector<32x16xf32> to vector<32x16xbf16>
    %cst_36 = arith.constant dense<0.000000e+00> : vector<128x16xf32>
    %163 = tpu.matmul %1, %162, %cst_36 {dimension_numbers = #tpu.dot_dimension_numbers<[1], [0], [0], [1], [0, 0, 1, 1], [], []>} : vector<128x32xbf16>, vector<32x16xbf16>, vector<128x16xf32> -> vector<128x16xf32>
    %164 = arith.truncf %161 : vector<32x16xf32> to vector<32x16xbf16>
    %cst_37 = arith.constant dense<0.000000e+00> : vector<128x16xf32>
    %165 = tpu.matmul %2, %164, %cst_37 {dimension_numbers = #tpu.dot_dimension_numbers<[1], [0], [0], [1], [0, 0, 1, 1], [], []>} : vector<128x32xbf16>, vector<32x16xbf16>, vector<128x16xf32> -> vector<128x16xf32>
    %166 = arith.addf %163, %165 : vector<128x16xf32>
    %167 = vector.broadcast %3 : vector<128x1xf32> to vector<128x16xf32>
    %168 = arith.addf %166, %167 : vector<128x16xf32>
    %169 = vector.extract_strided_slice %168 {offsets = [0, 0], sizes = [32, 16], strides = [1, 1]} : vector<128x16xf32> to vector<32x16xf32>
    %170 = arith.negf %169 : vector<32x16xf32>
    %171 = math.exp %170 : vector<32x16xf32>
    %cst_38 = arith.constant 1.000000e+00 : f32
    %172 = vector.broadcast %cst_38 : f32 to vector<32x16xf32>
    %173 = arith.addf %172, %171 : vector<32x16xf32>
    %174 = arith.divf %172, %173 : vector<32x16xf32>
    %175 = vector.extract_strided_slice %168 {offsets = [32, 0], sizes = [32, 16], strides = [1, 1]} : vector<128x16xf32> to vector<32x16xf32>
    %176 = arith.negf %175 : vector<32x16xf32>
    %177 = math.exp %176 : vector<32x16xf32>
    %cst_39 = arith.constant 1.000000e+00 : f32
    %178 = vector.broadcast %cst_39 : f32 to vector<32x16xf32>
    %179 = arith.addf %178, %177 : vector<32x16xf32>
    %180 = arith.divf %178, %179 : vector<32x16xf32>
    %181 = vector.extract_strided_slice %168 {offsets = [64, 0], sizes = [32, 16], strides = [1, 1]} : vector<128x16xf32> to vector<32x16xf32>
    %182 = math.tanh %181 : vector<32x16xf32>
    %183 = vector.extract_strided_slice %168 {offsets = [96, 0], sizes = [32, 16], strides = [1, 1]} : vector<128x16xf32> to vector<32x16xf32>
    %184 = arith.negf %183 : vector<32x16xf32>
    %185 = math.exp %184 : vector<32x16xf32>
    %cst_40 = arith.constant 1.000000e+00 : f32
    %186 = vector.broadcast %cst_40 : f32 to vector<32x16xf32>
    %187 = arith.addf %186, %185 : vector<32x16xf32>
    %188 = arith.divf %186, %187 : vector<32x16xf32>
    %189 = arith.mulf %180, %130 : vector<32x16xf32>
    %190 = arith.mulf %174, %182 : vector<32x16xf32>
    %191 = arith.addf %189, %190 : vector<32x16xf32>
    %192 = math.tanh %191 : vector<32x16xf32>
    %193 = arith.mulf %188, %192 : vector<32x16xf32>
    %194 = arith.truncf %161 : vector<32x16xf32> to vector<32x16xbf16>
    %cst_41 = arith.constant dense<0.000000e+00> : vector<128x16xf32>
    %195 = tpu.matmul %0, %194, %cst_41 {dimension_numbers = #tpu.dot_dimension_numbers<[1], [0], [0], [1], [0, 0, 1, 1], [], []>} : vector<128x32xbf16>, vector<32x16xbf16>, vector<128x16xf32> -> vector<128x16xf32>
    %196 = vector.extract_strided_slice %9 {offsets = [0, 48], sizes = [128, 16], strides = [1, 1]} : vector<128x128xf32> to vector<128x16xf32>
    %197 = arith.addf %195, %196 : vector<128x16xf32>
    %198 = vector.extract_strided_slice %197 {offsets = [0, 0], sizes = [32, 16], strides = [1, 1]} : vector<128x16xf32> to vector<32x16xf32>
    %199 = arith.negf %198 : vector<32x16xf32>
    %200 = math.exp %199 : vector<32x16xf32>
    %cst_42 = arith.constant 1.000000e+00 : f32
    %201 = vector.broadcast %cst_42 : f32 to vector<32x16xf32>
    %202 = arith.addf %201, %200 : vector<32x16xf32>
    %203 = arith.divf %201, %202 : vector<32x16xf32>
    %204 = vector.extract_strided_slice %197 {offsets = [32, 0], sizes = [32, 16], strides = [1, 1]} : vector<128x16xf32> to vector<32x16xf32>
    %205 = arith.negf %204 : vector<32x16xf32>
    %206 = math.exp %205 : vector<32x16xf32>
    %cst_43 = arith.constant 1.000000e+00 : f32
    %207 = vector.broadcast %cst_43 : f32 to vector<32x16xf32>
    %208 = arith.addf %207, %206 : vector<32x16xf32>
    %209 = arith.divf %207, %208 : vector<32x16xf32>
    %210 = vector.extract_strided_slice %197 {offsets = [64, 0], sizes = [32, 16], strides = [1, 1]} : vector<128x16xf32> to vector<32x16xf32>
    %211 = math.tanh %210 : vector<32x16xf32>
    %212 = vector.extract_strided_slice %197 {offsets = [96, 0], sizes = [32, 16], strides = [1, 1]} : vector<128x16xf32> to vector<32x16xf32>
    %213 = arith.negf %212 : vector<32x16xf32>
    %214 = math.exp %213 : vector<32x16xf32>
    %cst_44 = arith.constant 1.000000e+00 : f32
    %215 = vector.broadcast %cst_44 : f32 to vector<32x16xf32>
    %216 = arith.addf %215, %214 : vector<32x16xf32>
    %217 = arith.divf %215, %216 : vector<32x16xf32>
    %218 = arith.mulf %209, %159 : vector<32x16xf32>
    %219 = arith.mulf %203, %211 : vector<32x16xf32>
    %220 = arith.addf %218, %219 : vector<32x16xf32>
    %221 = math.tanh %220 : vector<32x16xf32>
    %222 = arith.mulf %217, %221 : vector<32x16xf32>
    %223 = arith.truncf %193 : vector<32x16xf32> to vector<32x16xbf16>
    %cst_45 = arith.constant dense<0.000000e+00> : vector<128x16xf32>
    %224 = tpu.matmul %1, %223, %cst_45 {dimension_numbers = #tpu.dot_dimension_numbers<[1], [0], [0], [1], [0, 0, 1, 1], [], []>} : vector<128x32xbf16>, vector<32x16xbf16>, vector<128x16xf32> -> vector<128x16xf32>
    %225 = arith.truncf %222 : vector<32x16xf32> to vector<32x16xbf16>
    %cst_46 = arith.constant dense<0.000000e+00> : vector<128x16xf32>
    %226 = tpu.matmul %2, %225, %cst_46 {dimension_numbers = #tpu.dot_dimension_numbers<[1], [0], [0], [1], [0, 0, 1, 1], [], []>} : vector<128x32xbf16>, vector<32x16xbf16>, vector<128x16xf32> -> vector<128x16xf32>
    %227 = arith.addf %224, %226 : vector<128x16xf32>
    %228 = vector.broadcast %3 : vector<128x1xf32> to vector<128x16xf32>
    %229 = arith.addf %227, %228 : vector<128x16xf32>
    %230 = vector.extract_strided_slice %229 {offsets = [0, 0], sizes = [32, 16], strides = [1, 1]} : vector<128x16xf32> to vector<32x16xf32>
    %231 = arith.negf %230 : vector<32x16xf32>
    %232 = math.exp %231 : vector<32x16xf32>
    %cst_47 = arith.constant 1.000000e+00 : f32
    %233 = vector.broadcast %cst_47 : f32 to vector<32x16xf32>
    %234 = arith.addf %233, %232 : vector<32x16xf32>
    %235 = arith.divf %233, %234 : vector<32x16xf32>
    %236 = vector.extract_strided_slice %229 {offsets = [32, 0], sizes = [32, 16], strides = [1, 1]} : vector<128x16xf32> to vector<32x16xf32>
    %237 = arith.negf %236 : vector<32x16xf32>
    %238 = math.exp %237 : vector<32x16xf32>
    %cst_48 = arith.constant 1.000000e+00 : f32
    %239 = vector.broadcast %cst_48 : f32 to vector<32x16xf32>
    %240 = arith.addf %239, %238 : vector<32x16xf32>
    %241 = arith.divf %239, %240 : vector<32x16xf32>
    %242 = vector.extract_strided_slice %229 {offsets = [64, 0], sizes = [32, 16], strides = [1, 1]} : vector<128x16xf32> to vector<32x16xf32>
    %243 = math.tanh %242 : vector<32x16xf32>
    %244 = vector.extract_strided_slice %229 {offsets = [96, 0], sizes = [32, 16], strides = [1, 1]} : vector<128x16xf32> to vector<32x16xf32>
    %245 = arith.negf %244 : vector<32x16xf32>
    %246 = math.exp %245 : vector<32x16xf32>
    %cst_49 = arith.constant 1.000000e+00 : f32
    %247 = vector.broadcast %cst_49 : f32 to vector<32x16xf32>
    %248 = arith.addf %247, %246 : vector<32x16xf32>
    %249 = arith.divf %247, %248 : vector<32x16xf32>
    %250 = arith.mulf %241, %191 : vector<32x16xf32>
    %251 = arith.mulf %235, %243 : vector<32x16xf32>
    %252 = arith.addf %250, %251 : vector<32x16xf32>
    %253 = math.tanh %252 : vector<32x16xf32>
    %254 = arith.mulf %249, %253 : vector<32x16xf32>
    %255 = arith.truncf %222 : vector<32x16xf32> to vector<32x16xbf16>
    %cst_50 = arith.constant dense<0.000000e+00> : vector<128x16xf32>
    %256 = tpu.matmul %0, %255, %cst_50 {dimension_numbers = #tpu.dot_dimension_numbers<[1], [0], [0], [1], [0, 0, 1, 1], [], []>} : vector<128x32xbf16>, vector<32x16xbf16>, vector<128x16xf32> -> vector<128x16xf32>
    %257 = vector.extract_strided_slice %9 {offsets = [0, 64], sizes = [128, 16], strides = [1, 1]} : vector<128x128xf32> to vector<128x16xf32>
    %258 = arith.addf %256, %257 : vector<128x16xf32>
    %259 = vector.extract_strided_slice %258 {offsets = [0, 0], sizes = [32, 16], strides = [1, 1]} : vector<128x16xf32> to vector<32x16xf32>
    %260 = arith.negf %259 : vector<32x16xf32>
    %261 = math.exp %260 : vector<32x16xf32>
    %cst_51 = arith.constant 1.000000e+00 : f32
    %262 = vector.broadcast %cst_51 : f32 to vector<32x16xf32>
    %263 = arith.addf %262, %261 : vector<32x16xf32>
    %264 = arith.divf %262, %263 : vector<32x16xf32>
    %265 = vector.extract_strided_slice %258 {offsets = [32, 0], sizes = [32, 16], strides = [1, 1]} : vector<128x16xf32> to vector<32x16xf32>
    %266 = arith.negf %265 : vector<32x16xf32>
    %267 = math.exp %266 : vector<32x16xf32>
    %cst_52 = arith.constant 1.000000e+00 : f32
    %268 = vector.broadcast %cst_52 : f32 to vector<32x16xf32>
    %269 = arith.addf %268, %267 : vector<32x16xf32>
    %270 = arith.divf %268, %269 : vector<32x16xf32>
    %271 = vector.extract_strided_slice %258 {offsets = [64, 0], sizes = [32, 16], strides = [1, 1]} : vector<128x16xf32> to vector<32x16xf32>
    %272 = math.tanh %271 : vector<32x16xf32>
    %273 = vector.extract_strided_slice %258 {offsets = [96, 0], sizes = [32, 16], strides = [1, 1]} : vector<128x16xf32> to vector<32x16xf32>
    %274 = arith.negf %273 : vector<32x16xf32>
    %275 = math.exp %274 : vector<32x16xf32>
    %cst_53 = arith.constant 1.000000e+00 : f32
    %276 = vector.broadcast %cst_53 : f32 to vector<32x16xf32>
    %277 = arith.addf %276, %275 : vector<32x16xf32>
    %278 = arith.divf %276, %277 : vector<32x16xf32>
    %279 = arith.mulf %270, %220 : vector<32x16xf32>
    %280 = arith.mulf %264, %272 : vector<32x16xf32>
    %281 = arith.addf %279, %280 : vector<32x16xf32>
    %282 = math.tanh %281 : vector<32x16xf32>
    %283 = arith.mulf %278, %282 : vector<32x16xf32>
    %284 = arith.truncf %254 : vector<32x16xf32> to vector<32x16xbf16>
    %cst_54 = arith.constant dense<0.000000e+00> : vector<128x16xf32>
    %285 = tpu.matmul %1, %284, %cst_54 {dimension_numbers = #tpu.dot_dimension_numbers<[1], [0], [0], [1], [0, 0, 1, 1], [], []>} : vector<128x32xbf16>, vector<32x16xbf16>, vector<128x16xf32> -> vector<128x16xf32>
    %286 = arith.truncf %283 : vector<32x16xf32> to vector<32x16xbf16>
    %cst_55 = arith.constant dense<0.000000e+00> : vector<128x16xf32>
    %287 = tpu.matmul %2, %286, %cst_55 {dimension_numbers = #tpu.dot_dimension_numbers<[1], [0], [0], [1], [0, 0, 1, 1], [], []>} : vector<128x32xbf16>, vector<32x16xbf16>, vector<128x16xf32> -> vector<128x16xf32>
    %288 = arith.addf %285, %287 : vector<128x16xf32>
    %289 = vector.broadcast %3 : vector<128x1xf32> to vector<128x16xf32>
    %290 = arith.addf %288, %289 : vector<128x16xf32>
    %291 = vector.extract_strided_slice %290 {offsets = [0, 0], sizes = [32, 16], strides = [1, 1]} : vector<128x16xf32> to vector<32x16xf32>
    %292 = arith.negf %291 : vector<32x16xf32>
    %293 = math.exp %292 : vector<32x16xf32>
    %cst_56 = arith.constant 1.000000e+00 : f32
    %294 = vector.broadcast %cst_56 : f32 to vector<32x16xf32>
    %295 = arith.addf %294, %293 : vector<32x16xf32>
    %296 = arith.divf %294, %295 : vector<32x16xf32>
    %297 = vector.extract_strided_slice %290 {offsets = [32, 0], sizes = [32, 16], strides = [1, 1]} : vector<128x16xf32> to vector<32x16xf32>
    %298 = arith.negf %297 : vector<32x16xf32>
    %299 = math.exp %298 : vector<32x16xf32>
    %cst_57 = arith.constant 1.000000e+00 : f32
    %300 = vector.broadcast %cst_57 : f32 to vector<32x16xf32>
    %301 = arith.addf %300, %299 : vector<32x16xf32>
    %302 = arith.divf %300, %301 : vector<32x16xf32>
    %303 = vector.extract_strided_slice %290 {offsets = [64, 0], sizes = [32, 16], strides = [1, 1]} : vector<128x16xf32> to vector<32x16xf32>
    %304 = math.tanh %303 : vector<32x16xf32>
    %305 = vector.extract_strided_slice %290 {offsets = [96, 0], sizes = [32, 16], strides = [1, 1]} : vector<128x16xf32> to vector<32x16xf32>
    %306 = arith.negf %305 : vector<32x16xf32>
    %307 = math.exp %306 : vector<32x16xf32>
    %cst_58 = arith.constant 1.000000e+00 : f32
    %308 = vector.broadcast %cst_58 : f32 to vector<32x16xf32>
    %309 = arith.addf %308, %307 : vector<32x16xf32>
    %310 = arith.divf %308, %309 : vector<32x16xf32>
    %311 = arith.mulf %302, %252 : vector<32x16xf32>
    %312 = arith.mulf %296, %304 : vector<32x16xf32>
    %313 = arith.addf %311, %312 : vector<32x16xf32>
    %314 = math.tanh %313 : vector<32x16xf32>
    %315 = arith.mulf %310, %314 : vector<32x16xf32>
    %316 = arith.truncf %283 : vector<32x16xf32> to vector<32x16xbf16>
    %cst_59 = arith.constant dense<0.000000e+00> : vector<128x16xf32>
    %317 = tpu.matmul %0, %316, %cst_59 {dimension_numbers = #tpu.dot_dimension_numbers<[1], [0], [0], [1], [0, 0, 1, 1], [], []>} : vector<128x32xbf16>, vector<32x16xbf16>, vector<128x16xf32> -> vector<128x16xf32>
    %318 = vector.extract_strided_slice %9 {offsets = [0, 80], sizes = [128, 16], strides = [1, 1]} : vector<128x128xf32> to vector<128x16xf32>
    %319 = arith.addf %317, %318 : vector<128x16xf32>
    %320 = vector.extract_strided_slice %319 {offsets = [0, 0], sizes = [32, 16], strides = [1, 1]} : vector<128x16xf32> to vector<32x16xf32>
    %321 = arith.negf %320 : vector<32x16xf32>
    %322 = math.exp %321 : vector<32x16xf32>
    %cst_60 = arith.constant 1.000000e+00 : f32
    %323 = vector.broadcast %cst_60 : f32 to vector<32x16xf32>
    %324 = arith.addf %323, %322 : vector<32x16xf32>
    %325 = arith.divf %323, %324 : vector<32x16xf32>
    %326 = vector.extract_strided_slice %319 {offsets = [32, 0], sizes = [32, 16], strides = [1, 1]} : vector<128x16xf32> to vector<32x16xf32>
    %327 = arith.negf %326 : vector<32x16xf32>
    %328 = math.exp %327 : vector<32x16xf32>
    %cst_61 = arith.constant 1.000000e+00 : f32
    %329 = vector.broadcast %cst_61 : f32 to vector<32x16xf32>
    %330 = arith.addf %329, %328 : vector<32x16xf32>
    %331 = arith.divf %329, %330 : vector<32x16xf32>
    %332 = vector.extract_strided_slice %319 {offsets = [64, 0], sizes = [32, 16], strides = [1, 1]} : vector<128x16xf32> to vector<32x16xf32>
    %333 = math.tanh %332 : vector<32x16xf32>
    %334 = vector.extract_strided_slice %319 {offsets = [96, 0], sizes = [32, 16], strides = [1, 1]} : vector<128x16xf32> to vector<32x16xf32>
    %335 = arith.negf %334 : vector<32x16xf32>
    %336 = math.exp %335 : vector<32x16xf32>
    %cst_62 = arith.constant 1.000000e+00 : f32
    %337 = vector.broadcast %cst_62 : f32 to vector<32x16xf32>
    %338 = arith.addf %337, %336 : vector<32x16xf32>
    %339 = arith.divf %337, %338 : vector<32x16xf32>
    %340 = arith.mulf %331, %281 : vector<32x16xf32>
    %341 = arith.mulf %325, %333 : vector<32x16xf32>
    %342 = arith.addf %340, %341 : vector<32x16xf32>
    %343 = math.tanh %342 : vector<32x16xf32>
    %344 = arith.mulf %339, %343 : vector<32x16xf32>
    %345 = arith.truncf %315 : vector<32x16xf32> to vector<32x16xbf16>
    %cst_63 = arith.constant dense<0.000000e+00> : vector<128x16xf32>
    %346 = tpu.matmul %1, %345, %cst_63 {dimension_numbers = #tpu.dot_dimension_numbers<[1], [0], [0], [1], [0, 0, 1, 1], [], []>} : vector<128x32xbf16>, vector<32x16xbf16>, vector<128x16xf32> -> vector<128x16xf32>
    %347 = arith.truncf %344 : vector<32x16xf32> to vector<32x16xbf16>
    %cst_64 = arith.constant dense<0.000000e+00> : vector<128x16xf32>
    %348 = tpu.matmul %2, %347, %cst_64 {dimension_numbers = #tpu.dot_dimension_numbers<[1], [0], [0], [1], [0, 0, 1, 1], [], []>} : vector<128x32xbf16>, vector<32x16xbf16>, vector<128x16xf32> -> vector<128x16xf32>
    %349 = arith.addf %346, %348 : vector<128x16xf32>
    %350 = vector.broadcast %3 : vector<128x1xf32> to vector<128x16xf32>
    %351 = arith.addf %349, %350 : vector<128x16xf32>
    %352 = vector.extract_strided_slice %351 {offsets = [0, 0], sizes = [32, 16], strides = [1, 1]} : vector<128x16xf32> to vector<32x16xf32>
    %353 = arith.negf %352 : vector<32x16xf32>
    %354 = math.exp %353 : vector<32x16xf32>
    %cst_65 = arith.constant 1.000000e+00 : f32
    %355 = vector.broadcast %cst_65 : f32 to vector<32x16xf32>
    %356 = arith.addf %355, %354 : vector<32x16xf32>
    %357 = arith.divf %355, %356 : vector<32x16xf32>
    %358 = vector.extract_strided_slice %351 {offsets = [32, 0], sizes = [32, 16], strides = [1, 1]} : vector<128x16xf32> to vector<32x16xf32>
    %359 = arith.negf %358 : vector<32x16xf32>
    %360 = math.exp %359 : vector<32x16xf32>
    %cst_66 = arith.constant 1.000000e+00 : f32
    %361 = vector.broadcast %cst_66 : f32 to vector<32x16xf32>
    %362 = arith.addf %361, %360 : vector<32x16xf32>
    %363 = arith.divf %361, %362 : vector<32x16xf32>
    %364 = vector.extract_strided_slice %351 {offsets = [64, 0], sizes = [32, 16], strides = [1, 1]} : vector<128x16xf32> to vector<32x16xf32>
    %365 = math.tanh %364 : vector<32x16xf32>
    %366 = vector.extract_strided_slice %351 {offsets = [96, 0], sizes = [32, 16], strides = [1, 1]} : vector<128x16xf32> to vector<32x16xf32>
    %367 = arith.negf %366 : vector<32x16xf32>
    %368 = math.exp %367 : vector<32x16xf32>
    %cst_67 = arith.constant 1.000000e+00 : f32
    %369 = vector.broadcast %cst_67 : f32 to vector<32x16xf32>
    %370 = arith.addf %369, %368 : vector<32x16xf32>
    %371 = arith.divf %369, %370 : vector<32x16xf32>
    %372 = arith.mulf %363, %313 : vector<32x16xf32>
    %373 = arith.mulf %357, %365 : vector<32x16xf32>
    %374 = arith.addf %372, %373 : vector<32x16xf32>
    %375 = math.tanh %374 : vector<32x16xf32>
    %376 = arith.mulf %371, %375 : vector<32x16xf32>
    %377 = arith.truncf %344 : vector<32x16xf32> to vector<32x16xbf16>
    %cst_68 = arith.constant dense<0.000000e+00> : vector<128x16xf32>
    %378 = tpu.matmul %0, %377, %cst_68 {dimension_numbers = #tpu.dot_dimension_numbers<[1], [0], [0], [1], [0, 0, 1, 1], [], []>} : vector<128x32xbf16>, vector<32x16xbf16>, vector<128x16xf32> -> vector<128x16xf32>
    %379 = vector.extract_strided_slice %9 {offsets = [0, 96], sizes = [128, 16], strides = [1, 1]} : vector<128x128xf32> to vector<128x16xf32>
    %380 = arith.addf %378, %379 : vector<128x16xf32>
    %381 = vector.extract_strided_slice %380 {offsets = [0, 0], sizes = [32, 16], strides = [1, 1]} : vector<128x16xf32> to vector<32x16xf32>
    %382 = arith.negf %381 : vector<32x16xf32>
    %383 = math.exp %382 : vector<32x16xf32>
    %cst_69 = arith.constant 1.000000e+00 : f32
    %384 = vector.broadcast %cst_69 : f32 to vector<32x16xf32>
    %385 = arith.addf %384, %383 : vector<32x16xf32>
    %386 = arith.divf %384, %385 : vector<32x16xf32>
    %387 = vector.extract_strided_slice %380 {offsets = [32, 0], sizes = [32, 16], strides = [1, 1]} : vector<128x16xf32> to vector<32x16xf32>
    %388 = arith.negf %387 : vector<32x16xf32>
    %389 = math.exp %388 : vector<32x16xf32>
    %cst_70 = arith.constant 1.000000e+00 : f32
    %390 = vector.broadcast %cst_70 : f32 to vector<32x16xf32>
    %391 = arith.addf %390, %389 : vector<32x16xf32>
    %392 = arith.divf %390, %391 : vector<32x16xf32>
    %393 = vector.extract_strided_slice %380 {offsets = [64, 0], sizes = [32, 16], strides = [1, 1]} : vector<128x16xf32> to vector<32x16xf32>
    %394 = math.tanh %393 : vector<32x16xf32>
    %395 = vector.extract_strided_slice %380 {offsets = [96, 0], sizes = [32, 16], strides = [1, 1]} : vector<128x16xf32> to vector<32x16xf32>
    %396 = arith.negf %395 : vector<32x16xf32>
    %397 = math.exp %396 : vector<32x16xf32>
    %cst_71 = arith.constant 1.000000e+00 : f32
    %398 = vector.broadcast %cst_71 : f32 to vector<32x16xf32>
    %399 = arith.addf %398, %397 : vector<32x16xf32>
    %400 = arith.divf %398, %399 : vector<32x16xf32>
    %401 = arith.mulf %392, %342 : vector<32x16xf32>
    %402 = arith.mulf %386, %394 : vector<32x16xf32>
    %403 = arith.addf %401, %402 : vector<32x16xf32>
    %404 = math.tanh %403 : vector<32x16xf32>
    %405 = arith.mulf %400, %404 : vector<32x16xf32>
    %406 = arith.truncf %376 : vector<32x16xf32> to vector<32x16xbf16>
    %cst_72 = arith.constant dense<0.000000e+00> : vector<128x16xf32>
    %407 = tpu.matmul %1, %406, %cst_72 {dimension_numbers = #tpu.dot_dimension_numbers<[1], [0], [0], [1], [0, 0, 1, 1], [], []>} : vector<128x32xbf16>, vector<32x16xbf16>, vector<128x16xf32> -> vector<128x16xf32>
    %408 = arith.truncf %405 : vector<32x16xf32> to vector<32x16xbf16>
    %cst_73 = arith.constant dense<0.000000e+00> : vector<128x16xf32>
    %409 = tpu.matmul %2, %408, %cst_73 {dimension_numbers = #tpu.dot_dimension_numbers<[1], [0], [0], [1], [0, 0, 1, 1], [], []>} : vector<128x32xbf16>, vector<32x16xbf16>, vector<128x16xf32> -> vector<128x16xf32>
    %410 = arith.addf %407, %409 : vector<128x16xf32>
    %411 = vector.broadcast %3 : vector<128x1xf32> to vector<128x16xf32>
    %412 = arith.addf %410, %411 : vector<128x16xf32>
    %413 = vector.extract_strided_slice %412 {offsets = [0, 0], sizes = [32, 16], strides = [1, 1]} : vector<128x16xf32> to vector<32x16xf32>
    %414 = arith.negf %413 : vector<32x16xf32>
    %415 = math.exp %414 : vector<32x16xf32>
    %cst_74 = arith.constant 1.000000e+00 : f32
    %416 = vector.broadcast %cst_74 : f32 to vector<32x16xf32>
    %417 = arith.addf %416, %415 : vector<32x16xf32>
    %418 = arith.divf %416, %417 : vector<32x16xf32>
    %419 = vector.extract_strided_slice %412 {offsets = [32, 0], sizes = [32, 16], strides = [1, 1]} : vector<128x16xf32> to vector<32x16xf32>
    %420 = arith.negf %419 : vector<32x16xf32>
    %421 = math.exp %420 : vector<32x16xf32>
    %cst_75 = arith.constant 1.000000e+00 : f32
    %422 = vector.broadcast %cst_75 : f32 to vector<32x16xf32>
    %423 = arith.addf %422, %421 : vector<32x16xf32>
    %424 = arith.divf %422, %423 : vector<32x16xf32>
    %425 = vector.extract_strided_slice %412 {offsets = [64, 0], sizes = [32, 16], strides = [1, 1]} : vector<128x16xf32> to vector<32x16xf32>
    %426 = math.tanh %425 : vector<32x16xf32>
    %427 = vector.extract_strided_slice %412 {offsets = [96, 0], sizes = [32, 16], strides = [1, 1]} : vector<128x16xf32> to vector<32x16xf32>
    %428 = arith.negf %427 : vector<32x16xf32>
    %429 = math.exp %428 : vector<32x16xf32>
    %cst_76 = arith.constant 1.000000e+00 : f32
    %430 = vector.broadcast %cst_76 : f32 to vector<32x16xf32>
    %431 = arith.addf %430, %429 : vector<32x16xf32>
    %432 = arith.divf %430, %431 : vector<32x16xf32>
    %433 = arith.mulf %424, %374 : vector<32x16xf32>
    %434 = arith.mulf %418, %426 : vector<32x16xf32>
    %435 = arith.addf %433, %434 : vector<32x16xf32>
    %436 = math.tanh %435 : vector<32x16xf32>
    %437 = arith.mulf %432, %436 : vector<32x16xf32>
    %438 = arith.truncf %405 : vector<32x16xf32> to vector<32x16xbf16>
    %cst_77 = arith.constant dense<0.000000e+00> : vector<128x16xf32>
    %439 = tpu.matmul %0, %438, %cst_77 {dimension_numbers = #tpu.dot_dimension_numbers<[1], [0], [0], [1], [0, 0, 1, 1], [], []>} : vector<128x32xbf16>, vector<32x16xbf16>, vector<128x16xf32> -> vector<128x16xf32>
    %440 = vector.extract_strided_slice %9 {offsets = [0, 112], sizes = [128, 16], strides = [1, 1]} : vector<128x128xf32> to vector<128x16xf32>
    %441 = arith.addf %439, %440 : vector<128x16xf32>
    %442 = vector.extract_strided_slice %441 {offsets = [0, 0], sizes = [32, 16], strides = [1, 1]} : vector<128x16xf32> to vector<32x16xf32>
    %443 = arith.negf %442 : vector<32x16xf32>
    %444 = math.exp %443 : vector<32x16xf32>
    %cst_78 = arith.constant 1.000000e+00 : f32
    %445 = vector.broadcast %cst_78 : f32 to vector<32x16xf32>
    %446 = arith.addf %445, %444 : vector<32x16xf32>
    %447 = arith.divf %445, %446 : vector<32x16xf32>
    %448 = vector.extract_strided_slice %441 {offsets = [32, 0], sizes = [32, 16], strides = [1, 1]} : vector<128x16xf32> to vector<32x16xf32>
    %449 = arith.negf %448 : vector<32x16xf32>
    %450 = math.exp %449 : vector<32x16xf32>
    %cst_79 = arith.constant 1.000000e+00 : f32
    %451 = vector.broadcast %cst_79 : f32 to vector<32x16xf32>
    %452 = arith.addf %451, %450 : vector<32x16xf32>
    %453 = arith.divf %451, %452 : vector<32x16xf32>
    %454 = vector.extract_strided_slice %441 {offsets = [64, 0], sizes = [32, 16], strides = [1, 1]} : vector<128x16xf32> to vector<32x16xf32>
    %455 = math.tanh %454 : vector<32x16xf32>
    %456 = vector.extract_strided_slice %441 {offsets = [96, 0], sizes = [32, 16], strides = [1, 1]} : vector<128x16xf32> to vector<32x16xf32>
    %457 = arith.negf %456 : vector<32x16xf32>
    %458 = math.exp %457 : vector<32x16xf32>
    %cst_80 = arith.constant 1.000000e+00 : f32
    %459 = vector.broadcast %cst_80 : f32 to vector<32x16xf32>
    %460 = arith.addf %459, %458 : vector<32x16xf32>
    %461 = arith.divf %459, %460 : vector<32x16xf32>
    %462 = arith.mulf %453, %403 : vector<32x16xf32>
    %463 = arith.mulf %447, %455 : vector<32x16xf32>
    %464 = arith.addf %462, %463 : vector<32x16xf32>
    %465 = math.tanh %464 : vector<32x16xf32>
    %466 = arith.mulf %461, %465 : vector<32x16xf32>
    %467 = arith.truncf %437 : vector<32x16xf32> to vector<32x16xbf16>
    %cst_81 = arith.constant dense<0.000000e+00> : vector<128x16xf32>
    %468 = tpu.matmul %1, %467, %cst_81 {dimension_numbers = #tpu.dot_dimension_numbers<[1], [0], [0], [1], [0, 0, 1, 1], [], []>} : vector<128x32xbf16>, vector<32x16xbf16>, vector<128x16xf32> -> vector<128x16xf32>
    %469 = arith.truncf %466 : vector<32x16xf32> to vector<32x16xbf16>
    %cst_82 = arith.constant dense<0.000000e+00> : vector<128x16xf32>
    %470 = tpu.matmul %2, %469, %cst_82 {dimension_numbers = #tpu.dot_dimension_numbers<[1], [0], [0], [1], [0, 0, 1, 1], [], []>} : vector<128x32xbf16>, vector<32x16xbf16>, vector<128x16xf32> -> vector<128x16xf32>
    %471 = arith.addf %468, %470 : vector<128x16xf32>
    %472 = vector.broadcast %3 : vector<128x1xf32> to vector<128x16xf32>
    %473 = arith.addf %471, %472 : vector<128x16xf32>
    %474 = vector.extract_strided_slice %473 {offsets = [0, 0], sizes = [32, 16], strides = [1, 1]} : vector<128x16xf32> to vector<32x16xf32>
    %475 = arith.negf %474 : vector<32x16xf32>
    %476 = math.exp %475 : vector<32x16xf32>
    %cst_83 = arith.constant 1.000000e+00 : f32
    %477 = vector.broadcast %cst_83 : f32 to vector<32x16xf32>
    %478 = arith.addf %477, %476 : vector<32x16xf32>
    %479 = arith.divf %477, %478 : vector<32x16xf32>
    %480 = vector.extract_strided_slice %473 {offsets = [32, 0], sizes = [32, 16], strides = [1, 1]} : vector<128x16xf32> to vector<32x16xf32>
    %481 = arith.negf %480 : vector<32x16xf32>
    %482 = math.exp %481 : vector<32x16xf32>
    %cst_84 = arith.constant 1.000000e+00 : f32
    %483 = vector.broadcast %cst_84 : f32 to vector<32x16xf32>
    %484 = arith.addf %483, %482 : vector<32x16xf32>
    %485 = arith.divf %483, %484 : vector<32x16xf32>
    %486 = vector.extract_strided_slice %473 {offsets = [64, 0], sizes = [32, 16], strides = [1, 1]} : vector<128x16xf32> to vector<32x16xf32>
    %487 = math.tanh %486 : vector<32x16xf32>
    %488 = vector.extract_strided_slice %473 {offsets = [96, 0], sizes = [32, 16], strides = [1, 1]} : vector<128x16xf32> to vector<32x16xf32>
    %489 = arith.negf %488 : vector<32x16xf32>
    %490 = math.exp %489 : vector<32x16xf32>
    %cst_85 = arith.constant 1.000000e+00 : f32
    %491 = vector.broadcast %cst_85 : f32 to vector<32x16xf32>
    %492 = arith.addf %491, %490 : vector<32x16xf32>
    %493 = arith.divf %491, %492 : vector<32x16xf32>
    %494 = arith.mulf %485, %435 : vector<32x16xf32>
    %495 = arith.mulf %479, %487 : vector<32x16xf32>
    %496 = arith.addf %494, %495 : vector<32x16xf32>
    %497 = math.tanh %496 : vector<32x16xf32>
    %498 = arith.mulf %493, %497 : vector<32x16xf32>
    %c0_86 = arith.constant 0 : index
    %c0_87 = arith.constant 0 : index
    %499 = vector.load %arg10[%c0_86, %c0_87] : memref<16x32xbf16, #tpu.memory_space<vmem>>, vector<16x32xbf16>
    %500 = arith.truncf %498 : vector<32x16xf32> to vector<32x16xbf16>
    %cst_88 = arith.constant dense<0.000000e+00> : vector<16x16xf32>
    %501 = tpu.matmul %499, %500, %cst_88 {dimension_numbers = #tpu.dot_dimension_numbers<[1], [0], [0], [1], [0, 0, 1, 1], [], []>} : vector<16x32xbf16>, vector<32x16xbf16>, vector<16x16xf32> -> vector<16x16xf32>
    %c0_89 = arith.constant 0 : index
    %c0_90 = arith.constant 0 : index
    %502 = vector.load %arg11[%c0_89, %c0_90] : memref<16x1xf32, #tpu.memory_space<vmem>>, vector<16x1xf32>
    %cst_91 = arith.constant dense<0.000000e+00> : vector<16x1xf32>
    %503 = tpu.matmul %501, %502, %cst_91 {dimension_numbers = #tpu.dot_dimension_numbers<[0], [0], [1], [1], [0, 1, 1, 1], [], []>} : vector<16x16xf32>, vector<16x1xf32>, vector<16x1xf32> -> vector<16x1xf32>
    %c0_92 = arith.constant 0 : index
    %c0_93 = arith.constant 0 : index
    %504 = vector.load %arg12[%c0_92, %c0_93] : memref<1x16xf32, #tpu.memory_space<vmem>>, vector<1x16xf32>
    %cst_94 = arith.constant dense<0.000000e+00> : vector<1x16xf32>
    %505 = tpu.matmul %504, %501, %cst_94 {dimension_numbers = #tpu.dot_dimension_numbers<[1], [0], [0], [1], [0, 0, 1, 1], [], []>} : vector<1x16xf32>, vector<16x16xf32>, vector<1x16xf32> -> vector<1x16xf32>
    %c0_95 = arith.constant 0 : index
    %c0_96 = arith.constant 0 : index
    %506 = vector.load %arg2[%c0_95, %c0_96] : memref<8x8xf32, #tpu.memory_space<vmem>>, vector<8x8xf32>
    %cst_97 = arith.constant 0.000000e+00 : f32
    %507 = vector.broadcast %cst_97 : f32 to vector<8x8xf32>
    %508 = arith.cmpf ogt, %506, %507 : vector<8x8xf32>
    %c0_98 = arith.constant 0 : index
    %c0_99 = arith.constant 0 : index
    %509 = vector.load %arg13[%c0_98, %c0_99] : memref<2x16xf32, #tpu.memory_space<vmem>>, vector<2x16xf32>
    %c0_100 = arith.constant 0 : index
    %c0_101 = arith.constant 0 : index
    %510 = vector.load %arg14[%c0_100, %c0_101] : memref<2x1xf32, #tpu.memory_space<vmem>>, vector<2x1xf32>
    %c0_102 = arith.constant 0 : index
    %c0_103 = arith.constant 0 : index
    %511 = vector.load %arg15[%c0_102, %c0_103] : memref<2x1xf32, #tpu.memory_space<vmem>>, vector<2x1xf32>
    %c0_104 = arith.constant 0 : index
    %c0_105 = arith.constant 0 : index
    %512 = vector.load %arg3[%c0_104, %c0_105] : memref<1x16xf32, #tpu.memory_space<vmem>>, vector<1x16xf32>
    %513 = vector.extract_strided_slice %503 {offsets = [0, 0], sizes = [8, 1], strides = [1, 1]} : vector<16x1xf32> to vector<8x1xf32>
    %514 = vector.extract_strided_slice %505 {offsets = [0, 0], sizes = [1, 8], strides = [1, 1]} : vector<1x16xf32> to vector<1x8xf32>
    %515 = vector.broadcast %513 : vector<8x1xf32> to vector<8x8xf32>
    %516 = vector.broadcast %514 : vector<1x8xf32> to vector<8x8xf32>
    %517 = arith.addf %515, %516 : vector<8x8xf32>
    %cst_106 = arith.constant 0.000000e+00 : f32
    %518 = vector.broadcast %cst_106 : f32 to vector<8x8xf32>
    %519 = arith.cmpf ogt, %517, %518 : vector<8x8xf32>
    %cst_107 = arith.constant 2.000000e-01 : f32
    %520 = vector.broadcast %cst_107 : f32 to vector<8x8xf32>
    %521 = arith.mulf %520, %517 : vector<8x8xf32>
    %522 = arith.select %519, %517, %521 : vector<8x8xi1>, vector<8x8xf32>
    %cst_108 = arith.constant -9.000000e+15 : f32
    %523 = vector.broadcast %cst_108 : f32 to vector<8x8xf32>
    %524 = arith.select %508, %522, %523 : vector<8x8xi1>, vector<8x8xf32>
    %cst_109 = arith.constant dense<0xFF800000> : vector<8xf32>
    %525 = vector.multi_reduction <maximumf>, %524, %cst_109 [1] : vector<8x8xf32> to vector<8xf32>
    %526 = vector.shape_cast %525 : vector<8xf32> to vector<8x1xf32>
    %527 = vector.broadcast %526 : vector<8x1xf32> to vector<8x8xf32>
    %528 = arith.subf %524, %527 : vector<8x8xf32>
    %529 = math.exp %528 : vector<8x8xf32>
    %cst_110 = arith.constant dense<0.000000e+00> : vector<8xf32>
    %530 = vector.multi_reduction <add>, %529, %cst_110 [1] : vector<8x8xf32> to vector<8xf32>
    %531 = vector.shape_cast %530 : vector<8xf32> to vector<8x1xf32>
    %532 = vector.broadcast %531 : vector<8x1xf32> to vector<8x8xf32>
    %533 = arith.divf %529, %532 : vector<8x8xf32>
    %534 = vector.extract_strided_slice %501 {offsets = [0, 0], sizes = [16, 8], strides = [1, 1]} : vector<16x16xf32> to vector<16x8xf32>
    %cst_111 = arith.constant dense<0.000000e+00> : vector<16x8xf32>
    %535 = tpu.matmul %534, %533, %cst_111 {dimension_numbers = #tpu.dot_dimension_numbers<[1], [1], [0], [0], [0, 0, 1, 0], [], []>} : vector<16x8xf32>, vector<8x8xf32>, vector<16x8xf32> -> vector<16x8xf32>
    %cst_112 = arith.constant 0.000000e+00 : f32
    %536 = vector.broadcast %cst_112 : f32 to vector<16x8xf32>
    %537 = arith.cmpf ogt, %535, %536 : vector<16x8xf32>
    %cst_113 = arith.constant 0.000000e+00 : f32
    %538 = vector.broadcast %cst_113 : f32 to vector<16x8xf32>
    %539 = arith.minimumf %535, %538 : vector<16x8xf32>
    %540 = math.exp %539 : vector<16x8xf32>
    %cst_114 = arith.constant 1.000000e+00 : f32
    %541 = vector.broadcast %cst_114 : f32 to vector<16x8xf32>
    %542 = arith.subf %540, %541 : vector<16x8xf32>
    %543 = arith.select %537, %535, %542 : vector<16x8xi1>, vector<16x8xf32>
    %cst_115 = arith.constant dense<0.000000e+00> : vector<2x8xf32>
    %544 = tpu.matmul %509, %543, %cst_115 {dimension_numbers = #tpu.dot_dimension_numbers<[1], [0], [0], [1], [0, 0, 1, 1], [], []>} : vector<2x16xf32>, vector<16x8xf32>, vector<2x8xf32> -> vector<2x8xf32>
    %545 = vector.extract_strided_slice %512 {offsets = [0, 0], sizes = [1, 8], strides = [1, 1]} : vector<1x16xf32> to vector<1x8xf32>
    %546 = vector.broadcast %510 : vector<2x1xf32> to vector<2x8xf32>
    %547 = vector.broadcast %545 : vector<1x8xf32> to vector<2x8xf32>
    %548 = arith.mulf %546, %547 : vector<2x8xf32>
    %549 = arith.addf %544, %548 : vector<2x8xf32>
    %550 = vector.broadcast %511 : vector<2x1xf32> to vector<2x8xf32>
    %551 = arith.addf %549, %550 : vector<2x8xf32>
    %cst_116 = arith.constant dense<0xFF800000> : vector<2xf32>
    %552 = vector.multi_reduction <maximumf>, %551, %cst_116 [1] : vector<2x8xf32> to vector<2xf32>
    %553 = vector.shape_cast %552 : vector<2xf32> to vector<2x1xf32>
    %554 = vector.broadcast %553 : vector<2x1xf32> to vector<2x8xf32>
    %555 = arith.subf %551, %554 : vector<2x8xf32>
    %556 = math.exp %555 : vector<2x8xf32>
    %cst_117 = arith.constant dense<0.000000e+00> : vector<2xf32>
    %557 = vector.multi_reduction <add>, %556, %cst_117 [1] : vector<2x8xf32> to vector<2xf32>
    %558 = vector.shape_cast %557 : vector<2xf32> to vector<2x1xf32>
    %559 = vector.broadcast %558 : vector<2x1xf32> to vector<2x8xf32>
    %560 = arith.divf %556, %559 : vector<2x8xf32>
    %561 = vector.extract_strided_slice %560 {offsets = [0, 0], sizes = [1, 8], strides = [1, 1]} : vector<2x8xf32> to vector<1x8xf32>
    %cst_118 = arith.constant 2.000000e+00 : f32
    %562 = vector.broadcast %cst_118 : f32 to vector<1x8xf32>
    %563 = arith.mulf %562, %561 : vector<1x8xf32>
    %564 = vector.extract_strided_slice %560 {offsets = [1, 0], sizes = [1, 8], strides = [1, 1]} : vector<2x8xf32> to vector<1x8xf32>
    %565 = arith.subf %563, %564 : vector<1x8xf32>
    %566 = vector.extract_strided_slice %503 {offsets = [8, 0], sizes = [8, 1], strides = [1, 1]} : vector<16x1xf32> to vector<8x1xf32>
    %567 = vector.extract_strided_slice %505 {offsets = [0, 8], sizes = [1, 8], strides = [1, 1]} : vector<1x16xf32> to vector<1x8xf32>
    %568 = vector.broadcast %566 : vector<8x1xf32> to vector<8x8xf32>
    %569 = vector.broadcast %567 : vector<1x8xf32> to vector<8x8xf32>
    %570 = arith.addf %568, %569 : vector<8x8xf32>
    %cst_119 = arith.constant 0.000000e+00 : f32
    %571 = vector.broadcast %cst_119 : f32 to vector<8x8xf32>
    %572 = arith.cmpf ogt, %570, %571 : vector<8x8xf32>
    %cst_120 = arith.constant 2.000000e-01 : f32
    %573 = vector.broadcast %cst_120 : f32 to vector<8x8xf32>
    %574 = arith.mulf %573, %570 : vector<8x8xf32>
    %575 = arith.select %572, %570, %574 : vector<8x8xi1>, vector<8x8xf32>
    %cst_121 = arith.constant -9.000000e+15 : f32
    %576 = vector.broadcast %cst_121 : f32 to vector<8x8xf32>
    %577 = arith.select %508, %575, %576 : vector<8x8xi1>, vector<8x8xf32>
    %cst_122 = arith.constant dense<0xFF800000> : vector<8xf32>
    %578 = vector.multi_reduction <maximumf>, %577, %cst_122 [1] : vector<8x8xf32> to vector<8xf32>
    %579 = vector.shape_cast %578 : vector<8xf32> to vector<8x1xf32>
    %580 = vector.broadcast %579 : vector<8x1xf32> to vector<8x8xf32>
    %581 = arith.subf %577, %580 : vector<8x8xf32>
    %582 = math.exp %581 : vector<8x8xf32>
    %cst_123 = arith.constant dense<0.000000e+00> : vector<8xf32>
    %583 = vector.multi_reduction <add>, %582, %cst_123 [1] : vector<8x8xf32> to vector<8xf32>
    %584 = vector.shape_cast %583 : vector<8xf32> to vector<8x1xf32>
    %585 = vector.broadcast %584 : vector<8x1xf32> to vector<8x8xf32>
    %586 = arith.divf %582, %585 : vector<8x8xf32>
    %587 = vector.extract_strided_slice %501 {offsets = [0, 8], sizes = [16, 8], strides = [1, 1]} : vector<16x16xf32> to vector<16x8xf32>
    %cst_124 = arith.constant dense<0.000000e+00> : vector<16x8xf32>
    %588 = tpu.matmul %587, %586, %cst_124 {dimension_numbers = #tpu.dot_dimension_numbers<[1], [1], [0], [0], [0, 0, 1, 0], [], []>} : vector<16x8xf32>, vector<8x8xf32>, vector<16x8xf32> -> vector<16x8xf32>
    %cst_125 = arith.constant 0.000000e+00 : f32
    %589 = vector.broadcast %cst_125 : f32 to vector<16x8xf32>
    %590 = arith.cmpf ogt, %588, %589 : vector<16x8xf32>
    %cst_126 = arith.constant 0.000000e+00 : f32
    %591 = vector.broadcast %cst_126 : f32 to vector<16x8xf32>
    %592 = arith.minimumf %588, %591 : vector<16x8xf32>
    %593 = math.exp %592 : vector<16x8xf32>
    %cst_127 = arith.constant 1.000000e+00 : f32
    %594 = vector.broadcast %cst_127 : f32 to vector<16x8xf32>
    %595 = arith.subf %593, %594 : vector<16x8xf32>
    %596 = arith.select %590, %588, %595 : vector<16x8xi1>, vector<16x8xf32>
    %cst_128 = arith.constant dense<0.000000e+00> : vector<2x8xf32>
    %597 = tpu.matmul %509, %596, %cst_128 {dimension_numbers = #tpu.dot_dimension_numbers<[1], [0], [0], [1], [0, 0, 1, 1], [], []>} : vector<2x16xf32>, vector<16x8xf32>, vector<2x8xf32> -> vector<2x8xf32>
    %598 = vector.extract_strided_slice %512 {offsets = [0, 8], sizes = [1, 8], strides = [1, 1]} : vector<1x16xf32> to vector<1x8xf32>
    %599 = vector.broadcast %510 : vector<2x1xf32> to vector<2x8xf32>
    %600 = vector.broadcast %598 : vector<1x8xf32> to vector<2x8xf32>
    %601 = arith.mulf %599, %600 : vector<2x8xf32>
    %602 = arith.addf %597, %601 : vector<2x8xf32>
    %603 = vector.broadcast %511 : vector<2x1xf32> to vector<2x8xf32>
    %604 = arith.addf %602, %603 : vector<2x8xf32>
    %cst_129 = arith.constant dense<0xFF800000> : vector<2xf32>
    %605 = vector.multi_reduction <maximumf>, %604, %cst_129 [1] : vector<2x8xf32> to vector<2xf32>
    %606 = vector.shape_cast %605 : vector<2xf32> to vector<2x1xf32>
    %607 = vector.broadcast %606 : vector<2x1xf32> to vector<2x8xf32>
    %608 = arith.subf %604, %607 : vector<2x8xf32>
    %609 = math.exp %608 : vector<2x8xf32>
    %cst_130 = arith.constant dense<0.000000e+00> : vector<2xf32>
    %610 = vector.multi_reduction <add>, %609, %cst_130 [1] : vector<2x8xf32> to vector<2xf32>
    %611 = vector.shape_cast %610 : vector<2xf32> to vector<2x1xf32>
    %612 = vector.broadcast %611 : vector<2x1xf32> to vector<2x8xf32>
    %613 = arith.divf %609, %612 : vector<2x8xf32>
    %614 = vector.extract_strided_slice %613 {offsets = [0, 0], sizes = [1, 8], strides = [1, 1]} : vector<2x8xf32> to vector<1x8xf32>
    %cst_131 = arith.constant 2.000000e+00 : f32
    %615 = vector.broadcast %cst_131 : f32 to vector<1x8xf32>
    %616 = arith.mulf %615, %614 : vector<1x8xf32>
    %617 = vector.extract_strided_slice %613 {offsets = [1, 0], sizes = [1, 8], strides = [1, 1]} : vector<2x8xf32> to vector<1x8xf32>
    %618 = arith.subf %616, %617 : vector<1x8xf32>
    %619 = tpu.concatenate %565, %618 in 0 : vector<1x8xf32>, vector<1x8xf32> -> vector<2x8xf32>
    %c0_132 = arith.constant 0 : index
    %c0_133 = arith.constant 0 : index
    %620 = vector.load %arg16[%c0_132, %c0_133] : memref<2x8xf32, #tpu.memory_space<vmem>>, vector<2x8xf32>
    tpu.vector_store %arg16[%c0_132, %c0_133], %619 {strides = array<i32>} : memref<2x8xf32, #tpu.memory_space<vmem>>, vector<2x8xf32>,
    return
  }
  func.func @transform_0(%arg0: i32) -> (i32, i32) {
    %c0_i32 = arith.constant 0 : i32
    %c0_i32_0 = arith.constant 0 : i32
    %c0_i32_1 = arith.constant 0 : i32
    return %c0_i32, %c0_i32_0 : i32, i32
  }
  func.func @transform_1(%arg0: i32) -> (i32, i32) {
    %c0_i32 = arith.constant 0 : i32
    %c0_i32_0 = arith.constant 0 : i32
    %c0_i32_1 = arith.constant 0 : i32
    return %c0_i32, %c0_i32_0 : i32, i32
  }
  func.func @transform_2(%arg0: i32) -> (i32, i32) {
    %c0_i32 = arith.constant 0 : i32
    %c0_i32_0 = arith.constant 0 : i32
    %c0_i32_1 = arith.constant 0 : i32
    return %c0_i32, %c0_i32_0 : i32, i32
  }
  func.func @transform_3(%arg0: i32) -> (i32, i32) {
    %c0_i32 = arith.constant 0 : i32
    %c0_i32_0 = arith.constant 0 : i32
    %c0_i32_1 = arith.constant 0 : i32
    return %c0_i32, %c0_i32_0 : i32, i32
  }
  func.func @transform_4(%arg0: i32) -> (i32, i32) {
    %c0_i32 = arith.constant 0 : i32
    %c0_i32_0 = arith.constant 0 : i32
    %c0_i32_1 = arith.constant 0 : i32
    return %c0_i32, %c0_i32_0 : i32, i32
  }
  func.func @transform_5(%arg0: i32) -> (i32, i32) {
    %c0_i32 = arith.constant 0 : i32
    %c0_i32_0 = arith.constant 0 : i32
    %c0_i32_1 = arith.constant 0 : i32
    return %c0_i32, %c0_i32_0 : i32, i32
  }
  func.func @transform_6(%arg0: i32) -> (i32, i32) {
    %c0_i32 = arith.constant 0 : i32
    %c0_i32_0 = arith.constant 0 : i32
    %c0_i32_1 = arith.constant 0 : i32
    return %c0_i32, %c0_i32_0 : i32, i32
  }
  func.func @transform_7(%arg0: i32) -> (i32, i32) {
    %c0_i32 = arith.constant 0 : i32
    %c0_i32_0 = arith.constant 0 : i32
    %c0_i32_1 = arith.constant 0 : i32
    return %c0_i32, %c0_i32_0 : i32, i32
  }
  func.func @transform_8(%arg0: i32) -> (i32, i32) {
    %c0_i32 = arith.constant 0 : i32
    %c0_i32_0 = arith.constant 0 : i32
    %c0_i32_1 = arith.constant 0 : i32
    return %c0_i32, %c0_i32_0 : i32, i32
  }
  func.func @transform_9(%arg0: i32) -> (i32, i32) {
    %c0_i32 = arith.constant 0 : i32
    %c0_i32_0 = arith.constant 0 : i32
    %c0_i32_1 = arith.constant 0 : i32
    return %c0_i32, %c0_i32_0 : i32, i32
  }
  func.func @transform_10(%arg0: i32) -> (i32, i32) {
    %c0_i32 = arith.constant 0 : i32
    %c0_i32_0 = arith.constant 0 : i32
    %c0_i32_1 = arith.constant 0 : i32
    return %c0_i32, %c0_i32_0 : i32, i32
  }
  func.func @transform_11(%arg0: i32) -> (i32, i32) {
    %c0_i32 = arith.constant 0 : i32
    %c0_i32_0 = arith.constant 0 : i32
    %c0_i32_1 = arith.constant 0 : i32
    return %c0_i32, %c0_i32_0 : i32, i32
  }
  func.func @transform_12(%arg0: i32) -> (i32, i32) {
    %c0_i32 = arith.constant 0 : i32
    %c0_i32_0 = arith.constant 0 : i32
    %c0_i32_1 = arith.constant 0 : i32
    return %c0_i32, %c0_i32_0 : i32, i32
  }
  func.func @transform_13(%arg0: i32) -> (i32, i32) {
    %c0_i32 = arith.constant 0 : i32
    %c0_i32_0 = arith.constant 0 : i32
    %c0_i32_1 = arith.constant 0 : i32
    return %c0_i32, %c0_i32_0 : i32, i32
  }
  func.func @transform_14(%arg0: i32) -> (i32, i32) {
    %c0_i32 = arith.constant 0 : i32
    %c0_i32_0 = arith.constant 0 : i32
    %c0_i32_1 = arith.constant 0 : i32
    return %c0_i32, %c0_i32_0 : i32, i32
  }
  func.func @transform_15(%arg0: i32) -> (i32, i32) {
    %c0_i32 = arith.constant 0 : i32
    %c0_i32_0 = arith.constant 0 : i32
    %c0_i32_1 = arith.constant 0 : i32
    return %c0_i32, %c0_i32_0 : i32, i32
  }
}

</mosaic_0001>

<llo_original>
// kernel: hgam_forward.1
$region0: #{hgam_forward.1}
  #allocation0 [shape = 'u32[]', space=smem, size = 0x4, offset = 0x4, fixed_abs, tag = 'smem constant byte address 0x4 - core index']
  #allocation1 [shape = 'u32[72,128]{1,0:T(1,128)}', space=vmem, size = 0x9000, scoped, tag = 'internal scratch']
  %s0 = inlined_call_operand.vmem [shape: bf16[4,128], index: 0, kind: input, shape index: {}]
  %s1 = inlined_call_operand.vmem [shape: f32[8,8], index: 1, kind: input, shape index: {}]
  %s2 = inlined_call_operand.vmem [shape: f32[1,16], index: 2, kind: input, shape index: {}]
  %s3 = inlined_call_operand.vmem [shape: bf16[128,32], index: 3, kind: input, shape index: {}]
  %s4 = inlined_call_operand.vmem [shape: bf16[128,4], index: 4, kind: input, shape index: {}]
  %s5 = inlined_call_operand.vmem [shape: f32[128,1], index: 5, kind: input, shape index: {}]
  %s6 = inlined_call_operand.vmem [shape: bf16[128,32], index: 6, kind: input, shape index: {}]
  %s7 = inlined_call_operand.vmem [shape: bf16[128,32], index: 7, kind: input, shape index: {}]
  %s8 = inlined_call_operand.vmem [shape: f32[128,1], index: 8, kind: input, shape index: {}]
  %s9 = inlined_call_operand.vmem [shape: bf16[16,32], index: 9, kind: input, shape index: {}]
  %s10 = inlined_call_operand.vmem [shape: f32[16,1], index: 10, kind: input, shape index: {}]
  %s11 = inlined_call_operand.vmem [shape: f32[1,16], index: 11, kind: input, shape index: {}]
  %s12 = inlined_call_operand.vmem [shape: f32[2,16], index: 12, kind: input, shape index: {}]
  %s13 = inlined_call_operand.vmem [shape: f32[2,1], index: 13, kind: input, shape index: {}]
  %s14 = inlined_call_operand.vmem [shape: f32[2,1], index: 14, kind: input, shape index: {}]
  %s15 = inlined_call_operand.hbm [shape: f32[2,8], index: 15, kind: output, shape index: {}]
  %s16 = sld [smem:[#allocation0]]
  $region70: #{hgam_forward.1} parent=0
    _
  %s18 = ssub.s32 1, %s16
  %s19 = scalar_select 0, %s18, %s16
  $region1: #{hgam_forward.1} parent=0
    #allocation2 [shape = 'u8[1024]{0}', space=vmem, size = 0x400, scoped, tag = 'output window, operand 0, single buffered']
    #allocation3 [shape = 's32[1]{0}', space=sflag, size = 0x4, scoped, tag = 'scoped memory for hgam_forward.1']
    %20 = vsyncpa [#allocation3], 0
    // Predicated region
    $region2: #{hgam_forward.1} parent=1 // pred_check
      _
    $region3: #{hgam_forward.1} parent=1 // pred_check_branch
      %22 = sbr.rel (0) target = $region5
    $region4: #{hgam_forward.1} parent=1 // pred_region
      _
    $region5: #{hgam_forward.1} parent=1 // pred_fallthru
      _
    // Predicated region
    $region6: #{hgam_forward.1} parent=1 // pred_check
      _
    $region7: #{hgam_forward.1} parent=1 // pred_check_branch
      %24 = sbr.rel (0) target = $region9
    $region8: #{hgam_forward.1} parent=1 // pred_region
      _
    $region9: #{hgam_forward.1} parent=1 // pred_fallthru
      _
    // Predicated region
    $region10: #{hgam_forward.1} parent=1 // pred_check
      _
    $region11: #{hgam_forward.1} parent=1 // pred_check_branch
      %26 = sbr.rel (0) target = $region13
    $region12: #{hgam_forward.1} parent=1 // pred_region
      _
    $region13: #{hgam_forward.1} parent=1 // pred_fallthru
      _
    // Predicated region
    $region14: #{hgam_forward.1} parent=1 // pred_check
      _
    $region15: #{hgam_forward.1} parent=1 // pred_check_branch
      %28 = sbr.rel (0) target = $region17
    $region16: #{hgam_forward.1} parent=1 // pred_region
      _
    $region17: #{hgam_forward.1} parent=1 // pred_fallthru
      _
    // Predicated region
    $region18: #{hgam_forward.1} parent=1 // pred_check
      _
    $region19: #{hgam_forward.1} parent=1 // pred_check_branch
      %30 = sbr.rel (0) target = $region21
    $region20: #{hgam_forward.1} parent=1 // pred_region
      _
    $region21: #{hgam_forward.1} parent=1 // pred_fallthru
      _
    // Predicated region
    $region22: #{hgam_forward.1} parent=1 // pred_check
      _
    $region23: #{hgam_forward.1} parent=1 // pred_check_branch
      %32 = sbr.rel (0) target = $region25
    $region24: #{hgam_forward.1} parent=1 // pred_region
      _
    $region25: #{hgam_forward.1} parent=1 // pred_fallthru
      _
    // Predicated region
    $region26: #{hgam_forward.1} parent=1 // pred_check
      _
    $region27: #{hgam_forward.1} parent=1 // pred_check_branch
      %34 = sbr.rel (0) target = $region29
    $region28: #{hgam_forward.1} parent=1 // pred_region
      _
    $region29: #{hgam_forward.1} parent=1 // pred_fallthru
      _
    // Predicated region
    $region30: #{hgam_forward.1} parent=1 // pred_check
      _
    $region31: #{hgam_forward.1} parent=1 // pred_check_branch
      %36 = sbr.rel (0) target = $region33
    $region32: #{hgam_forward.1} parent=1 // pred_region
      _
    $region33: #{hgam_forward.1} parent=1 // pred_fallthru
      _
    // Predicated region
    $region34: #{hgam_forward.1} parent=1 // pred_check
      _
    $region35: #{hgam_forward.1} parent=1 // pred_check_branch
      %38 = sbr.rel (0) target = $region37
    $region36: #{hgam_forward.1} parent=1 // pred_region
      _
    $region37: #{hgam_forward.1} parent=1 // pred_fallthru
      _
    // Predicated region
    $region38: #{hgam_forward.1} parent=1 // pred_check
      _
    $region39: #{hgam_forward.1} parent=1 // pred_check_branch
      %40 = sbr.rel (0) target = $region41
    $region40: #{hgam_forward.1} parent=1 // pred_region
      _
    $region41: #{hgam_forward.1} parent=1 // pred_fallthru
      _
    // Predicated region
    $region42: #{hgam_forward.1} parent=1 // pred_check
      _
    $region43: #{hgam_forward.1} parent=1 // pred_check_branch
      %42 = sbr.rel (0) target = $region45
    $region44: #{hgam_forward.1} parent=1 // pred_region
      _
    $region45: #{hgam_forward.1} parent=1 // pred_fallthru
      _
    // Predicated region
    $region46: #{hgam_forward.1} parent=1 // pred_check
      _
    $region47: #{hgam_forward.1} parent=1 // pred_check_branch
      %44 = sbr.rel (0) target = $region49
    $region48: #{hgam_forward.1} parent=1 // pred_region
      _
    $region49: #{hgam_forward.1} parent=1 // pred_fallthru
      _
    // Predicated region
    $region50: #{hgam_forward.1} parent=1 // pred_check
      _
    $region51: #{hgam_forward.1} parent=1 // pred_check_branch
      %46 = sbr.rel (0) target = $region53
    $region52: #{hgam_forward.1} parent=1 // pred_region
      _
    $region53: #{hgam_forward.1} parent=1 // pred_fallthru
      _
    // Predicated region
    $region54: #{hgam_forward.1} parent=1 // pred_check
      _
    $region55: #{hgam_forward.1} parent=1 // pred_check_branch
      %48 = sbr.rel (0) target = $region57
    $region56: #{hgam_forward.1} parent=1 // pred_region
      _
    $region57: #{hgam_forward.1} parent=1 // pred_fallthru
      _
    // Predicated region
    $region58: #{hgam_forward.1} parent=1 // pred_check
      _
    $region59: #{hgam_forward.1} parent=1 // pred_check_branch
      %50 = sbr.rel (0) target = $region61
    $region60: #{hgam_forward.1} parent=1 // pred_region
      _
    $region61: #{hgam_forward.1} parent=1 // pred_fallthru
      _
    %v52 = vld [vmem:[%s3] sm:$0xf]
    %v53 = vld [vmem:[%s3 + $0x4] sm:$0xf]
    %v54 = vld [vmem:[%s3 + $0x8] sm:$0xf]
    %v55 = vld [vmem:[%s3 + $0xc] sm:$0xf]
    %v56 = vld [vmem:[%s3 + $0x10] sm:$0xf]
    %v57 = vld [vmem:[%s3 + $0x14] sm:$0xf]
    %v58 = vld [vmem:[%s3 + $0x18] sm:$0xf]
    %v59 = vld [vmem:[%s3 + $0x1c] sm:$0xf]
    %v60 = vld [vmem:[%s3 + $0x20] sm:$0xf]
    %v61 = vld [vmem:[%s3 + $0x24] sm:$0xf]
    %v62 = vld [vmem:[%s3 + $0x28] sm:$0xf]
    %v63 = vld [vmem:[%s3 + $0x2c] sm:$0xf]
    %v64 = vld [vmem:[%s3 + $0x30] sm:$0xf]
    %v65 = vld [vmem:[%s3 + $0x34] sm:$0xf]
    %v66 = vld [vmem:[%s3 + $0x38] sm:$0xf]
    %v67 = vld [vmem:[%s3 + $0x3c] sm:$0xf]
    %v68 = vld [vmem:[%s6] sm:$0xf]
    %v69 = vld [vmem:[%s6 + $0x4] sm:$0xf]
    %v70 = vld [vmem:[%s6 + $0x8] sm:$0xf]
    %v71 = vld [vmem:[%s6 + $0xc] sm:$0xf]
    %v72 = vld [vmem:[%s6 + $0x10] sm:$0xf]
    %v73 = vld [vmem:[%s6 + $0x14] sm:$0xf]
    %v74 = vld [vmem:[%s6 + $0x18] sm:$0xf]
    %v75 = vld [vmem:[%s6 + $0x1c] sm:$0xf]
    %v76 = vld [vmem:[%s6 + $0x20] sm:$0xf]
    %v77 = vld [vmem:[%s6 + $0x24] sm:$0xf]
    %v78 = vld [vmem:[%s6 + $0x28] sm:$0xf]
    %v79 = vld [vmem:[%s6 + $0x2c] sm:$0xf]
    %v80 = vld [vmem:[%s6 + $0x30] sm:$0xf]
    %v81 = vld [vmem:[%s6 + $0x34] sm:$0xf]
    %v82 = vld [vmem:[%s6 + $0x38] sm:$0xf]
    %v83 = vld [vmem:[%s6 + $0x3c] sm:$0xf]
    %v84 = vld [vmem:[%s7] sm:$0xf]
    %v85 = vld [vmem:[%s7 + $0x4] sm:$0xf]
    %v86 = vld [vmem:[%s7 + $0x8] sm:$0xf]
    %v87 = vld [vmem:[%s7 + $0xc] sm:$0xf]
    %v88 = vld [vmem:[%s7 + $0x10] sm:$0xf]
    %v89 = vld [vmem:[%s7 + $0x14] sm:$0xf]
    %v90 = vld [vmem:[%s7 + $0x18] sm:$0xf]
    %v91 = vld [vmem:[%s7 + $0x1c] sm:$0xf]
    %v92 = vld [vmem:[%s7 + $0x20] sm:$0xf]
    %v93 = vld [vmem:[%s7 + $0x24] sm:$0xf]
    %v94 = vld [vmem:[%s7 + $0x28] sm:$0xf]
    %v95 = vld [vmem:[%s7 + $0x2c] sm:$0xf]
    %v96 = vld [vmem:[%s7 + $0x30] sm:$0xf]
    %v97 = vld [vmem:[%s7 + $0x34] sm:$0xf]
    %v98 = vld [vmem:[%s7 + $0x38] sm:$0xf]
    %v99 = vld [vmem:[%s7 + $0x3c] sm:$0xf]
    %v100 = vld [vmem:[%s8] sm:$0xff]
    %v101 = vld [vmem:[%s8 + $0x8] sm:$0xff]
    %v102 = vld [vmem:[%s8 + $0x10] sm:$0xff]
    %v103 = vld [vmem:[%s8 + $0x18] sm:$0xff]
    %v104 = vld [vmem:[%s8 + $0x20] sm:$0xff]
    %v105 = vld [vmem:[%s8 + $0x28] sm:$0xff]
    %v106 = vld [vmem:[%s8 + $0x30] sm:$0xff]
    %v107 = vld [vmem:[%s8 + $0x38] sm:$0xff]
    %v108 = vld [vmem:[%s8 + $0x40] sm:$0xff]
    %v109 = vld [vmem:[%s8 + $0x48] sm:$0xff]
    %v110 = vld [vmem:[%s8 + $0x50] sm:$0xff]
    %v111 = vld [vmem:[%s8 + $0x58] sm:$0xff]
    %v112 = vld [vmem:[%s8 + $0x60] sm:$0xff]
    %v113 = vld [vmem:[%s8 + $0x68] sm:$0xff]
    %v114 = vld [vmem:[%s8 + $0x70] sm:$0xff]
    %v115 = vld [vmem:[%s8 + $0x78] sm:$0xff]
    %v116 = vld [vmem:[%s4] sm:$0xf]
    %v117 = vld [vmem:[%s4 + $0x4] sm:$0xf]
    %v118 = vld [vmem:[%s4 + $0x8] sm:$0xf]
    %v119 = vld [vmem:[%s4 + $0xc] sm:$0xf]
    %v120 = vld [vmem:[%s4 + $0x10] sm:$0xf]
    %v121 = vld [vmem:[%s4 + $0x14] sm:$0xf]
    %v122 = vld [vmem:[%s4 + $0x18] sm:$0xf]
    %v123 = vld [vmem:[%s4 + $0x1c] sm:$0xf]
    %v124 = vld [vmem:[%s4 + $0x20] sm:$0xf]
    %v125 = vld [vmem:[%s4 + $0x24] sm:$0xf]
    %v126 = vld [vmem:[%s4 + $0x28] sm:$0xf]
    %v127 = vld [vmem:[%s4 + $0x2c] sm:$0xf]
    %v128 = vld [vmem:[%s4 + $0x30] sm:$0xf]
    %v129 = vld [vmem:[%s4 + $0x34] sm:$0xf]
    %v130 = vld [vmem:[%s4 + $0x38] sm:$0xf]
    %v131 = vld [vmem:[%s4 + $0x3c] sm:$0xf]
    %v132 = vld [vmem:[%s0] sm:$0x3]
    %v133 = vld [vmem:[%s5] sm:$0xff]
    %v134 = vld [vmem:[%s5 + $0x8] sm:$0xff]
    %v135 = vld [vmem:[%s5 + $0x10] sm:$0xff]
    %v136 = vld [vmem:[%s5 + $0x18] sm:$0xff]
    %v137 = vld [vmem:[%s5 + $0x20] sm:$0xff]
    %v138 = vld [vmem:[%s5 + $0x28] sm:$0xff]
    %v139 = vld [vmem:[%s5 + $0x30] sm:$0xff]
    %v140 = vld [vmem:[%s5 + $0x38] sm:$0xff]
    %v141 = vld [vmem:[%s5 + $0x40] sm:$0xff]
    %v142 = vld [vmem:[%s5 + $0x48] sm:$0xff]
    %v143 = vld [vmem:[%s5 + $0x50] sm:$0xff]
    %v144 = vld [vmem:[%s5 + $0x58] sm:$0xff]
    %v145 = vld [vmem:[%s5 + $0x60] sm:$0xff]
    %v146 = vld [vmem:[%s5 + $0x68] sm:$0xff]
    %v147 = vld [vmem:[%s5 + $0x70] sm:$0xff]
    %v148 = vld [vmem:[%s5 + $0x78] sm:$0xff]
    %150 = vset.pattern.permute.xlu0 0
    %151 = vperm.xlu0 %150, %v133
    %v152 = vpop.permute.xlu0 %151
    %155 = vset.pattern.permute.xlu0 0
    %156 = vperm.xlu0 %155, %v134
    %v157 = vpop.permute.xlu0 %156
    %160 = vset.pattern.permute.xlu0 0
    %161 = vperm.xlu0 %160, %v135
    %v162 = vpop.permute.xlu0 %161
    %165 = vset.pattern.permute.xlu0 0
    %166 = vperm.xlu0 %165, %v136
    %v167 = vpop.permute.xlu0 %166
    %170 = vset.pattern.permute.xlu0 0
    %171 = vperm.xlu0 %170, %v137
    %v172 = vpop.permute.xlu0 %171
    %175 = vset.pattern.permute.xlu0 0
    %176 = vperm.xlu0 %175, %v138
    %v177 = vpop.permute.xlu0 %176
    %180 = vset.pattern.permute.xlu0 0
    %181 = vperm.xlu0 %180, %v139
    %v182 = vpop.permute.xlu0 %181
    %185 = vset.pattern.permute.xlu0 0
    %186 = vperm.xlu0 %185, %v140
    %v187 = vpop.permute.xlu0 %186
    %190 = vset.pattern.permute.xlu0 0
    %191 = vperm.xlu0 %190, %v141
    %v192 = vpop.permute.xlu0 %191
    %195 = vset.pattern.permute.xlu0 0
    %196 = vperm.xlu0 %195, %v142
    %v197 = vpop.permute.xlu0 %196
    %200 = vset.pattern.permute.xlu0 0
    %201 = vperm.xlu0 %200, %v143
    %v202 = vpop.permute.xlu0 %201
    %205 = vset.pattern.permute.xlu0 0
    %206 = vperm.xlu0 %205, %v144
    %v207 = vpop.permute.xlu0 %206
    %210 = vset.pattern.permute.xlu0 0
    %211 = vperm.xlu0 %210, %v145
    %v212 = vpop.permute.xlu0 %211
    %215 = vset.pattern.permute.xlu0 0
    %216 = vperm.xlu0 %215, %v146
    %v217 = vpop.permute.xlu0 %216
    %220 = vset.pattern.permute.xlu0 0
    %221 = vperm.xlu0 %220, %v147
    %v222 = vpop.permute.xlu0 %221
    %225 = vset.pattern.permute.xlu0 0
    %226 = vperm.xlu0 %225, %v148
    %v227 = vpop.permute.xlu0 %226
    %v245 = vunpack.c.l.b16 %v116
    %v246 = vunpack.c.l.b16 %v117
    %v247 = vunpack.c.l.b16 %v118
    %v248 = vunpack.c.l.b16 %v119
    %v249 = vunpack.c.l.b16 %v120
    %v250 = vunpack.c.l.b16 %v121
    %v251 = vunpack.c.l.b16 %v122
    %v252 = vunpack.c.l.b16 %v123
    %v253 = vunpack.c.l.b16 %v124
    %v254 = vunpack.c.l.b16 %v125
    %v255 = vunpack.c.l.b16 %v126
    %v256 = vunpack.c.l.b16 %v127
    %v257 = vunpack.c.l.b16 %v128
    %v258 = vunpack.c.l.b16 %v129
    %v259 = vunpack.c.l.b16 %v130
    %v260 = vunpack.c.l.b16 %v131
    %v261 = vpack.c.b16 %v246, %v245
    %v262 = vpack.c.b16 %v248, %v247
    %v263 = vpack.c.b16 %v250, %v249
    %v264 = vpack.c.b16 %v252, %v251
    %v265 = vpack.c.b16 %v254, %v253
    %v266 = vpack.c.b16 %v256, %v255
    %v267 = vpack.c.b16 %v258, %v257
    %v268 = vpack.c.b16 %v260, %v259
    %vm269 = vcmask 31744
    %v271 = vsel %vm269, %v261, 0
    %v274 = vsel %vm269, %v262, 0
    %v277 = vsel %vm269, %v263, 0
    %v280 = vsel %vm269, %v264, 0
    %v283 = vsel %vm269, %v265, 0
    %v286 = vsel %vm269, %v266, 0
    %v289 = vsel %vm269, %v267, 0
    %v292 = vsel %vm269, %v268, 0
    %vm294 = vcmask 1041408
    %v296 = vsel %vm294, %v132, 0
    %298 = vmatpush.bf16.msra.mxu0 0
    %299 = vmatpush.bf16.msra.mxu0 0
    %300 = vmatpush.bf16.msra.mxu0 0
    %301 = vmatpush.bf16.msra.mxu0 0
    %302 = vmatpush.bf16.msra.mxu0 0
    %303 = vmatpush.bf16.msra.mxu0 0
    %304 = vmatpush.bf16.msra.mxu0 0
    %305 = vmatpush.bf16.msra.mxu0 %v296
    %306 = vmatmul.bf16.gmra.mxu0 %v271
    %v307 = vpop.f32.mrf.mxu0
    %v308 = vadd.f32 %v152, %v307
    %v309 = vpop.f32.mrf.mxu0
    %v310 = vadd.f32 %v157, %v309
    %311 = vmatmul.bf16.gmra.mxu0 %v274
    %v312 = vpop.f32.mrf.mxu0
    %v313 = vadd.f32 %v162, %v312
    %v314 = vpop.f32.mrf.mxu0
    %v315 = vadd.f32 %v167, %v314
    %316 = vmatmul.bf16.gmra.mxu0 %v277
    %v317 = vpop.f32.mrf.mxu0
    %v318 = vadd.f32 %v172, %v317
    %v319 = vpop.f32.mrf.mxu0
    %v320 = vadd.f32 %v177, %v319
    %321 = vmatmul.bf16.gmra.mxu0 %v280
    %v322 = vpop.f32.mrf.mxu0
    %v323 = vadd.f32 %v182, %v322
    %v324 = vpop.f32.mrf.mxu0
    %v325 = vadd.f32 %v187, %v324
    %326 = vmatmul.bf16.gmra.mxu0 %v283
    %v327 = vpop.f32.mrf.mxu0
    %v328 = vadd.f32 %v192, %v327
    %v329 = vpop.f32.mrf.mxu0
    %v330 = vadd.f32 %v197, %v329
    %331 = vmatmul.bf16.gmra.mxu0 %v286
    %v332 = vpop.f32.mrf.mxu0
    %v333 = vadd.f32 %v202, %v332
    %v334 = vpop.f32.mrf.mxu0
    %v335 = vadd.f32 %v207, %v334
    %336 = vmatmul.bf16.gmra.mxu0 %v289
    %v337 = vpop.f32.mrf.mxu0
    %v338 = vadd.f32 %v212, %v337
    %v339 = vpop.f32.mrf.mxu0
    %v340 = vadd.f32 %v217, %v339
    %341 = vmatmul.bf16.gmra.mxu0 %v292
    %v342 = vpop.f32.mrf.mxu0
    %v343 = vadd.f32 %v222, %v342
    %v344 = vpop.f32.mrf.mxu0
    %v345 = vadd.f32 %v227, %v344
    %346 = vdwg.mxu0
    %v363 = vunpack.c.l.b16 %v52
    %v364 = vunpack.c.l.b16 %v53
    %v365 = vunpack.c.l.b16 %v54
    %v366 = vunpack.c.l.b16 %v55
    %v367 = vunpack.c.l.b16 %v56
    %v368 = vunpack.c.l.b16 %v57
    %v369 = vunpack.c.l.b16 %v58
    %v370 = vunpack.c.l.b16 %v59
    %v371 = vunpack.c.l.b16 %v60
    %v372 = vunpack.c.l.b16 %v61
    %v373 = vunpack.c.l.b16 %v62
    %v374 = vunpack.c.l.b16 %v63
    %v375 = vunpack.c.l.b16 %v64
    %v376 = vunpack.c.l.b16 %v65
    %v377 = vunpack.c.l.b16 %v66
    %v378 = vunpack.c.l.b16 %v67
    %v379 = vpack.c.b16 %v364, %v363
    %v380 = vpack.c.b16 %v366, %v365
    %v381 = vpack.c.b16 %v368, %v367
    %v382 = vpack.c.b16 %v370, %v369
    %v383 = vpack.c.b16 %v372, %v371
    %v384 = vpack.c.b16 %v374, %v373
    %v385 = vpack.c.b16 %v376, %v375
    %v386 = vpack.c.b16 %v378, %v377
    %vm387 = vcmask 261120
    %v389 = vsel %vm387, %v379, 0
    %v392 = vsel %vm387, %v380, 0
    %v395 = vsel %vm387, %v381, 0
    %v398 = vsel %vm387, %v382, 0
    %v401 = vsel %vm387, %v383, 0
    %v404 = vsel %vm387, %v384, 0
    %v407 = vsel %vm387, %v385, 0
    %v410 = vsel %vm387, %v386, 0
    %412 = vmatpush.bf16.msra.mxu0 0
    %413 = vmatpush.bf16.msra.mxu0 0
    %414 = vmatpush.bf16.msra.mxu0 0
    %415 = vmatpush.bf16.msra.mxu0 0
    %416 = vmatpush.bf16.msra.mxu0 0
    %417 = vmatpush.bf16.msra.mxu0 0
    %418 = vmatpush.bf16.msra.mxu0 0
    %419 = vmatpush.bf16.msra.mxu0 0
    %420 = vmatmul.bf16.gmra.mxu0 %v389
    %v421 = vpop.f32.mrf.mxu0
    %v422 = vadd.f32 %v308, %v421
    %v423 = vpop.f32.mrf.mxu0
    %v424 = vadd.f32 %v310, %v423
    %425 = vmatmul.bf16.gmra.mxu0 %v392
    %v426 = vpop.f32.mrf.mxu0
    %v427 = vadd.f32 %v313, %v426
    %v428 = vpop.f32.mrf.mxu0
    %v429 = vadd.f32 %v315, %v428
    %430 = vmatmul.bf16.gmra.mxu0 %v395
    %v431 = vpop.f32.mrf.mxu0
    %v432 = vadd.f32 %v318, %v431
    %v433 = vpop.f32.mrf.mxu0
    %v434 = vadd.f32 %v320, %v433
    %435 = vmatmul.bf16.gmra.mxu0 %v398
    %v436 = vpop.f32.mrf.mxu0
    %v437 = vadd.f32 %v323, %v436
    %v438 = vpop.f32.mrf.mxu0
    %v439 = vadd.f32 %v325, %v438
    %440 = vmatmul.bf16.gmra.mxu0 %v401
    %v441 = vpop.f32.mrf.mxu0
    %v442 = vadd.f32 %v328, %v441
    %v443 = vpop.f32.mrf.mxu0
    %v444 = vadd.f32 %v330, %v443
    %445 = vmatmul.bf16.gmra.mxu0 %v404
    %v446 = vpop.f32.mrf.mxu0
    %v447 = vadd.f32 %v333, %v446
    %v448 = vpop.f32.mrf.mxu0
    %v449 = vadd.f32 %v335, %v448
    %450 = vmatmul.bf16.gmra.mxu0 %v407
    %v451 = vpop.f32.mrf.mxu0
    %v452 = vadd.f32 %v338, %v451
    %v453 = vpop.f32.mrf.mxu0
    %v454 = vadd.f32 %v340, %v453
    %455 = vmatmul.bf16.gmra.mxu0 %v410
    %v456 = vpop.f32.mrf.mxu0
    %v457 = vadd.f32 %v343, %v456
    %v458 = vpop.f32.mrf.mxu0
    %v459 = vadd.f32 %v345, %v458
    %460 = vdwg.mxu0
    %v461 = vxor.u32 %v422, 2147483648
    %v462 = vxor.u32 %v424, 2147483648
    %v463 = vxor.u32 %v427, 2147483648
    %v464 = vxor.u32 %v429, 2147483648
    %v465 = vmul.f32 %v461, 1.442695
    %v466 = vpow.pop %v465
    %v467 = vmul.f32 %v462, 1.442695
    %v468 = vpow.pop %v467
    %v469 = vmul.f32 %v463, 1.442695
    %v470 = vpow.pop %v469
    %v471 = vmul.f32 %v464, 1.442695
    %v472 = vpow.pop %v471
    %v473 = vadd.f32 %v466, 1.0
    %v474 = vadd.f32 %v468, 1.0
    %v475 = vadd.f32 %v470, 1.0
    %v476 = vadd.f32 %v472, 1.0
    %v477 = vrcp.pop %v473
    %v478 = vmul.f32 %v473, %v477
    %v479 = vsub.f32 1.0, %v478
    %v480 = vmul.f32 %v477, %v479
    %v481 = vadd.f32 %v477, %v480
    %vm482 = vweird.f32 %v473
    %vm483 = vweird.f32 %v477
    %vm484 = vmor %vm482, %vm483
    %v485 = vsel %vm484, %v477, %v481
    %v486 = vand.u32 2147483647, %v473
    %vm487 = vcmp.eq.f32.partialorder %v486, 8.507059e+37
    %v488 = vand.u32 %v473, 2147483648
    %v489 = vor.u32 1.1754944e-38, %v488
    %v490 = vsel %vm487, %v489, %v485
    %v491 = vmul.f32 1.0, %v490
    %v492 = vrcp.pop %v474
    %v493 = vmul.f32 %v474, %v492
    %v494 = vsub.f32 1.0, %v493
    %v495 = vmul.f32 %v492, %v494
    %v496 = vadd.f32 %v492, %v495
    %vm497 = vweird.f32 %v474
    %vm498 = vweird.f32 %v492
    %vm499 = vmor %vm497, %vm498
    %v500 = vsel %vm499, %v492, %v496
    %v501 = vand.u32 2147483647, %v474
    %vm502 = vcmp.eq.f32.partialorder %v501, 8.507059e+37
    %v503 = vand.u32 %v474, 2147483648
    %v504 = vor.u32 1.1754944e-38, %v503
    %v505 = vsel %vm502, %v504, %v500
    %v506 = vmul.f32 1.0, %v505
    %v507 = vrcp.pop %v475
    %v508 = vmul.f32 %v475, %v507
    %v509 = vsub.f32 1.0, %v508
    %v510 = vmul.f32 %v507, %v509
    %v511 = vadd.f32 %v507, %v510
    %vm512 = vweird.f32 %v475
    %vm513 = vweird.f32 %v507
    %vm514 = vmor %vm512, %vm513
    %v515 = vsel %vm514, %v507, %v511
    %v516 = vand.u32 2147483647, %v475
    %vm517 = vcmp.eq.f32.partialorder %v516, 8.507059e+37
    %v518 = vand.u32 %v475, 2147483648
    %v519 = vor.u32 1.1754944e-38, %v518
    %v520 = vsel %vm517, %v519, %v515
    %v521 = vmul.f32 1.0, %v520
    %v522 = vrcp.pop %v476
    %v523 = vmul.f32 %v476, %v522
    %v524 = vsub.f32 1.0, %v523
    %v525 = vmul.f32 %v522, %v524
    %v526 = vadd.f32 %v522, %v525
    %vm527 = vweird.f32 %v476
    %vm528 = vweird.f32 %v522
    %vm529 = vmor %vm527, %vm528
    %v530 = vsel %vm529, %v522, %v526
    %v531 = vand.u32 2147483647, %v476
    %vm532 = vcmp.eq.f32.partialorder %v531, 8.507059e+37
    %v533 = vand.u32 %v476, 2147483648
    %v534 = vor.u32 1.1754944e-38, %v533
    %v535 = vsel %vm532, %v534, %v530
    %v536 = vmul.f32 1.0, %v535
    %v537 = vxor.u32 %v432, 2147483648
    %v538 = vxor.u32 %v434, 2147483648
    %v539 = vxor.u32 %v437, 2147483648
    %v540 = vxor.u32 %v439, 2147483648
    %v541 = vmul.f32 %v537, 1.442695
    %v542 = vpow.pop %v541
    %v543 = vmul.f32 %v538, 1.442695
    %v544 = vpow.pop %v543
    %v545 = vmul.f32 %v539, 1.442695
    %v546 = vpow.pop %v545
    %v547 = vmul.f32 %v540, 1.442695
    %v548 = vpow.pop %v547
    %v549 = vadd.f32 %v542, 1.0
    %v550 = vadd.f32 %v544, 1.0
    %v551 = vadd.f32 %v546, 1.0
    %v552 = vadd.f32 %v548, 1.0
    %v553 = vrcp.pop %v549
    %v554 = vmul.f32 %v549, %v553
    %v555 = vsub.f32 1.0, %v554
    %v556 = vmul.f32 %v553, %v555
    %v557 = vadd.f32 %v553, %v556
    %vm558 = vweird.f32 %v549
    %vm559 = vweird.f32 %v553
    %vm560 = vmor %vm558, %vm559
    %v561 = vsel %vm560, %v553, %v557
    %v562 = vand.u32 2147483647, %v549
    %vm563 = vcmp.eq.f32.partialorder %v562, 8.507059e+37
    %v564 = vand.u32 %v549, 2147483648
    %v565 = vor.u32 1.1754944e-38, %v564
    %v566 = vsel %vm563, %v565, %v561
    %v567 = vmul.f32 1.0, %v566
    %v568 = vrcp.pop %v550
    %v569 = vmul.f32 %v550, %v568
    %v570 = vsub.f32 1.0, %v569
    %v571 = vmul.f32 %v568, %v570
    %v572 = vadd.f32 %v568, %v571
    %vm573 = vweird.f32 %v550
    %vm574 = vweird.f32 %v568
    %vm575 = vmor %vm573, %vm574
    %v576 = vsel %vm575, %v568, %v572
    %v577 = vand.u32 2147483647, %v550
    %vm578 = vcmp.eq.f32.partialorder %v577, 8.507059e+37
    %v579 = vand.u32 %v550, 2147483648
    %v580 = vor.u32 1.1754944e-38, %v579
    %v581 = vsel %vm578, %v580, %v576
    %v582 = vmul.f32 1.0, %v581
    %v583 = vrcp.pop %v551
    %v584 = vmul.f32 %v551, %v583
    %v585 = vsub.f32 1.0, %v584
    %v586 = vmul.f32 %v583, %v585
    %v587 = vadd.f32 %v583, %v586
    %vm588 = vweird.f32 %v551
    %vm589 = vweird.f32 %v583
    %vm590 = vmor %vm588, %vm589
    %v591 = vsel %vm590, %v583, %v587
    %v592 = vand.u32 2147483647, %v551
    %vm593 = vcmp.eq.f32.partialorder %v592, 8.507059e+37
    %v594 = vand.u32 %v551, 2147483648
    %v595 = vor.u32 1.1754944e-38, %v594
    %v596 = vsel %vm593, %v595, %v591
    %v597 = vmul.f32 1.0, %v596
    %v598 = vrcp.pop %v552
    %v599 = vmul.f32 %v552, %v598
    %v600 = vsub.f32 1.0, %v599
    %v601 = vmul.f32 %v598, %v600
    %v602 = vadd.f32 %v598, %v601
    %vm603 = vweird.f32 %v552
    %vm604 = vweird.f32 %v598
    %vm605 = vmor %vm603, %vm604
    %v606 = vsel %vm605, %v598, %v602
    %v607 = vand.u32 2147483647, %v552
    %vm608 = vcmp.eq.f32.partialorder %v607, 8.507059e+37
    %v609 = vand.u32 %v552, 2147483648
    %v610 = vor.u32 1.1754944e-38, %v609
    %v611 = vsel %vm608, %v610, %v606
    %v612 = vmul.f32 1.0, %v611
    %v613 = vtanh.pop %v442
    %v614 = vtanh.pop %v444
    %v615 = vtanh.pop %v447
    %v616 = vtanh.pop %v449
    %v617 = vxor.u32 %v452, 2147483648
    %v618 = vxor.u32 %v454, 2147483648
    %v619 = vxor.u32 %v457, 2147483648
    %v620 = vxor.u32 %v459, 2147483648
    %v621 = vmul.f32 %v617, 1.442695
    %v622 = vpow.pop %v621
    %v623 = vmul.f32 %v618, 1.442695
    %v624 = vpow.pop %v623
    %v625 = vmul.f32 %v619, 1.442695
    %v626 = vpow.pop %v625
    %v627 = vmul.f32 %v620, 1.442695
    %v628 = vpow.pop %v627
    %v629 = vadd.f32 %v622, 1.0
    %v630 = vadd.f32 %v624, 1.0
    %v631 = vadd.f32 %v626, 1.0
    %v632 = vadd.f32 %v628, 1.0
    %v633 = vrcp.pop %v629
    %v634 = vmul.f32 %v629, %v633
    %v635 = vsub.f32 1.0, %v634
    %v636 = vmul.f32 %v633, %v635
    %v637 = vadd.f32 %v633, %v636
    %vm638 = vweird.f32 %v629
    %vm639 = vweird.f32 %v633
    %vm640 = vmor %vm638, %vm639
    %v641 = vsel %vm640, %v633, %v637
    %v642 = vand.u32 2147483647, %v629
    %vm643 = vcmp.eq.f32.partialorder %v642, 8.507059e+37
    %v644 = vand.u32 %v629, 2147483648
    %v645 = vor.u32 1.1754944e-38, %v644
    %v646 = vsel %vm643, %v645, %v641
    %v647 = vmul.f32 1.0, %v646
    %v648 = vrcp.pop %v630
    %v649 = vmul.f32 %v630, %v648
    %v650 = vsub.f32 1.0, %v649
    %v651 = vmul.f32 %v648, %v650
    %v652 = vadd.f32 %v648, %v651
    %vm653 = vweird.f32 %v630
    %vm654 = vweird.f32 %v648
    %vm655 = vmor %vm653, %vm654
    %v656 = vsel %vm655, %v648, %v652
    %v657 = vand.u32 2147483647, %v630
    %vm658 = vcmp.eq.f32.partialorder %v657, 8.507059e+37
    %v659 = vand.u32 %v630, 2147483648
    %v660 = vor.u32 1.1754944e-38, %v659
    %v661 = vsel %vm658, %v660, %v656
    %v662 = vmul.f32 1.0, %v661
    %v663 = vrcp.pop %v631
    %v664 = vmul.f32 %v631, %v663
    %v665 = vsub.f32 1.0, %v664
    %v666 = vmul.f32 %v663, %v665
    %v667 = vadd.f32 %v663, %v666
    %vm668 = vweird.f32 %v631
    %vm669 = vweird.f32 %v663
    %vm670 = vmor %vm668, %vm669
    %v671 = vsel %vm670, %v663, %v667
    %v672 = vand.u32 2147483647, %v631
    %vm673 = vcmp.eq.f32.partialorder %v672, 8.507059e+37
    %v674 = vand.u32 %v631, 2147483648
    %v675 = vor.u32 1.1754944e-38, %v674
    %v676 = vsel %vm673, %v675, %v671
    %v677 = vmul.f32 1.0, %v676
    %v678 = vrcp.pop %v632
    %v679 = vmul.f32 %v632, %v678
    %v680 = vsub.f32 1.0, %v679
    %v681 = vmul.f32 %v678, %v680
    %v682 = vadd.f32 %v678, %v681
    %vm683 = vweird.f32 %v632
    %vm684 = vweird.f32 %v678
    %vm685 = vmor %vm683, %vm684
    %v686 = vsel %vm685, %v678, %v682
    %v687 = vand.u32 2147483647, %v632
    %vm688 = vcmp.eq.f32.partialorder %v687, 8.507059e+37
    %v689 = vand.u32 %v632, 2147483648
    %v690 = vor.u32 1.1754944e-38, %v689
    %v691 = vsel %vm688, %v690, %v686
    %v692 = vmul.f32 1.0, %v691
    %v693 = vmul.f32 %v567, 0.0
    %v694 = vmul.f32 %v582, 0.0
    %v695 = vmul.f32 %v597, 0.0
    %v696 = vmul.f32 %v612, 0.0
    %v697 = vmul.f32 %v491, %v613
    %v698 = vmul.f32 %v506, %v614
    %v699 = vmul.f32 %v521, %v615
    %v700 = vmul.f32 %v536, %v616
    %v701 = vadd.f32 %v693, %v697
    %v702 = vadd.f32 %v694, %v698
    %v703 = vadd.f32 %v695, %v699
    %v704 = vadd.f32 %v696, %v700
    %v705 = vtanh.pop %v701
    %v706 = vtanh.pop %v702
    %v707 = vtanh.pop %v703
    %v708 = vtanh.pop %v704
    %v709 = vmul.f32 %v647, %v705
    %v710 = vmul.f32 %v662, %v706
    %v711 = vmul.f32 %v677, %v707
    %v712 = vmul.f32 %v692, %v708
    %v713 = vpack.c.bf16 %v710, %v709
    %v714 = vpack.c.bf16 %v712, %v711
    %v731 = vunpack.c.l.b16 %v84
    %v732 = vunpack.c.l.b16 %v85
    %v733 = vunpack.c.l.b16 %v86
    %v734 = vunpack.c.l.b16 %v87
    %v735 = vunpack.c.l.b16 %v88
    %v736 = vunpack.c.l.b16 %v89
    %v737 = vunpack.c.l.b16 %v90
    %v738 = vunpack.c.l.b16 %v91
    %v739 = vunpack.c.l.b16 %v92
    %v740 = vunpack.c.l.b16 %v93
    %v741 = vunpack.c.l.b16 %v94
    %v742 = vunpack.c.l.b16 %v95
    %v743 = vunpack.c.l.b16 %v96
    %v744 = vunpack.c.l.b16 %v97
    %v745 = vunpack.c.l.b16 %v98
    %v746 = vunpack.c.l.b16 %v99
    %v747 = vpack.c.b16 %v732, %v731
    %v748 = vpack.c.b16 %v734, %v733
    %v749 = vpack.c.b16 %v736, %v735
    %v750 = vpack.c.b16 %v738, %v737
    %v751 = vpack.c.b16 %v740, %v739
    %v752 = vpack.c.b16 %v742, %v741
    %v753 = vpack.c.b16 %v744, %v743
    %v754 = vpack.c.b16 %v746, %v745
    %v756 = vsel %vm387, %v747, 0
    %v759 = vsel %vm387, %v748, 0
    %v762 = vsel %vm387, %v749, 0
    %v765 = vsel %vm387, %v750, 0
    %v768 = vsel %vm387, %v751, 0
    %v771 = vsel %vm387, %v752, 0
    %v774 = vsel %vm387, %v753, 0
    %v777 = vsel %vm387, %v754, 0
    %779 = vmatpush.bf16.msra.mxu0 0
    %780 = vmatpush.bf16.msra.mxu0 0
    %781 = vmatpush.bf16.msra.mxu0 0
    %782 = vmatpush.bf16.msra.mxu0 0
    %783 = vmatpush.bf16.msra.mxu0 0
    %784 = vmatpush.bf16.msra.mxu0 0
    %785 = vmatpush.bf16.msra.mxu0 %v714
    %786 = vmatpush.bf16.msra.mxu0 %v713
    %787 = vmatmul.bf16.gmra.mxu0 %v756
    %v788 = vpop.f32.mrf.mxu0
    %v789 = vadd.f32 0.0, %v788
    %v790 = vpop.f32.mrf.mxu0
    %v791 = vadd.f32 0.0, %v790
    %792 = vmatmul.bf16.gmra.mxu0 %v759
    %v793 = vpop.f32.mrf.mxu0
    %v794 = vadd.f32 0.0, %v793
    %v795 = vpop.f32.mrf.mxu0
    %v796 = vadd.f32 0.0, %v795
    %797 = vmatmul.bf16.gmra.mxu0 %v762
    %v798 = vpop.f32.mrf.mxu0
    %v799 = vadd.f32 0.0, %v798
    %v800 = vpop.f32.mrf.mxu0
    %v801 = vadd.f32 0.0, %v800
    %802 = vmatmul.bf16.gmra.mxu0 %v765
    %v803 = vpop.f32.mrf.mxu0
    %v804 = vadd.f32 0.0, %v803
    %v805 = vpop.f32.mrf.mxu0
    %v806 = vadd.f32 0.0, %v805
    %807 = vmatmul.bf16.gmra.mxu0 %v768
    %v808 = vpop.f32.mrf.mxu0
    %v809 = vadd.f32 0.0, %v808
    %v810 = vpop.f32.mrf.mxu0
    %v811 = vadd.f32 0.0, %v810
    %812 = vmatmul.bf16.gmra.mxu0 %v771
    %v813 = vpop.f32.mrf.mxu0
    %v814 = vadd.f32 0.0, %v813
    %v815 = vpop.f32.mrf.mxu0
    %v816 = vadd.f32 0.0, %v815
    %817 = vmatmul.bf16.gmra.mxu0 %v774
    %v818 = vpop.f32.mrf.mxu0
    %v819 = vadd.f32 0.0, %v818
    %v820 = vpop.f32.mrf.mxu0
    %v821 = vadd.f32 0.0, %v820
    %822 = vmatmul.bf16.gmra.mxu0 %v777
    %v823 = vpop.f32.mrf.mxu0
    %v824 = vadd.f32 0.0, %v823
    %v825 = vpop.f32.mrf.mxu0
    %v826 = vadd.f32 0.0, %v825
    %827 = vdwg.mxu0
    %v844 = vunpack.c.l.b16 %v68
    %v845 = vunpack.c.l.b16 %v69
    %v846 = vunpack.c.l.b16 %v70
    %v847 = vunpack.c.l.b16 %v71
    %v848 = vunpack.c.l.b16 %v72
    %v849 = vunpack.c.l.b16 %v73
    %v850 = vunpack.c.l.b16 %v74
    %v851 = vunpack.c.l.b16 %v75
    %v852 = vunpack.c.l.b16 %v76
    %v853 = vunpack.c.l.b16 %v77
    %v854 = vunpack.c.l.b16 %v78
    %v855 = vunpack.c.l.b16 %v79
    %v856 = vunpack.c.l.b16 %v80
    %v857 = vunpack.c.l.b16 %v81
    %v858 = vunpack.c.l.b16 %v82
    %v859 = vunpack.c.l.b16 %v83
    %v860 = vpack.c.b16 %v845, %v844
    %v861 = vpack.c.b16 %v847, %v846
    %v862 = vpack.c.b16 %v849, %v848
    %v863 = vpack.c.b16 %v851, %v850
    %v864 = vpack.c.b16 %v853, %v852
    %v865 = vpack.c.b16 %v855, %v854
    %v866 = vpack.c.b16 %v857, %v856
    %v867 = vpack.c.b16 %v859, %v858
    %v869 = vsel %vm387, %v860, 0
    %v872 = vsel %vm387, %v861, 0
    %v875 = vsel %vm387, %v862, 0
    %v878 = vsel %vm387, %v863, 0
    %v881 = vsel %vm387, %v864, 0
    %v884 = vsel %vm387, %v865, 0
    %v887 = vsel %vm387, %v866, 0
    %v890 = vsel %vm387, %v867, 0
    %892 = vmatpush.bf16.msra.mxu0 0
    %893 = vmatpush.bf16.msra.mxu0 0
    %894 = vmatpush.bf16.msra.mxu0 0
    %895 = vmatpush.bf16.msra.mxu0 0
    %896 = vmatpush.bf16.msra.mxu0 0
    %897 = vmatpush.bf16.msra.mxu0 0
    %898 = vmatpush.bf16.msra.mxu0 0
    %899 = vmatpush.bf16.msra.mxu0 0
    %900 = vmatmul.bf16.gmra.mxu0 %v869
    %v901 = vpop.f32.mrf.mxu0
    %v902 = vadd.f32 %v789, %v901
    %v903 = vpop.f32.mrf.mxu0
    %v904 = vadd.f32 %v791, %v903
    %905 = vmatmul.bf16.gmra.mxu0 %v872
    %v906 = vpop.f32.mrf.mxu0
    %v907 = vadd.f32 %v794, %v906
    %v908 = vpop.f32.mrf.mxu0
    %v909 = vadd.f32 %v796, %v908
    %910 = vmatmul.bf16.gmra.mxu0 %v875
    %v911 = vpop.f32.mrf.mxu0
    %v912 = vadd.f32 %v799, %v911
    %v913 = vpop.f32.mrf.mxu0
    %v914 = vadd.f32 %v801, %v913
    %915 = vmatmul.bf16.gmra.mxu0 %v878
    %v916 = vpop.f32.mrf.mxu0
    %v917 = vadd.f32 %v804, %v916
    %v918 = vpop.f32.mrf.mxu0
    %v919 = vadd.f32 %v806, %v918
    %920 = vmatmul.bf16.gmra.mxu0 %v881
    %v921 = vpop.f32.mrf.mxu0
    %v922 = vadd.f32 %v809, %v921
    %v923 = vpop.f32.mrf.mxu0
    %v924 = vadd.f32 %v811, %v923
    %925 = vmatmul.bf16.gmra.mxu0 %v884
    %v926 = vpop.f32.mrf.mxu0
    %v927 = vadd.f32 %v814, %v926
    %v928 = vpop.f32.mrf.mxu0
    %v929 = vadd.f32 %v816, %v928
    %930 = vmatmul.bf16.gmra.mxu0 %v887
    %v931 = vpop.f32.mrf.mxu0
    %v932 = vadd.f32 %v819, %v931
    %v933 = vpop.f32.mrf.mxu0
    %v934 = vadd.f32 %v821, %v933
    %935 = vmatmul.bf16.gmra.mxu0 %v890
    %v936 = vpop.f32.mrf.mxu0
    %v937 = vadd.f32 %v824, %v936
    %v938 = vpop.f32.mrf.mxu0
    %v939 = vadd.f32 %v826, %v938
    %940 = vdwg.mxu0
    %942 = vset.pattern.permute.xlu0 0
    %943 = vperm.xlu0 %942, %v100
    %v944 = vpop.permute.xlu0 %943
    %947 = vset.pattern.permute.xlu0 0
    %948 = vperm.xlu0 %947, %v101
    %v949 = vpop.permute.xlu0 %948
    %952 = vset.pattern.permute.xlu0 0
    %953 = vperm.xlu0 %952, %v102
    %v954 = vpop.permute.xlu0 %953
    %957 = vset.pattern.permute.xlu0 0
    %958 = vperm.xlu0 %957, %v103
    %v959 = vpop.permute.xlu0 %958
    %962 = vset.pattern.permute.xlu0 0
    %963 = vperm.xlu0 %962, %v104
    %v964 = vpop.permute.xlu0 %963
    %967 = vset.pattern.permute.xlu0 0
    %968 = vperm.xlu0 %967, %v105
    %v969 = vpop.permute.xlu0 %968
    %972 = vset.pattern.permute.xlu0 0
    %973 = vperm.xlu0 %972, %v106
    %v974 = vpop.permute.xlu0 %973
    %977 = vset.pattern.permute.xlu0 0
    %978 = vperm.xlu0 %977, %v107
    %v979 = vpop.permute.xlu0 %978
    %982 = vset.pattern.permute.xlu0 0
    %983 = vperm.xlu0 %982, %v108
    %v984 = vpop.permute.xlu0 %983
    %987 = vset.pattern.permute.xlu0 0
    %988 = vperm.xlu0 %987, %v109
    %v989 = vpop.permute.xlu0 %988
    %992 = vset.pattern.permute.xlu0 0
    %993 = vperm.xlu0 %992, %v110
    %v994 = vpop.permute.xlu0 %993
    %997 = vset.pattern.permute.xlu0 0
    %998 = vperm.xlu0 %997, %v111
    %v999 = vpop.permute.xlu0 %998
    %1002 = vset.pattern.permute.xlu0 0
    %1003 = vperm.xlu0 %1002, %v112
    %v1004 = vpop.permute.xlu0 %1003
    %1007 = vset.pattern.permute.xlu0 0
    %1008 = vperm.xlu0 %1007, %v113
    %v1009 = vpop.permute.xlu0 %1008
    %1012 = vset.pattern.permute.xlu0 0
    %1013 = vperm.xlu0 %1012, %v114
    %v1014 = vpop.permute.xlu0 %1013
    %1017 = vset.pattern.permute.xlu0 0
    %1018 = vperm.xlu0 %1017, %v115
    %v1019 = vpop.permute.xlu0 %1018
    %v1021 = vadd.f32 %v902, %v944
    %v1022 = vadd.f32 %v904, %v949
    %v1023 = vadd.f32 %v907, %v954
    %v1024 = vadd.f32 %v909, %v959
    %v1025 = vadd.f32 %v912, %v964
    %v1026 = vadd.f32 %v914, %v969
    %v1027 = vadd.f32 %v917, %v974
    %v1028 = vadd.f32 %v919, %v979
    %v1029 = vadd.f32 %v922, %v984
    %v1030 = vadd.f32 %v924, %v989
    %v1031 = vadd.f32 %v927, %v994
    %v1032 = vadd.f32 %v929, %v999
    %v1033 = vadd.f32 %v932, %v1004
    %v1034 = vadd.f32 %v934, %v1009
    %v1035 = vadd.f32 %v937, %v1014
    %v1036 = vadd.f32 %v939, %v1019
    %v1037 = vxor.u32 %v1021, 2147483648
    %v1038 = vxor.u32 %v1022, 2147483648
    %v1039 = vxor.u32 %v1023, 2147483648
    %v1040 = vxor.u32 %v1024, 2147483648
    %v1041 = vmul.f32 %v1037, 1.442695
    %v1042 = vpow.pop %v1041
    %v1043 = vmul.f32 %v1038, 1.442695
    %v1044 = vpow.pop %v1043
    %v1045 = vmul.f32 %v1039, 1.442695
    %v1046 = vpow.pop %v1045
    %v1047 = vmul.f32 %v1040, 1.442695
    %v1048 = vpow.pop %v1047
    %v1049 = vadd.f32 %v1042, 1.0
    %v1050 = vadd.f32 %v1044, 1.0
    %v1051 = vadd.f32 %v1046, 1.0
    %v1052 = vadd.f32 %v1048, 1.0
    %v1053 = vrcp.pop %v1049
    %v1054 = vmul.f32 %v1049, %v1053
    %v1055 = vsub.f32 1.0, %v1054
    %v1056 = vmul.f32 %v1053, %v1055
    %v1057 = vadd.f32 %v1053, %v1056
    %vm1058 = vweird.f32 %v1049
    %vm1059 = vweird.f32 %v1053
    %vm1060 = vmor %vm1058, %vm1059
    %v1061 = vsel %vm1060, %v1053, %v1057
    %v1062 = vand.u32 2147483647, %v1049
    %vm1063 = vcmp.eq.f32.partialorder %v1062, 8.507059e+37
    %v1064 = vand.u32 %v1049, 2147483648
    %v1065 = vor.u32 1.1754944e-38, %v1064
    %v1066 = vsel %vm1063, %v1065, %v1061
    %v1067 = vmul.f32 1.0, %v1066
    %v1068 = vrcp.pop %v1050
    %v1069 = vmul.f32 %v1050, %v1068
    %v1070 = vsub.f32 1.0, %v1069
    %v1071 = vmul.f32 %v1068, %v1070
    %v1072 = vadd.f32 %v1068, %v1071
    %vm1073 = vweird.f32 %v1050
    %vm1074 = vweird.f32 %v1068
    %vm1075 = vmor %vm1073, %vm1074
    %v1076 = vsel %vm1075, %v1068, %v1072
    %v1077 = vand.u32 2147483647, %v1050
    %vm1078 = vcmp.eq.f32.partialorder %v1077, 8.507059e+37
    %v1079 = vand.u32 %v1050, 2147483648
    %v1080 = vor.u32 1.1754944e-38, %v1079
    %v1081 = vsel %vm1078, %v1080, %v1076
    %v1082 = vmul.f32 1.0, %v1081
    %v1083 = vrcp.pop %v1051
    %v1084 = vmul.f32 %v1051, %v1083
    %v1085 = vsub.f32 1.0, %v1084
    %v1086 = vmul.f32 %v1083, %v1085
    %v1087 = vadd.f32 %v1083, %v1086
    %vm1088 = vweird.f32 %v1051
    %vm1089 = vweird.f32 %v1083
    %vm1090 = vmor %vm1088, %vm1089
    %v1091 = vsel %vm1090, %v1083, %v1087
    %v1092 = vand.u32 2147483647, %v1051
    %vm1093 = vcmp.eq.f32.partialorder %v1092, 8.507059e+37
    %v1094 = vand.u32 %v1051, 2147483648
    %v1095 = vor.u32 1.1754944e-38, %v1094
    %v1096 = vsel %vm1093, %v1095, %v1091
    %v1097 = vmul.f32 1.0, %v1096
    %v1098 = vrcp.pop %v1052
    %v1099 = vmul.f32 %v1052, %v1098
    %v1100 = vsub.f32 1.0, %v1099
    %v1101 = vmul.f32 %v1098, %v1100
    %v1102 = vadd.f32 %v1098, %v1101
    %vm1103 = vweird.f32 %v1052
    %vm1104 = vweird.f32 %v1098
    %vm1105 = vmor %vm1103, %vm1104
    %v1106 = vsel %vm1105, %v1098, %v1102
    %v1107 = vand.u32 2147483647, %v1052
    %vm1108 = vcmp.eq.f32.partialorder %v1107, 8.507059e+37
    %v1109 = vand.u32 %v1052, 2147483648
    %v1110 = vor.u32 1.1754944e-38, %v1109
    %v1111 = vsel %vm1108, %v1110, %v1106
    %v1112 = vmul.f32 1.0, %v1111
    %v1113 = vxor.u32 %v1025, 2147483648
    %v1114 = vxor.u32 %v1026, 2147483648
    %v1115 = vxor.u32 %v1027, 2147483648
    %v1116 = vxor.u32 %v1028, 2147483648
    %v1117 = vmul.f32 %v1113, 1.442695
    %v1118 = vpow.pop %v1117
    %v1119 = vmul.f32 %v1114, 1.442695
    %v1120 = vpow.pop %v1119
    %v1121 = vmul.f32 %v1115, 1.442695
    %v1122 = vpow.pop %v1121
    %v1123 = vmul.f32 %v1116, 1.442695
    %v1124 = vpow.pop %v1123
    %v1125 = vadd.f32 %v1118, 1.0
    %v1126 = vadd.f32 %v1120, 1.0
    %v1127 = vadd.f32 %v1122, 1.0
    %v1128 = vadd.f32 %v1124, 1.0
    %v1129 = vrcp.pop %v1125
    %v1130 = vmul.f32 %v1125, %v1129
    %v1131 = vsub.f32 1.0, %v1130
    %v1132 = vmul.f32 %v1129, %v1131
    %v1133 = vadd.f32 %v1129, %v1132
    %vm1134 = vweird.f32 %v1125
    %vm1135 = vweird.f32 %v1129
    %vm1136 = vmor %vm1134, %vm1135
    %v1137 = vsel %vm1136, %v1129, %v1133
    %v1138 = vand.u32 2147483647, %v1125
    %vm1139 = vcmp.eq.f32.partialorder %v1138, 8.507059e+37
    %v1140 = vand.u32 %v1125, 2147483648
    %v1141 = vor.u32 1.1754944e-38, %v1140
    %v1142 = vsel %vm1139, %v1141, %v1137
    %v1143 = vmul.f32 1.0, %v1142
    %v1144 = vrcp.pop %v1126
    %v1145 = vmul.f32 %v1126, %v1144
    %v1146 = vsub.f32 1.0, %v1145
    %v1147 = vmul.f32 %v1144, %v1146
    %v1148 = vadd.f32 %v1144, %v1147
    %vm1149 = vweird.f32 %v1126
    %vm1150 = vweird.f32 %v1144
    %vm1151 = vmor %vm1149, %vm1150
    %v1152 = vsel %vm1151, %v1144, %v1148
    %v1153 = vand.u32 2147483647, %v1126
    %vm1154 = vcmp.eq.f32.partialorder %v1153, 8.507059e+37
    %v1155 = vand.u32 %v1126, 2147483648
    %v1156 = vor.u32 1.1754944e-38, %v1155
    %v1157 = vsel %vm1154, %v1156, %v1152
    %v1158 = vmul.f32 1.0, %v1157
    %v1159 = vrcp.pop %v1127
    %v1160 = vmul.f32 %v1127, %v1159
    %v1161 = vsub.f32 1.0, %v1160
    %v1162 = vmul.f32 %v1159, %v1161
    %v1163 = vadd.f32 %v1159, %v1162
    %vm1164 = vweird.f32 %v1127
    %vm1165 = vweird.f32 %v1159
    %vm1166 = vmor %vm1164, %vm1165
    %v1167 = vsel %vm1166, %v1159, %v1163
    %v1168 = vand.u32 2147483647, %v1127
    %vm1169 = vcmp.eq.f32.partialorder %v1168, 8.507059e+37
    %v1170 = vand.u32 %v1127, 2147483648
    %v1171 = vor.u32 1.1754944e-38, %v1170
    %v1172 = vsel %vm1169, %v1171, %v1167
    %v1173 = vmul.f32 1.0, %v1172
    %v1174 = vrcp.pop %v1128
    %v1175 = vmul.f32 %v1128, %v1174
    %v1176 = vsub.f32 1.0, %v1175
    %v1177 = vmul.f32 %v1174, %v1176
    %v1178 = vadd.f32 %v1174, %v1177
    %vm1179 = vweird.f32 %v1128
    %vm1180 = vweird.f32 %v1174
    %vm1181 = vmor %vm1179, %vm1180
    %v1182 = vsel %vm1181, %v1174, %v1178
    %v1183 = vand.u32 2147483647, %v1128
    %vm1184 = vcmp.eq.f32.partialorder %v1183, 8.507059e+37
    %v1185 = vand.u32 %v1128, 2147483648
    %v1186 = vor.u32 1.1754944e-38, %v1185
    %v1187 = vsel %vm1184, %v1186, %v1182
    %v1188 = vmul.f32 1.0, %v1187
    %v1189 = vtanh.pop %v1029
    %v1190 = vtanh.pop %v1030
    %v1191 = vtanh.pop %v1031
    %v1192 = vtanh.pop %v1032
    %v1193 = vxor.u32 %v1033, 2147483648
    %v1194 = vxor.u32 %v1034, 2147483648
    %v1195 = vxor.u32 %v1035, 2147483648
    %v1196 = vxor.u32 %v1036, 2147483648
    %v1197 = vmul.f32 %v1193, 1.442695
    %v1198 = vpow.pop %v1197
    %v1199 = vmul.f32 %v1194, 1.442695
    %v1200 = vpow.pop %v1199
    %v1201 = vmul.f32 %v1195, 1.442695
    %v1202 = vpow.pop %v1201
    %v1203 = vmul.f32 %v1196, 1.442695
    %v1204 = vpow.pop %v1203
    %v1205 = vadd.f32 %v1198, 1.0
    %v1206 = vadd.f32 %v1200, 1.0
    %v1207 = vadd.f32 %v1202, 1.0
    %v1208 = vadd.f32 %v1204, 1.0
    %v1209 = vrcp.pop %v1205
    %v1210 = vmul.f32 %v1205, %v1209
    %v1211 = vsub.f32 1.0, %v1210
    %v1212 = vmul.f32 %v1209, %v1211
    %v1213 = vadd.f32 %v1209, %v1212
    %vm1214 = vweird.f32 %v1205
    %vm1215 = vweird.f32 %v1209
    %vm1216 = vmor %vm1214, %vm1215
    %v1217 = vsel %vm1216, %v1209, %v1213
    %v1218 = vand.u32 2147483647, %v1205
    %vm1219 = vcmp.eq.f32.partialorder %v1218, 8.507059e+37
    %v1220 = vand.u32 %v1205, 2147483648
    %v1221 = vor.u32 1.1754944e-38, %v1220
    %v1222 = vsel %vm1219, %v1221, %v1217
    %v1223 = vmul.f32 1.0, %v1222
    %v1224 = vrcp.pop %v1206
    %v1225 = vmul.f32 %v1206, %v1224
    %v1226 = vsub.f32 1.0, %v1225
    %v1227 = vmul.f32 %v1224, %v1226
    %v1228 = vadd.f32 %v1224, %v1227
    %vm1229 = vweird.f32 %v1206
    %vm1230 = vweird.f32 %v1224
    %vm1231 = vmor %vm1229, %vm1230
    %v1232 = vsel %vm1231, %v1224, %v1228
    %v1233 = vand.u32 2147483647, %v1206
    %vm1234 = vcmp.eq.f32.partialorder %v1233, 8.507059e+37
    %v1235 = vand.u32 %v1206, 2147483648
    %v1236 = vor.u32 1.1754944e-38, %v1235
    %v1237 = vsel %vm1234, %v1236, %v1232
    %v1238 = vmul.f32 1.0, %v1237
    %v1239 = vrcp.pop %v1207
    %v1240 = vmul.f32 %v1207, %v1239
    %v1241 = vsub.f32 1.0, %v1240
    %v1242 = vmul.f32 %v1239, %v1241
    %v1243 = vadd.f32 %v1239, %v1242
    %vm1244 = vweird.f32 %v1207
    %vm1245 = vweird.f32 %v1239
    %vm1246 = vmor %vm1244, %vm1245
    %v1247 = vsel %vm1246, %v1239, %v1243
    %v1248 = vand.u32 2147483647, %v1207
    %vm1249 = vcmp.eq.f32.partialorder %v1248, 8.507059e+37
    %v1250 = vand.u32 %v1207, 2147483648
    %v1251 = vor.u32 1.1754944e-38, %v1250
    %v1252 = vsel %vm1249, %v1251, %v1247
    %v1253 = vmul.f32 1.0, %v1252
    %v1254 = vrcp.pop %v1208
    %v1255 = vmul.f32 %v1208, %v1254
    %v1256 = vsub.f32 1.0, %v1255
    %v1257 = vmul.f32 %v1254, %v1256
    %v1258 = vadd.f32 %v1254, %v1257
    %vm1259 = vweird.f32 %v1208
    %vm1260 = vweird.f32 %v1254
    %vm1261 = vmor %vm1259, %vm1260
    %v1262 = vsel %vm1261, %v1254, %v1258
    %v1263 = vand.u32 2147483647, %v1208
    %vm1264 = vcmp.eq.f32.partialorder %v1263, 8.507059e+37
    %v1265 = vand.u32 %v1208, 2147483648
    %v1266 = vor.u32 1.1754944e-38, %v1265
    %v1267 = vsel %vm1264, %v1266, %v1262
    %v1268 = vmul.f32 1.0, %v1267
    %v1269 = vmul.f32 %v1143, 0.0
    %v1270 = vmul.f32 %v1158, 0.0
    %v1271 = vmul.f32 %v1173, 0.0
    %v1272 = vmul.f32 %v1188, 0.0
    %v1273 = vmul.f32 %v1067, %v1189
    %v1274 = vmul.f32 %v1082, %v1190
    %v1275 = vmul.f32 %v1097, %v1191
    %v1276 = vmul.f32 %v1112, %v1192
    %v1277 = vadd.f32 %v1269, %v1273
    %v1278 = vadd.f32 %v1270, %v1274
    %v1279 = vadd.f32 %v1271, %v1275
    %v1280 = vadd.f32 %v1272, %v1276
    %v1281 = vtanh.pop %v1277
    %v1282 = vtanh.pop %v1278
    %v1283 = vtanh.pop %v1279
    %v1284 = vtanh.pop %v1280
    %v1285 = vmul.f32 %v1223, %v1281
    %v1286 = vmul.f32 %v1238, %v1282
    %v1287 = vmul.f32 %v1253, %v1283
    %v1288 = vmul.f32 %v1268, %v1284
    %1305 = vrot.lane.b32.xlu0 %v308, 112
    %v1306 = vpop.permute.xlu0 %1305
    %1307 = vrot.lane.b32.xlu0 %v310, 112
    %v1308 = vpop.permute.xlu0 %1307
    %1309 = vrot.lane.b32.xlu0 %v313, 112
    %v1310 = vpop.permute.xlu0 %1309
    %1311 = vrot.lane.b32.xlu0 %v315, 112
    %v1312 = vpop.permute.xlu0 %1311
    %1313 = vrot.lane.b32.xlu0 %v318, 112
    %v1314 = vpop.permute.xlu0 %1313
    %1315 = vrot.lane.b32.xlu0 %v320, 112
    %v1316 = vpop.permute.xlu0 %1315
    %1317 = vrot.lane.b32.xlu0 %v323, 112
    %v1318 = vpop.permute.xlu0 %1317
    %1319 = vrot.lane.b32.xlu0 %v325, 112
    %v1320 = vpop.permute.xlu0 %1319
    %1321 = vrot.lane.b32.xlu0 %v328, 112
    %v1322 = vpop.permute.xlu0 %1321
    %1323 = vrot.lane.b32.xlu0 %v330, 112
    %v1324 = vpop.permute.xlu0 %1323
    %1325 = vrot.lane.b32.xlu0 %v333, 112
    %v1326 = vpop.permute.xlu0 %1325
    %1327 = vrot.lane.b32.xlu0 %v335, 112
    %v1328 = vpop.permute.xlu0 %1327
    %1329 = vrot.lane.b32.xlu0 %v338, 112
    %v1330 = vpop.permute.xlu0 %1329
    %1331 = vrot.lane.b32.xlu0 %v340, 112
    %v1332 = vpop.permute.xlu0 %1331
    %1333 = vrot.lane.b32.xlu0 %v343, 112
    %v1334 = vpop.permute.xlu0 %1333
    %1335 = vrot.lane.b32.xlu0 %v345, 112
    %v1336 = vpop.permute.xlu0 %1335
    %1353 = vmatpush.bf16.msra.mxu0 0
    %1354 = vmatpush.bf16.msra.mxu0 0
    %1355 = vmatpush.bf16.msra.mxu0 0
    %1356 = vmatpush.bf16.msra.mxu0 0
    %1357 = vmatpush.bf16.msra.mxu0 0
    %1358 = vmatpush.bf16.msra.mxu0 0
    %1359 = vmatpush.bf16.msra.mxu0 %v714
    %1360 = vmatpush.bf16.msra.mxu0 %v713
    %1361 = vmatmul.bf16.gmra.mxu0 %v389
    %v1362 = vpop.f32.mrf.mxu0
    %v1363 = vadd.f32 %v1306, %v1362
    %v1364 = vpop.f32.mrf.mxu0
    %v1365 = vadd.f32 %v1308, %v1364
    %1366 = vmatmul.bf16.gmra.mxu0 %v392
    %v1367 = vpop.f32.mrf.mxu0
    %v1368 = vadd.f32 %v1310, %v1367
    %v1369 = vpop.f32.mrf.mxu0
    %v1370 = vadd.f32 %v1312, %v1369
    %1371 = vmatmul.bf16.gmra.mxu0 %v395
    %v1372 = vpop.f32.mrf.mxu0
    %v1373 = vadd.f32 %v1314, %v1372
    %v1374 = vpop.f32.mrf.mxu0
    %v1375 = vadd.f32 %v1316, %v1374
    %1376 = vmatmul.bf16.gmra.mxu0 %v398
    %v1377 = vpop.f32.mrf.mxu0
    %v1378 = vadd.f32 %v1318, %v1377
    %v1379 = vpop.f32.mrf.mxu0
    %v1380 = vadd.f32 %v1320, %v1379
    %1381 = vmatmul.bf16.gmra.mxu0 %v401
    %v1382 = vpop.f32.mrf.mxu0
    %v1383 = vadd.f32 %v1322, %v1382
    %v1384 = vpop.f32.mrf.mxu0
    %v1385 = vadd.f32 %v1324, %v1384
    %1386 = vmatmul.bf16.gmra.mxu0 %v404
    %v1387 = vpop.f32.mrf.mxu0
    %v1388 = vadd.f32 %v1326, %v1387
    %v1389 = vpop.f32.mrf.mxu0
    %v1390 = vadd.f32 %v1328, %v1389
    %1391 = vmatmul.bf16.gmra.mxu0 %v407
    %v1392 = vpop.f32.mrf.mxu0
    %v1393 = vadd.f32 %v1330, %v1392
    %v1394 = vpop.f32.mrf.mxu0
    %v1395 = vadd.f32 %v1332, %v1394
    %1396 = vmatmul.bf16.gmra.mxu0 %v410
    %v1397 = vpop.f32.mrf.mxu0
    %v1398 = vadd.f32 %v1334, %v1397
    %v1399 = vpop.f32.mrf.mxu0
    %v1400 = vadd.f32 %v1336, %v1399
    %1401 = vdwg.mxu0
    %v1402 = vxor.u32 %v1363, 2147483648
    %v1403 = vxor.u32 %v1365, 2147483648
    %v1404 = vxor.u32 %v1368, 2147483648
    %v1405 = vxor.u32 %v1370, 2147483648
    %v1406 = vmul.f32 %v1402, 1.442695
    %v1407 = vpow.pop %v1406
    %v1408 = vmul.f32 %v1403, 1.442695
    %v1409 = vpow.pop %v1408
    %v1410 = vmul.f32 %v1404, 1.442695
    %v1411 = vpow.pop %v1410
    %v1412 = vmul.f32 %v1405, 1.442695
    %v1413 = vpow.pop %v1412
    %v1414 = vadd.f32 %v1407, 1.0
    %v1415 = vadd.f32 %v1409, 1.0
    %v1416 = vadd.f32 %v1411, 1.0
    %v1417 = vadd.f32 %v1413, 1.0
    %v1418 = vrcp.pop %v1414
    %v1419 = vmul.f32 %v1414, %v1418
    %v1420 = vsub.f32 1.0, %v1419
    %v1421 = vmul.f32 %v1418, %v1420
    %v1422 = vadd.f32 %v1418, %v1421
    %vm1423 = vweird.f32 %v1414
    %vm1424 = vweird.f32 %v1418
    %vm1425 = vmor %vm1423, %vm1424
    %v1426 = vsel %vm1425, %v1418, %v1422
    %v1427 = vand.u32 2147483647, %v1414
    %vm1428 = vcmp.eq.f32.partialorder %v1427, 8.507059e+37
    %v1429 = vand.u32 %v1414, 2147483648
    %v1430 = vor.u32 1.1754944e-38, %v1429
    %v1431 = vsel %vm1428, %v1430, %v1426
    %v1432 = vmul.f32 1.0, %v1431
    %v1433 = vrcp.pop %v1415
    %v1434 = vmul.f32 %v1415, %v1433
    %v1435 = vsub.f32 1.0, %v1434
    %v1436 = vmul.f32 %v1433, %v1435
    %v1437 = vadd.f32 %v1433, %v1436
    %vm1438 = vweird.f32 %v1415
    %vm1439 = vweird.f32 %v1433
    %vm1440 = vmor %vm1438, %vm1439
    %v1441 = vsel %vm1440, %v1433, %v1437
    %v1442 = vand.u32 2147483647, %v1415
    %vm1443 = vcmp.eq.f32.partialorder %v1442, 8.507059e+37
    %v1444 = vand.u32 %v1415, 2147483648
    %v1445 = vor.u32 1.1754944e-38, %v1444
    %v1446 = vsel %vm1443, %v1445, %v1441
    %v1447 = vmul.f32 1.0, %v1446
    %v1448 = vrcp.pop %v1416
    %v1449 = vmul.f32 %v1416, %v1448
    %v1450 = vsub.f32 1.0, %v1449
    %v1451 = vmul.f32 %v1448, %v1450
    %v1452 = vadd.f32 %v1448, %v1451
    %vm1453 = vweird.f32 %v1416
    %vm1454 = vweird.f32 %v1448
    %vm1455 = vmor %vm1453, %vm1454
    %v1456 = vsel %vm1455, %v1448, %v1452
    %v1457 = vand.u32 2147483647, %v1416
    %vm1458 = vcmp.eq.f32.partialorder %v1457, 8.507059e+37
    %v1459 = vand.u32 %v1416, 2147483648
    %v1460 = vor.u32 1.1754944e-38, %v1459
    %v1461 = vsel %vm1458, %v1460, %v1456
    %v1462 = vmul.f32 1.0, %v1461
    %v1463 = vrcp.pop %v1417
    %v1464 = vmul.f32 %v1417, %v1463
    %v1465 = vsub.f32 1.0, %v1464
    %v1466 = vmul.f32 %v1463, %v1465
    %v1467 = vadd.f32 %v1463, %v1466
    %vm1468 = vweird.f32 %v1417
    %vm1469 = vweird.f32 %v1463
    %vm1470 = vmor %vm1468, %vm1469
    %v1471 = vsel %vm1470, %v1463, %v1467
    %v1472 = vand.u32 2147483647, %v1417
    %vm1473 = vcmp.eq.f32.partialorder %v1472, 8.507059e+37
    %v1474 = vand.u32 %v1417, 2147483648
    %v1475 = vor.u32 1.1754944e-38, %v1474
    %v1476 = vsel %vm1473, %v1475, %v1471
    %v1477 = vmul.f32 1.0, %v1476
    %v1478 = vxor.u32 %v1373, 2147483648
    %v1479 = vxor.u32 %v1375, 2147483648
    %v1480 = vxor.u32 %v1378, 2147483648
    %v1481 = vxor.u32 %v1380, 2147483648
    %v1482 = vmul.f32 %v1478, 1.442695
    %v1483 = vpow.pop %v1482
    %v1484 = vmul.f32 %v1479, 1.442695
    %v1485 = vpow.pop %v1484
    %v1486 = vmul.f32 %v1480, 1.442695
    %v1487 = vpow.pop %v1486
    %v1488 = vmul.f32 %v1481, 1.442695
    %v1489 = vpow.pop %v1488
    %v1490 = vadd.f32 %v1483, 1.0
    %v1491 = vadd.f32 %v1485, 1.0
    %v1492 = vadd.f32 %v1487, 1.0
    %v1493 = vadd.f32 %v1489, 1.0
    %v1494 = vrcp.pop %v1490
    %v1495 = vmul.f32 %v1490, %v1494
    %v1496 = vsub.f32 1.0, %v1495
    %v1497 = vmul.f32 %v1494, %v1496
    %v1498 = vadd.f32 %v1494, %v1497
    %vm1499 = vweird.f32 %v1490
    %vm1500 = vweird.f32 %v1494
    %vm1501 = vmor %vm1499, %vm1500
    %v1502 = vsel %vm1501, %v1494, %v1498
    %v1503 = vand.u32 2147483647, %v1490
    %vm1504 = vcmp.eq.f32.partialorder %v1503, 8.507059e+37
    %v1505 = vand.u32 %v1490, 2147483648
    %v1506 = vor.u32 1.1754944e-38, %v1505
    %v1507 = vsel %vm1504, %v1506, %v1502
    %v1508 = vmul.f32 1.0, %v1507
    %v1509 = vrcp.pop %v1491
    %v1510 = vmul.f32 %v1491, %v1509
    %v1511 = vsub.f32 1.0, %v1510
    %v1512 = vmul.f32 %v1509, %v1511
    %v1513 = vadd.f32 %v1509, %v1512
    %vm1514 = vweird.f32 %v1491
    %vm1515 = vweird.f32 %v1509
    %vm1516 = vmor %vm1514, %vm1515
    %v1517 = vsel %vm1516, %v1509, %v1513
    %v1518 = vand.u32 2147483647, %v1491
    %vm1519 = vcmp.eq.f32.partialorder %v1518, 8.507059e+37
    %v1520 = vand.u32 %v1491, 2147483648
    %v1521 = vor.u32 1.1754944e-38, %v1520
    %v1522 = vsel %vm1519, %v1521, %v1517
    %v1523 = vmul.f32 1.0, %v1522
    %v1524 = vrcp.pop %v1492
    %v1525 = vmul.f32 %v1492, %v1524
    %v1526 = vsub.f32 1.0, %v1525
    %v1527 = vmul.f32 %v1524, %v1526
    %v1528 = vadd.f32 %v1524, %v1527
    %vm1529 = vweird.f32 %v1492
    %vm1530 = vweird.f32 %v1524
    %vm1531 = vmor %vm1529, %vm1530
    %v1532 = vsel %vm1531, %v1524, %v1528
    %v1533 = vand.u32 2147483647, %v1492
    %vm1534 = vcmp.eq.f32.partialorder %v1533, 8.507059e+37
    %v1535 = vand.u32 %v1492, 2147483648
    %v1536 = vor.u32 1.1754944e-38, %v1535
    %v1537 = vsel %vm1534, %v1536, %v1532
    %v1538 = vmul.f32 1.0, %v1537
    %v1539 = vrcp.pop %v1493
    %v1540 = vmul.f32 %v1493, %v1539
    %v1541 = vsub.f32 1.0, %v1540
    %v1542 = vmul.f32 %v1539, %v1541
    %v1543 = vadd.f32 %v1539, %v1542
    %vm1544 = vweird.f32 %v1493
    %vm1545 = vweird.f32 %v1539
    %vm1546 = vmor %vm1544, %vm1545
    %v1547 = vsel %vm1546, %v1539, %v1543
    %v1548 = vand.u32 2147483647, %v1493
    %vm1549 = vcmp.eq.f32.partialorder %v1548, 8.507059e+37
    %v1550 = vand.u32 %v1493, 2147483648
    %v1551 = vor.u32 1.1754944e-38, %v1550
    %v1552 = vsel %vm1549, %v1551, %v1547
    %v1553 = vmul.f32 1.0, %v1552
    %v1554 = vtanh.pop %v1383
    %v1555 = vtanh.pop %v1385
    %v1556 = vtanh.pop %v1388
    %v1557 = vtanh.pop %v1390
    %v1558 = vxor.u32 %v1393, 2147483648
    %v1559 = vxor.u32 %v1395, 2147483648
    %v1560 = vxor.u32 %v1398, 2147483648
    %v1561 = vxor.u32 %v1400, 2147483648
    %v1562 = vmul.f32 %v1558, 1.442695
    %v1563 = vpow.pop %v1562
    %v1564 = vmul.f32 %v1559, 1.442695
    %v1565 = vpow.pop %v1564
    %v1566 = vmul.f32 %v1560, 1.442695
    %v1567 = vpow.pop %v1566
    %v1568 = vmul.f32 %v1561, 1.442695
    %v1569 = vpow.pop %v1568
    %v1570 = vadd.f32 %v1563, 1.0
    %v1571 = vadd.f32 %v1565, 1.0
    %v1572 = vadd.f32 %v1567, 1.0
    %v1573 = vadd.f32 %v1569, 1.0
    %v1574 = vrcp.pop %v1570
    %v1575 = vmul.f32 %v1570, %v1574
    %v1576 = vsub.f32 1.0, %v1575
    %v1577 = vmul.f32 %v1574, %v1576
    %v1578 = vadd.f32 %v1574, %v1577
    %vm1579 = vweird.f32 %v1570
    %vm1580 = vweird.f32 %v1574
    %vm1581 = vmor %vm1579, %vm1580
    %v1582 = vsel %vm1581, %v1574, %v1578
    %v1583 = vand.u32 2147483647, %v1570
    %vm1584 = vcmp.eq.f32.partialorder %v1583, 8.507059e+37
    %v1585 = vand.u32 %v1570, 2147483648
    %v1586 = vor.u32 1.1754944e-38, %v1585
    %v1587 = vsel %vm1584, %v1586, %v1582
    %v1588 = vmul.f32 1.0, %v1587
    %v1589 = vrcp.pop %v1571
    %v1590 = vmul.f32 %v1571, %v1589
    %v1591 = vsub.f32 1.0, %v1590
    %v1592 = vmul.f32 %v1589, %v1591
    %v1593 = vadd.f32 %v1589, %v1592
    %vm1594 = vweird.f32 %v1571
    %vm1595 = vweird.f32 %v1589
    %vm1596 = vmor %vm1594, %vm1595
    %v1597 = vsel %vm1596, %v1589, %v1593
    %v1598 = vand.u32 2147483647, %v1571
    %vm1599 = vcmp.eq.f32.partialorder %v1598, 8.507059e+37
    %v1600 = vand.u32 %v1571, 2147483648
    %v1601 = vor.u32 1.1754944e-38, %v1600
    %v1602 = vsel %vm1599, %v1601, %v1597
    %v1603 = vmul.f32 1.0, %v1602
    %v1604 = vrcp.pop %v1572
    %v1605 = vmul.f32 %v1572, %v1604
    %v1606 = vsub.f32 1.0, %v1605
    %v1607 = vmul.f32 %v1604, %v1606
    %v1608 = vadd.f32 %v1604, %v1607
    %vm1609 = vweird.f32 %v1572
    %vm1610 = vweird.f32 %v1604
    %vm1611 = vmor %vm1609, %vm1610
    %v1612 = vsel %vm1611, %v1604, %v1608
    %v1613 = vand.u32 2147483647, %v1572
    %vm1614 = vcmp.eq.f32.partialorder %v1613, 8.507059e+37
    %v1615 = vand.u32 %v1572, 2147483648
    %v1616 = vor.u32 1.1754944e-38, %v1615
    %v1617 = vsel %vm1614, %v1616, %v1612
    %v1618 = vmul.f32 1.0, %v1617
    %v1619 = vrcp.pop %v1573
    %v1620 = vmul.f32 %v1573, %v1619
    %v1621 = vsub.f32 1.0, %v1620
    %v1622 = vmul.f32 %v1619, %v1621
    %v1623 = vadd.f32 %v1619, %v1622
    %vm1624 = vweird.f32 %v1573
    %vm1625 = vweird.f32 %v1619
    %vm1626 = vmor %vm1624, %vm1625
    %v1627 = vsel %vm1626, %v1619, %v1623
    %v1628 = vand.u32 2147483647, %v1573
    %vm1629 = vcmp.eq.f32.partialorder %v1628, 8.507059e+37
    %v1630 = vand.u32 %v1573, 2147483648
    %v1631 = vor.u32 1.1754944e-38, %v1630
    %v1632 = vsel %vm1629, %v1631, %v1627
    %v1633 = vmul.f32 1.0, %v1632
    %v1634 = vmul.f32 %v1508, %v701
    %v1635 = vmul.f32 %v1523, %v702
    %v1636 = vmul.f32 %v1538, %v703
    %v1637 = vmul.f32 %v1553, %v704
    %v1638 = vmul.f32 %v1432, %v1554
    %v1639 = vmul.f32 %v1447, %v1555
    %v1640 = vmul.f32 %v1462, %v1556
    %v1641 = vmul.f32 %v1477, %v1557
    %v1642 = vadd.f32 %v1634, %v1638
    %v1643 = vadd.f32 %v1635, %v1639
    %v1644 = vadd.f32 %v1636, %v1640
    %v1645 = vadd.f32 %v1637, %v1641
    %v1646 = vtanh.pop %v1642
    %v1647 = vtanh.pop %v1643
    %v1648 = vtanh.pop %v1644
    %v1649 = vtanh.pop %v1645
    %v1650 = vmul.f32 %v1588, %v1646
    %v1651 = vmul.f32 %v1603, %v1647
    %v1652 = vmul.f32 %v1618, %v1648
    %v1653 = vmul.f32 %v1633, %v1649
    %v1654 = vpack.c.bf16 %v1286, %v1285
    %v1655 = vpack.c.bf16 %v1288, %v1287
    %v1656 = vpack.c.bf16 %v1651, %v1650
    %v1657 = vpack.c.bf16 %v1653, %v1652
    %1658 = vmatpush.bf16.msra.mxu0 0
    %1659 = vmatpush.bf16.msra.mxu0 0
    %1660 = vmatpush.bf16.msra.mxu0 0
    %1661 = vmatpush.bf16.msra.mxu0 0
    %1662 = vmatpush.bf16.msra.mxu0 0
    %1663 = vmatpush.bf16.msra.mxu0 0
    %1664 = vmatpush.bf16.msra.mxu0 %v1657
    %1665 = vmatpush.bf16.msra.mxu0 %v1656
    %1666 = vmatmul.bf16.gmra.mxu0 %v756
    %v1667 = vpop.f32.mrf.mxu0
    %v1668 = vadd.f32 0.0, %v1667
    %v1669 = vpop.f32.mrf.mxu0
    %v1670 = vadd.f32 0.0, %v1669
    %1671 = vmatmul.bf16.gmra.mxu0 %v759
    %v1672 = vpop.f32.mrf.mxu0
    %v1673 = vadd.f32 0.0, %v1672
    %v1674 = vpop.f32.mrf.mxu0
    %v1675 = vadd.f32 0.0, %v1674
    %1676 = vmatmul.bf16.gmra.mxu0 %v762
    %v1677 = vpop.f32.mrf.mxu0
    %v1678 = vadd.f32 0.0, %v1677
    %v1679 = vpop.f32.mrf.mxu0
    %v1680 = vadd.f32 0.0, %v1679
    %1681 = vmatmul.bf16.gmra.mxu0 %v765
    %v1682 = vpop.f32.mrf.mxu0
    %v1683 = vadd.f32 0.0, %v1682
    %v1684 = vpop.f32.mrf.mxu0
    %v1685 = vadd.f32 0.0, %v1684
    %1686 = vmatmul.bf16.gmra.mxu0 %v768
    %v1687 = vpop.f32.mrf.mxu0
    %v1688 = vadd.f32 0.0, %v1687
    %v1689 = vpop.f32.mrf.mxu0
    %v1690 = vadd.f32 0.0, %v1689
    %1691 = vmatmul.bf16.gmra.mxu0 %v771
    %v1692 = vpop.f32.mrf.mxu0
    %v1693 = vadd.f32 0.0, %v1692
    %v1694 = vpop.f32.mrf.mxu0
    %v1695 = vadd.f32 0.0, %v1694
    %1696 = vmatmul.bf16.gmra.mxu0 %v774
    %v1697 = vpop.f32.mrf.mxu0
    %v1698 = vadd.f32 0.0, %v1697
    %v1699 = vpop.f32.mrf.mxu0
    %v1700 = vadd.f32 0.0, %v1699
    %1701 = vmatmul.bf16.gmra.mxu0 %v777
    %v1702 = vpop.f32.mrf.mxu0
    %v1703 = vadd.f32 0.0, %v1702
    %v1704 = vpop.f32.mrf.mxu0
    %v1705 = vadd.f32 0.0, %v1704
    %1706 = vdwg.mxu0
    %1707 = vmatpush.bf16.msra.mxu0 0
    %1708 = vmatpush.bf16.msra.mxu0 0
    %1709 = vmatpush.bf16.msra.mxu0 0
    %1710 = vmatpush.bf16.msra.mxu0 0
    %1711 = vmatpush.bf16.msra.mxu0 0
    %1712 = vmatpush.bf16.msra.mxu0 0
    %1713 = vmatpush.bf16.msra.mxu0 %v1655
    %1714 = vmatpush.bf16.msra.mxu0 %v1654
    %1715 = vmatmul.bf16.gmra.mxu0 %v869
    %v1716 = vpop.f32.mrf.mxu0
    %v1717 = vadd.f32 %v1668, %v1716
    %v1718 = vpop.f32.mrf.mxu0
    %v1719 = vadd.f32 %v1670, %v1718
    %1720 = vmatmul.bf16.gmra.mxu0 %v872
    %v1721 = vpop.f32.mrf.mxu0
    %v1722 = vadd.f32 %v1673, %v1721
    %v1723 = vpop.f32.mrf.mxu0
    %v1724 = vadd.f32 %v1675, %v1723
    %1725 = vmatmul.bf16.gmra.mxu0 %v875
    %v1726 = vpop.f32.mrf.mxu0
    %v1727 = vadd.f32 %v1678, %v1726
    %v1728 = vpop.f32.mrf.mxu0
    %v1729 = vadd.f32 %v1680, %v1728
    %1730 = vmatmul.bf16.gmra.mxu0 %v878
    %v1731 = vpop.f32.mrf.mxu0
    %v1732 = vadd.f32 %v1683, %v1731
    %v1733 = vpop.f32.mrf.mxu0
    %v1734 = vadd.f32 %v1685, %v1733
    %1735 = vmatmul.bf16.gmra.mxu0 %v881
    %v1736 = vpop.f32.mrf.mxu0
    %v1737 = vadd.f32 %v1688, %v1736
    %v1738 = vpop.f32.mrf.mxu0
    %v1739 = vadd.f32 %v1690, %v1738
    %1740 = vmatmul.bf16.gmra.mxu0 %v884
    %v1741 = vpop.f32.mrf.mxu0
    %v1742 = vadd.f32 %v1693, %v1741
    %v1743 = vpop.f32.mrf.mxu0
    %v1744 = vadd.f32 %v1695, %v1743
    %1745 = vmatmul.bf16.gmra.mxu0 %v887
    %v1746 = vpop.f32.mrf.mxu0
    %v1747 = vadd.f32 %v1698, %v1746
    %v1748 = vpop.f32.mrf.mxu0
    %v1749 = vadd.f32 %v1700, %v1748
    %1750 = vmatmul.bf16.gmra.mxu0 %v890
    %v1751 = vpop.f32.mrf.mxu0
    %v1752 = vadd.f32 %v1703, %v1751
    %v1753 = vpop.f32.mrf.mxu0
    %v1754 = vadd.f32 %v1705, %v1753
    %1755 = vdwg.mxu0
    %v1756 = vadd.f32 %v1717, %v944
    %v1757 = vadd.f32 %v1719, %v949
    %v1758 = vadd.f32 %v1722, %v954
    %v1759 = vadd.f32 %v1724, %v959
    %v1760 = vadd.f32 %v1727, %v964
    %v1761 = vadd.f32 %v1729, %v969
    %v1762 = vadd.f32 %v1732, %v974
    %v1763 = vadd.f32 %v1734, %v979
    %v1764 = vadd.f32 %v1737, %v984
    %v1765 = vadd.f32 %v1739, %v989
    %v1766 = vadd.f32 %v1742, %v994
    %v1767 = vadd.f32 %v1744, %v999
    %v1768 = vadd.f32 %v1747, %v1004
    %v1769 = vadd.f32 %v1749, %v1009
    %v1770 = vadd.f32 %v1752, %v1014
    %v1771 = vadd.f32 %v1754, %v1019
    %v1772 = vxor.u32 %v1756, 2147483648
    %v1773 = vxor.u32 %v1757, 2147483648
    %v1774 = vxor.u32 %v1758, 2147483648
    %v1775 = vxor.u32 %v1759, 2147483648
    %v1776 = vmul.f32 %v1772, 1.442695
    %v1777 = vpow.pop %v1776
    %v1778 = vmul.f32 %v1773, 1.442695
    %v1779 = vpow.pop %v1778
    %v1780 = vmul.f32 %v1774, 1.442695
    %v1781 = vpow.pop %v1780
    %v1782 = vmul.f32 %v1775, 1.442695
    %v1783 = vpow.pop %v1782
    %v1784 = vadd.f32 %v1777, 1.0
    %v1785 = vadd.f32 %v1779, 1.0
    %v1786 = vadd.f32 %v1781, 1.0
    %v1787 = vadd.f32 %v1783, 1.0
    %v1788 = vrcp.pop %v1784
    %v1789 = vmul.f32 %v1784, %v1788
    %v1790 = vsub.f32 1.0, %v1789
    %v1791 = vmul.f32 %v1788, %v1790
    %v1792 = vadd.f32 %v1788, %v1791
    %vm1793 = vweird.f32 %v1784
    %vm1794 = vweird.f32 %v1788
    %vm1795 = vmor %vm1793, %vm1794
    %v1796 = vsel %vm1795, %v1788, %v1792
    %v1797 = vand.u32 2147483647, %v1784
    %vm1798 = vcmp.eq.f32.partialorder %v1797, 8.507059e+37
    %v1799 = vand.u32 %v1784, 2147483648
    %v1800 = vor.u32 1.1754944e-38, %v1799
    %v1801 = vsel %vm1798, %v1800, %v1796
    %v1802 = vmul.f32 1.0, %v1801
    %v1803 = vrcp.pop %v1785
    %v1804 = vmul.f32 %v1785, %v1803
    %v1805 = vsub.f32 1.0, %v1804
    %v1806 = vmul.f32 %v1803, %v1805
    %v1807 = vadd.f32 %v1803, %v1806
    %vm1808 = vweird.f32 %v1785
    %vm1809 = vweird.f32 %v1803
    %vm1810 = vmor %vm1808, %vm1809
    %v1811 = vsel %vm1810, %v1803, %v1807
    %v1812 = vand.u32 2147483647, %v1785
    %vm1813 = vcmp.eq.f32.partialorder %v1812, 8.507059e+37
    %v1814 = vand.u32 %v1785, 2147483648
    %v1815 = vor.u32 1.1754944e-38, %v1814
    %v1816 = vsel %vm1813, %v1815, %v1811
    %v1817 = vmul.f32 1.0, %v1816
    %v1818 = vrcp.pop %v1786
    %v1819 = vmul.f32 %v1786, %v1818
    %v1820 = vsub.f32 1.0, %v1819
    %v1821 = vmul.f32 %v1818, %v1820
    %v1822 = vadd.f32 %v1818, %v1821
    %vm1823 = vweird.f32 %v1786
    %vm1824 = vweird.f32 %v1818
    %vm1825 = vmor %vm1823, %vm1824
    %v1826 = vsel %vm1825, %v1818, %v1822
    %v1827 = vand.u32 2147483647, %v1786
    %vm1828 = vcmp.eq.f32.partialorder %v1827, 8.507059e+37
    %v1829 = vand.u32 %v1786, 2147483648
    %v1830 = vor.u32 1.1754944e-38, %v1829
    %v1831 = vsel %vm1828, %v1830, %v1826
    %v1832 = vmul.f32 1.0, %v1831
    %v1833 = vrcp.pop %v1787
    %v1834 = vmul.f32 %v1787, %v1833
    %v1835 = vsub.f32 1.0, %v1834
    %v1836 = vmul.f32 %v1833, %v1835
    %v1837 = vadd.f32 %v1833, %v1836
    %vm1838 = vweird.f32 %v1787
    %vm1839 = vweird.f32 %v1833
    %vm1840 = vmor %vm1838, %vm1839
    %v1841 = vsel %vm1840, %v1833, %v1837
    %v1842 = vand.u32 2147483647, %v1787
    %vm1843 = vcmp.eq.f32.partialorder %v1842, 8.507059e+37
    %v1844 = vand.u32 %v1787, 2147483648
    %v1845 = vor.u32 1.1754944e-38, %v1844
    %v1846 = vsel %vm1843, %v1845, %v1841
    %v1847 = vmul.f32 1.0, %v1846
    %v1848 = vxor.u32 %v1760, 2147483648
    %v1849 = vxor.u32 %v1761, 2147483648
    %v1850 = vxor.u32 %v1762, 2147483648
    %v1851 = vxor.u32 %v1763, 2147483648
    %v1852 = vmul.f32 %v1848, 1.442695
    %v1853 = vpow.pop %v1852
    %v1854 = vmul.f32 %v1849, 1.442695
    %v1855 = vpow.pop %v1854
    %v1856 = vmul.f32 %v1850, 1.442695
    %v1857 = vpow.pop %v1856
    %v1858 = vmul.f32 %v1851, 1.442695
    %v1859 = vpow.pop %v1858
    %v1860 = vadd.f32 %v1853, 1.0
    %v1861 = vadd.f32 %v1855, 1.0
    %v1862 = vadd.f32 %v1857, 1.0
    %v1863 = vadd.f32 %v1859, 1.0
    %v1864 = vrcp.pop %v1860
    %v1865 = vmul.f32 %v1860, %v1864
    %v1866 = vsub.f32 1.0, %v1865
    %v1867 = vmul.f32 %v1864, %v1866
    %v1868 = vadd.f32 %v1864, %v1867
    %vm1869 = vweird.f32 %v1860
    %vm1870 = vweird.f32 %v1864
    %vm1871 = vmor %vm1869, %vm1870
    %v1872 = vsel %vm1871, %v1864, %v1868
    %v1873 = vand.u32 2147483647, %v1860
    %vm1874 = vcmp.eq.f32.partialorder %v1873, 8.507059e+37
    %v1875 = vand.u32 %v1860, 2147483648
    %v1876 = vor.u32 1.1754944e-38, %v1875
    %v1877 = vsel %vm1874, %v1876, %v1872
    %v1878 = vmul.f32 1.0, %v1877
    %v1879 = vrcp.pop %v1861
    %v1880 = vmul.f32 %v1861, %v1879
    %v1881 = vsub.f32 1.0, %v1880
    %v1882 = vmul.f32 %v1879, %v1881
    %v1883 = vadd.f32 %v1879, %v1882
    %vm1884 = vweird.f32 %v1861
    %vm1885 = vweird.f32 %v1879
    %vm1886 = vmor %vm1884, %vm1885
    %v1887 = vsel %vm1886, %v1879, %v1883
    %v1888 = vand.u32 2147483647, %v1861
    %vm1889 = vcmp.eq.f32.partialorder %v1888, 8.507059e+37
    %v1890 = vand.u32 %v1861, 2147483648
    %v1891 = vor.u32 1.1754944e-38, %v1890
    %v1892 = vsel %vm1889, %v1891, %v1887
    %v1893 = vmul.f32 1.0, %v1892
    %v1894 = vrcp.pop %v1862
    %v1895 = vmul.f32 %v1862, %v1894
    %v1896 = vsub.f32 1.0, %v1895
    %v1897 = vmul.f32 %v1894, %v1896
    %v1898 = vadd.f32 %v1894, %v1897
    %vm1899 = vweird.f32 %v1862
    %vm1900 = vweird.f32 %v1894
    %vm1901 = vmor %vm1899, %vm1900
    %v1902 = vsel %vm1901, %v1894, %v1898
    %v1903 = vand.u32 2147483647, %v1862
    %vm1904 = vcmp.eq.f32.partialorder %v1903, 8.507059e+37
    %v1905 = vand.u32 %v1862, 2147483648
    %v1906 = vor.u32 1.1754944e-38, %v1905
    %v1907 = vsel %vm1904, %v1906, %v1902
    %v1908 = vmul.f32 1.0, %v1907
    %v1909 = vrcp.pop %v1863
    %v1910 = vmul.f32 %v1863, %v1909
    %v1911 = vsub.f32 1.0, %v1910
    %v1912 = vmul.f32 %v1909, %v1911
    %v1913 = vadd.f32 %v1909, %v1912
    %vm1914 = vweird.f32 %v1863
    %vm1915 = vweird.f32 %v1909
    %vm1916 = vmor %vm1914, %vm1915
    %v1917 = vsel %vm1916, %v1909, %v1913
    %v1918 = vand.u32 2147483647, %v1863
    %vm1919 = vcmp.eq.f32.partialorder %v1918, 8.507059e+37
    %v1920 = vand.u32 %v1863, 2147483648
    %v1921 = vor.u32 1.1754944e-38, %v1920
    %v1922 = vsel %vm1919, %v1921, %v1917
    %v1923 = vmul.f32 1.0, %v1922
    %v1924 = vtanh.pop %v1764
    %v1925 = vtanh.pop %v1765
    %v1926 = vtanh.pop %v1766
    %v1927 = vtanh.pop %v1767
    %v1928 = vxor.u32 %v1768, 2147483648
    %v1929 = vxor.u32 %v1769, 2147483648
    %v1930 = vxor.u32 %v1770, 2147483648
    %v1931 = vxor.u32 %v1771, 2147483648
    %v1932 = vmul.f32 %v1928, 1.442695
    %v1933 = vpow.pop %v1932
    %v1934 = vmul.f32 %v1929, 1.442695
    %v1935 = vpow.pop %v1934
    %v1936 = vmul.f32 %v1930, 1.442695
    %v1937 = vpow.pop %v1936
    %v1938 = vmul.f32 %v1931, 1.442695
    %v1939 = vpow.pop %v1938
    %v1940 = vadd.f32 %v1933, 1.0
    %v1941 = vadd.f32 %v1935, 1.0
    %v1942 = vadd.f32 %v1937, 1.0
    %v1943 = vadd.f32 %v1939, 1.0
    %v1944 = vrcp.pop %v1940
    %v1945 = vmul.f32 %v1940, %v1944
    %v1946 = vsub.f32 1.0, %v1945
    %v1947 = vmul.f32 %v1944, %v1946
    %v1948 = vadd.f32 %v1944, %v1947
    %vm1949 = vweird.f32 %v1940
    %vm1950 = vweird.f32 %v1944
    %vm1951 = vmor %vm1949, %vm1950
    %v1952 = vsel %vm1951, %v1944, %v1948
    %v1953 = vand.u32 2147483647, %v1940
    %vm1954 = vcmp.eq.f32.partialorder %v1953, 8.507059e+37
    %v1955 = vand.u32 %v1940, 2147483648
    %v1956 = vor.u32 1.1754944e-38, %v1955
    %v1957 = vsel %vm1954, %v1956, %v1952
    %v1958 = vmul.f32 1.0, %v1957
    %v1959 = vrcp.pop %v1941
    %v1960 = vmul.f32 %v1941, %v1959
    %v1961 = vsub.f32 1.0, %v1960
    %v1962 = vmul.f32 %v1959, %v1961
    %v1963 = vadd.f32 %v1959, %v1962
    %vm1964 = vweird.f32 %v1941
    %vm1965 = vweird.f32 %v1959
    %vm1966 = vmor %vm1964, %vm1965
    %v1967 = vsel %vm1966, %v1959, %v1963
    %v1968 = vand.u32 2147483647, %v1941
    %vm1969 = vcmp.eq.f32.partialorder %v1968, 8.507059e+37
    %v1970 = vand.u32 %v1941, 2147483648
    %v1971 = vor.u32 1.1754944e-38, %v1970
    %v1972 = vsel %vm1969, %v1971, %v1967
    %v1973 = vmul.f32 1.0, %v1972
    %v1974 = vrcp.pop %v1942
    %v1975 = vmul.f32 %v1942, %v1974
    %v1976 = vsub.f32 1.0, %v1975
    %v1977 = vmul.f32 %v1974, %v1976
    %v1978 = vadd.f32 %v1974, %v1977
    %vm1979 = vweird.f32 %v1942
    %vm1980 = vweird.f32 %v1974
    %vm1981 = vmor %vm1979, %vm1980
    %v1982 = vsel %vm1981, %v1974, %v1978
    %v1983 = vand.u32 2147483647, %v1942
    %vm1984 = vcmp.eq.f32.partialorder %v1983, 8.507059e+37
    %v1985 = vand.u32 %v1942, 2147483648
    %v1986 = vor.u32 1.1754944e-38, %v1985
    %v1987 = vsel %vm1984, %v1986, %v1982
    %v1988 = vmul.f32 1.0, %v1987
    %v1989 = vrcp.pop %v1943
    %v1990 = vmul.f32 %v1943, %v1989
    %v1991 = vsub.f32 1.0, %v1990
    %v1992 = vmul.f32 %v1989, %v1991
    %v1993 = vadd.f32 %v1989, %v1992
    %vm1994 = vweird.f32 %v1943
    %vm1995 = vweird.f32 %v1989
    %vm1996 = vmor %vm1994, %vm1995
    %v1997 = vsel %vm1996, %v1989, %v1993
    %v1998 = vand.u32 2147483647, %v1943
    %vm1999 = vcmp.eq.f32.partialorder %v1998, 8.507059e+37
    %v2000 = vand.u32 %v1943, 2147483648
    %v2001 = vor.u32 1.1754944e-38, %v2000
    %v2002 = vsel %vm1999, %v2001, %v1997
    %v2003 = vmul.f32 1.0, %v2002
    %v2004 = vmul.f32 %v1878, %v1277
    %v2005 = vmul.f32 %v1893, %v1278
    %v2006 = vmul.f32 %v1908, %v1279
    %v2007 = vmul.f32 %v1923, %v1280
    %v2008 = vmul.f32 %v1802, %v1924
    %v2009 = vmul.f32 %v1817, %v1925
    %v2010 = vmul.f32 %v1832, %v1926
    %v2011 = vmul.f32 %v1847, %v1927
    %v2012 = vadd.f32 %v2004, %v2008
    %v2013 = vadd.f32 %v2005, %v2009
    %v2014 = vadd.f32 %v2006, %v2010
    %v2015 = vadd.f32 %v2007, %v2011
    %v2016 = vtanh.pop %v2012
    %v2017 = vtanh.pop %v2013
    %v2018 = vtanh.pop %v2014
    %v2019 = vtanh.pop %v2015
    %v2020 = vmul.f32 %v1958, %v2016
    %v2021 = vmul.f32 %v1973, %v2017
    %v2022 = vmul.f32 %v1988, %v2018
    %v2023 = vmul.f32 %v2003, %v2019
    %2024 = vrot.lane.b32.xlu0 %v308, 96
    %v2025 = vpop.permute.xlu0 %2024
    %2026 = vrot.lane.b32.xlu0 %v310, 96
    %v2027 = vpop.permute.xlu0 %2026
    %2028 = vrot.lane.b32.xlu0 %v313, 96
    %v2029 = vpop.permute.xlu0 %2028
    %2030 = vrot.lane.b32.xlu0 %v315, 96
    %v2031 = vpop.permute.xlu0 %2030
    %2032 = vrot.lane.b32.xlu0 %v318, 96
    %v2033 = vpop.permute.xlu0 %2032
    %2034 = vrot.lane.b32.xlu0 %v320, 96
    %v2035 = vpop.permute.xlu0 %2034
    %2036 = vrot.lane.b32.xlu0 %v323, 96
    %v2037 = vpop.permute.xlu0 %2036
    %2038 = vrot.lane.b32.xlu0 %v325, 96
    %v2039 = vpop.permute.xlu0 %2038
    %2040 = vrot.lane.b32.xlu0 %v328, 96
    %v2041 = vpop.permute.xlu0 %2040
    %2042 = vrot.lane.b32.xlu0 %v330, 96
    %v2043 = vpop.permute.xlu0 %2042
    %2044 = vrot.lane.b32.xlu0 %v333, 96
    %v2045 = vpop.permute.xlu0 %2044
    %2046 = vrot.lane.b32.xlu0 %v335, 96
    %v2047 = vpop.permute.xlu0 %2046
    %2048 = vrot.lane.b32.xlu0 %v338, 96
    %v2049 = vpop.permute.xlu0 %2048
    %2050 = vrot.lane.b32.xlu0 %v340, 96
    %v2051 = vpop.permute.xlu0 %2050
    %2052 = vrot.lane.b32.xlu0 %v343, 96
    %v2053 = vpop.permute.xlu0 %2052
    %2054 = vrot.lane.b32.xlu0 %v345, 96
    %v2055 = vpop.permute.xlu0 %2054
    %2072 = vmatpush.bf16.msra.mxu0 0
    %2073 = vmatpush.bf16.msra.mxu0 0
    %2074 = vmatpush.bf16.msra.mxu0 0
    %2075 = vmatpush.bf16.msra.mxu0 0
    %2076 = vmatpush.bf16.msra.mxu0 0
    %2077 = vmatpush.bf16.msra.mxu0 0
    %2078 = vmatpush.bf16.msra.mxu0 %v1657
    %2079 = vmatpush.bf16.msra.mxu0 %v1656
    %2080 = vmatmul.bf16.gmra.mxu0 %v389
    %v2081 = vpop.f32.mrf.mxu0
    %v2082 = vadd.f32 %v2025, %v2081
    %v2083 = vpop.f32.mrf.mxu0
    %v2084 = vadd.f32 %v2027, %v2083
    %2085 = vmatmul.bf16.gmra.mxu0 %v392
    %v2086 = vpop.f32.mrf.mxu0
    %v2087 = vadd.f32 %v2029, %v2086
    %v2088 = vpop.f32.mrf.mxu0
    %v2089 = vadd.f32 %v2031, %v2088
    %2090 = vmatmul.bf16.gmra.mxu0 %v395
    %v2091 = vpop.f32.mrf.mxu0
    %v2092 = vadd.f32 %v2033, %v2091
    %v2093 = vpop.f32.mrf.mxu0
    %v2094 = vadd.f32 %v2035, %v2093
    %2095 = vmatmul.bf16.gmra.mxu0 %v398
    %v2096 = vpop.f32.mrf.mxu0
    %v2097 = vadd.f32 %v2037, %v2096
    %v2098 = vpop.f32.mrf.mxu0
    %v2099 = vadd.f32 %v2039, %v2098
    %2100 = vmatmul.bf16.gmra.mxu0 %v401
    %v2101 = vpop.f32.mrf.mxu0
    %v2102 = vadd.f32 %v2041, %v2101
    %v2103 = vpop.f32.mrf.mxu0
    %v2104 = vadd.f32 %v2043, %v2103
    %2105 = vmatmul.bf16.gmra.mxu0 %v404
    %v2106 = vpop.f32.mrf.mxu0
    %v2107 = vadd.f32 %v2045, %v2106
    %v2108 = vpop.f32.mrf.mxu0
    %v2109 = vadd.f32 %v2047, %v2108
    %2110 = vmatmul.bf16.gmra.mxu0 %v407
    %v2111 = vpop.f32.mrf.mxu0
    %v2112 = vadd.f32 %v2049, %v2111
    %v2113 = vpop.f32.mrf.mxu0
    %v2114 = vadd.f32 %v2051, %v2113
    %2115 = vmatmul.bf16.gmra.mxu0 %v410
    %v2116 = vpop.f32.mrf.mxu0
    %v2117 = vadd.f32 %v2053, %v2116
    %v2118 = vpop.f32.mrf.mxu0
    %v2119 = vadd.f32 %v2055, %v2118
    %2120 = vdwg.mxu0
    %v2121 = vxor.u32 %v2082, 2147483648
    %v2122 = vxor.u32 %v2084, 2147483648
    %v2123 = vxor.u32 %v2087, 2147483648
    %v2124 = vxor.u32 %v2089, 2147483648
    %v2125 = vmul.f32 %v2121, 1.442695
    %v2126 = vpow.pop %v2125
    %v2127 = vmul.f32 %v2122, 1.442695
    %v2128 = vpow.pop %v2127
    %v2129 = vmul.f32 %v2123, 1.442695
    %v2130 = vpow.pop %v2129
    %v2131 = vmul.f32 %v2124, 1.442695
    %v2132 = vpow.pop %v2131
    %v2133 = vadd.f32 %v2126, 1.0
    %v2134 = vadd.f32 %v2128, 1.0
    %v2135 = vadd.f32 %v2130, 1.0
    %v2136 = vadd.f32 %v2132, 1.0
    %v2137 = vrcp.pop %v2133
    %v2138 = vmul.f32 %v2133, %v2137
    %v2139 = vsub.f32 1.0, %v2138
    %v2140 = vmul.f32 %v2137, %v2139
    %v2141 = vadd.f32 %v2137, %v2140
    %vm2142 = vweird.f32 %v2133
    %vm2143 = vweird.f32 %v2137
    %vm2144 = vmor %vm2142, %vm2143
    %v2145 = vsel %vm2144, %v2137, %v2141
    %v2146 = vand.u32 2147483647, %v2133
    %vm2147 = vcmp.eq.f32.partialorder %v2146, 8.507059e+37
    %v2148 = vand.u32 %v2133, 2147483648
    %v2149 = vor.u32 1.1754944e-38, %v2148
    %v2150 = vsel %vm2147, %v2149, %v2145
    %v2151 = vmul.f32 1.0, %v2150
    %v2152 = vrcp.pop %v2134
    %v2153 = vmul.f32 %v2134, %v2152
    %v2154 = vsub.f32 1.0, %v2153
    %v2155 = vmul.f32 %v2152, %v2154
    %v2156 = vadd.f32 %v2152, %v2155
    %vm2157 = vweird.f32 %v2134
    %vm2158 = vweird.f32 %v2152
    %vm2159 = vmor %vm2157, %vm2158
    %v2160 = vsel %vm2159, %v2152, %v2156
    %v2161 = vand.u32 2147483647, %v2134
    %vm2162 = vcmp.eq.f32.partialorder %v2161, 8.507059e+37
    %v2163 = vand.u32 %v2134, 2147483648
    %v2164 = vor.u32 1.1754944e-38, %v2163
    %v2165 = vsel %vm2162, %v2164, %v2160
    %v2166 = vmul.f32 1.0, %v2165
    %v2167 = vrcp.pop %v2135
    %v2168 = vmul.f32 %v2135, %v2167
    %v2169 = vsub.f32 1.0, %v2168
    %v2170 = vmul.f32 %v2167, %v2169
    %v2171 = vadd.f32 %v2167, %v2170
    %vm2172 = vweird.f32 %v2135
    %vm2173 = vweird.f32 %v2167
    %vm2174 = vmor %vm2172, %vm2173
    %v2175 = vsel %vm2174, %v2167, %v2171
    %v2176 = vand.u32 2147483647, %v2135
    %vm2177 = vcmp.eq.f32.partialorder %v2176, 8.507059e+37
    %v2178 = vand.u32 %v2135, 2147483648
    %v2179 = vor.u32 1.1754944e-38, %v2178
    %v2180 = vsel %vm2177, %v2179, %v2175
    %v2181 = vmul.f32 1.0, %v2180
    %v2182 = vrcp.pop %v2136
    %v2183 = vmul.f32 %v2136, %v2182
    %v2184 = vsub.f32 1.0, %v2183
    %v2185 = vmul.f32 %v2182, %v2184
    %v2186 = vadd.f32 %v2182, %v2185
    %vm2187 = vweird.f32 %v2136
    %vm2188 = vweird.f32 %v2182
    %vm2189 = vmor %vm2187, %vm2188
    %v2190 = vsel %vm2189, %v2182, %v2186
    %v2191 = vand.u32 2147483647, %v2136
    %vm2192 = vcmp.eq.f32.partialorder %v2191, 8.507059e+37
    %v2193 = vand.u32 %v2136, 2147483648
    %v2194 = vor.u32 1.1754944e-38, %v2193
    %v2195 = vsel %vm2192, %v2194, %v2190
    %v2196 = vmul.f32 1.0, %v2195
    %v2197 = vxor.u32 %v2092, 2147483648
    %v2198 = vxor.u32 %v2094, 2147483648
    %v2199 = vxor.u32 %v2097, 2147483648
    %v2200 = vxor.u32 %v2099, 2147483648
    %v2201 = vmul.f32 %v2197, 1.442695
    %v2202 = vpow.pop %v2201
    %v2203 = vmul.f32 %v2198, 1.442695
    %v2204 = vpow.pop %v2203
    %v2205 = vmul.f32 %v2199, 1.442695
    %v2206 = vpow.pop %v2205
    %v2207 = vmul.f32 %v2200, 1.442695
    %v2208 = vpow.pop %v2207
    %v2209 = vadd.f32 %v2202, 1.0
    %v2210 = vadd.f32 %v2204, 1.0
    %v2211 = vadd.f32 %v2206, 1.0
    %v2212 = vadd.f32 %v2208, 1.0
    %v2213 = vrcp.pop %v2209
    %v2214 = vmul.f32 %v2209, %v2213
    %v2215 = vsub.f32 1.0, %v2214
    %v2216 = vmul.f32 %v2213, %v2215
    %v2217 = vadd.f32 %v2213, %v2216
    %vm2218 = vweird.f32 %v2209
    %vm2219 = vweird.f32 %v2213
    %vm2220 = vmor %vm2218, %vm2219
    %v2221 = vsel %vm2220, %v2213, %v2217
    %v2222 = vand.u32 2147483647, %v2209
    %vm2223 = vcmp.eq.f32.partialorder %v2222, 8.507059e+37
    %v2224 = vand.u32 %v2209, 2147483648
    %v2225 = vor.u32 1.1754944e-38, %v2224
    %v2226 = vsel %vm2223, %v2225, %v2221
    %v2227 = vmul.f32 1.0, %v2226
    %v2228 = vrcp.pop %v2210
    %v2229 = vmul.f32 %v2210, %v2228
    %v2230 = vsub.f32 1.0, %v2229
    %v2231 = vmul.f32 %v2228, %v2230
    %v2232 = vadd.f32 %v2228, %v2231
    %vm2233 = vweird.f32 %v2210
    %vm2234 = vweird.f32 %v2228
    %vm2235 = vmor %vm2233, %vm2234
    %v2236 = vsel %vm2235, %v2228, %v2232
    %v2237 = vand.u32 2147483647, %v2210
    %vm2238 = vcmp.eq.f32.partialorder %v2237, 8.507059e+37
    %v2239 = vand.u32 %v2210, 2147483648
    %v2240 = vor.u32 1.1754944e-38, %v2239
    %v2241 = vsel %vm2238, %v2240, %v2236
    %v2242 = vmul.f32 1.0, %v2241
    %v2243 = vrcp.pop %v2211
    %v2244 = vmul.f32 %v2211, %v2243
    %v2245 = vsub.f32 1.0, %v2244
    %v2246 = vmul.f32 %v2243, %v2245
    %v2247 = vadd.f32 %v2243, %v2246
    %vm2248 = vweird.f32 %v2211
    %vm2249 = vweird.f32 %v2243
    %vm2250 = vmor %vm2248, %vm2249
    %v2251 = vsel %vm2250, %v2243, %v2247
    %v2252 = vand.u32 2147483647, %v2211
    %vm2253 = vcmp.eq.f32.partialorder %v2252, 8.507059e+37
    %v2254 = vand.u32 %v2211, 2147483648
    %v2255 = vor.u32 1.1754944e-38, %v2254
    %v2256 = vsel %vm2253, %v2255, %v2251
    %v2257 = vmul.f32 1.0, %v2256
    %v2258 = vrcp.pop %v2212
    %v2259 = vmul.f32 %v2212, %v2258
    %v2260 = vsub.f32 1.0, %v2259
    %v2261 = vmul.f32 %v2258, %v2260
    %v2262 = vadd.f32 %v2258, %v2261
    %vm2263 = vweird.f32 %v2212
    %vm2264 = vweird.f32 %v2258
    %vm2265 = vmor %vm2263, %vm2264
    %v2266 = vsel %vm2265, %v2258, %v2262
    %v2267 = vand.u32 2147483647, %v2212
    %vm2268 = vcmp.eq.f32.partialorder %v2267, 8.507059e+37
    %v2269 = vand.u32 %v2212, 2147483648
    %v2270 = vor.u32 1.1754944e-38, %v2269
    %v2271 = vsel %vm2268, %v2270, %v2266
    %v2272 = vmul.f32 1.0, %v2271
    %v2273 = vtanh.pop %v2102
    %v2274 = vtanh.pop %v2104
    %v2275 = vtanh.pop %v2107
    %v2276 = vtanh.pop %v2109
    %v2277 = vxor.u32 %v2112, 2147483648
    %v2278 = vxor.u32 %v2114, 2147483648
    %v2279 = vxor.u32 %v2117, 2147483648
    %v2280 = vxor.u32 %v2119, 2147483648
    %v2281 = vmul.f32 %v2277, 1.442695
    %v2282 = vpow.pop %v2281
    %v2283 = vmul.f32 %v2278, 1.442695
    %v2284 = vpow.pop %v2283
    %v2285 = vmul.f32 %v2279, 1.442695
    %v2286 = vpow.pop %v2285
    %v2287 = vmul.f32 %v2280, 1.442695
    %v2288 = vpow.pop %v2287
    %v2289 = vadd.f32 %v2282, 1.0
    %v2290 = vadd.f32 %v2284, 1.0
    %v2291 = vadd.f32 %v2286, 1.0
    %v2292 = vadd.f32 %v2288, 1.0
    %v2293 = vrcp.pop %v2289
    %v2294 = vmul.f32 %v2289, %v2293
    %v2295 = vsub.f32 1.0, %v2294
    %v2296 = vmul.f32 %v2293, %v2295
    %v2297 = vadd.f32 %v2293, %v2296
    %vm2298 = vweird.f32 %v2289
    %vm2299 = vweird.f32 %v2293
    %vm2300 = vmor %vm2298, %vm2299
    %v2301 = vsel %vm2300, %v2293, %v2297
    %v2302 = vand.u32 2147483647, %v2289
    %vm2303 = vcmp.eq.f32.partialorder %v2302, 8.507059e+37
    %v2304 = vand.u32 %v2289, 2147483648
    %v2305 = vor.u32 1.1754944e-38, %v2304
    %v2306 = vsel %vm2303, %v2305, %v2301
    %v2307 = vmul.f32 1.0, %v2306
    %v2308 = vrcp.pop %v2290
    %v2309 = vmul.f32 %v2290, %v2308
    %v2310 = vsub.f32 1.0, %v2309
    %v2311 = vmul.f32 %v2308, %v2310
    %v2312 = vadd.f32 %v2308, %v2311
    %vm2313 = vweird.f32 %v2290
    %vm2314 = vweird.f32 %v2308
    %vm2315 = vmor %vm2313, %vm2314
    %v2316 = vsel %vm2315, %v2308, %v2312
    %v2317 = vand.u32 2147483647, %v2290
    %vm2318 = vcmp.eq.f32.partialorder %v2317, 8.507059e+37
    %v2319 = vand.u32 %v2290, 2147483648
    %v2320 = vor.u32 1.1754944e-38, %v2319
    %v2321 = vsel %vm2318, %v2320, %v2316
    %v2322 = vmul.f32 1.0, %v2321
    %v2323 = vrcp.pop %v2291
    %v2324 = vmul.f32 %v2291, %v2323
    %v2325 = vsub.f32 1.0, %v2324
    %v2326 = vmul.f32 %v2323, %v2325
    %v2327 = vadd.f32 %v2323, %v2326
    %vm2328 = vweird.f32 %v2291
    %vm2329 = vweird.f32 %v2323
    %vm2330 = vmor %vm2328, %vm2329
    %v2331 = vsel %vm2330, %v2323, %v2327
    %v2332 = vand.u32 2147483647, %v2291
    %vm2333 = vcmp.eq.f32.partialorder %v2332, 8.507059e+37
    %v2334 = vand.u32 %v2291, 2147483648
    %v2335 = vor.u32 1.1754944e-38, %v2334
    %v2336 = vsel %vm2333, %v2335, %v2331
    %v2337 = vmul.f32 1.0, %v2336
    %v2338 = vrcp.pop %v2292
    %v2339 = vmul.f32 %v2292, %v2338
    %v2340 = vsub.f32 1.0, %v2339
    %v2341 = vmul.f32 %v2338, %v2340
    %v2342 = vadd.f32 %v2338, %v2341
    %vm2343 = vweird.f32 %v2292
    %vm2344 = vweird.f32 %v2338
    %vm2345 = vmor %vm2343, %vm2344
    %v2346 = vsel %vm2345, %v2338, %v2342
    %v2347 = vand.u32 2147483647, %v2292
    %vm2348 = vcmp.eq.f32.partialorder %v2347, 8.507059e+37
    %v2349 = vand.u32 %v2292, 2147483648
    %v2350 = vor.u32 1.1754944e-38, %v2349
    %v2351 = vsel %vm2348, %v2350, %v2346
    %v2352 = vmul.f32 1.0, %v2351
    %v2353 = vmul.f32 %v2227, %v1642
    %v2354 = vmul.f32 %v2242, %v1643
    %v2355 = vmul.f32 %v2257, %v1644
    %v2356 = vmul.f32 %v2272, %v1645
    %v2357 = vmul.f32 %v2151, %v2273
    %v2358 = vmul.f32 %v2166, %v2274
    %v2359 = vmul.f32 %v2181, %v2275
    %v2360 = vmul.f32 %v2196, %v2276
    %v2361 = vadd.f32 %v2353, %v2357
    %v2362 = vadd.f32 %v2354, %v2358
    %v2363 = vadd.f32 %v2355, %v2359
    %v2364 = vadd.f32 %v2356, %v2360
    %v2365 = vtanh.pop %v2361
    %v2366 = vtanh.pop %v2362
    %v2367 = vtanh.pop %v2363
    %v2368 = vtanh.pop %v2364
    %v2369 = vmul.f32 %v2307, %v2365
    %v2370 = vmul.f32 %v2322, %v2366
    %v2371 = vmul.f32 %v2337, %v2367
    %v2372 = vmul.f32 %v2352, %v2368
    %v2373 = vpack.c.bf16 %v2021, %v2020
    %v2374 = vpack.c.bf16 %v2023, %v2022
    %v2375 = vpack.c.bf16 %v2370, %v2369
    %v2376 = vpack.c.bf16 %v2372, %v2371
    %2377 = vmatpush.bf16.msra.mxu0 0
    %2378 = vmatpush.bf16.msra.mxu0 0
    %2379 = vmatpush.bf16.msra.mxu0 0
    %2380 = vmatpush.bf16.msra.mxu0 0
    %2381 = vmatpush.bf16.msra.mxu0 0
    %2382 = vmatpush.bf16.msra.mxu0 0
    %2383 = vmatpush.bf16.msra.mxu0 %v2376
    %2384 = vmatpush.bf16.msra.mxu0 %v2375
    %2385 = vmatmul.bf16.gmra.mxu0 %v756
    %v2386 = vpop.f32.mrf.mxu0
    %v2387 = vadd.f32 0.0, %v2386
    %v2388 = vpop.f32.mrf.mxu0
    %v2389 = vadd.f32 0.0, %v2388
    %2390 = vmatmul.bf16.gmra.mxu0 %v759
    %v2391 = vpop.f32.mrf.mxu0
    %v2392 = vadd.f32 0.0, %v2391
    %v2393 = vpop.f32.mrf.mxu0
    %v2394 = vadd.f32 0.0, %v2393
    %2395 = vmatmul.bf16.gmra.mxu0 %v762
    %v2396 = vpop.f32.mrf.mxu0
    %v2397 = vadd.f32 0.0, %v2396
    %v2398 = vpop.f32.mrf.mxu0
    %v2399 = vadd.f32 0.0, %v2398
    %2400 = vmatmul.bf16.gmra.mxu0 %v765
    %v2401 = vpop.f32.mrf.mxu0
    %v2402 = vadd.f32 0.0, %v2401
    %v2403 = vpop.f32.mrf.mxu0
    %v2404 = vadd.f32 0.0, %v2403
    %2405 = vmatmul.bf16.gmra.mxu0 %v768
    %v2406 = vpop.f32.mrf.mxu0
    %v2407 = vadd.f32 0.0, %v2406
    %v2408 = vpop.f32.mrf.mxu0
    %v2409 = vadd.f32 0.0, %v2408
    %2410 = vmatmul.bf16.gmra.mxu0 %v771
    %v2411 = vpop.f32.mrf.mxu0
    %v2412 = vadd.f32 0.0, %v2411
    %v2413 = vpop.f32.mrf.mxu0
    %v2414 = vadd.f32 0.0, %v2413
    %2415 = vmatmul.bf16.gmra.mxu0 %v774
    %v2416 = vpop.f32.mrf.mxu0
    %v2417 = vadd.f32 0.0, %v2416
    %v2418 = vpop.f32.mrf.mxu0
    %v2419 = vadd.f32 0.0, %v2418
    %2420 = vmatmul.bf16.gmra.mxu0 %v777
    %v2421 = vpop.f32.mrf.mxu0
    %v2422 = vadd.f32 0.0, %v2421
    %v2423 = vpop.f32.mrf.mxu0
    %v2424 = vadd.f32 0.0, %v2423
    %2425 = vdwg.mxu0
    %2426 = vmatpush.bf16.msra.mxu0 0
    %2427 = vmatpush.bf16.msra.mxu0 0
    %2428 = vmatpush.bf16.msra.mxu0 0
    %2429 = vmatpush.bf16.msra.mxu0 0
    %2430 = vmatpush.bf16.msra.mxu0 0
    %2431 = vmatpush.bf16.msra.mxu0 0
    %2432 = vmatpush.bf16.msra.mxu0 %v2374
    %2433 = vmatpush.bf16.msra.mxu0 %v2373
    %2434 = vmatmul.bf16.gmra.mxu0 %v869
    %v2435 = vpop.f32.mrf.mxu0
    %v2436 = vadd.f32 %v2387, %v2435
    %v2437 = vpop.f32.mrf.mxu0
    %v2438 = vadd.f32 %v2389, %v2437
    %2439 = vmatmul.bf16.gmra.mxu0 %v872
    %v2440 = vpop.f32.mrf.mxu0
    %v2441 = vadd.f32 %v2392, %v2440
    %v2442 = vpop.f32.mrf.mxu0
    %v2443 = vadd.f32 %v2394, %v2442
    %2444 = vmatmul.bf16.gmra.mxu0 %v875
    %v2445 = vpop.f32.mrf.mxu0
    %v2446 = vadd.f32 %v2397, %v2445
    %v2447 = vpop.f32.mrf.mxu0
    %v2448 = vadd.f32 %v2399, %v2447
    %2449 = vmatmul.bf16.gmra.mxu0 %v878
    %v2450 = vpop.f32.mrf.mxu0
    %v2451 = vadd.f32 %v2402, %v2450
    %v2452 = vpop.f32.mrf.mxu0
    %v2453 = vadd.f32 %v2404, %v2452
    %2454 = vmatmul.bf16.gmra.mxu0 %v881
    %v2455 = vpop.f32.mrf.mxu0
    %v2456 = vadd.f32 %v2407, %v2455
    %v2457 = vpop.f32.mrf.mxu0
    %v2458 = vadd.f32 %v2409, %v2457
    %2459 = vmatmul.bf16.gmra.mxu0 %v884
    %v2460 = vpop.f32.mrf.mxu0
    %v2461 = vadd.f32 %v2412, %v2460
    %v2462 = vpop.f32.mrf.mxu0
    %v2463 = vadd.f32 %v2414, %v2462
    %2464 = vmatmul.bf16.gmra.mxu0 %v887
    %v2465 = vpop.f32.mrf.mxu0
    %v2466 = vadd.f32 %v2417, %v2465
    %v2467 = vpop.f32.mrf.mxu0
    %v2468 = vadd.f32 %v2419, %v2467
    %2469 = vmatmul.bf16.gmra.mxu0 %v890
    %v2470 = vpop.f32.mrf.mxu0
    %v2471 = vadd.f32 %v2422, %v2470
    %v2472 = vpop.f32.mrf.mxu0
    %v2473 = vadd.f32 %v2424, %v2472
    %2474 = vdwg.mxu0
    %v2475 = vadd.f32 %v2436, %v944
    %v2476 = vadd.f32 %v2438, %v949
    %v2477 = vadd.f32 %v2441, %v954
    %v2478 = vadd.f32 %v2443, %v959
    %v2479 = vadd.f32 %v2446, %v964
    %v2480 = vadd.f32 %v2448, %v969
    %v2481 = vadd.f32 %v2451, %v974
    %v2482 = vadd.f32 %v2453, %v979
    %v2483 = vadd.f32 %v2456, %v984
    %v2484 = vadd.f32 %v2458, %v989
    %v2485 = vadd.f32 %v2461, %v994
    %v2486 = vadd.f32 %v2463, %v999
    %v2487 = vadd.f32 %v2466, %v1004
    %v2488 = vadd.f32 %v2468, %v1009
    %v2489 = vadd.f32 %v2471, %v1014
    %v2490 = vadd.f32 %v2473, %v1019
    %v2491 = vxor.u32 %v2475, 2147483648
    %v2492 = vxor.u32 %v2476, 2147483648
    %v2493 = vxor.u32 %v2477, 2147483648
    %v2494 = vxor.u32 %v2478, 2147483648
    %v2495 = vmul.f32 %v2491, 1.442695
    %v2496 = vpow.pop %v2495
    %v2497 = vmul.f32 %v2492, 1.442695
    %v2498 = vpow.pop %v2497
    %v2499 = vmul.f32 %v2493, 1.442695
    %v2500 = vpow.pop %v2499
    %v2501 = vmul.f32 %v2494, 1.442695
    %v2502 = vpow.pop %v2501
    %v2503 = vadd.f32 %v2496, 1.0
    %v2504 = vadd.f32 %v2498, 1.0
    %v2505 = vadd.f32 %v2500, 1.0
    %v2506 = vadd.f32 %v2502, 1.0
    %v2507 = vrcp.pop %v2503
    %v2508 = vmul.f32 %v2503, %v2507
    %v2509 = vsub.f32 1.0, %v2508
    %v2510 = vmul.f32 %v2507, %v2509
    %v2511 = vadd.f32 %v2507, %v2510
    %vm2512 = vweird.f32 %v2503
    %vm2513 = vweird.f32 %v2507
    %vm2514 = vmor %vm2512, %vm2513
    %v2515 = vsel %vm2514, %v2507, %v2511
    %v2516 = vand.u32 2147483647, %v2503
    %vm2517 = vcmp.eq.f32.partialorder %v2516, 8.507059e+37
    %v2518 = vand.u32 %v2503, 2147483648
    %v2519 = vor.u32 1.1754944e-38, %v2518
    %v2520 = vsel %vm2517, %v2519, %v2515
    %v2521 = vmul.f32 1.0, %v2520
    %v2522 = vrcp.pop %v2504
    %v2523 = vmul.f32 %v2504, %v2522
    %v2524 = vsub.f32 1.0, %v2523
    %v2525 = vmul.f32 %v2522, %v2524
    %v2526 = vadd.f32 %v2522, %v2525
    %vm2527 = vweird.f32 %v2504
    %vm2528 = vweird.f32 %v2522
    %vm2529 = vmor %vm2527, %vm2528
    %v2530 = vsel %vm2529, %v2522, %v2526
    %v2531 = vand.u32 2147483647, %v2504
    %vm2532 = vcmp.eq.f32.partialorder %v2531, 8.507059e+37
    %v2533 = vand.u32 %v2504, 2147483648
    %v2534 = vor.u32 1.1754944e-38, %v2533
    %v2535 = vsel %vm2532, %v2534, %v2530
    %v2536 = vmul.f32 1.0, %v2535
    %v2537 = vrcp.pop %v2505
    %v2538 = vmul.f32 %v2505, %v2537
    %v2539 = vsub.f32 1.0, %v2538
    %v2540 = vmul.f32 %v2537, %v2539
    %v2541 = vadd.f32 %v2537, %v2540
    %vm2542 = vweird.f32 %v2505
    %vm2543 = vweird.f32 %v2537
    %vm2544 = vmor %vm2542, %vm2543
    %v2545 = vsel %vm2544, %v2537, %v2541
    %v2546 = vand.u32 2147483647, %v2505
    %vm2547 = vcmp.eq.f32.partialorder %v2546, 8.507059e+37
    %v2548 = vand.u32 %v2505, 2147483648
    %v2549 = vor.u32 1.1754944e-38, %v2548
    %v2550 = vsel %vm2547, %v2549, %v2545
    %v2551 = vmul.f32 1.0, %v2550
    %v2552 = vrcp.pop %v2506
    %v2553 = vmul.f32 %v2506, %v2552
    %v2554 = vsub.f32 1.0, %v2553
    %v2555 = vmul.f32 %v2552, %v2554
    %v2556 = vadd.f32 %v2552, %v2555
    %vm2557 = vweird.f32 %v2506
    %vm2558 = vweird.f32 %v2552
    %vm2559 = vmor %vm2557, %vm2558
    %v2560 = vsel %vm2559, %v2552, %v2556
    %v2561 = vand.u32 2147483647, %v2506
    %vm2562 = vcmp.eq.f32.partialorder %v2561, 8.507059e+37
    %v2563 = vand.u32 %v2506, 2147483648
    %v2564 = vor.u32 1.1754944e-38, %v2563
    %v2565 = vsel %vm2562, %v2564, %v2560
    %v2566 = vmul.f32 1.0, %v2565
    %v2567 = vxor.u32 %v2479, 2147483648
    %v2568 = vxor.u32 %v2480, 2147483648
    %v2569 = vxor.u32 %v2481, 2147483648
    %v2570 = vxor.u32 %v2482, 2147483648
    %v2571 = vmul.f32 %v2567, 1.442695
    %v2572 = vpow.pop %v2571
    %v2573 = vmul.f32 %v2568, 1.442695
    %v2574 = vpow.pop %v2573
    %v2575 = vmul.f32 %v2569, 1.442695
    %v2576 = vpow.pop %v2575
    %v2577 = vmul.f32 %v2570, 1.442695
    %v2578 = vpow.pop %v2577
    %v2579 = vadd.f32 %v2572, 1.0
    %v2580 = vadd.f32 %v2574, 1.0
    %v2581 = vadd.f32 %v2576, 1.0
    %v2582 = vadd.f32 %v2578, 1.0
    %v2583 = vrcp.pop %v2579
    %v2584 = vmul.f32 %v2579, %v2583
    %v2585 = vsub.f32 1.0, %v2584
    %v2586 = vmul.f32 %v2583, %v2585
    %v2587 = vadd.f32 %v2583, %v2586
    %vm2588 = vweird.f32 %v2579
    %vm2589 = vweird.f32 %v2583
    %vm2590 = vmor %vm2588, %vm2589
    %v2591 = vsel %vm2590, %v2583, %v2587
    %v2592 = vand.u32 2147483647, %v2579
    %vm2593 = vcmp.eq.f32.partialorder %v2592, 8.507059e+37
    %v2594 = vand.u32 %v2579, 2147483648
    %v2595 = vor.u32 1.1754944e-38, %v2594
    %v2596 = vsel %vm2593, %v2595, %v2591
    %v2597 = vmul.f32 1.0, %v2596
    %v2598 = vrcp.pop %v2580
    %v2599 = vmul.f32 %v2580, %v2598
    %v2600 = vsub.f32 1.0, %v2599
    %v2601 = vmul.f32 %v2598, %v2600
    %v2602 = vadd.f32 %v2598, %v2601
    %vm2603 = vweird.f32 %v2580
    %vm2604 = vweird.f32 %v2598
    %vm2605 = vmor %vm2603, %vm2604
    %v2606 = vsel %vm2605, %v2598, %v2602
    %v2607 = vand.u32 2147483647, %v2580
    %vm2608 = vcmp.eq.f32.partialorder %v2607, 8.507059e+37
    %v2609 = vand.u32 %v2580, 2147483648
    %v2610 = vor.u32 1.1754944e-38, %v2609
    %v2611 = vsel %vm2608, %v2610, %v2606
    %v2612 = vmul.f32 1.0, %v2611
    %v2613 = vrcp.pop %v2581
    %v2614 = vmul.f32 %v2581, %v2613
    %v2615 = vsub.f32 1.0, %v2614
    %v2616 = vmul.f32 %v2613, %v2615
    %v2617 = vadd.f32 %v2613, %v2616
    %vm2618 = vweird.f32 %v2581
    %vm2619 = vweird.f32 %v2613
    %vm2620 = vmor %vm2618, %vm2619
    %v2621 = vsel %vm2620, %v2613, %v2617
    %v2622 = vand.u32 2147483647, %v2581
    %vm2623 = vcmp.eq.f32.partialorder %v2622, 8.507059e+37
    %v2624 = vand.u32 %v2581, 2147483648
    %v2625 = vor.u32 1.1754944e-38, %v2624
    %v2626 = vsel %vm2623, %v2625, %v2621
    %v2627 = vmul.f32 1.0, %v2626
    %v2628 = vrcp.pop %v2582
    %v2629 = vmul.f32 %v2582, %v2628
    %v2630 = vsub.f32 1.0, %v2629
    %v2631 = vmul.f32 %v2628, %v2630
    %v2632 = vadd.f32 %v2628, %v2631
    %vm2633 = vweird.f32 %v2582
    %vm2634 = vweird.f32 %v2628
    %vm2635 = vmor %vm2633, %vm2634
    %v2636 = vsel %vm2635, %v2628, %v2632
    %v2637 = vand.u32 2147483647, %v2582
    %vm2638 = vcmp.eq.f32.partialorder %v2637, 8.507059e+37
    %v2639 = vand.u32 %v2582, 2147483648
    %v2640 = vor.u32 1.1754944e-38, %v2639
    %v2641 = vsel %vm2638, %v2640, %v2636
    %v2642 = vmul.f32 1.0, %v2641
    %v2643 = vtanh.pop %v2483
    %v2644 = vtanh.pop %v2484
    %v2645 = vtanh.pop %v2485
    %v2646 = vtanh.pop %v2486
    %v2647 = vxor.u32 %v2487, 2147483648
    %v2648 = vxor.u32 %v2488, 2147483648
    %v2649 = vxor.u32 %v2489, 2147483648
    %v2650 = vxor.u32 %v2490, 2147483648
    %v2651 = vmul.f32 %v2647, 1.442695
    %v2652 = vpow.pop %v2651
    %v2653 = vmul.f32 %v2648, 1.442695
    %v2654 = vpow.pop %v2653
    %v2655 = vmul.f32 %v2649, 1.442695
    %v2656 = vpow.pop %v2655
    %v2657 = vmul.f32 %v2650, 1.442695
    %v2658 = vpow.pop %v2657
    %v2659 = vadd.f32 %v2652, 1.0
    %v2660 = vadd.f32 %v2654, 1.0
    %v2661 = vadd.f32 %v2656, 1.0
    %v2662 = vadd.f32 %v2658, 1.0
    %v2663 = vrcp.pop %v2659
    %v2664 = vmul.f32 %v2659, %v2663
    %v2665 = vsub.f32 1.0, %v2664
    %v2666 = vmul.f32 %v2663, %v2665
    %v2667 = vadd.f32 %v2663, %v2666
    %vm2668 = vweird.f32 %v2659
    %vm2669 = vweird.f32 %v2663
    %vm2670 = vmor %vm2668, %vm2669
    %v2671 = vsel %vm2670, %v2663, %v2667
    %v2672 = vand.u32 2147483647, %v2659
    %vm2673 = vcmp.eq.f32.partialorder %v2672, 8.507059e+37
    %v2674 = vand.u32 %v2659, 2147483648
    %v2675 = vor.u32 1.1754944e-38, %v2674
    %v2676 = vsel %vm2673, %v2675, %v2671
    %v2677 = vmul.f32 1.0, %v2676
    %v2678 = vrcp.pop %v2660
    %v2679 = vmul.f32 %v2660, %v2678
    %v2680 = vsub.f32 1.0, %v2679
    %v2681 = vmul.f32 %v2678, %v2680
    %v2682 = vadd.f32 %v2678, %v2681
    %vm2683 = vweird.f32 %v2660
    %vm2684 = vweird.f32 %v2678
    %vm2685 = vmor %vm2683, %vm2684
    %v2686 = vsel %vm2685, %v2678, %v2682
    %v2687 = vand.u32 2147483647, %v2660
    %vm2688 = vcmp.eq.f32.partialorder %v2687, 8.507059e+37
    %v2689 = vand.u32 %v2660, 2147483648
    %v2690 = vor.u32 1.1754944e-38, %v2689
    %v2691 = vsel %vm2688, %v2690, %v2686
    %v2692 = vmul.f32 1.0, %v2691
    %v2693 = vrcp.pop %v2661
    %v2694 = vmul.f32 %v2661, %v2693
    %v2695 = vsub.f32 1.0, %v2694
    %v2696 = vmul.f32 %v2693, %v2695
    %v2697 = vadd.f32 %v2693, %v2696
    %vm2698 = vweird.f32 %v2661
    %vm2699 = vweird.f32 %v2693
    %vm2700 = vmor %vm2698, %vm2699
    %v2701 = vsel %vm2700, %v2693, %v2697
    %v2702 = vand.u32 2147483647, %v2661
    %vm2703 = vcmp.eq.f32.partialorder %v2702, 8.507059e+37
    %v2704 = vand.u32 %v2661, 2147483648
    %v2705 = vor.u32 1.1754944e-38, %v2704
    %v2706 = vsel %vm2703, %v2705, %v2701
    %v2707 = vmul.f32 1.0, %v2706
    %v2708 = vrcp.pop %v2662
    %v2709 = vmul.f32 %v2662, %v2708
    %v2710 = vsub.f32 1.0, %v2709
    %v2711 = vmul.f32 %v2708, %v2710
    %v2712 = vadd.f32 %v2708, %v2711
    %vm2713 = vweird.f32 %v2662
    %vm2714 = vweird.f32 %v2708
    %vm2715 = vmor %vm2713, %vm2714
    %v2716 = vsel %vm2715, %v2708, %v2712
    %v2717 = vand.u32 2147483647, %v2662
    %vm2718 = vcmp.eq.f32.partialorder %v2717, 8.507059e+37
    %v2719 = vand.u32 %v2662, 2147483648
    %v2720 = vor.u32 1.1754944e-38, %v2719
    %v2721 = vsel %vm2718, %v2720, %v2716
    %v2722 = vmul.f32 1.0, %v2721
    %v2723 = vmul.f32 %v2597, %v2012
    %v2724 = vmul.f32 %v2612, %v2013
    %v2725 = vmul.f32 %v2627, %v2014
    %v2726 = vmul.f32 %v2642, %v2015
    %v2727 = vmul.f32 %v2521, %v2643
    %v2728 = vmul.f32 %v2536, %v2644
    %v2729 = vmul.f32 %v2551, %v2645
    %v2730 = vmul.f32 %v2566, %v2646
    %v2731 = vadd.f32 %v2723, %v2727
    %v2732 = vadd.f32 %v2724, %v2728
    %v2733 = vadd.f32 %v2725, %v2729
    %v2734 = vadd.f32 %v2726, %v2730
    %v2735 = vtanh.pop %v2731
    %v2736 = vtanh.pop %v2732
    %v2737 = vtanh.pop %v2733
    %v2738 = vtanh.pop %v2734
    %v2739 = vmul.f32 %v2677, %v2735
    %v2740 = vmul.f32 %v2692, %v2736
    %v2741 = vmul.f32 %v2707, %v2737
    %v2742 = vmul.f32 %v2722, %v2738
    %2743 = vrot.lane.b32.xlu0 %v308, 80
    %v2744 = vpop.permute.xlu0 %2743
    %2745 = vrot.lane.b32.xlu0 %v310, 80
    %v2746 = vpop.permute.xlu0 %2745
    %2747 = vrot.lane.b32.xlu0 %v313, 80
    %v2748 = vpop.permute.xlu0 %2747
    %2749 = vrot.lane.b32.xlu0 %v315, 80
    %v2750 = vpop.permute.xlu0 %2749
    %2751 = vrot.lane.b32.xlu0 %v318, 80
    %v2752 = vpop.permute.xlu0 %2751
    %2753 = vrot.lane.b32.xlu0 %v320, 80
    %v2754 = vpop.permute.xlu0 %2753
    %2755 = vrot.lane.b32.xlu0 %v323, 80
    %v2756 = vpop.permute.xlu0 %2755
    %2757 = vrot.lane.b32.xlu0 %v325, 80
    %v2758 = vpop.permute.xlu0 %2757
    %2759 = vrot.lane.b32.xlu0 %v328, 80
    %v2760 = vpop.permute.xlu0 %2759
    %2761 = vrot.lane.b32.xlu0 %v330, 80
    %v2762 = vpop.permute.xlu0 %2761
    %2763 = vrot.lane.b32.xlu0 %v333, 80
    %v2764 = vpop.permute.xlu0 %2763
    %2765 = vrot.lane.b32.xlu0 %v335, 80
    %v2766 = vpop.permute.xlu0 %2765
    %2767 = vrot.lane.b32.xlu0 %v338, 80
    %v2768 = vpop.permute.xlu0 %2767
    %2769 = vrot.lane.b32.xlu0 %v340, 80
    %v2770 = vpop.permute.xlu0 %2769
    %2771 = vrot.lane.b32.xlu0 %v343, 80
    %v2772 = vpop.permute.xlu0 %2771
    %2773 = vrot.lane.b32.xlu0 %v345, 80
    %v2774 = vpop.permute.xlu0 %2773
    %2791 = vmatpush.bf16.msra.mxu0 0
    %2792 = vmatpush.bf16.msra.mxu0 0
    %2793 = vmatpush.bf16.msra.mxu0 0
    %2794 = vmatpush.bf16.msra.mxu0 0
    %2795 = vmatpush.bf16.msra.mxu0 0
    %2796 = vmatpush.bf16.msra.mxu0 0
    %2797 = vmatpush.bf16.msra.mxu0 %v2376
    %2798 = vmatpush.bf16.msra.mxu0 %v2375
    %2799 = vmatmul.bf16.gmra.mxu0 %v389
    %v2800 = vpop.f32.mrf.mxu0
    %v2801 = vadd.f32 %v2744, %v2800
    %v2802 = vpop.f32.mrf.mxu0
    %v2803 = vadd.f32 %v2746, %v2802
    %2804 = vmatmul.bf16.gmra.mxu0 %v392
    %v2805 = vpop.f32.mrf.mxu0
    %v2806 = vadd.f32 %v2748, %v2805
    %v2807 = vpop.f32.mrf.mxu0
    %v2808 = vadd.f32 %v2750, %v2807
    %2809 = vmatmul.bf16.gmra.mxu0 %v395
    %v2810 = vpop.f32.mrf.mxu0
    %v2811 = vadd.f32 %v2752, %v2810
    %v2812 = vpop.f32.mrf.mxu0
    %v2813 = vadd.f32 %v2754, %v2812
    %2814 = vmatmul.bf16.gmra.mxu0 %v398
    %v2815 = vpop.f32.mrf.mxu0
    %v2816 = vadd.f32 %v2756, %v2815
    %v2817 = vpop.f32.mrf.mxu0
    %v2818 = vadd.f32 %v2758, %v2817
    %2819 = vmatmul.bf16.gmra.mxu0 %v401
    %v2820 = vpop.f32.mrf.mxu0
    %v2821 = vadd.f32 %v2760, %v2820
    %v2822 = vpop.f32.mrf.mxu0
    %v2823 = vadd.f32 %v2762, %v2822
    %2824 = vmatmul.bf16.gmra.mxu0 %v404
    %v2825 = vpop.f32.mrf.mxu0
    %v2826 = vadd.f32 %v2764, %v2825
    %v2827 = vpop.f32.mrf.mxu0
    %v2828 = vadd.f32 %v2766, %v2827
    %2829 = vmatmul.bf16.gmra.mxu0 %v407
    %v2830 = vpop.f32.mrf.mxu0
    %v2831 = vadd.f32 %v2768, %v2830
    %v2832 = vpop.f32.mrf.mxu0
    %v2833 = vadd.f32 %v2770, %v2832
    %2834 = vmatmul.bf16.gmra.mxu0 %v410
    %v2835 = vpop.f32.mrf.mxu0
    %v2836 = vadd.f32 %v2772, %v2835
    %v2837 = vpop.f32.mrf.mxu0
    %v2838 = vadd.f32 %v2774, %v2837
    %2839 = vdwg.mxu0
    %v2840 = vxor.u32 %v2801, 2147483648
    %v2841 = vxor.u32 %v2803, 2147483648
    %v2842 = vxor.u32 %v2806, 2147483648
    %v2843 = vxor.u32 %v2808, 2147483648
    %v2844 = vmul.f32 %v2840, 1.442695
    %v2845 = vpow.pop %v2844
    %v2846 = vmul.f32 %v2841, 1.442695
    %v2847 = vpow.pop %v2846
    %v2848 = vmul.f32 %v2842, 1.442695
    %v2849 = vpow.pop %v2848
    %v2850 = vmul.f32 %v2843, 1.442695
    %v2851 = vpow.pop %v2850
    %v2852 = vadd.f32 %v2845, 1.0
    %v2853 = vadd.f32 %v2847, 1.0
    %v2854 = vadd.f32 %v2849, 1.0
    %v2855 = vadd.f32 %v2851, 1.0
    %v2856 = vrcp.pop %v2852
    %v2857 = vmul.f32 %v2852, %v2856
    %v2858 = vsub.f32 1.0, %v2857
    %v2859 = vmul.f32 %v2856, %v2858
    %v2860 = vadd.f32 %v2856, %v2859
    %vm2861 = vweird.f32 %v2852
    %vm2862 = vweird.f32 %v2856
    %vm2863 = vmor %vm2861, %vm2862
    %v2864 = vsel %vm2863, %v2856, %v2860
    %v2865 = vand.u32 2147483647, %v2852
    %vm2866 = vcmp.eq.f32.partialorder %v2865, 8.507059e+37
    %v2867 = vand.u32 %v2852, 2147483648
    %v2868 = vor.u32 1.1754944e-38, %v2867
    %v2869 = vsel %vm2866, %v2868, %v2864
    %v2870 = vmul.f32 1.0, %v2869
    %v2871 = vrcp.pop %v2853
    %v2872 = vmul.f32 %v2853, %v2871
    %v2873 = vsub.f32 1.0, %v2872
    %v2874 = vmul.f32 %v2871, %v2873
    %v2875 = vadd.f32 %v2871, %v2874
    %vm2876 = vweird.f32 %v2853
    %vm2877 = vweird.f32 %v2871
    %vm2878 = vmor %vm2876, %vm2877
    %v2879 = vsel %vm2878, %v2871, %v2875
    %v2880 = vand.u32 2147483647, %v2853
    %vm2881 = vcmp.eq.f32.partialorder %v2880, 8.507059e+37
    %v2882 = vand.u32 %v2853, 2147483648
    %v2883 = vor.u32 1.1754944e-38, %v2882
    %v2884 = vsel %vm2881, %v2883, %v2879
    %v2885 = vmul.f32 1.0, %v2884
    %v2886 = vrcp.pop %v2854
    %v2887 = vmul.f32 %v2854, %v2886
    %v2888 = vsub.f32 1.0, %v2887
    %v2889 = vmul.f32 %v2886, %v2888
    %v2890 = vadd.f32 %v2886, %v2889
    %vm2891 = vweird.f32 %v2854
    %vm2892 = vweird.f32 %v2886
    %vm2893 = vmor %vm2891, %vm2892
    %v2894 = vsel %vm2893, %v2886, %v2890
    %v2895 = vand.u32 2147483647, %v2854
    %vm2896 = vcmp.eq.f32.partialorder %v2895, 8.507059e+37
    %v2897 = vand.u32 %v2854, 2147483648
    %v2898 = vor.u32 1.1754944e-38, %v2897
    %v2899 = vsel %vm2896, %v2898, %v2894
    %v2900 = vmul.f32 1.0, %v2899
    %v2901 = vrcp.pop %v2855
    %v2902 = vmul.f32 %v2855, %v2901
    %v2903 = vsub.f32 1.0, %v2902
    %v2904 = vmul.f32 %v2901, %v2903
    %v2905 = vadd.f32 %v2901, %v2904
    %vm2906 = vweird.f32 %v2855
    %vm2907 = vweird.f32 %v2901
    %vm2908 = vmor %vm2906, %vm2907
    %v2909 = vsel %vm2908, %v2901, %v2905
    %v2910 = vand.u32 2147483647, %v2855
    %vm2911 = vcmp.eq.f32.partialorder %v2910, 8.507059e+37
    %v2912 = vand.u32 %v2855, 2147483648
    %v2913 = vor.u32 1.1754944e-38, %v2912
    %v2914 = vsel %vm2911, %v2913, %v2909
    %v2915 = vmul.f32 1.0, %v2914
    %v2916 = vxor.u32 %v2811, 2147483648
    %v2917 = vxor.u32 %v2813, 2147483648
    %v2918 = vxor.u32 %v2816, 2147483648
    %v2919 = vxor.u32 %v2818, 2147483648
    %v2920 = vmul.f32 %v2916, 1.442695
    %v2921 = vpow.pop %v2920
    %v2922 = vmul.f32 %v2917, 1.442695
    %v2923 = vpow.pop %v2922
    %v2924 = vmul.f32 %v2918, 1.442695
    %v2925 = vpow.pop %v2924
    %v2926 = vmul.f32 %v2919, 1.442695
    %v2927 = vpow.pop %v2926
    %v2928 = vadd.f32 %v2921, 1.0
    %v2929 = vadd.f32 %v2923, 1.0
    %v2930 = vadd.f32 %v2925, 1.0
    %v2931 = vadd.f32 %v2927, 1.0
    %v2932 = vrcp.pop %v2928
    %v2933 = vmul.f32 %v2928, %v2932
    %v2934 = vsub.f32 1.0, %v2933
    %v2935 = vmul.f32 %v2932, %v2934
    %v2936 = vadd.f32 %v2932, %v2935
    %vm2937 = vweird.f32 %v2928
    %vm2938 = vweird.f32 %v2932
    %vm2939 = vmor %vm2937, %vm2938
    %v2940 = vsel %vm2939, %v2932, %v2936
    %v2941 = vand.u32 2147483647, %v2928
    %vm2942 = vcmp.eq.f32.partialorder %v2941, 8.507059e+37
    %v2943 = vand.u32 %v2928, 2147483648
    %v2944 = vor.u32 1.1754944e-38, %v2943
    %v2945 = vsel %vm2942, %v2944, %v2940
    %v2946 = vmul.f32 1.0, %v2945
    %v2947 = vrcp.pop %v2929
    %v2948 = vmul.f32 %v2929, %v2947
    %v2949 = vsub.f32 1.0, %v2948
    %v2950 = vmul.f32 %v2947, %v2949
    %v2951 = vadd.f32 %v2947, %v2950
    %vm2952 = vweird.f32 %v2929
    %vm2953 = vweird.f32 %v2947
    %vm2954 = vmor %vm2952, %vm2953
    %v2955 = vsel %vm2954, %v2947, %v2951
    %v2956 = vand.u32 2147483647, %v2929
    %vm2957 = vcmp.eq.f32.partialorder %v2956, 8.507059e+37
    %v2958 = vand.u32 %v2929, 2147483648
    %v2959 = vor.u32 1.1754944e-38, %v2958
    %v2960 = vsel %vm2957, %v2959, %v2955
    %v2961 = vmul.f32 1.0, %v2960
    %v2962 = vrcp.pop %v2930
    %v2963 = vmul.f32 %v2930, %v2962
    %v2964 = vsub.f32 1.0, %v2963
    %v2965 = vmul.f32 %v2962, %v2964
    %v2966 = vadd.f32 %v2962, %v2965
    %vm2967 = vweird.f32 %v2930
    %vm2968 = vweird.f32 %v2962
    %vm2969 = vmor %vm2967, %vm2968
    %v2970 = vsel %vm2969, %v2962, %v2966
    %v2971 = vand.u32 2147483647, %v2930
    %vm2972 = vcmp.eq.f32.partialorder %v2971, 8.507059e+37
    %v2973 = vand.u32 %v2930, 2147483648
    %v2974 = vor.u32 1.1754944e-38, %v2973
    %v2975 = vsel %vm2972, %v2974, %v2970
    %v2976 = vmul.f32 1.0, %v2975
    %v2977 = vrcp.pop %v2931
    %v2978 = vmul.f32 %v2931, %v2977
    %v2979 = vsub.f32 1.0, %v2978
    %v2980 = vmul.f32 %v2977, %v2979
    %v2981 = vadd.f32 %v2977, %v2980
    %vm2982 = vweird.f32 %v2931
    %vm2983 = vweird.f32 %v2977
    %vm2984 = vmor %vm2982, %vm2983
    %v2985 = vsel %vm2984, %v2977, %v2981
    %v2986 = vand.u32 2147483647, %v2931
    %vm2987 = vcmp.eq.f32.partialorder %v2986, 8.507059e+37
    %v2988 = vand.u32 %v2931, 2147483648
    %v2989 = vor.u32 1.1754944e-38, %v2988
    %v2990 = vsel %vm2987, %v2989, %v2985
    %v2991 = vmul.f32 1.0, %v2990
    %v2992 = vtanh.pop %v2821
    %v2993 = vtanh.pop %v2823
    %v2994 = vtanh.pop %v2826
    %v2995 = vtanh.pop %v2828
    %v2996 = vxor.u32 %v2831, 2147483648
    %v2997 = vxor.u32 %v2833, 2147483648
    %v2998 = vxor.u32 %v2836, 2147483648
    %v2999 = vxor.u32 %v2838, 2147483648
    %v3000 = vmul.f32 %v2996, 1.442695
    %v3001 = vpow.pop %v3000
    %v3002 = vmul.f32 %v2997, 1.442695
    %v3003 = vpow.pop %v3002
    %v3004 = vmul.f32 %v2998, 1.442695
    %v3005 = vpow.pop %v3004
    %v3006 = vmul.f32 %v2999, 1.442695
    %v3007 = vpow.pop %v3006
    %v3008 = vadd.f32 %v3001, 1.0
    %v3009 = vadd.f32 %v3003, 1.0
    %v3010 = vadd.f32 %v3005, 1.0
    %v3011 = vadd.f32 %v3007, 1.0
    %v3012 = vrcp.pop %v3008
    %v3013 = vmul.f32 %v3008, %v3012
    %v3014 = vsub.f32 1.0, %v3013
    %v3015 = vmul.f32 %v3012, %v3014
    %v3016 = vadd.f32 %v3012, %v3015
    %vm3017 = vweird.f32 %v3008
    %vm3018 = vweird.f32 %v3012
    %vm3019 = vmor %vm3017, %vm3018
    %v3020 = vsel %vm3019, %v3012, %v3016
    %v3021 = vand.u32 2147483647, %v3008
    %vm3022 = vcmp.eq.f32.partialorder %v3021, 8.507059e+37
    %v3023 = vand.u32 %v3008, 2147483648
    %v3024 = vor.u32 1.1754944e-38, %v3023
    %v3025 = vsel %vm3022, %v3024, %v3020
    %v3026 = vmul.f32 1.0, %v3025
    %v3027 = vrcp.pop %v3009
    %v3028 = vmul.f32 %v3009, %v3027
    %v3029 = vsub.f32 1.0, %v3028
    %v3030 = vmul.f32 %v3027, %v3029
    %v3031 = vadd.f32 %v3027, %v3030
    %vm3032 = vweird.f32 %v3009
    %vm3033 = vweird.f32 %v3027
    %vm3034 = vmor %vm3032, %vm3033
    %v3035 = vsel %vm3034, %v3027, %v3031
    %v3036 = vand.u32 2147483647, %v3009
    %vm3037 = vcmp.eq.f32.partialorder %v3036, 8.507059e+37
    %v3038 = vand.u32 %v3009, 2147483648
    %v3039 = vor.u32 1.1754944e-38, %v3038
    %v3040 = vsel %vm3037, %v3039, %v3035
    %v3041 = vmul.f32 1.0, %v3040
    %v3042 = vrcp.pop %v3010
    %v3043 = vmul.f32 %v3010, %v3042
    %v3044 = vsub.f32 1.0, %v3043
    %v3045 = vmul.f32 %v3042, %v3044
    %v3046 = vadd.f32 %v3042, %v3045
    %vm3047 = vweird.f32 %v3010
    %vm3048 = vweird.f32 %v3042
    %vm3049 = vmor %vm3047, %vm3048
    %v3050 = vsel %vm3049, %v3042, %v3046
    %v3051 = vand.u32 2147483647, %v3010
    %vm3052 = vcmp.eq.f32.partialorder %v3051, 8.507059e+37
    %v3053 = vand.u32 %v3010, 2147483648
    %v3054 = vor.u32 1.1754944e-38, %v3053
    %v3055 = vsel %vm3052, %v3054, %v3050
    %v3056 = vmul.f32 1.0, %v3055
    %v3057 = vrcp.pop %v3011
    %v3058 = vmul.f32 %v3011, %v3057
    %v3059 = vsub.f32 1.0, %v3058
    %v3060 = vmul.f32 %v3057, %v3059
    %v3061 = vadd.f32 %v3057, %v3060
    %vm3062 = vweird.f32 %v3011
    %vm3063 = vweird.f32 %v3057
    %vm3064 = vmor %vm3062, %vm3063
    %v3065 = vsel %vm3064, %v3057, %v3061
    %v3066 = vand.u32 2147483647, %v3011
    %vm3067 = vcmp.eq.f32.partialorder %v3066, 8.507059e+37
    %v3068 = vand.u32 %v3011, 2147483648
    %v3069 = vor.u32 1.1754944e-38, %v3068
    %v3070 = vsel %vm3067, %v3069, %v3065
    %v3071 = vmul.f32 1.0, %v3070
    %v3072 = vmul.f32 %v2946, %v2361
    %v3073 = vmul.f32 %v2961, %v2362
    %v3074 = vmul.f32 %v2976, %v2363
    %v3075 = vmul.f32 %v2991, %v2364
    %v3076 = vmul.f32 %v2870, %v2992
    %v3077 = vmul.f32 %v2885, %v2993
    %v3078 = vmul.f32 %v2900, %v2994
    %v3079 = vmul.f32 %v2915, %v2995
    %v3080 = vadd.f32 %v3072, %v3076
    %v3081 = vadd.f32 %v3073, %v3077
    %v3082 = vadd.f32 %v3074, %v3078
    %v3083 = vadd.f32 %v3075, %v3079
    %v3084 = vtanh.pop %v3080
    %v3085 = vtanh.pop %v3081
    %v3086 = vtanh.pop %v3082
    %v3087 = vtanh.pop %v3083
    %v3088 = vmul.f32 %v3026, %v3084
    %v3089 = vmul.f32 %v3041, %v3085
    %v3090 = vmul.f32 %v3056, %v3086
    %v3091 = vmul.f32 %v3071, %v3087
    %v3092 = vpack.c.bf16 %v2740, %v2739
    %v3093 = vpack.c.bf16 %v2742, %v2741
    %v3094 = vpack.c.bf16 %v3089, %v3088
    %v3095 = vpack.c.bf16 %v3091, %v3090
    %3096 = vmatpush.bf16.msra.mxu0 0
    %3097 = vmatpush.bf16.msra.mxu0 0
    %3098 = vmatpush.bf16.msra.mxu0 0
    %3099 = vmatpush.bf16.msra.mxu0 0
    %3100 = vmatpush.bf16.msra.mxu0 0
    %3101 = vmatpush.bf16.msra.mxu0 0
    %3102 = vmatpush.bf16.msra.mxu0 %v3095
    %3103 = vmatpush.bf16.msra.mxu0 %v3094
    %3104 = vmatmul.bf16.gmra.mxu0 %v756
    %v3105 = vpop.f32.mrf.mxu0
    %v3106 = vadd.f32 0.0, %v3105
    %v3107 = vpop.f32.mrf.mxu0
    %v3108 = vadd.f32 0.0, %v3107
    %3109 = vmatmul.bf16.gmra.mxu0 %v759
    %v3110 = vpop.f32.mrf.mxu0
    %v3111 = vadd.f32 0.0, %v3110
    %v3112 = vpop.f32.mrf.mxu0
    %v3113 = vadd.f32 0.0, %v3112
    %3114 = vmatmul.bf16.gmra.mxu0 %v762
    %v3115 = vpop.f32.mrf.mxu0
    %v3116 = vadd.f32 0.0, %v3115
    %v3117 = vpop.f32.mrf.mxu0
    %v3118 = vadd.f32 0.0, %v3117
    %3119 = vmatmul.bf16.gmra.mxu0 %v765
    %v3120 = vpop.f32.mrf.mxu0
    %v3121 = vadd.f32 0.0, %v3120
    %v3122 = vpop.f32.mrf.mxu0
    %v3123 = vadd.f32 0.0, %v3122
    %3124 = vmatmul.bf16.gmra.mxu0 %v768
    %v3125 = vpop.f32.mrf.mxu0
    %v3126 = vadd.f32 0.0, %v3125
    %v3127 = vpop.f32.mrf.mxu0
    %v3128 = vadd.f32 0.0, %v3127
    %3129 = vmatmul.bf16.gmra.mxu0 %v771
    %v3130 = vpop.f32.mrf.mxu0
    %v3131 = vadd.f32 0.0, %v3130
    %v3132 = vpop.f32.mrf.mxu0
    %v3133 = vadd.f32 0.0, %v3132
    %3134 = vmatmul.bf16.gmra.mxu0 %v774
    %v3135 = vpop.f32.mrf.mxu0
    %v3136 = vadd.f32 0.0, %v3135
    %v3137 = vpop.f32.mrf.mxu0
    %v3138 = vadd.f32 0.0, %v3137
    %3139 = vmatmul.bf16.gmra.mxu0 %v777
    %v3140 = vpop.f32.mrf.mxu0
    %v3141 = vadd.f32 0.0, %v3140
    %v3142 = vpop.f32.mrf.mxu0
    %v3143 = vadd.f32 0.0, %v3142
    %3144 = vdwg.mxu0
    %3145 = vmatpush.bf16.msra.mxu0 0
    %3146 = vmatpush.bf16.msra.mxu0 0
    %3147 = vmatpush.bf16.msra.mxu0 0
    %3148 = vmatpush.bf16.msra.mxu0 0
    %3149 = vmatpush.bf16.msra.mxu0 0
    %3150 = vmatpush.bf16.msra.mxu0 0
    %3151 = vmatpush.bf16.msra.mxu0 %v3093
    %3152 = vmatpush.bf16.msra.mxu0 %v3092
    %3153 = vmatmul.bf16.gmra.mxu0 %v869
    %v3154 = vpop.f32.mrf.mxu0
    %v3155 = vadd.f32 %v3106, %v3154
    %v3156 = vpop.f32.mrf.mxu0
    %v3157 = vadd.f32 %v3108, %v3156
    %3158 = vmatmul.bf16.gmra.mxu0 %v872
    %v3159 = vpop.f32.mrf.mxu0
    %v3160 = vadd.f32 %v3111, %v3159
    %v3161 = vpop.f32.mrf.mxu0
    %v3162 = vadd.f32 %v3113, %v3161
    %3163 = vmatmul.bf16.gmra.mxu0 %v875
    %v3164 = vpop.f32.mrf.mxu0
    %v3165 = vadd.f32 %v3116, %v3164
    %v3166 = vpop.f32.mrf.mxu0
    %v3167 = vadd.f32 %v3118, %v3166
    %3168 = vmatmul.bf16.gmra.mxu0 %v878
    %v3169 = vpop.f32.mrf.mxu0
    %v3170 = vadd.f32 %v3121, %v3169
    %v3171 = vpop.f32.mrf.mxu0
    %v3172 = vadd.f32 %v3123, %v3171
    %3173 = vmatmul.bf16.gmra.mxu0 %v881
    %v3174 = vpop.f32.mrf.mxu0
    %v3175 = vadd.f32 %v3126, %v3174
    %v3176 = vpop.f32.mrf.mxu0
    %v3177 = vadd.f32 %v3128, %v3176
    %3178 = vmatmul.bf16.gmra.mxu0 %v884
    %v3179 = vpop.f32.mrf.mxu0
    %v3180 = vadd.f32 %v3131, %v3179
    %v3181 = vpop.f32.mrf.mxu0
    %v3182 = vadd.f32 %v3133, %v3181
    %3183 = vmatmul.bf16.gmra.mxu0 %v887
    %v3184 = vpop.f32.mrf.mxu0
    %v3185 = vadd.f32 %v3136, %v3184
    %v3186 = vpop.f32.mrf.mxu0
    %v3187 = vadd.f32 %v3138, %v3186
    %3188 = vmatmul.bf16.gmra.mxu0 %v890
    %v3189 = vpop.f32.mrf.mxu0
    %v3190 = vadd.f32 %v3141, %v3189
    %v3191 = vpop.f32.mrf.mxu0
    %v3192 = vadd.f32 %v3143, %v3191
    %3193 = vdwg.mxu0
    %v3194 = vadd.f32 %v3155, %v944
    %v3195 = vadd.f32 %v3157, %v949
    %v3196 = vadd.f32 %v3160, %v954
    %v3197 = vadd.f32 %v3162, %v959
    %v3198 = vadd.f32 %v3165, %v964
    %v3199 = vadd.f32 %v3167, %v969
    %v3200 = vadd.f32 %v3170, %v974
    %v3201 = vadd.f32 %v3172, %v979
    %v3202 = vadd.f32 %v3175, %v984
    %v3203 = vadd.f32 %v3177, %v989
    %v3204 = vadd.f32 %v3180, %v994
    %v3205 = vadd.f32 %v3182, %v999
    %v3206 = vadd.f32 %v3185, %v1004
    %v3207 = vadd.f32 %v3187, %v1009
    %v3208 = vadd.f32 %v3190, %v1014
    %v3209 = vadd.f32 %v3192, %v1019
    %v3210 = vxor.u32 %v3194, 2147483648
    %v3211 = vxor.u32 %v3195, 2147483648
    %v3212 = vxor.u32 %v3196, 2147483648
    %v3213 = vxor.u32 %v3197, 2147483648
    %v3214 = vmul.f32 %v3210, 1.442695
    %v3215 = vpow.pop %v3214
    %v3216 = vmul.f32 %v3211, 1.442695
    %v3217 = vpow.pop %v3216
    %v3218 = vmul.f32 %v3212, 1.442695
    %v3219 = vpow.pop %v3218
    %v3220 = vmul.f32 %v3213, 1.442695
    %v3221 = vpow.pop %v3220
    %v3222 = vadd.f32 %v3215, 1.0
    %v3223 = vadd.f32 %v3217, 1.0
    %v3224 = vadd.f32 %v3219, 1.0
    %v3225 = vadd.f32 %v3221, 1.0
    %v3226 = vrcp.pop %v3222
    %v3227 = vmul.f32 %v3222, %v3226
    %v3228 = vsub.f32 1.0, %v3227
    %v3229 = vmul.f32 %v3226, %v3228
    %v3230 = vadd.f32 %v3226, %v3229
    %vm3231 = vweird.f32 %v3222
    %vm3232 = vweird.f32 %v3226
    %vm3233 = vmor %vm3231, %vm3232
    %v3234 = vsel %vm3233, %v3226, %v3230
    %v3235 = vand.u32 2147483647, %v3222
    %vm3236 = vcmp.eq.f32.partialorder %v3235, 8.507059e+37
    %v3237 = vand.u32 %v3222, 2147483648
    %v3238 = vor.u32 1.1754944e-38, %v3237
    %v3239 = vsel %vm3236, %v3238, %v3234
    %v3240 = vmul.f32 1.0, %v3239
    %v3241 = vrcp.pop %v3223
    %v3242 = vmul.f32 %v3223, %v3241
    %v3243 = vsub.f32 1.0, %v3242
    %v3244 = vmul.f32 %v3241, %v3243
    %v3245 = vadd.f32 %v3241, %v3244
    %vm3246 = vweird.f32 %v3223
    %vm3247 = vweird.f32 %v3241
    %vm3248 = vmor %vm3246, %vm3247
    %v3249 = vsel %vm3248, %v3241, %v3245
    %v3250 = vand.u32 2147483647, %v3223
    %vm3251 = vcmp.eq.f32.partialorder %v3250, 8.507059e+37
    %v3252 = vand.u32 %v3223, 2147483648
    %v3253 = vor.u32 1.1754944e-38, %v3252
    %v3254 = vsel %vm3251, %v3253, %v3249
    %v3255 = vmul.f32 1.0, %v3254
    %v3256 = vrcp.pop %v3224
    %v3257 = vmul.f32 %v3224, %v3256
    %v3258 = vsub.f32 1.0, %v3257
    %v3259 = vmul.f32 %v3256, %v3258
    %v3260 = vadd.f32 %v3256, %v3259
    %vm3261 = vweird.f32 %v3224
    %vm3262 = vweird.f32 %v3256
    %vm3263 = vmor %vm3261, %vm3262
    %v3264 = vsel %vm3263, %v3256, %v3260
    %v3265 = vand.u32 2147483647, %v3224
    %vm3266 = vcmp.eq.f32.partialorder %v3265, 8.507059e+37
    %v3267 = vand.u32 %v3224, 2147483648
    %v3268 = vor.u32 1.1754944e-38, %v3267
    %v3269 = vsel %vm3266, %v3268, %v3264
    %v3270 = vmul.f32 1.0, %v3269
    %v3271 = vrcp.pop %v3225
    %v3272 = vmul.f32 %v3225, %v3271
    %v3273 = vsub.f32 1.0, %v3272
    %v3274 = vmul.f32 %v3271, %v3273
    %v3275 = vadd.f32 %v3271, %v3274
    %vm3276 = vweird.f32 %v3225
    %vm3277 = vweird.f32 %v3271
    %vm3278 = vmor %vm3276, %vm3277
    %v3279 = vsel %vm3278, %v3271, %v3275
    %v3280 = vand.u32 2147483647, %v3225
    %vm3281 = vcmp.eq.f32.partialorder %v3280, 8.507059e+37
    %v3282 = vand.u32 %v3225, 2147483648
    %v3283 = vor.u32 1.1754944e-38, %v3282
    %v3284 = vsel %vm3281, %v3283, %v3279
    %v3285 = vmul.f32 1.0, %v3284
    %v3286 = vxor.u32 %v3198, 2147483648
    %v3287 = vxor.u32 %v3199, 2147483648
    %v3288 = vxor.u32 %v3200, 2147483648
    %v3289 = vxor.u32 %v3201, 2147483648
    %v3290 = vmul.f32 %v3286, 1.442695
    %v3291 = vpow.pop %v3290
    %v3292 = vmul.f32 %v3287, 1.442695
    %v3293 = vpow.pop %v3292
    %v3294 = vmul.f32 %v3288, 1.442695
    %v3295 = vpow.pop %v3294
    %v3296 = vmul.f32 %v3289, 1.442695
    %v3297 = vpow.pop %v3296
    %v3298 = vadd.f32 %v3291, 1.0
    %v3299 = vadd.f32 %v3293, 1.0
    %v3300 = vadd.f32 %v3295, 1.0
    %v3301 = vadd.f32 %v3297, 1.0
    %v3302 = vrcp.pop %v3298
    %v3303 = vmul.f32 %v3298, %v3302
    %v3304 = vsub.f32 1.0, %v3303
    %v3305 = vmul.f32 %v3302, %v3304
    %v3306 = vadd.f32 %v3302, %v3305
    %vm3307 = vweird.f32 %v3298
    %vm3308 = vweird.f32 %v3302
    %vm3309 = vmor %vm3307, %vm3308
    %v3310 = vsel %vm3309, %v3302, %v3306
    %v3311 = vand.u32 2147483647, %v3298
    %vm3312 = vcmp.eq.f32.partialorder %v3311, 8.507059e+37
    %v3313 = vand.u32 %v3298, 2147483648
    %v3314 = vor.u32 1.1754944e-38, %v3313
    %v3315 = vsel %vm3312, %v3314, %v3310
    %v3316 = vmul.f32 1.0, %v3315
    %v3317 = vrcp.pop %v3299
    %v3318 = vmul.f32 %v3299, %v3317
    %v3319 = vsub.f32 1.0, %v3318
    %v3320 = vmul.f32 %v3317, %v3319
    %v3321 = vadd.f32 %v3317, %v3320
    %vm3322 = vweird.f32 %v3299
    %vm3323 = vweird.f32 %v3317
    %vm3324 = vmor %vm3322, %vm3323
    %v3325 = vsel %vm3324, %v3317, %v3321
    %v3326 = vand.u32 2147483647, %v3299
    %vm3327 = vcmp.eq.f32.partialorder %v3326, 8.507059e+37
    %v3328 = vand.u32 %v3299, 2147483648
    %v3329 = vor.u32 1.1754944e-38, %v3328
    %v3330 = vsel %vm3327, %v3329, %v3325
    %v3331 = vmul.f32 1.0, %v3330
    %v3332 = vrcp.pop %v3300
    %v3333 = vmul.f32 %v3300, %v3332
    %v3334 = vsub.f32 1.0, %v3333
    %v3335 = vmul.f32 %v3332, %v3334
    %v3336 = vadd.f32 %v3332, %v3335
    %vm3337 = vweird.f32 %v3300
    %vm3338 = vweird.f32 %v3332
    %vm3339 = vmor %vm3337, %vm3338
    %v3340 = vsel %vm3339, %v3332, %v3336
    %v3341 = vand.u32 2147483647, %v3300
    %vm3342 = vcmp.eq.f32.partialorder %v3341, 8.507059e+37
    %v3343 = vand.u32 %v3300, 2147483648
    %v3344 = vor.u32 1.1754944e-38, %v3343
    %v3345 = vsel %vm3342, %v3344, %v3340
    %v3346 = vmul.f32 1.0, %v3345
    %v3347 = vrcp.pop %v3301
    %v3348 = vmul.f32 %v3301, %v3347
    %v3349 = vsub.f32 1.0, %v3348
    %v3350 = vmul.f32 %v3347, %v3349
    %v3351 = vadd.f32 %v3347, %v3350
    %vm3352 = vweird.f32 %v3301
    %vm3353 = vweird.f32 %v3347
    %vm3354 = vmor %vm3352, %vm3353
    %v3355 = vsel %vm3354, %v3347, %v3351
    %v3356 = vand.u32 2147483647, %v3301
    %vm3357 = vcmp.eq.f32.partialorder %v3356, 8.507059e+37
    %v3358 = vand.u32 %v3301, 2147483648
    %v3359 = vor.u32 1.1754944e-38, %v3358
    %v3360 = vsel %vm3357, %v3359, %v3355
    %v3361 = vmul.f32 1.0, %v3360
    %v3362 = vtanh.pop %v3202
    %v3363 = vtanh.pop %v3203
    %v3364 = vtanh.pop %v3204
    %v3365 = vtanh.pop %v3205
    %v3366 = vxor.u32 %v3206, 2147483648
    %v3367 = vxor.u32 %v3207, 2147483648
    %v3368 = vxor.u32 %v3208, 2147483648
    %v3369 = vxor.u32 %v3209, 2147483648
    %v3370 = vmul.f32 %v3366, 1.442695
    %v3371 = vpow.pop %v3370
    %v3372 = vmul.f32 %v3367, 1.442695
    %v3373 = vpow.pop %v3372
    %v3374 = vmul.f32 %v3368, 1.442695
    %v3375 = vpow.pop %v3374
    %v3376 = vmul.f32 %v3369, 1.442695
    %v3377 = vpow.pop %v3376
    %v3378 = vadd.f32 %v3371, 1.0
    %v3379 = vadd.f32 %v3373, 1.0
    %v3380 = vadd.f32 %v3375, 1.0
    %v3381 = vadd.f32 %v3377, 1.0
    %v3382 = vrcp.pop %v3378
    %v3383 = vmul.f32 %v3378, %v3382
    %v3384 = vsub.f32 1.0, %v3383
    %v3385 = vmul.f32 %v3382, %v3384
    %v3386 = vadd.f32 %v3382, %v3385
    %vm3387 = vweird.f32 %v3378
    %vm3388 = vweird.f32 %v3382
    %vm3389 = vmor %vm3387, %vm3388
    %v3390 = vsel %vm3389, %v3382, %v3386
    %v3391 = vand.u32 2147483647, %v3378
    %vm3392 = vcmp.eq.f32.partialorder %v3391, 8.507059e+37
    %v3393 = vand.u32 %v3378, 2147483648
    %v3394 = vor.u32 1.1754944e-38, %v3393
    %v3395 = vsel %vm3392, %v3394, %v3390
    %v3396 = vmul.f32 1.0, %v3395
    %v3397 = vrcp.pop %v3379
    %v3398 = vmul.f32 %v3379, %v3397
    %v3399 = vsub.f32 1.0, %v3398
    %v3400 = vmul.f32 %v3397, %v3399
    %v3401 = vadd.f32 %v3397, %v3400
    %vm3402 = vweird.f32 %v3379
    %vm3403 = vweird.f32 %v3397
    %vm3404 = vmor %vm3402, %vm3403
    %v3405 = vsel %vm3404, %v3397, %v3401
    %v3406 = vand.u32 2147483647, %v3379
    %vm3407 = vcmp.eq.f32.partialorder %v3406, 8.507059e+37
    %v3408 = vand.u32 %v3379, 2147483648
    %v3409 = vor.u32 1.1754944e-38, %v3408
    %v3410 = vsel %vm3407, %v3409, %v3405
    %v3411 = vmul.f32 1.0, %v3410
    %v3412 = vrcp.pop %v3380
    %v3413 = vmul.f32 %v3380, %v3412
    %v3414 = vsub.f32 1.0, %v3413
    %v3415 = vmul.f32 %v3412, %v3414
    %v3416 = vadd.f32 %v3412, %v3415
    %vm3417 = vweird.f32 %v3380
    %vm3418 = vweird.f32 %v3412
    %vm3419 = vmor %vm3417, %vm3418
    %v3420 = vsel %vm3419, %v3412, %v3416
    %v3421 = vand.u32 2147483647, %v3380
    %vm3422 = vcmp.eq.f32.partialorder %v3421, 8.507059e+37
    %v3423 = vand.u32 %v3380, 2147483648
    %v3424 = vor.u32 1.1754944e-38, %v3423
    %v3425 = vsel %vm3422, %v3424, %v3420
    %v3426 = vmul.f32 1.0, %v3425
    %v3427 = vrcp.pop %v3381
    %v3428 = vmul.f32 %v3381, %v3427
    %v3429 = vsub.f32 1.0, %v3428
    %v3430 = vmul.f32 %v3427, %v3429
    %v3431 = vadd.f32 %v3427, %v3430
    %vm3432 = vweird.f32 %v3381
    %vm3433 = vweird.f32 %v3427
    %vm3434 = vmor %vm3432, %vm3433
    %v3435 = vsel %vm3434, %v3427, %v3431
    %v3436 = vand.u32 2147483647, %v3381
    %vm3437 = vcmp.eq.f32.partialorder %v3436, 8.507059e+37
    %v3438 = vand.u32 %v3381, 2147483648
    %v3439 = vor.u32 1.1754944e-38, %v3438
    %v3440 = vsel %vm3437, %v3439, %v3435
    %v3441 = vmul.f32 1.0, %v3440
    %v3442 = vmul.f32 %v3316, %v2731
    %v3443 = vmul.f32 %v3331, %v2732
    %v3444 = vmul.f32 %v3346, %v2733
    %v3445 = vmul.f32 %v3361, %v2734
    %v3446 = vmul.f32 %v3240, %v3362
    %v3447 = vmul.f32 %v3255, %v3363
    %v3448 = vmul.f32 %v3270, %v3364
    %v3449 = vmul.f32 %v3285, %v3365
    %v3450 = vadd.f32 %v3442, %v3446
    %v3451 = vadd.f32 %v3443, %v3447
    %v3452 = vadd.f32 %v3444, %v3448
    %v3453 = vadd.f32 %v3445, %v3449
    %v3454 = vtanh.pop %v3450
    %v3455 = vtanh.pop %v3451
    %v3456 = vtanh.pop %v3452
    %v3457 = vtanh.pop %v3453
    %v3458 = vmul.f32 %v3396, %v3454
    %v3459 = vmul.f32 %v3411, %v3455
    %v3460 = vmul.f32 %v3426, %v3456
    %v3461 = vmul.f32 %v3441, %v3457
    %3462 = vrot.lane.b32.xlu0 %v308, 64
    %v3463 = vpop.permute.xlu0 %3462
    %3464 = vrot.lane.b32.xlu0 %v310, 64
    %v3465 = vpop.permute.xlu0 %3464
    %3466 = vrot.lane.b32.xlu0 %v313, 64
    %v3467 = vpop.permute.xlu0 %3466
    %3468 = vrot.lane.b32.xlu0 %v315, 64
    %v3469 = vpop.permute.xlu0 %3468
    %3470 = vrot.lane.b32.xlu0 %v318, 64
    %v3471 = vpop.permute.xlu0 %3470
    %3472 = vrot.lane.b32.xlu0 %v320, 64
    %v3473 = vpop.permute.xlu0 %3472
    %3474 = vrot.lane.b32.xlu0 %v323, 64
    %v3475 = vpop.permute.xlu0 %3474
    %3476 = vrot.lane.b32.xlu0 %v325, 64
    %v3477 = vpop.permute.xlu0 %3476
    %3478 = vrot.lane.b32.xlu0 %v328, 64
    %v3479 = vpop.permute.xlu0 %3478
    %3480 = vrot.lane.b32.xlu0 %v330, 64
    %v3481 = vpop.permute.xlu0 %3480
    %3482 = vrot.lane.b32.xlu0 %v333, 64
    %v3483 = vpop.permute.xlu0 %3482
    %3484 = vrot.lane.b32.xlu0 %v335, 64
    %v3485 = vpop.permute.xlu0 %3484
    %3486 = vrot.lane.b32.xlu0 %v338, 64
    %v3487 = vpop.permute.xlu0 %3486
    %3488 = vrot.lane.b32.xlu0 %v340, 64
    %v3489 = vpop.permute.xlu0 %3488
    %3490 = vrot.lane.b32.xlu0 %v343, 64
    %v3491 = vpop.permute.xlu0 %3490
    %3492 = vrot.lane.b32.xlu0 %v345, 64
    %v3493 = vpop.permute.xlu0 %3492
    %3510 = vmatpush.bf16.msra.mxu0 0
    %3511 = vmatpush.bf16.msra.mxu0 0
    %3512 = vmatpush.bf16.msra.mxu0 0
    %3513 = vmatpush.bf16.msra.mxu0 0
    %3514 = vmatpush.bf16.msra.mxu0 0
    %3515 = vmatpush.bf16.msra.mxu0 0
    %3516 = vmatpush.bf16.msra.mxu0 %v3095
    %3517 = vmatpush.bf16.msra.mxu0 %v3094
    %3518 = vmatmul.bf16.gmra.mxu0 %v389
    %v3519 = vpop.f32.mrf.mxu0
    %v3520 = vadd.f32 %v3463, %v3519
    %v3521 = vpop.f32.mrf.mxu0
    %v3522 = vadd.f32 %v3465, %v3521
    %3523 = vmatmul.bf16.gmra.mxu0 %v392
    %v3524 = vpop.f32.mrf.mxu0
    %v3525 = vadd.f32 %v3467, %v3524
    %v3526 = vpop.f32.mrf.mxu0
    %v3527 = vadd.f32 %v3469, %v3526
    %3528 = vmatmul.bf16.gmra.mxu0 %v395
    %v3529 = vpop.f32.mrf.mxu0
    %v3530 = vadd.f32 %v3471, %v3529
    %v3531 = vpop.f32.mrf.mxu0
    %v3532 = vadd.f32 %v3473, %v3531
    %3533 = vmatmul.bf16.gmra.mxu0 %v398
    %v3534 = vpop.f32.mrf.mxu0
    %v3535 = vadd.f32 %v3475, %v3534
    %v3536 = vpop.f32.mrf.mxu0
    %v3537 = vadd.f32 %v3477, %v3536
    %3538 = vmatmul.bf16.gmra.mxu0 %v401
    %v3539 = vpop.f32.mrf.mxu0
    %v3540 = vadd.f32 %v3479, %v3539
    %v3541 = vpop.f32.mrf.mxu0
    %v3542 = vadd.f32 %v3481, %v3541
    %3543 = vmatmul.bf16.gmra.mxu0 %v404
    %v3544 = vpop.f32.mrf.mxu0
    %v3545 = vadd.f32 %v3483, %v3544
    %v3546 = vpop.f32.mrf.mxu0
    %v3547 = vadd.f32 %v3485, %v3546
    %3548 = vmatmul.bf16.gmra.mxu0 %v407
    %v3549 = vpop.f32.mrf.mxu0
    %v3550 = vadd.f32 %v3487, %v3549
    %v3551 = vpop.f32.mrf.mxu0
    %v3552 = vadd.f32 %v3489, %v3551
    %3553 = vmatmul.bf16.gmra.mxu0 %v410
    %v3554 = vpop.f32.mrf.mxu0
    %v3555 = vadd.f32 %v3491, %v3554
    %v3556 = vpop.f32.mrf.mxu0
    %v3557 = vadd.f32 %v3493, %v3556
    %3558 = vdwg.mxu0
    %v3559 = vxor.u32 %v3520, 2147483648
    %v3560 = vxor.u32 %v3522, 2147483648
    %v3561 = vxor.u32 %v3525, 2147483648
    %v3562 = vxor.u32 %v3527, 2147483648
    %v3563 = vmul.f32 %v3559, 1.442695
    %v3564 = vpow.pop %v3563
    %v3565 = vmul.f32 %v3560, 1.442695
    %v3566 = vpow.pop %v3565
    %v3567 = vmul.f32 %v3561, 1.442695
    %v3568 = vpow.pop %v3567
    %v3569 = vmul.f32 %v3562, 1.442695
    %v3570 = vpow.pop %v3569
    %v3571 = vadd.f32 %v3564, 1.0
    %v3572 = vadd.f32 %v3566, 1.0
    %v3573 = vadd.f32 %v3568, 1.0
    %v3574 = vadd.f32 %v3570, 1.0
    %v3575 = vrcp.pop %v3571
    %v3576 = vmul.f32 %v3571, %v3575
    %v3577 = vsub.f32 1.0, %v3576
    %v3578 = vmul.f32 %v3575, %v3577
    %v3579 = vadd.f32 %v3575, %v3578
    %vm3580 = vweird.f32 %v3571
    %vm3581 = vweird.f32 %v3575
    %vm3582 = vmor %vm3580, %vm3581
    %v3583 = vsel %vm3582, %v3575, %v3579
    %v3584 = vand.u32 2147483647, %v3571
    %vm3585 = vcmp.eq.f32.partialorder %v3584, 8.507059e+37
    %v3586 = vand.u32 %v3571, 2147483648
    %v3587 = vor.u32 1.1754944e-38, %v3586
    %v3588 = vsel %vm3585, %v3587, %v3583
    %v3589 = vmul.f32 1.0, %v3588
    %v3590 = vrcp.pop %v3572
    %v3591 = vmul.f32 %v3572, %v3590
    %v3592 = vsub.f32 1.0, %v3591
    %v3593 = vmul.f32 %v3590, %v3592
    %v3594 = vadd.f32 %v3590, %v3593
    %vm3595 = vweird.f32 %v3572
    %vm3596 = vweird.f32 %v3590
    %vm3597 = vmor %vm3595, %vm3596
    %v3598 = vsel %vm3597, %v3590, %v3594
    %v3599 = vand.u32 2147483647, %v3572
    %vm3600 = vcmp.eq.f32.partialorder %v3599, 8.507059e+37
    %v3601 = vand.u32 %v3572, 2147483648
    %v3602 = vor.u32 1.1754944e-38, %v3601
    %v3603 = vsel %vm3600, %v3602, %v3598
    %v3604 = vmul.f32 1.0, %v3603
    %v3605 = vrcp.pop %v3573
    %v3606 = vmul.f32 %v3573, %v3605
    %v3607 = vsub.f32 1.0, %v3606
    %v3608 = vmul.f32 %v3605, %v3607
    %v3609 = vadd.f32 %v3605, %v3608
    %vm3610 = vweird.f32 %v3573
    %vm3611 = vweird.f32 %v3605
    %vm3612 = vmor %vm3610, %vm3611
    %v3613 = vsel %vm3612, %v3605, %v3609
    %v3614 = vand.u32 2147483647, %v3573
    %vm3615 = vcmp.eq.f32.partialorder %v3614, 8.507059e+37
    %v3616 = vand.u32 %v3573, 2147483648
    %v3617 = vor.u32 1.1754944e-38, %v3616
    %v3618 = vsel %vm3615, %v3617, %v3613
    %v3619 = vmul.f32 1.0, %v3618
    %v3620 = vrcp.pop %v3574
    %v3621 = vmul.f32 %v3574, %v3620
    %v3622 = vsub.f32 1.0, %v3621
    %v3623 = vmul.f32 %v3620, %v3622
    %v3624 = vadd.f32 %v3620, %v3623
    %vm3625 = vweird.f32 %v3574
    %vm3626 = vweird.f32 %v3620
    %vm3627 = vmor %vm3625, %vm3626
    %v3628 = vsel %vm3627, %v3620, %v3624
    %v3629 = vand.u32 2147483647, %v3574
    %vm3630 = vcmp.eq.f32.partialorder %v3629, 8.507059e+37
    %v3631 = vand.u32 %v3574, 2147483648
    %v3632 = vor.u32 1.1754944e-38, %v3631
    %v3633 = vsel %vm3630, %v3632, %v3628
    %v3634 = vmul.f32 1.0, %v3633
    %v3635 = vxor.u32 %v3530, 2147483648
    %v3636 = vxor.u32 %v3532, 2147483648
    %v3637 = vxor.u32 %v3535, 2147483648
    %v3638 = vxor.u32 %v3537, 2147483648
    %v3639 = vmul.f32 %v3635, 1.442695
    %v3640 = vpow.pop %v3639
    %v3641 = vmul.f32 %v3636, 1.442695
    %v3642 = vpow.pop %v3641
    %v3643 = vmul.f32 %v3637, 1.442695
    %v3644 = vpow.pop %v3643
    %v3645 = vmul.f32 %v3638, 1.442695
    %v3646 = vpow.pop %v3645
    %v3647 = vadd.f32 %v3640, 1.0
    %v3648 = vadd.f32 %v3642, 1.0
    %v3649 = vadd.f32 %v3644, 1.0
    %v3650 = vadd.f32 %v3646, 1.0
    %v3651 = vrcp.pop %v3647
    %v3652 = vmul.f32 %v3647, %v3651
    %v3653 = vsub.f32 1.0, %v3652
    %v3654 = vmul.f32 %v3651, %v3653
    %v3655 = vadd.f32 %v3651, %v3654
    %vm3656 = vweird.f32 %v3647
    %vm3657 = vweird.f32 %v3651
    %vm3658 = vmor %vm3656, %vm3657
    %v3659 = vsel %vm3658, %v3651, %v3655
    %v3660 = vand.u32 2147483647, %v3647
    %vm3661 = vcmp.eq.f32.partialorder %v3660, 8.507059e+37
    %v3662 = vand.u32 %v3647, 2147483648
    %v3663 = vor.u32 1.1754944e-38, %v3662
    %v3664 = vsel %vm3661, %v3663, %v3659
    %v3665 = vmul.f32 1.0, %v3664
    %v3666 = vrcp.pop %v3648
    %v3667 = vmul.f32 %v3648, %v3666
    %v3668 = vsub.f32 1.0, %v3667
    %v3669 = vmul.f32 %v3666, %v3668
    %v3670 = vadd.f32 %v3666, %v3669
    %vm3671 = vweird.f32 %v3648
    %vm3672 = vweird.f32 %v3666
    %vm3673 = vmor %vm3671, %vm3672
    %v3674 = vsel %vm3673, %v3666, %v3670
    %v3675 = vand.u32 2147483647, %v3648
    %vm3676 = vcmp.eq.f32.partialorder %v3675, 8.507059e+37
    %v3677 = vand.u32 %v3648, 2147483648
    %v3678 = vor.u32 1.1754944e-38, %v3677
    %v3679 = vsel %vm3676, %v3678, %v3674
    %v3680 = vmul.f32 1.0, %v3679
    %v3681 = vrcp.pop %v3649
    %v3682 = vmul.f32 %v3649, %v3681
    %v3683 = vsub.f32 1.0, %v3682
    %v3684 = vmul.f32 %v3681, %v3683
    %v3685 = vadd.f32 %v3681, %v3684
    %vm3686 = vweird.f32 %v3649
    %vm3687 = vweird.f32 %v3681
    %vm3688 = vmor %vm3686, %vm3687
    %v3689 = vsel %vm3688, %v3681, %v3685
    %v3690 = vand.u32 2147483647, %v3649
    %vm3691 = vcmp.eq.f32.partialorder %v3690, 8.507059e+37
    %v3692 = vand.u32 %v3649, 2147483648
    %v3693 = vor.u32 1.1754944e-38, %v3692
    %v3694 = vsel %vm3691, %v3693, %v3689
    %v3695 = vmul.f32 1.0, %v3694
    %v3696 = vrcp.pop %v3650
    %v3697 = vmul.f32 %v3650, %v3696
    %v3698 = vsub.f32 1.0, %v3697
    %v3699 = vmul.f32 %v3696, %v3698
    %v3700 = vadd.f32 %v3696, %v3699
    %vm3701 = vweird.f32 %v3650
    %vm3702 = vweird.f32 %v3696
    %vm3703 = vmor %vm3701, %vm3702
    %v3704 = vsel %vm3703, %v3696, %v3700
    %v3705 = vand.u32 2147483647, %v3650
    %vm3706 = vcmp.eq.f32.partialorder %v3705, 8.507059e+37
    %v3707 = vand.u32 %v3650, 2147483648
    %v3708 = vor.u32 1.1754944e-38, %v3707
    %v3709 = vsel %vm3706, %v3708, %v3704
    %v3710 = vmul.f32 1.0, %v3709
    %v3711 = vtanh.pop %v3540
    %v3712 = vtanh.pop %v3542
    %v3713 = vtanh.pop %v3545
    %v3714 = vtanh.pop %v3547
    %v3715 = vxor.u32 %v3550, 2147483648
    %v3716 = vxor.u32 %v3552, 2147483648
    %v3717 = vxor.u32 %v3555, 2147483648
    %v3718 = vxor.u32 %v3557, 2147483648
    %v3719 = vmul.f32 %v3715, 1.442695
    %v3720 = vpow.pop %v3719
    %v3721 = vmul.f32 %v3716, 1.442695
    %v3722 = vpow.pop %v3721
    %v3723 = vmul.f32 %v3717, 1.442695
    %v3724 = vpow.pop %v3723
    %v3725 = vmul.f32 %v3718, 1.442695
    %v3726 = vpow.pop %v3725
    %v3727 = vadd.f32 %v3720, 1.0
    %v3728 = vadd.f32 %v3722, 1.0
    %v3729 = vadd.f32 %v3724, 1.0
    %v3730 = vadd.f32 %v3726, 1.0
    %v3731 = vrcp.pop %v3727
    %v3732 = vmul.f32 %v3727, %v3731
    %v3733 = vsub.f32 1.0, %v3732
    %v3734 = vmul.f32 %v3731, %v3733
    %v3735 = vadd.f32 %v3731, %v3734
    %vm3736 = vweird.f32 %v3727
    %vm3737 = vweird.f32 %v3731
    %vm3738 = vmor %vm3736, %vm3737
    %v3739 = vsel %vm3738, %v3731, %v3735
    %v3740 = vand.u32 2147483647, %v3727
    %vm3741 = vcmp.eq.f32.partialorder %v3740, 8.507059e+37
    %v3742 = vand.u32 %v3727, 2147483648
    %v3743 = vor.u32 1.1754944e-38, %v3742
    %v3744 = vsel %vm3741, %v3743, %v3739
    %v3745 = vmul.f32 1.0, %v3744
    %v3746 = vrcp.pop %v3728
    %v3747 = vmul.f32 %v3728, %v3746
    %v3748 = vsub.f32 1.0, %v3747
    %v3749 = vmul.f32 %v3746, %v3748
    %v3750 = vadd.f32 %v3746, %v3749
    %vm3751 = vweird.f32 %v3728
    %vm3752 = vweird.f32 %v3746
    %vm3753 = vmor %vm3751, %vm3752
    %v3754 = vsel %vm3753, %v3746, %v3750
    %v3755 = vand.u32 2147483647, %v3728
    %vm3756 = vcmp.eq.f32.partialorder %v3755, 8.507059e+37
    %v3757 = vand.u32 %v3728, 2147483648
    %v3758 = vor.u32 1.1754944e-38, %v3757
    %v3759 = vsel %vm3756, %v3758, %v3754
    %v3760 = vmul.f32 1.0, %v3759
    %v3761 = vrcp.pop %v3729
    %v3762 = vmul.f32 %v3729, %v3761
    %v3763 = vsub.f32 1.0, %v3762
    %v3764 = vmul.f32 %v3761, %v3763
    %v3765 = vadd.f32 %v3761, %v3764
    %vm3766 = vweird.f32 %v3729
    %vm3767 = vweird.f32 %v3761
    %vm3768 = vmor %vm3766, %vm3767
    %v3769 = vsel %vm3768, %v3761, %v3765
    %v3770 = vand.u32 2147483647, %v3729
    %vm3771 = vcmp.eq.f32.partialorder %v3770, 8.507059e+37
    %v3772 = vand.u32 %v3729, 2147483648
    %v3773 = vor.u32 1.1754944e-38, %v3772
    %v3774 = vsel %vm3771, %v3773, %v3769
    %v3775 = vmul.f32 1.0, %v3774
    %v3776 = vrcp.pop %v3730
    %v3777 = vmul.f32 %v3730, %v3776
    %v3778 = vsub.f32 1.0, %v3777
    %v3779 = vmul.f32 %v3776, %v3778
    %v3780 = vadd.f32 %v3776, %v3779
    %vm3781 = vweird.f32 %v3730
    %vm3782 = vweird.f32 %v3776
    %vm3783 = vmor %vm3781, %vm3782
    %v3784 = vsel %vm3783, %v3776, %v3780
    %v3785 = vand.u32 2147483647, %v3730
    %vm3786 = vcmp.eq.f32.partialorder %v3785, 8.507059e+37
    %v3787 = vand.u32 %v3730, 2147483648
    %v3788 = vor.u32 1.1754944e-38, %v3787
    %v3789 = vsel %vm3786, %v3788, %v3784
    %v3790 = vmul.f32 1.0, %v3789
    %v3791 = vmul.f32 %v3665, %v3080
    %v3792 = vmul.f32 %v3680, %v3081
    %v3793 = vmul.f32 %v3695, %v3082
    %v3794 = vmul.f32 %v3710, %v3083
    %v3795 = vmul.f32 %v3589, %v3711
    %v3796 = vmul.f32 %v3604, %v3712
    %v3797 = vmul.f32 %v3619, %v3713
    %v3798 = vmul.f32 %v3634, %v3714
    %v3799 = vadd.f32 %v3791, %v3795
    %v3800 = vadd.f32 %v3792, %v3796
    %v3801 = vadd.f32 %v3793, %v3797
    %v3802 = vadd.f32 %v3794, %v3798
    %v3803 = vtanh.pop %v3799
    %v3804 = vtanh.pop %v3800
    %v3805 = vtanh.pop %v3801
    %v3806 = vtanh.pop %v3802
    %v3807 = vmul.f32 %v3745, %v3803
    %v3808 = vmul.f32 %v3760, %v3804
    %v3809 = vmul.f32 %v3775, %v3805
    %v3810 = vmul.f32 %v3790, %v3806
    %v3811 = vpack.c.bf16 %v3459, %v3458
    %v3812 = vpack.c.bf16 %v3461, %v3460
    %v3813 = vpack.c.bf16 %v3808, %v3807
    %v3814 = vpack.c.bf16 %v3810, %v3809
    %3815 = vmatpush.bf16.msra.mxu0 0
    %3816 = vmatpush.bf16.msra.mxu0 0
    %3817 = vmatpush.bf16.msra.mxu0 0
    %3818 = vmatpush.bf16.msra.mxu0 0
    %3819 = vmatpush.bf16.msra.mxu0 0
    %3820 = vmatpush.bf16.msra.mxu0 0
    %3821 = vmatpush.bf16.msra.mxu0 %v3814
    %3822 = vmatpush.bf16.msra.mxu0 %v3813
    %3823 = vmatmul.bf16.gmra.mxu0 %v756
    %v3824 = vpop.f32.mrf.mxu0
    %v3825 = vadd.f32 0.0, %v3824
    %v3826 = vpop.f32.mrf.mxu0
    %v3827 = vadd.f32 0.0, %v3826
    %3828 = vmatmul.bf16.gmra.mxu0 %v759
    %v3829 = vpop.f32.mrf.mxu0
    %v3830 = vadd.f32 0.0, %v3829
    %v3831 = vpop.f32.mrf.mxu0
    %v3832 = vadd.f32 0.0, %v3831
    %3833 = vmatmul.bf16.gmra.mxu0 %v762
    %v3834 = vpop.f32.mrf.mxu0
    %v3835 = vadd.f32 0.0, %v3834
    %v3836 = vpop.f32.mrf.mxu0
    %v3837 = vadd.f32 0.0, %v3836
    %3838 = vmatmul.bf16.gmra.mxu0 %v765
    %v3839 = vpop.f32.mrf.mxu0
    %v3840 = vadd.f32 0.0, %v3839
    %v3841 = vpop.f32.mrf.mxu0
    %v3842 = vadd.f32 0.0, %v3841
    %3843 = vmatmul.bf16.gmra.mxu0 %v768
    %v3844 = vpop.f32.mrf.mxu0
    %v3845 = vadd.f32 0.0, %v3844
    %v3846 = vpop.f32.mrf.mxu0
    %v3847 = vadd.f32 0.0, %v3846
    %3848 = vmatmul.bf16.gmra.mxu0 %v771
    %v3849 = vpop.f32.mrf.mxu0
    %v3850 = vadd.f32 0.0, %v3849
    %v3851 = vpop.f32.mrf.mxu0
    %v3852 = vadd.f32 0.0, %v3851
    %3853 = vmatmul.bf16.gmra.mxu0 %v774
    %v3854 = vpop.f32.mrf.mxu0
    %v3855 = vadd.f32 0.0, %v3854
    %v3856 = vpop.f32.mrf.mxu0
    %v3857 = vadd.f32 0.0, %v3856
    %3858 = vmatmul.bf16.gmra.mxu0 %v777
    %v3859 = vpop.f32.mrf.mxu0
    %v3860 = vadd.f32 0.0, %v3859
    %v3861 = vpop.f32.mrf.mxu0
    %v3862 = vadd.f32 0.0, %v3861
    %3863 = vdwg.mxu0
    %3864 = vmatpush.bf16.msra.mxu0 0
    %3865 = vmatpush.bf16.msra.mxu0 0
    %3866 = vmatpush.bf16.msra.mxu0 0
    %3867 = vmatpush.bf16.msra.mxu0 0
    %3868 = vmatpush.bf16.msra.mxu0 0
    %3869 = vmatpush.bf16.msra.mxu0 0
    %3870 = vmatpush.bf16.msra.mxu0 %v3812
    %3871 = vmatpush.bf16.msra.mxu0 %v3811
    %3872 = vmatmul.bf16.gmra.mxu0 %v869
    %v3873 = vpop.f32.mrf.mxu0
    %v3874 = vadd.f32 %v3825, %v3873
    %v3875 = vpop.f32.mrf.mxu0
    %v3876 = vadd.f32 %v3827, %v3875
    %3877 = vmatmul.bf16.gmra.mxu0 %v872
    %v3878 = vpop.f32.mrf.mxu0
    %v3879 = vadd.f32 %v3830, %v3878
    %v3880 = vpop.f32.mrf.mxu0
    %v3881 = vadd.f32 %v3832, %v3880
    %3882 = vmatmul.bf16.gmra.mxu0 %v875
    %v3883 = vpop.f32.mrf.mxu0
    %v3884 = vadd.f32 %v3835, %v3883
    %v3885 = vpop.f32.mrf.mxu0
    %v3886 = vadd.f32 %v3837, %v3885
    %3887 = vmatmul.bf16.gmra.mxu0 %v878
    %v3888 = vpop.f32.mrf.mxu0
    %v3889 = vadd.f32 %v3840, %v3888
    %v3890 = vpop.f32.mrf.mxu0
    %v3891 = vadd.f32 %v3842, %v3890
    %3892 = vmatmul.bf16.gmra.mxu0 %v881
    %v3893 = vpop.f32.mrf.mxu0
    %v3894 = vadd.f32 %v3845, %v3893
    %v3895 = vpop.f32.mrf.mxu0
    %v3896 = vadd.f32 %v3847, %v3895
    %3897 = vmatmul.bf16.gmra.mxu0 %v884
    %v3898 = vpop.f32.mrf.mxu0
    %v3899 = vadd.f32 %v3850, %v3898
    %v3900 = vpop.f32.mrf.mxu0
    %v3901 = vadd.f32 %v3852, %v3900
    %3902 = vmatmul.bf16.gmra.mxu0 %v887
    %v3903 = vpop.f32.mrf.mxu0
    %v3904 = vadd.f32 %v3855, %v3903
    %v3905 = vpop.f32.mrf.mxu0
    %v3906 = vadd.f32 %v3857, %v3905
    %3907 = vmatmul.bf16.gmra.mxu0 %v890
    %v3908 = vpop.f32.mrf.mxu0
    %v3909 = vadd.f32 %v3860, %v3908
    %v3910 = vpop.f32.mrf.mxu0
    %v3911 = vadd.f32 %v3862, %v3910
    %3912 = vdwg.mxu0
    %v3913 = vadd.f32 %v3874, %v944
    %v3914 = vadd.f32 %v3876, %v949
    %v3915 = vadd.f32 %v3879, %v954
    %v3916 = vadd.f32 %v3881, %v959
    %v3917 = vadd.f32 %v3884, %v964
    %v3918 = vadd.f32 %v3886, %v969
    %v3919 = vadd.f32 %v3889, %v974
    %v3920 = vadd.f32 %v3891, %v979
    %v3921 = vadd.f32 %v3894, %v984
    %v3922 = vadd.f32 %v3896, %v989
    %v3923 = vadd.f32 %v3899, %v994
    %v3924 = vadd.f32 %v3901, %v999
    %v3925 = vadd.f32 %v3904, %v1004
    %v3926 = vadd.f32 %v3906, %v1009
    %v3927 = vadd.f32 %v3909, %v1014
    %v3928 = vadd.f32 %v3911, %v1019
    %v3929 = vxor.u32 %v3913, 2147483648
    %v3930 = vxor.u32 %v3914, 2147483648
    %v3931 = vxor.u32 %v3915, 2147483648
    %v3932 = vxor.u32 %v3916, 2147483648
    %v3933 = vmul.f32 %v3929, 1.442695
    %v3934 = vpow.pop %v3933
    %v3935 = vmul.f32 %v3930, 1.442695
    %v3936 = vpow.pop %v3935
    %v3937 = vmul.f32 %v3931, 1.442695
    %v3938 = vpow.pop %v3937
    %v3939 = vmul.f32 %v3932, 1.442695
    %v3940 = vpow.pop %v3939
    %v3941 = vadd.f32 %v3934, 1.0
    %v3942 = vadd.f32 %v3936, 1.0
    %v3943 = vadd.f32 %v3938, 1.0
    %v3944 = vadd.f32 %v3940, 1.0
    %v3945 = vrcp.pop %v3941
    %v3946 = vmul.f32 %v3941, %v3945
    %v3947 = vsub.f32 1.0, %v3946
    %v3948 = vmul.f32 %v3945, %v3947
    %v3949 = vadd.f32 %v3945, %v3948
    %vm3950 = vweird.f32 %v3941
    %vm3951 = vweird.f32 %v3945
    %vm3952 = vmor %vm3950, %vm3951
    %v3953 = vsel %vm3952, %v3945, %v3949
    %v3954 = vand.u32 2147483647, %v3941
    %vm3955 = vcmp.eq.f32.partialorder %v3954, 8.507059e+37
    %v3956 = vand.u32 %v3941, 2147483648
    %v3957 = vor.u32 1.1754944e-38, %v3956
    %v3958 = vsel %vm3955, %v3957, %v3953
    %v3959 = vmul.f32 1.0, %v3958
    %v3960 = vrcp.pop %v3942
    %v3961 = vmul.f32 %v3942, %v3960
    %v3962 = vsub.f32 1.0, %v3961
    %v3963 = vmul.f32 %v3960, %v3962
    %v3964 = vadd.f32 %v3960, %v3963
    %vm3965 = vweird.f32 %v3942
    %vm3966 = vweird.f32 %v3960
    %vm3967 = vmor %vm3965, %vm3966
    %v3968 = vsel %vm3967, %v3960, %v3964
    %v3969 = vand.u32 2147483647, %v3942
    %vm3970 = vcmp.eq.f32.partialorder %v3969, 8.507059e+37
    %v3971 = vand.u32 %v3942, 2147483648
    %v3972 = vor.u32 1.1754944e-38, %v3971
    %v3973 = vsel %vm3970, %v3972, %v3968
    %v3974 = vmul.f32 1.0, %v3973
    %v3975 = vrcp.pop %v3943
    %v3976 = vmul.f32 %v3943, %v3975
    %v3977 = vsub.f32 1.0, %v3976
    %v3978 = vmul.f32 %v3975, %v3977
    %v3979 = vadd.f32 %v3975, %v3978
    %vm3980 = vweird.f32 %v3943
    %vm3981 = vweird.f32 %v3975
    %vm3982 = vmor %vm3980, %vm3981
    %v3983 = vsel %vm3982, %v3975, %v3979
    %v3984 = vand.u32 2147483647, %v3943
    %vm3985 = vcmp.eq.f32.partialorder %v3984, 8.507059e+37
    %v3986 = vand.u32 %v3943, 2147483648
    %v3987 = vor.u32 1.1754944e-38, %v3986
    %v3988 = vsel %vm3985, %v3987, %v3983
    %v3989 = vmul.f32 1.0, %v3988
    %v3990 = vrcp.pop %v3944
    %v3991 = vmul.f32 %v3944, %v3990
    %v3992 = vsub.f32 1.0, %v3991
    %v3993 = vmul.f32 %v3990, %v3992
    %v3994 = vadd.f32 %v3990, %v3993
    %vm3995 = vweird.f32 %v3944
    %vm3996 = vweird.f32 %v3990
    %vm3997 = vmor %vm3995, %vm3996
    %v3998 = vsel %vm3997, %v3990, %v3994
    %v3999 = vand.u32 2147483647, %v3944
    %vm4000 = vcmp.eq.f32.partialorder %v3999, 8.507059e+37
    %v4001 = vand.u32 %v3944, 2147483648
    %v4002 = vor.u32 1.1754944e-38, %v4001
    %v4003 = vsel %vm4000, %v4002, %v3998
    %v4004 = vmul.f32 1.0, %v4003
    %v4005 = vxor.u32 %v3917, 2147483648
    %v4006 = vxor.u32 %v3918, 2147483648
    %v4007 = vxor.u32 %v3919, 2147483648
    %v4008 = vxor.u32 %v3920, 2147483648
    %v4009 = vmul.f32 %v4005, 1.442695
    %v4010 = vpow.pop %v4009
    %v4011 = vmul.f32 %v4006, 1.442695
    %v4012 = vpow.pop %v4011
    %v4013 = vmul.f32 %v4007, 1.442695
    %v4014 = vpow.pop %v4013
    %v4015 = vmul.f32 %v4008, 1.442695
    %v4016 = vpow.pop %v4015
    %v4017 = vadd.f32 %v4010, 1.0
    %v4018 = vadd.f32 %v4012, 1.0
    %v4019 = vadd.f32 %v4014, 1.0
    %v4020 = vadd.f32 %v4016, 1.0
    %v4021 = vrcp.pop %v4017
    %v4022 = vmul.f32 %v4017, %v4021
    %v4023 = vsub.f32 1.0, %v4022
    %v4024 = vmul.f32 %v4021, %v4023
    %v4025 = vadd.f32 %v4021, %v4024
    %vm4026 = vweird.f32 %v4017
    %vm4027 = vweird.f32 %v4021
    %vm4028 = vmor %vm4026, %vm4027
    %v4029 = vsel %vm4028, %v4021, %v4025
    %v4030 = vand.u32 2147483647, %v4017
    %vm4031 = vcmp.eq.f32.partialorder %v4030, 8.507059e+37
    %v4032 = vand.u32 %v4017, 2147483648
    %v4033 = vor.u32 1.1754944e-38, %v4032
    %v4034 = vsel %vm4031, %v4033, %v4029
    %v4035 = vmul.f32 1.0, %v4034
    %v4036 = vrcp.pop %v4018
    %v4037 = vmul.f32 %v4018, %v4036
    %v4038 = vsub.f32 1.0, %v4037
    %v4039 = vmul.f32 %v4036, %v4038
    %v4040 = vadd.f32 %v4036, %v4039
    %vm4041 = vweird.f32 %v4018
    %vm4042 = vweird.f32 %v4036
    %vm4043 = vmor %vm4041, %vm4042
    %v4044 = vsel %vm4043, %v4036, %v4040
    %v4045 = vand.u32 2147483647, %v4018
    %vm4046 = vcmp.eq.f32.partialorder %v4045, 8.507059e+37
    %v4047 = vand.u32 %v4018, 2147483648
    %v4048 = vor.u32 1.1754944e-38, %v4047
    %v4049 = vsel %vm4046, %v4048, %v4044
    %v4050 = vmul.f32 1.0, %v4049
    %v4051 = vrcp.pop %v4019
    %v4052 = vmul.f32 %v4019, %v4051
    %v4053 = vsub.f32 1.0, %v4052
    %v4054 = vmul.f32 %v4051, %v4053
    %v4055 = vadd.f32 %v4051, %v4054
    %vm4056 = vweird.f32 %v4019
    %vm4057 = vweird.f32 %v4051
    %vm4058 = vmor %vm4056, %vm4057
    %v4059 = vsel %vm4058, %v4051, %v4055
    %v4060 = vand.u32 2147483647, %v4019
    %vm4061 = vcmp.eq.f32.partialorder %v4060, 8.507059e+37
    %v4062 = vand.u32 %v4019, 2147483648
    %v4063 = vor.u32 1.1754944e-38, %v4062
    %v4064 = vsel %vm4061, %v4063, %v4059
    %v4065 = vmul.f32 1.0, %v4064
    %v4066 = vrcp.pop %v4020
    %v4067 = vmul.f32 %v4020, %v4066
    %v4068 = vsub.f32 1.0, %v4067
    %v4069 = vmul.f32 %v4066, %v4068
    %v4070 = vadd.f32 %v4066, %v4069
    %vm4071 = vweird.f32 %v4020
    %vm4072 = vweird.f32 %v4066
    %vm4073 = vmor %vm4071, %vm4072
    %v4074 = vsel %vm4073, %v4066, %v4070
    %v4075 = vand.u32 2147483647, %v4020
    %vm4076 = vcmp.eq.f32.partialorder %v4075, 8.507059e+37
    %v4077 = vand.u32 %v4020, 2147483648
    %v4078 = vor.u32 1.1754944e-38, %v4077
    %v4079 = vsel %vm4076, %v4078, %v4074
    %v4080 = vmul.f32 1.0, %v4079
    %v4081 = vtanh.pop %v3921
    %v4082 = vtanh.pop %v3922
    %v4083 = vtanh.pop %v3923
    %v4084 = vtanh.pop %v3924
    %v4085 = vxor.u32 %v3925, 2147483648
    %v4086 = vxor.u32 %v3926, 2147483648
    %v4087 = vxor.u32 %v3927, 2147483648
    %v4088 = vxor.u32 %v3928, 2147483648
    %v4089 = vmul.f32 %v4085, 1.442695
    %v4090 = vpow.pop %v4089
    %v4091 = vmul.f32 %v4086, 1.442695
    %v4092 = vpow.pop %v4091
    %v4093 = vmul.f32 %v4087, 1.442695
    %v4094 = vpow.pop %v4093
    %v4095 = vmul.f32 %v4088, 1.442695
    %v4096 = vpow.pop %v4095
    %v4097 = vadd.f32 %v4090, 1.0
    %v4098 = vadd.f32 %v4092, 1.0
    %v4099 = vadd.f32 %v4094, 1.0
    %v4100 = vadd.f32 %v4096, 1.0
    %v4101 = vrcp.pop %v4097
    %v4102 = vmul.f32 %v4097, %v4101
    %v4103 = vsub.f32 1.0, %v4102
    %v4104 = vmul.f32 %v4101, %v4103
    %v4105 = vadd.f32 %v4101, %v4104
    %vm4106 = vweird.f32 %v4097
    %vm4107 = vweird.f32 %v4101
    %vm4108 = vmor %vm4106, %vm4107
    %v4109 = vsel %vm4108, %v4101, %v4105
    %v4110 = vand.u32 2147483647, %v4097
    %vm4111 = vcmp.eq.f32.partialorder %v4110, 8.507059e+37
    %v4112 = vand.u32 %v4097, 2147483648
    %v4113 = vor.u32 1.1754944e-38, %v4112
    %v4114 = vsel %vm4111, %v4113, %v4109
    %v4115 = vmul.f32 1.0, %v4114
    %v4116 = vrcp.pop %v4098
    %v4117 = vmul.f32 %v4098, %v4116
    %v4118 = vsub.f32 1.0, %v4117
    %v4119 = vmul.f32 %v4116, %v4118
    %v4120 = vadd.f32 %v4116, %v4119
    %vm4121 = vweird.f32 %v4098
    %vm4122 = vweird.f32 %v4116
    %vm4123 = vmor %vm4121, %vm4122
    %v4124 = vsel %vm4123, %v4116, %v4120
    %v4125 = vand.u32 2147483647, %v4098
    %vm4126 = vcmp.eq.f32.partialorder %v4125, 8.507059e+37
    %v4127 = vand.u32 %v4098, 2147483648
    %v4128 = vor.u32 1.1754944e-38, %v4127
    %v4129 = vsel %vm4126, %v4128, %v4124
    %v4130 = vmul.f32 1.0, %v4129
    %v4131 = vrcp.pop %v4099
    %v4132 = vmul.f32 %v4099, %v4131
    %v4133 = vsub.f32 1.0, %v4132
    %v4134 = vmul.f32 %v4131, %v4133
    %v4135 = vadd.f32 %v4131, %v4134
    %vm4136 = vweird.f32 %v4099
    %vm4137 = vweird.f32 %v4131
    %vm4138 = vmor %vm4136, %vm4137
    %v4139 = vsel %vm4138, %v4131, %v4135
    %v4140 = vand.u32 2147483647, %v4099
    %vm4141 = vcmp.eq.f32.partialorder %v4140, 8.507059e+37
    %v4142 = vand.u32 %v4099, 2147483648
    %v4143 = vor.u32 1.1754944e-38, %v4142
    %v4144 = vsel %vm4141, %v4143, %v4139
    %v4145 = vmul.f32 1.0, %v4144
    %v4146 = vrcp.pop %v4100
    %v4147 = vmul.f32 %v4100, %v4146
    %v4148 = vsub.f32 1.0, %v4147
    %v4149 = vmul.f32 %v4146, %v4148
    %v4150 = vadd.f32 %v4146, %v4149
    %vm4151 = vweird.f32 %v4100
    %vm4152 = vweird.f32 %v4146
    %vm4153 = vmor %vm4151, %vm4152
    %v4154 = vsel %vm4153, %v4146, %v4150
    %v4155 = vand.u32 2147483647, %v4100
    %vm4156 = vcmp.eq.f32.partialorder %v4155, 8.507059e+37
    %v4157 = vand.u32 %v4100, 2147483648
    %v4158 = vor.u32 1.1754944e-38, %v4157
    %v4159 = vsel %vm4156, %v4158, %v4154
    %v4160 = vmul.f32 1.0, %v4159
    %v4161 = vmul.f32 %v4035, %v3450
    %v4162 = vmul.f32 %v4050, %v3451
    %v4163 = vmul.f32 %v4065, %v3452
    %v4164 = vmul.f32 %v4080, %v3453
    %v4165 = vmul.f32 %v3959, %v4081
    %v4166 = vmul.f32 %v3974, %v4082
    %v4167 = vmul.f32 %v3989, %v4083
    %v4168 = vmul.f32 %v4004, %v4084
    %v4169 = vadd.f32 %v4161, %v4165
    %v4170 = vadd.f32 %v4162, %v4166
    %v4171 = vadd.f32 %v4163, %v4167
    %v4172 = vadd.f32 %v4164, %v4168
    %v4173 = vtanh.pop %v4169
    %v4174 = vtanh.pop %v4170
    %v4175 = vtanh.pop %v4171
    %v4176 = vtanh.pop %v4172
    %v4177 = vmul.f32 %v4115, %v4173
    %v4178 = vmul.f32 %v4130, %v4174
    %v4179 = vmul.f32 %v4145, %v4175
    %v4180 = vmul.f32 %v4160, %v4176
    %4181 = vrot.lane.b32.xlu0 %v308, 48
    %v4182 = vpop.permute.xlu0 %4181
    %4183 = vrot.lane.b32.xlu0 %v310, 48
    %v4184 = vpop.permute.xlu0 %4183
    %4185 = vrot.lane.b32.xlu0 %v313, 48
    %v4186 = vpop.permute.xlu0 %4185
    %4187 = vrot.lane.b32.xlu0 %v315, 48
    %v4188 = vpop.permute.xlu0 %4187
    %4189 = vrot.lane.b32.xlu0 %v318, 48
    %v4190 = vpop.permute.xlu0 %4189
    %4191 = vrot.lane.b32.xlu0 %v320, 48
    %v4192 = vpop.permute.xlu0 %4191
    %4193 = vrot.lane.b32.xlu0 %v323, 48
    %v4194 = vpop.permute.xlu0 %4193
    %4195 = vrot.lane.b32.xlu0 %v325, 48
    %v4196 = vpop.permute.xlu0 %4195
    %4197 = vrot.lane.b32.xlu0 %v328, 48
    %v4198 = vpop.permute.xlu0 %4197
    %4199 = vrot.lane.b32.xlu0 %v330, 48
    %v4200 = vpop.permute.xlu0 %4199
    %4201 = vrot.lane.b32.xlu0 %v333, 48
    %v4202 = vpop.permute.xlu0 %4201
    %4203 = vrot.lane.b32.xlu0 %v335, 48
    %v4204 = vpop.permute.xlu0 %4203
    %4205 = vrot.lane.b32.xlu0 %v338, 48
    %v4206 = vpop.permute.xlu0 %4205
    %4207 = vrot.lane.b32.xlu0 %v340, 48
    %v4208 = vpop.permute.xlu0 %4207
    %4209 = vrot.lane.b32.xlu0 %v343, 48
    %v4210 = vpop.permute.xlu0 %4209
    %4211 = vrot.lane.b32.xlu0 %v345, 48
    %v4212 = vpop.permute.xlu0 %4211
    %4229 = vmatpush.bf16.msra.mxu0 0
    %4230 = vmatpush.bf16.msra.mxu0 0
    %4231 = vmatpush.bf16.msra.mxu0 0
    %4232 = vmatpush.bf16.msra.mxu0 0
    %4233 = vmatpush.bf16.msra.mxu0 0
    %4234 = vmatpush.bf16.msra.mxu0 0
    %4235 = vmatpush.bf16.msra.mxu0 %v3814
    %4236 = vmatpush.bf16.msra.mxu0 %v3813
    %4237 = vmatmul.bf16.gmra.mxu0 %v389
    %v4238 = vpop.f32.mrf.mxu0
    %v4239 = vadd.f32 %v4182, %v4238
    %v4240 = vpop.f32.mrf.mxu0
    %v4241 = vadd.f32 %v4184, %v4240
    %4242 = vmatmul.bf16.gmra.mxu0 %v392
    %v4243 = vpop.f32.mrf.mxu0
    %v4244 = vadd.f32 %v4186, %v4243
    %v4245 = vpop.f32.mrf.mxu0
    %v4246 = vadd.f32 %v4188, %v4245
    %4247 = vmatmul.bf16.gmra.mxu0 %v395
    %v4248 = vpop.f32.mrf.mxu0
    %v4249 = vadd.f32 %v4190, %v4248
    %v4250 = vpop.f32.mrf.mxu0
    %v4251 = vadd.f32 %v4192, %v4250
    %4252 = vmatmul.bf16.gmra.mxu0 %v398
    %v4253 = vpop.f32.mrf.mxu0
    %v4254 = vadd.f32 %v4194, %v4253
    %v4255 = vpop.f32.mrf.mxu0
    %v4256 = vadd.f32 %v4196, %v4255
    %4257 = vmatmul.bf16.gmra.mxu0 %v401
    %v4258 = vpop.f32.mrf.mxu0
    %v4259 = vadd.f32 %v4198, %v4258
    %v4260 = vpop.f32.mrf.mxu0
    %v4261 = vadd.f32 %v4200, %v4260
    %4262 = vmatmul.bf16.gmra.mxu0 %v404
    %v4263 = vpop.f32.mrf.mxu0
    %v4264 = vadd.f32 %v4202, %v4263
    %v4265 = vpop.f32.mrf.mxu0
    %v4266 = vadd.f32 %v4204, %v4265
    %4267 = vmatmul.bf16.gmra.mxu0 %v407
    %v4268 = vpop.f32.mrf.mxu0
    %v4269 = vadd.f32 %v4206, %v4268
    %v4270 = vpop.f32.mrf.mxu0
    %v4271 = vadd.f32 %v4208, %v4270
    %4272 = vmatmul.bf16.gmra.mxu0 %v410
    %v4273 = vpop.f32.mrf.mxu0
    %v4274 = vadd.f32 %v4210, %v4273
    %v4275 = vpop.f32.mrf.mxu0
    %v4276 = vadd.f32 %v4212, %v4275
    %4277 = vdwg.mxu0
    %v4278 = vxor.u32 %v4239, 2147483648
    %v4279 = vxor.u32 %v4241, 2147483648
    %v4280 = vxor.u32 %v4244, 2147483648
    %v4281 = vxor.u32 %v4246, 2147483648
    %v4282 = vmul.f32 %v4278, 1.442695
    %v4283 = vpow.pop %v4282
    %v4284 = vmul.f32 %v4279, 1.442695
    %v4285 = vpow.pop %v4284
    %v4286 = vmul.f32 %v4280, 1.442695
    %v4287 = vpow.pop %v4286
    %v4288 = vmul.f32 %v4281, 1.442695
    %v4289 = vpow.pop %v4288
    %v4290 = vadd.f32 %v4283, 1.0
    %v4291 = vadd.f32 %v4285, 1.0
    %v4292 = vadd.f32 %v4287, 1.0
    %v4293 = vadd.f32 %v4289, 1.0
    %v4294 = vrcp.pop %v4290
    %v4295 = vmul.f32 %v4290, %v4294
    %v4296 = vsub.f32 1.0, %v4295
    %v4297 = vmul.f32 %v4294, %v4296
    %v4298 = vadd.f32 %v4294, %v4297
    %vm4299 = vweird.f32 %v4290
    %vm4300 = vweird.f32 %v4294
    %vm4301 = vmor %vm4299, %vm4300
    %v4302 = vsel %vm4301, %v4294, %v4298
    %v4303 = vand.u32 2147483647, %v4290
    %vm4304 = vcmp.eq.f32.partialorder %v4303, 8.507059e+37
    %v4305 = vand.u32 %v4290, 2147483648
    %v4306 = vor.u32 1.1754944e-38, %v4305
    %v4307 = vsel %vm4304, %v4306, %v4302
    %v4308 = vmul.f32 1.0, %v4307
    %v4309 = vrcp.pop %v4291
    %v4310 = vmul.f32 %v4291, %v4309
    %v4311 = vsub.f32 1.0, %v4310
    %v4312 = vmul.f32 %v4309, %v4311
    %v4313 = vadd.f32 %v4309, %v4312
    %vm4314 = vweird.f32 %v4291
    %vm4315 = vweird.f32 %v4309
    %vm4316 = vmor %vm4314, %vm4315
    %v4317 = vsel %vm4316, %v4309, %v4313
    %v4318 = vand.u32 2147483647, %v4291
    %vm4319 = vcmp.eq.f32.partialorder %v4318, 8.507059e+37
    %v4320 = vand.u32 %v4291, 2147483648
    %v4321 = vor.u32 1.1754944e-38, %v4320
    %v4322 = vsel %vm4319, %v4321, %v4317
    %v4323 = vmul.f32 1.0, %v4322
    %v4324 = vrcp.pop %v4292
    %v4325 = vmul.f32 %v4292, %v4324
    %v4326 = vsub.f32 1.0, %v4325
    %v4327 = vmul.f32 %v4324, %v4326
    %v4328 = vadd.f32 %v4324, %v4327
    %vm4329 = vweird.f32 %v4292
    %vm4330 = vweird.f32 %v4324
    %vm4331 = vmor %vm4329, %vm4330
    %v4332 = vsel %vm4331, %v4324, %v4328
    %v4333 = vand.u32 2147483647, %v4292
    %vm4334 = vcmp.eq.f32.partialorder %v4333, 8.507059e+37
    %v4335 = vand.u32 %v4292, 2147483648
    %v4336 = vor.u32 1.1754944e-38, %v4335
    %v4337 = vsel %vm4334, %v4336, %v4332
    %v4338 = vmul.f32 1.0, %v4337
    %v4339 = vrcp.pop %v4293
    %v4340 = vmul.f32 %v4293, %v4339
    %v4341 = vsub.f32 1.0, %v4340
    %v4342 = vmul.f32 %v4339, %v4341
    %v4343 = vadd.f32 %v4339, %v4342
    %vm4344 = vweird.f32 %v4293
    %vm4345 = vweird.f32 %v4339
    %vm4346 = vmor %vm4344, %vm4345
    %v4347 = vsel %vm4346, %v4339, %v4343
    %v4348 = vand.u32 2147483647, %v4293
    %vm4349 = vcmp.eq.f32.partialorder %v4348, 8.507059e+37
    %v4350 = vand.u32 %v4293, 2147483648
    %v4351 = vor.u32 1.1754944e-38, %v4350
    %v4352 = vsel %vm4349, %v4351, %v4347
    %v4353 = vmul.f32 1.0, %v4352
    %v4354 = vxor.u32 %v4249, 2147483648
    %v4355 = vxor.u32 %v4251, 2147483648
    %v4356 = vxor.u32 %v4254, 2147483648
    %v4357 = vxor.u32 %v4256, 2147483648
    %v4358 = vmul.f32 %v4354, 1.442695
    %v4359 = vpow.pop %v4358
    %v4360 = vmul.f32 %v4355, 1.442695
    %v4361 = vpow.pop %v4360
    %v4362 = vmul.f32 %v4356, 1.442695
    %v4363 = vpow.pop %v4362
    %v4364 = vmul.f32 %v4357, 1.442695
    %v4365 = vpow.pop %v4364
    %v4366 = vadd.f32 %v4359, 1.0
    %v4367 = vadd.f32 %v4361, 1.0
    %v4368 = vadd.f32 %v4363, 1.0
    %v4369 = vadd.f32 %v4365, 1.0
    %v4370 = vrcp.pop %v4366
    %v4371 = vmul.f32 %v4366, %v4370
    %v4372 = vsub.f32 1.0, %v4371
    %v4373 = vmul.f32 %v4370, %v4372
    %v4374 = vadd.f32 %v4370, %v4373
    %vm4375 = vweird.f32 %v4366
    %vm4376 = vweird.f32 %v4370
    %vm4377 = vmor %vm4375, %vm4376
    %v4378 = vsel %vm4377, %v4370, %v4374
    %v4379 = vand.u32 2147483647, %v4366
    %vm4380 = vcmp.eq.f32.partialorder %v4379, 8.507059e+37
    %v4381 = vand.u32 %v4366, 2147483648
    %v4382 = vor.u32 1.1754944e-38, %v4381
    %v4383 = vsel %vm4380, %v4382, %v4378
    %v4384 = vmul.f32 1.0, %v4383
    %v4385 = vrcp.pop %v4367
    %v4386 = vmul.f32 %v4367, %v4385
    %v4387 = vsub.f32 1.0, %v4386
    %v4388 = vmul.f32 %v4385, %v4387
    %v4389 = vadd.f32 %v4385, %v4388
    %vm4390 = vweird.f32 %v4367
    %vm4391 = vweird.f32 %v4385
    %vm4392 = vmor %vm4390, %vm4391
    %v4393 = vsel %vm4392, %v4385, %v4389
    %v4394 = vand.u32 2147483647, %v4367
    %vm4395 = vcmp.eq.f32.partialorder %v4394, 8.507059e+37
    %v4396 = vand.u32 %v4367, 2147483648
    %v4397 = vor.u32 1.1754944e-38, %v4396
    %v4398 = vsel %vm4395, %v4397, %v4393
    %v4399 = vmul.f32 1.0, %v4398
    %v4400 = vrcp.pop %v4368
    %v4401 = vmul.f32 %v4368, %v4400
    %v4402 = vsub.f32 1.0, %v4401
    %v4403 = vmul.f32 %v4400, %v4402
    %v4404 = vadd.f32 %v4400, %v4403
    %vm4405 = vweird.f32 %v4368
    %vm4406 = vweird.f32 %v4400
    %vm4407 = vmor %vm4405, %vm4406
    %v4408 = vsel %vm4407, %v4400, %v4404
    %v4409 = vand.u32 2147483647, %v4368
    %vm4410 = vcmp.eq.f32.partialorder %v4409, 8.507059e+37
    %v4411 = vand.u32 %v4368, 2147483648
    %v4412 = vor.u32 1.1754944e-38, %v4411
    %v4413 = vsel %vm4410, %v4412, %v4408
    %v4414 = vmul.f32 1.0, %v4413
    %v4415 = vrcp.pop %v4369
    %v4416 = vmul.f32 %v4369, %v4415
    %v4417 = vsub.f32 1.0, %v4416
    %v4418 = vmul.f32 %v4415, %v4417
    %v4419 = vadd.f32 %v4415, %v4418
    %vm4420 = vweird.f32 %v4369
    %vm4421 = vweird.f32 %v4415
    %vm4422 = vmor %vm4420, %vm4421
    %v4423 = vsel %vm4422, %v4415, %v4419
    %v4424 = vand.u32 2147483647, %v4369
    %vm4425 = vcmp.eq.f32.partialorder %v4424, 8.507059e+37
    %v4426 = vand.u32 %v4369, 2147483648
    %v4427 = vor.u32 1.1754944e-38, %v4426
    %v4428 = vsel %vm4425, %v4427, %v4423
    %v4429 = vmul.f32 1.0, %v4428
    %v4430 = vtanh.pop %v4259
    %v4431 = vtanh.pop %v4261
    %v4432 = vtanh.pop %v4264
    %v4433 = vtanh.pop %v4266
    %v4434 = vxor.u32 %v4269, 2147483648
    %v4435 = vxor.u32 %v4271, 2147483648
    %v4436 = vxor.u32 %v4274, 2147483648
    %v4437 = vxor.u32 %v4276, 2147483648
    %v4438 = vmul.f32 %v4434, 1.442695
    %v4439 = vpow.pop %v4438
    %v4440 = vmul.f32 %v4435, 1.442695
    %v4441 = vpow.pop %v4440
    %v4442 = vmul.f32 %v4436, 1.442695
    %v4443 = vpow.pop %v4442
    %v4444 = vmul.f32 %v4437, 1.442695
    %v4445 = vpow.pop %v4444
    %v4446 = vadd.f32 %v4439, 1.0
    %v4447 = vadd.f32 %v4441, 1.0
    %v4448 = vadd.f32 %v4443, 1.0
    %v4449 = vadd.f32 %v4445, 1.0
    %v4450 = vrcp.pop %v4446
    %v4451 = vmul.f32 %v4446, %v4450
    %v4452 = vsub.f32 1.0, %v4451
    %v4453 = vmul.f32 %v4450, %v4452
    %v4454 = vadd.f32 %v4450, %v4453
    %vm4455 = vweird.f32 %v4446
    %vm4456 = vweird.f32 %v4450
    %vm4457 = vmor %vm4455, %vm4456
    %v4458 = vsel %vm4457, %v4450, %v4454
    %v4459 = vand.u32 2147483647, %v4446
    %vm4460 = vcmp.eq.f32.partialorder %v4459, 8.507059e+37
    %v4461 = vand.u32 %v4446, 2147483648
    %v4462 = vor.u32 1.1754944e-38, %v4461
    %v4463 = vsel %vm4460, %v4462, %v4458
    %v4464 = vmul.f32 1.0, %v4463
    %v4465 = vrcp.pop %v4447
    %v4466 = vmul.f32 %v4447, %v4465
    %v4467 = vsub.f32 1.0, %v4466
    %v4468 = vmul.f32 %v4465, %v4467
    %v4469 = vadd.f32 %v4465, %v4468
    %vm4470 = vweird.f32 %v4447
    %vm4471 = vweird.f32 %v4465
    %vm4472 = vmor %vm4470, %vm4471
    %v4473 = vsel %vm4472, %v4465, %v4469
    %v4474 = vand.u32 2147483647, %v4447
    %vm4475 = vcmp.eq.f32.partialorder %v4474, 8.507059e+37
    %v4476 = vand.u32 %v4447, 2147483648
    %v4477 = vor.u32 1.1754944e-38, %v4476
    %v4478 = vsel %vm4475, %v4477, %v4473
    %v4479 = vmul.f32 1.0, %v4478
    %v4480 = vrcp.pop %v4448
    %v4481 = vmul.f32 %v4448, %v4480
    %v4482 = vsub.f32 1.0, %v4481
    %v4483 = vmul.f32 %v4480, %v4482
    %v4484 = vadd.f32 %v4480, %v4483
    %vm4485 = vweird.f32 %v4448
    %vm4486 = vweird.f32 %v4480
    %vm4487 = vmor %vm4485, %vm4486
    %v4488 = vsel %vm4487, %v4480, %v4484
    %v4489 = vand.u32 2147483647, %v4448
    %vm4490 = vcmp.eq.f32.partialorder %v4489, 8.507059e+37
    %v4491 = vand.u32 %v4448, 2147483648
    %v4492 = vor.u32 1.1754944e-38, %v4491
    %v4493 = vsel %vm4490, %v4492, %v4488
    %v4494 = vmul.f32 1.0, %v4493
    %v4495 = vrcp.pop %v4449
    %v4496 = vmul.f32 %v4449, %v4495
    %v4497 = vsub.f32 1.0, %v4496
    %v4498 = vmul.f32 %v4495, %v4497
    %v4499 = vadd.f32 %v4495, %v4498
    %vm4500 = vweird.f32 %v4449
    %vm4501 = vweird.f32 %v4495
    %vm4502 = vmor %vm4500, %vm4501
    %v4503 = vsel %vm4502, %v4495, %v4499
    %v4504 = vand.u32 2147483647, %v4449
    %vm4505 = vcmp.eq.f32.partialorder %v4504, 8.507059e+37
    %v4506 = vand.u32 %v4449, 2147483648
    %v4507 = vor.u32 1.1754944e-38, %v4506
    %v4508 = vsel %vm4505, %v4507, %v4503
    %v4509 = vmul.f32 1.0, %v4508
    %v4510 = vmul.f32 %v4384, %v3799
    %v4511 = vmul.f32 %v4399, %v3800
    %v4512 = vmul.f32 %v4414, %v3801
    %v4513 = vmul.f32 %v4429, %v3802
    %v4514 = vmul.f32 %v4308, %v4430
    %v4515 = vmul.f32 %v4323, %v4431
    %v4516 = vmul.f32 %v4338, %v4432
    %v4517 = vmul.f32 %v4353, %v4433
    %v4518 = vadd.f32 %v4510, %v4514
    %v4519 = vadd.f32 %v4511, %v4515
    %v4520 = vadd.f32 %v4512, %v4516
    %v4521 = vadd.f32 %v4513, %v4517
    %v4522 = vtanh.pop %v4518
    %v4523 = vtanh.pop %v4519
    %v4524 = vtanh.pop %v4520
    %v4525 = vtanh.pop %v4521
    %v4526 = vmul.f32 %v4464, %v4522
    %v4527 = vmul.f32 %v4479, %v4523
    %v4528 = vmul.f32 %v4494, %v4524
    %v4529 = vmul.f32 %v4509, %v4525
    %v4530 = vpack.c.bf16 %v4178, %v4177
    %v4531 = vpack.c.bf16 %v4180, %v4179
    %v4532 = vpack.c.bf16 %v4527, %v4526
    %v4533 = vpack.c.bf16 %v4529, %v4528
    %4534 = vmatpush.bf16.msra.mxu0 0
    %4535 = vmatpush.bf16.msra.mxu0 0
    %4536 = vmatpush.bf16.msra.mxu0 0
    %4537 = vmatpush.bf16.msra.mxu0 0
    %4538 = vmatpush.bf16.msra.mxu0 0
    %4539 = vmatpush.bf16.msra.mxu0 0
    %4540 = vmatpush.bf16.msra.mxu0 %v4533
    %4541 = vmatpush.bf16.msra.mxu0 %v4532
    %4542 = vmatmul.bf16.gmra.mxu0 %v756
    %v4543 = vpop.f32.mrf.mxu0
    %v4544 = vadd.f32 0.0, %v4543
    %v4545 = vpop.f32.mrf.mxu0
    %v4546 = vadd.f32 0.0, %v4545
    %4547 = vmatmul.bf16.gmra.mxu0 %v759
    %v4548 = vpop.f32.mrf.mxu0
    %v4549 = vadd.f32 0.0, %v4548
    %v4550 = vpop.f32.mrf.mxu0
    %v4551 = vadd.f32 0.0, %v4550
    %4552 = vmatmul.bf16.gmra.mxu0 %v762
    %v4553 = vpop.f32.mrf.mxu0
    %v4554 = vadd.f32 0.0, %v4553
    %v4555 = vpop.f32.mrf.mxu0
    %v4556 = vadd.f32 0.0, %v4555
    %4557 = vmatmul.bf16.gmra.mxu0 %v765
    %v4558 = vpop.f32.mrf.mxu0
    %v4559 = vadd.f32 0.0, %v4558
    %v4560 = vpop.f32.mrf.mxu0
    %v4561 = vadd.f32 0.0, %v4560
    %4562 = vmatmul.bf16.gmra.mxu0 %v768
    %v4563 = vpop.f32.mrf.mxu0
    %v4564 = vadd.f32 0.0, %v4563
    %v4565 = vpop.f32.mrf.mxu0
    %v4566 = vadd.f32 0.0, %v4565
    %4567 = vmatmul.bf16.gmra.mxu0 %v771
    %v4568 = vpop.f32.mrf.mxu0
    %v4569 = vadd.f32 0.0, %v4568
    %v4570 = vpop.f32.mrf.mxu0
    %v4571 = vadd.f32 0.0, %v4570
    %4572 = vmatmul.bf16.gmra.mxu0 %v774
    %v4573 = vpop.f32.mrf.mxu0
    %v4574 = vadd.f32 0.0, %v4573
    %v4575 = vpop.f32.mrf.mxu0
    %v4576 = vadd.f32 0.0, %v4575
    %4577 = vmatmul.bf16.gmra.mxu0 %v777
    %v4578 = vpop.f32.mrf.mxu0
    %v4579 = vadd.f32 0.0, %v4578
    %v4580 = vpop.f32.mrf.mxu0
    %v4581 = vadd.f32 0.0, %v4580
    %4582 = vdwg.mxu0
    %4583 = vmatpush.bf16.msra.mxu0 0
    %4584 = vmatpush.bf16.msra.mxu0 0
    %4585 = vmatpush.bf16.msra.mxu0 0
    %4586 = vmatpush.bf16.msra.mxu0 0
    %4587 = vmatpush.bf16.msra.mxu0 0
    %4588 = vmatpush.bf16.msra.mxu0 0
    %4589 = vmatpush.bf16.msra.mxu0 %v4531
    %4590 = vmatpush.bf16.msra.mxu0 %v4530
    %4591 = vmatmul.bf16.gmra.mxu0 %v869
    %v4592 = vpop.f32.mrf.mxu0
    %v4593 = vadd.f32 %v4544, %v4592
    %v4594 = vpop.f32.mrf.mxu0
    %v4595 = vadd.f32 %v4546, %v4594
    %4596 = vmatmul.bf16.gmra.mxu0 %v872
    %v4597 = vpop.f32.mrf.mxu0
    %v4598 = vadd.f32 %v4549, %v4597
    %v4599 = vpop.f32.mrf.mxu0
    %v4600 = vadd.f32 %v4551, %v4599
    %4601 = vmatmul.bf16.gmra.mxu0 %v875
    %v4602 = vpop.f32.mrf.mxu0
    %v4603 = vadd.f32 %v4554, %v4602
    %v4604 = vpop.f32.mrf.mxu0
    %v4605 = vadd.f32 %v4556, %v4604
    %4606 = vmatmul.bf16.gmra.mxu0 %v878
    %v4607 = vpop.f32.mrf.mxu0
    %v4608 = vadd.f32 %v4559, %v4607
    %v4609 = vpop.f32.mrf.mxu0
    %v4610 = vadd.f32 %v4561, %v4609
    %4611 = vmatmul.bf16.gmra.mxu0 %v881
    %v4612 = vpop.f32.mrf.mxu0
    %v4613 = vadd.f32 %v4564, %v4612
    %v4614 = vpop.f32.mrf.mxu0
    %v4615 = vadd.f32 %v4566, %v4614
    %4616 = vmatmul.bf16.gmra.mxu0 %v884
    %v4617 = vpop.f32.mrf.mxu0
    %v4618 = vadd.f32 %v4569, %v4617
    %v4619 = vpop.f32.mrf.mxu0
    %v4620 = vadd.f32 %v4571, %v4619
    %4621 = vmatmul.bf16.gmra.mxu0 %v887
    %v4622 = vpop.f32.mrf.mxu0
    %v4623 = vadd.f32 %v4574, %v4622
    %v4624 = vpop.f32.mrf.mxu0
    %v4625 = vadd.f32 %v4576, %v4624
    %4626 = vmatmul.bf16.gmra.mxu0 %v890
    %v4627 = vpop.f32.mrf.mxu0
    %v4628 = vadd.f32 %v4579, %v4627
    %v4629 = vpop.f32.mrf.mxu0
    %v4630 = vadd.f32 %v4581, %v4629
    %4631 = vdwg.mxu0
    %v4632 = vadd.f32 %v4593, %v944
    %v4633 = vadd.f32 %v4595, %v949
    %v4634 = vadd.f32 %v4598, %v954
    %v4635 = vadd.f32 %v4600, %v959
    %v4636 = vadd.f32 %v4603, %v964
    %v4637 = vadd.f32 %v4605, %v969
    %v4638 = vadd.f32 %v4608, %v974
    %v4639 = vadd.f32 %v4610, %v979
    %v4640 = vadd.f32 %v4613, %v984
    %v4641 = vadd.f32 %v4615, %v989
    %v4642 = vadd.f32 %v4618, %v994
    %v4643 = vadd.f32 %v4620, %v999
    %v4644 = vadd.f32 %v4623, %v1004
    %v4645 = vadd.f32 %v4625, %v1009
    %v4646 = vadd.f32 %v4628, %v1014
    %v4647 = vadd.f32 %v4630, %v1019
    %v4648 = vxor.u32 %v4632, 2147483648
    %v4649 = vxor.u32 %v4633, 2147483648
    %v4650 = vxor.u32 %v4634, 2147483648
    %v4651 = vxor.u32 %v4635, 2147483648
    %v4652 = vmul.f32 %v4648, 1.442695
    %v4653 = vpow.pop %v4652
    %v4654 = vmul.f32 %v4649, 1.442695
    %v4655 = vpow.pop %v4654
    %v4656 = vmul.f32 %v4650, 1.442695
    %v4657 = vpow.pop %v4656
    %v4658 = vmul.f32 %v4651, 1.442695
    %v4659 = vpow.pop %v4658
    %v4660 = vadd.f32 %v4653, 1.0
    %v4661 = vadd.f32 %v4655, 1.0
    %v4662 = vadd.f32 %v4657, 1.0
    %v4663 = vadd.f32 %v4659, 1.0
    %v4664 = vrcp.pop %v4660
    %v4665 = vmul.f32 %v4660, %v4664
    %v4666 = vsub.f32 1.0, %v4665
    %v4667 = vmul.f32 %v4664, %v4666
    %v4668 = vadd.f32 %v4664, %v4667
    %vm4669 = vweird.f32 %v4660
    %vm4670 = vweird.f32 %v4664
    %vm4671 = vmor %vm4669, %vm4670
    %v4672 = vsel %vm4671, %v4664, %v4668
    %v4673 = vand.u32 2147483647, %v4660
    %vm4674 = vcmp.eq.f32.partialorder %v4673, 8.507059e+37
    %v4675 = vand.u32 %v4660, 2147483648
    %v4676 = vor.u32 1.1754944e-38, %v4675
    %v4677 = vsel %vm4674, %v4676, %v4672
    %v4678 = vmul.f32 1.0, %v4677
    %v4679 = vrcp.pop %v4661
    %v4680 = vmul.f32 %v4661, %v4679
    %v4681 = vsub.f32 1.0, %v4680
    %v4682 = vmul.f32 %v4679, %v4681
    %v4683 = vadd.f32 %v4679, %v4682
    %vm4684 = vweird.f32 %v4661
    %vm4685 = vweird.f32 %v4679
    %vm4686 = vmor %vm4684, %vm4685
    %v4687 = vsel %vm4686, %v4679, %v4683
    %v4688 = vand.u32 2147483647, %v4661
    %vm4689 = vcmp.eq.f32.partialorder %v4688, 8.507059e+37
    %v4690 = vand.u32 %v4661, 2147483648
    %v4691 = vor.u32 1.1754944e-38, %v4690
    %v4692 = vsel %vm4689, %v4691, %v4687
    %v4693 = vmul.f32 1.0, %v4692
    %v4694 = vrcp.pop %v4662
    %v4695 = vmul.f32 %v4662, %v4694
    %v4696 = vsub.f32 1.0, %v4695
    %v4697 = vmul.f32 %v4694, %v4696
    %v4698 = vadd.f32 %v4694, %v4697
    %vm4699 = vweird.f32 %v4662
    %vm4700 = vweird.f32 %v4694
    %vm4701 = vmor %vm4699, %vm4700
    %v4702 = vsel %vm4701, %v4694, %v4698
    %v4703 = vand.u32 2147483647, %v4662
    %vm4704 = vcmp.eq.f32.partialorder %v4703, 8.507059e+37
    %v4705 = vand.u32 %v4662, 2147483648
    %v4706 = vor.u32 1.1754944e-38, %v4705
    %v4707 = vsel %vm4704, %v4706, %v4702
    %v4708 = vmul.f32 1.0, %v4707
    %v4709 = vrcp.pop %v4663
    %v4710 = vmul.f32 %v4663, %v4709
    %v4711 = vsub.f32 1.0, %v4710
    %v4712 = vmul.f32 %v4709, %v4711
    %v4713 = vadd.f32 %v4709, %v4712
    %vm4714 = vweird.f32 %v4663
    %vm4715 = vweird.f32 %v4709
    %vm4716 = vmor %vm4714, %vm4715
    %v4717 = vsel %vm4716, %v4709, %v4713
    %v4718 = vand.u32 2147483647, %v4663
    %vm4719 = vcmp.eq.f32.partialorder %v4718, 8.507059e+37
    %v4720 = vand.u32 %v4663, 2147483648
    %v4721 = vor.u32 1.1754944e-38, %v4720
    %v4722 = vsel %vm4719, %v4721, %v4717
    %v4723 = vmul.f32 1.0, %v4722
    %v4724 = vxor.u32 %v4636, 2147483648
    %v4725 = vxor.u32 %v4637, 2147483648
    %v4726 = vxor.u32 %v4638, 2147483648
    %v4727 = vxor.u32 %v4639, 2147483648
    %v4728 = vmul.f32 %v4724, 1.442695
    %v4729 = vpow.pop %v4728
    %v4730 = vmul.f32 %v4725, 1.442695
    %v4731 = vpow.pop %v4730
    %v4732 = vmul.f32 %v4726, 1.442695
    %v4733 = vpow.pop %v4732
    %v4734 = vmul.f32 %v4727, 1.442695
    %v4735 = vpow.pop %v4734
    %v4736 = vadd.f32 %v4729, 1.0
    %v4737 = vadd.f32 %v4731, 1.0
    %v4738 = vadd.f32 %v4733, 1.0
    %v4739 = vadd.f32 %v4735, 1.0
    %v4740 = vrcp.pop %v4736
    %v4741 = vmul.f32 %v4736, %v4740
    %v4742 = vsub.f32 1.0, %v4741
    %v4743 = vmul.f32 %v4740, %v4742
    %v4744 = vadd.f32 %v4740, %v4743
    %vm4745 = vweird.f32 %v4736
    %vm4746 = vweird.f32 %v4740
    %vm4747 = vmor %vm4745, %vm4746
    %v4748 = vsel %vm4747, %v4740, %v4744
    %v4749 = vand.u32 2147483647, %v4736
    %vm4750 = vcmp.eq.f32.partialorder %v4749, 8.507059e+37
    %v4751 = vand.u32 %v4736, 2147483648
    %v4752 = vor.u32 1.1754944e-38, %v4751
    %v4753 = vsel %vm4750, %v4752, %v4748
    %v4754 = vmul.f32 1.0, %v4753
    %v4755 = vrcp.pop %v4737
    %v4756 = vmul.f32 %v4737, %v4755
    %v4757 = vsub.f32 1.0, %v4756
    %v4758 = vmul.f32 %v4755, %v4757
    %v4759 = vadd.f32 %v4755, %v4758
    %vm4760 = vweird.f32 %v4737
    %vm4761 = vweird.f32 %v4755
    %vm4762 = vmor %vm4760, %vm4761
    %v4763 = vsel %vm4762, %v4755, %v4759
    %v4764 = vand.u32 2147483647, %v4737
    %vm4765 = vcmp.eq.f32.partialorder %v4764, 8.507059e+37
    %v4766 = vand.u32 %v4737, 2147483648
    %v4767 = vor.u32 1.1754944e-38, %v4766
    %v4768 = vsel %vm4765, %v4767, %v4763
    %v4769 = vmul.f32 1.0, %v4768
    %v4770 = vrcp.pop %v4738
    %v4771 = vmul.f32 %v4738, %v4770
    %v4772 = vsub.f32 1.0, %v4771
    %v4773 = vmul.f32 %v4770, %v4772
    %v4774 = vadd.f32 %v4770, %v4773
    %vm4775 = vweird.f32 %v4738
    %vm4776 = vweird.f32 %v4770
    %vm4777 = vmor %vm4775, %vm4776
    %v4778 = vsel %vm4777, %v4770, %v4774
    %v4779 = vand.u32 2147483647, %v4738
    %vm4780 = vcmp.eq.f32.partialorder %v4779, 8.507059e+37
    %v4781 = vand.u32 %v4738, 2147483648
    %v4782 = vor.u32 1.1754944e-38, %v4781
    %v4783 = vsel %vm4780, %v4782, %v4778
    %v4784 = vmul.f32 1.0, %v4783
    %v4785 = vrcp.pop %v4739
    %v4786 = vmul.f32 %v4739, %v4785
    %v4787 = vsub.f32 1.0, %v4786
    %v4788 = vmul.f32 %v4785, %v4787
    %v4789 = vadd.f32 %v4785, %v4788
    %vm4790 = vweird.f32 %v4739
    %vm4791 = vweird.f32 %v4785
    %vm4792 = vmor %vm4790, %vm4791
    %v4793 = vsel %vm4792, %v4785, %v4789
    %v4794 = vand.u32 2147483647, %v4739
    %vm4795 = vcmp.eq.f32.partialorder %v4794, 8.507059e+37
    %v4796 = vand.u32 %v4739, 2147483648
    %v4797 = vor.u32 1.1754944e-38, %v4796
    %v4798 = vsel %vm4795, %v4797, %v4793
    %v4799 = vmul.f32 1.0, %v4798
    %v4800 = vtanh.pop %v4640
    %v4801 = vtanh.pop %v4641
    %v4802 = vtanh.pop %v4642
    %v4803 = vtanh.pop %v4643
    %v4804 = vxor.u32 %v4644, 2147483648
    %v4805 = vxor.u32 %v4645, 2147483648
    %v4806 = vxor.u32 %v4646, 2147483648
    %v4807 = vxor.u32 %v4647, 2147483648
    %v4808 = vmul.f32 %v4804, 1.442695
    %v4809 = vpow.pop %v4808
    %v4810 = vmul.f32 %v4805, 1.442695
    %v4811 = vpow.pop %v4810
    %v4812 = vmul.f32 %v4806, 1.442695
    %v4813 = vpow.pop %v4812
    %v4814 = vmul.f32 %v4807, 1.442695
    %v4815 = vpow.pop %v4814
    %v4816 = vadd.f32 %v4809, 1.0
    %v4817 = vadd.f32 %v4811, 1.0
    %v4818 = vadd.f32 %v4813, 1.0
    %v4819 = vadd.f32 %v4815, 1.0
    %v4820 = vrcp.pop %v4816
    %v4821 = vmul.f32 %v4816, %v4820
    %v4822 = vsub.f32 1.0, %v4821
    %v4823 = vmul.f32 %v4820, %v4822
    %v4824 = vadd.f32 %v4820, %v4823
    %vm4825 = vweird.f32 %v4816
    %vm4826 = vweird.f32 %v4820
    %vm4827 = vmor %vm4825, %vm4826
    %v4828 = vsel %vm4827, %v4820, %v4824
    %v4829 = vand.u32 2147483647, %v4816
    %vm4830 = vcmp.eq.f32.partialorder %v4829, 8.507059e+37
    %v4831 = vand.u32 %v4816, 2147483648
    %v4832 = vor.u32 1.1754944e-38, %v4831
    %v4833 = vsel %vm4830, %v4832, %v4828
    %v4834 = vmul.f32 1.0, %v4833
    %v4835 = vrcp.pop %v4817
    %v4836 = vmul.f32 %v4817, %v4835
    %v4837 = vsub.f32 1.0, %v4836
    %v4838 = vmul.f32 %v4835, %v4837
    %v4839 = vadd.f32 %v4835, %v4838
    %vm4840 = vweird.f32 %v4817
    %vm4841 = vweird.f32 %v4835
    %vm4842 = vmor %vm4840, %vm4841
    %v4843 = vsel %vm4842, %v4835, %v4839
    %v4844 = vand.u32 2147483647, %v4817
    %vm4845 = vcmp.eq.f32.partialorder %v4844, 8.507059e+37
    %v4846 = vand.u32 %v4817, 2147483648
    %v4847 = vor.u32 1.1754944e-38, %v4846
    %v4848 = vsel %vm4845, %v4847, %v4843
    %v4849 = vmul.f32 1.0, %v4848
    %v4850 = vrcp.pop %v4818
    %v4851 = vmul.f32 %v4818, %v4850
    %v4852 = vsub.f32 1.0, %v4851
    %v4853 = vmul.f32 %v4850, %v4852
    %v4854 = vadd.f32 %v4850, %v4853
    %vm4855 = vweird.f32 %v4818
    %vm4856 = vweird.f32 %v4850
    %vm4857 = vmor %vm4855, %vm4856
    %v4858 = vsel %vm4857, %v4850, %v4854
    %v4859 = vand.u32 2147483647, %v4818
    %vm4860 = vcmp.eq.f32.partialorder %v4859, 8.507059e+37
    %v4861 = vand.u32 %v4818, 2147483648
    %v4862 = vor.u32 1.1754944e-38, %v4861
    %v4863 = vsel %vm4860, %v4862, %v4858
    %v4864 = vmul.f32 1.0, %v4863
    %v4865 = vrcp.pop %v4819
    %v4866 = vmul.f32 %v4819, %v4865
    %v4867 = vsub.f32 1.0, %v4866
    %v4868 = vmul.f32 %v4865, %v4867
    %v4869 = vadd.f32 %v4865, %v4868
    %vm4870 = vweird.f32 %v4819
    %vm4871 = vweird.f32 %v4865
    %vm4872 = vmor %vm4870, %vm4871
    %v4873 = vsel %vm4872, %v4865, %v4869
    %v4874 = vand.u32 2147483647, %v4819
    %vm4875 = vcmp.eq.f32.partialorder %v4874, 8.507059e+37
    %v4876 = vand.u32 %v4819, 2147483648
    %v4877 = vor.u32 1.1754944e-38, %v4876
    %v4878 = vsel %vm4875, %v4877, %v4873
    %v4879 = vmul.f32 1.0, %v4878
    %v4880 = vmul.f32 %v4754, %v4169
    %v4881 = vmul.f32 %v4769, %v4170
    %v4882 = vmul.f32 %v4784, %v4171
    %v4883 = vmul.f32 %v4799, %v4172
    %v4884 = vmul.f32 %v4678, %v4800
    %v4885 = vmul.f32 %v4693, %v4801
    %v4886 = vmul.f32 %v4708, %v4802
    %v4887 = vmul.f32 %v4723, %v4803
    %v4888 = vadd.f32 %v4880, %v4884
    %v4889 = vadd.f32 %v4881, %v4885
    %v4890 = vadd.f32 %v4882, %v4886
    %v4891 = vadd.f32 %v4883, %v4887
    %v4892 = vtanh.pop %v4888
    %v4893 = vtanh.pop %v4889
    %v4894 = vtanh.pop %v4890
    %v4895 = vtanh.pop %v4891
    %v4896 = vmul.f32 %v4834, %v4892
    %v4897 = vmul.f32 %v4849, %v4893
    %v4898 = vmul.f32 %v4864, %v4894
    %v4899 = vmul.f32 %v4879, %v4895
    %4900 = vrot.lane.b32.xlu0 %v308, 32
    %v4901 = vpop.permute.xlu0 %4900
    %4902 = vrot.lane.b32.xlu0 %v310, 32
    %v4903 = vpop.permute.xlu0 %4902
    %4904 = vrot.lane.b32.xlu0 %v313, 32
    %v4905 = vpop.permute.xlu0 %4904
    %4906 = vrot.lane.b32.xlu0 %v315, 32
    %v4907 = vpop.permute.xlu0 %4906
    %4908 = vrot.lane.b32.xlu0 %v318, 32
    %v4909 = vpop.permute.xlu0 %4908
    %4910 = vrot.lane.b32.xlu0 %v320, 32
    %v4911 = vpop.permute.xlu0 %4910
    %4912 = vrot.lane.b32.xlu0 %v323, 32
    %v4913 = vpop.permute.xlu0 %4912
    %4914 = vrot.lane.b32.xlu0 %v325, 32
    %v4915 = vpop.permute.xlu0 %4914
    %4916 = vrot.lane.b32.xlu0 %v328, 32
    %v4917 = vpop.permute.xlu0 %4916
    %4918 = vrot.lane.b32.xlu0 %v330, 32
    %v4919 = vpop.permute.xlu0 %4918
    %4920 = vrot.lane.b32.xlu0 %v333, 32
    %v4921 = vpop.permute.xlu0 %4920
    %4922 = vrot.lane.b32.xlu0 %v335, 32
    %v4923 = vpop.permute.xlu0 %4922
    %4924 = vrot.lane.b32.xlu0 %v338, 32
    %v4925 = vpop.permute.xlu0 %4924
    %4926 = vrot.lane.b32.xlu0 %v340, 32
    %v4927 = vpop.permute.xlu0 %4926
    %4928 = vrot.lane.b32.xlu0 %v343, 32
    %v4929 = vpop.permute.xlu0 %4928
    %4930 = vrot.lane.b32.xlu0 %v345, 32
    %v4931 = vpop.permute.xlu0 %4930
    %4948 = vmatpush.bf16.msra.mxu0 0
    %4949 = vmatpush.bf16.msra.mxu0 0
    %4950 = vmatpush.bf16.msra.mxu0 0
    %4951 = vmatpush.bf16.msra.mxu0 0
    %4952 = vmatpush.bf16.msra.mxu0 0
    %4953 = vmatpush.bf16.msra.mxu0 0
    %4954 = vmatpush.bf16.msra.mxu0 %v4533
    %4955 = vmatpush.bf16.msra.mxu0 %v4532
    %4956 = vmatmul.bf16.gmra.mxu0 %v389
    %v4957 = vpop.f32.mrf.mxu0
    %v4958 = vadd.f32 %v4901, %v4957
    %v4959 = vpop.f32.mrf.mxu0
    %v4960 = vadd.f32 %v4903, %v4959
    %4961 = vmatmul.bf16.gmra.mxu0 %v392
    %v4962 = vpop.f32.mrf.mxu0
    %v4963 = vadd.f32 %v4905, %v4962
    %v4964 = vpop.f32.mrf.mxu0
    %v4965 = vadd.f32 %v4907, %v4964
    %4966 = vmatmul.bf16.gmra.mxu0 %v395
    %v4967 = vpop.f32.mrf.mxu0
    %v4968 = vadd.f32 %v4909, %v4967
    %v4969 = vpop.f32.mrf.mxu0
    %v4970 = vadd.f32 %v4911, %v4969
    %4971 = vmatmul.bf16.gmra.mxu0 %v398
    %v4972 = vpop.f32.mrf.mxu0
    %v4973 = vadd.f32 %v4913, %v4972
    %v4974 = vpop.f32.mrf.mxu0
    %v4975 = vadd.f32 %v4915, %v4974
    %4976 = vmatmul.bf16.gmra.mxu0 %v401
    %v4977 = vpop.f32.mrf.mxu0
    %v4978 = vadd.f32 %v4917, %v4977
    %v4979 = vpop.f32.mrf.mxu0
    %v4980 = vadd.f32 %v4919, %v4979
    %4981 = vmatmul.bf16.gmra.mxu0 %v404
    %v4982 = vpop.f32.mrf.mxu0
    %v4983 = vadd.f32 %v4921, %v4982
    %v4984 = vpop.f32.mrf.mxu0
    %v4985 = vadd.f32 %v4923, %v4984
    %4986 = vmatmul.bf16.gmra.mxu0 %v407
    %v4987 = vpop.f32.mrf.mxu0
    %v4988 = vadd.f32 %v4925, %v4987
    %v4989 = vpop.f32.mrf.mxu0
    %v4990 = vadd.f32 %v4927, %v4989
    %4991 = vmatmul.bf16.gmra.mxu0 %v410
    %v4992 = vpop.f32.mrf.mxu0
    %v4993 = vadd.f32 %v4929, %v4992
    %v4994 = vpop.f32.mrf.mxu0
    %v4995 = vadd.f32 %v4931, %v4994
    %4996 = vdwg.mxu0
    %v4997 = vxor.u32 %v4958, 2147483648
    %v4998 = vxor.u32 %v4960, 2147483648
    %v4999 = vxor.u32 %v4963, 2147483648
    %v5000 = vxor.u32 %v4965, 2147483648
    %v5001 = vmul.f32 %v4997, 1.442695
    %v5002 = vpow.pop %v5001
    %v5003 = vmul.f32 %v4998, 1.442695
    %v5004 = vpow.pop %v5003
    %v5005 = vmul.f32 %v4999, 1.442695
    %v5006 = vpow.pop %v5005
    %v5007 = vmul.f32 %v5000, 1.442695
    %v5008 = vpow.pop %v5007
    %v5009 = vadd.f32 %v5002, 1.0
    %v5010 = vadd.f32 %v5004, 1.0
    %v5011 = vadd.f32 %v5006, 1.0
    %v5012 = vadd.f32 %v5008, 1.0
    %v5013 = vrcp.pop %v5009
    %v5014 = vmul.f32 %v5009, %v5013
    %v5015 = vsub.f32 1.0, %v5014
    %v5016 = vmul.f32 %v5013, %v5015
    %v5017 = vadd.f32 %v5013, %v5016
    %vm5018 = vweird.f32 %v5009
    %vm5019 = vweird.f32 %v5013
    %vm5020 = vmor %vm5018, %vm5019
    %v5021 = vsel %vm5020, %v5013, %v5017
    %v5022 = vand.u32 2147483647, %v5009
    %vm5023 = vcmp.eq.f32.partialorder %v5022, 8.507059e+37
    %v5024 = vand.u32 %v5009, 2147483648
    %v5025 = vor.u32 1.1754944e-38, %v5024
    %v5026 = vsel %vm5023, %v5025, %v5021
    %v5027 = vmul.f32 1.0, %v5026
    %v5028 = vrcp.pop %v5010
    %v5029 = vmul.f32 %v5010, %v5028
    %v5030 = vsub.f32 1.0, %v5029
    %v5031 = vmul.f32 %v5028, %v5030
    %v5032 = vadd.f32 %v5028, %v5031
    %vm5033 = vweird.f32 %v5010
    %vm5034 = vweird.f32 %v5028
    %vm5035 = vmor %vm5033, %vm5034
    %v5036 = vsel %vm5035, %v5028, %v5032
    %v5037 = vand.u32 2147483647, %v5010
    %vm5038 = vcmp.eq.f32.partialorder %v5037, 8.507059e+37
    %v5039 = vand.u32 %v5010, 2147483648
    %v5040 = vor.u32 1.1754944e-38, %v5039
    %v5041 = vsel %vm5038, %v5040, %v5036
    %v5042 = vmul.f32 1.0, %v5041
    %v5043 = vrcp.pop %v5011
    %v5044 = vmul.f32 %v5011, %v5043
    %v5045 = vsub.f32 1.0, %v5044
    %v5046 = vmul.f32 %v5043, %v5045
    %v5047 = vadd.f32 %v5043, %v5046
    %vm5048 = vweird.f32 %v5011
    %vm5049 = vweird.f32 %v5043
    %vm5050 = vmor %vm5048, %vm5049
    %v5051 = vsel %vm5050, %v5043, %v5047
    %v5052 = vand.u32 2147483647, %v5011
    %vm5053 = vcmp.eq.f32.partialorder %v5052, 8.507059e+37
    %v5054 = vand.u32 %v5011, 2147483648
    %v5055 = vor.u32 1.1754944e-38, %v5054
    %v5056 = vsel %vm5053, %v5055, %v5051
    %v5057 = vmul.f32 1.0, %v5056
    %v5058 = vrcp.pop %v5012
    %v5059 = vmul.f32 %v5012, %v5058
    %v5060 = vsub.f32 1.0, %v5059
    %v5061 = vmul.f32 %v5058, %v5060
    %v5062 = vadd.f32 %v5058, %v5061
    %vm5063 = vweird.f32 %v5012
    %vm5064 = vweird.f32 %v5058
    %vm5065 = vmor %vm5063, %vm5064
    %v5066 = vsel %vm5065, %v5058, %v5062
    %v5067 = vand.u32 2147483647, %v5012
    %vm5068 = vcmp.eq.f32.partialorder %v5067, 8.507059e+37
    %v5069 = vand.u32 %v5012, 2147483648
    %v5070 = vor.u32 1.1754944e-38, %v5069
    %v5071 = vsel %vm5068, %v5070, %v5066
    %v5072 = vmul.f32 1.0, %v5071
    %v5073 = vxor.u32 %v4968, 2147483648
    %v5074 = vxor.u32 %v4970, 2147483648
    %v5075 = vxor.u32 %v4973, 2147483648
    %v5076 = vxor.u32 %v4975, 2147483648
    %v5077 = vmul.f32 %v5073, 1.442695
    %v5078 = vpow.pop %v5077
    %v5079 = vmul.f32 %v5074, 1.442695
    %v5080 = vpow.pop %v5079
    %v5081 = vmul.f32 %v5075, 1.442695
    %v5082 = vpow.pop %v5081
    %v5083 = vmul.f32 %v5076, 1.442695
    %v5084 = vpow.pop %v5083
    %v5085 = vadd.f32 %v5078, 1.0
    %v5086 = vadd.f32 %v5080, 1.0
    %v5087 = vadd.f32 %v5082, 1.0
    %v5088 = vadd.f32 %v5084, 1.0
    %v5089 = vrcp.pop %v5085
    %v5090 = vmul.f32 %v5085, %v5089
    %v5091 = vsub.f32 1.0, %v5090
    %v5092 = vmul.f32 %v5089, %v5091
    %v5093 = vadd.f32 %v5089, %v5092
    %vm5094 = vweird.f32 %v5085
    %vm5095 = vweird.f32 %v5089
    %vm5096 = vmor %vm5094, %vm5095
    %v5097 = vsel %vm5096, %v5089, %v5093
    %v5098 = vand.u32 2147483647, %v5085
    %vm5099 = vcmp.eq.f32.partialorder %v5098, 8.507059e+37
    %v5100 = vand.u32 %v5085, 2147483648
    %v5101 = vor.u32 1.1754944e-38, %v5100
    %v5102 = vsel %vm5099, %v5101, %v5097
    %v5103 = vmul.f32 1.0, %v5102
    %v5104 = vrcp.pop %v5086
    %v5105 = vmul.f32 %v5086, %v5104
    %v5106 = vsub.f32 1.0, %v5105
    %v5107 = vmul.f32 %v5104, %v5106
    %v5108 = vadd.f32 %v5104, %v5107
    %vm5109 = vweird.f32 %v5086
    %vm5110 = vweird.f32 %v5104
    %vm5111 = vmor %vm5109, %vm5110
    %v5112 = vsel %vm5111, %v5104, %v5108
    %v5113 = vand.u32 2147483647, %v5086
    %vm5114 = vcmp.eq.f32.partialorder %v5113, 8.507059e+37
    %v5115 = vand.u32 %v5086, 2147483648
    %v5116 = vor.u32 1.1754944e-38, %v5115
    %v5117 = vsel %vm5114, %v5116, %v5112
    %v5118 = vmul.f32 1.0, %v5117
    %v5119 = vrcp.pop %v5087
    %v5120 = vmul.f32 %v5087, %v5119
    %v5121 = vsub.f32 1.0, %v5120
    %v5122 = vmul.f32 %v5119, %v5121
    %v5123 = vadd.f32 %v5119, %v5122
    %vm5124 = vweird.f32 %v5087
    %vm5125 = vweird.f32 %v5119
    %vm5126 = vmor %vm5124, %vm5125
    %v5127 = vsel %vm5126, %v5119, %v5123
    %v5128 = vand.u32 2147483647, %v5087
    %vm5129 = vcmp.eq.f32.partialorder %v5128, 8.507059e+37
    %v5130 = vand.u32 %v5087, 2147483648
    %v5131 = vor.u32 1.1754944e-38, %v5130
    %v5132 = vsel %vm5129, %v5131, %v5127
    %v5133 = vmul.f32 1.0, %v5132
    %v5134 = vrcp.pop %v5088
    %v5135 = vmul.f32 %v5088, %v5134
    %v5136 = vsub.f32 1.0, %v5135
    %v5137 = vmul.f32 %v5134, %v5136
    %v5138 = vadd.f32 %v5134, %v5137
    %vm5139 = vweird.f32 %v5088
    %vm5140 = vweird.f32 %v5134
    %vm5141 = vmor %vm5139, %vm5140
    %v5142 = vsel %vm5141, %v5134, %v5138
    %v5143 = vand.u32 2147483647, %v5088
    %vm5144 = vcmp.eq.f32.partialorder %v5143, 8.507059e+37
    %v5145 = vand.u32 %v5088, 2147483648
    %v5146 = vor.u32 1.1754944e-38, %v5145
    %v5147 = vsel %vm5144, %v5146, %v5142
    %v5148 = vmul.f32 1.0, %v5147
    %v5149 = vtanh.pop %v4978
    %v5150 = vtanh.pop %v4980
    %v5151 = vtanh.pop %v4983
    %v5152 = vtanh.pop %v4985
    %v5153 = vxor.u32 %v4988, 2147483648
    %v5154 = vxor.u32 %v4990, 2147483648
    %v5155 = vxor.u32 %v4993, 2147483648
    %v5156 = vxor.u32 %v4995, 2147483648
    %v5157 = vmul.f32 %v5153, 1.442695
    %v5158 = vpow.pop %v5157
    %v5159 = vmul.f32 %v5154, 1.442695
    %v5160 = vpow.pop %v5159
    %v5161 = vmul.f32 %v5155, 1.442695
    %v5162 = vpow.pop %v5161
    %v5163 = vmul.f32 %v5156, 1.442695
    %v5164 = vpow.pop %v5163
    %v5165 = vadd.f32 %v5158, 1.0
    %v5166 = vadd.f32 %v5160, 1.0
    %v5167 = vadd.f32 %v5162, 1.0
    %v5168 = vadd.f32 %v5164, 1.0
    %v5169 = vrcp.pop %v5165
    %v5170 = vmul.f32 %v5165, %v5169
    %v5171 = vsub.f32 1.0, %v5170
    %v5172 = vmul.f32 %v5169, %v5171
    %v5173 = vadd.f32 %v5169, %v5172
    %vm5174 = vweird.f32 %v5165
    %vm5175 = vweird.f32 %v5169
    %vm5176 = vmor %vm5174, %vm5175
    %v5177 = vsel %vm5176, %v5169, %v5173
    %v5178 = vand.u32 2147483647, %v5165
    %vm5179 = vcmp.eq.f32.partialorder %v5178, 8.507059e+37
    %v5180 = vand.u32 %v5165, 2147483648
    %v5181 = vor.u32 1.1754944e-38, %v5180
    %v5182 = vsel %vm5179, %v5181, %v5177
    %v5183 = vmul.f32 1.0, %v5182
    %v5184 = vrcp.pop %v5166
    %v5185 = vmul.f32 %v5166, %v5184
    %v5186 = vsub.f32 1.0, %v5185
    %v5187 = vmul.f32 %v5184, %v5186
    %v5188 = vadd.f32 %v5184, %v5187
    %vm5189 = vweird.f32 %v5166
    %vm5190 = vweird.f32 %v5184
    %vm5191 = vmor %vm5189, %vm5190
    %v5192 = vsel %vm5191, %v5184, %v5188
    %v5193 = vand.u32 2147483647, %v5166
    %vm5194 = vcmp.eq.f32.partialorder %v5193, 8.507059e+37
    %v5195 = vand.u32 %v5166, 2147483648
    %v5196 = vor.u32 1.1754944e-38, %v5195
    %v5197 = vsel %vm5194, %v5196, %v5192
    %v5198 = vmul.f32 1.0, %v5197
    %v5199 = vrcp.pop %v5167
    %v5200 = vmul.f32 %v5167, %v5199
    %v5201 = vsub.f32 1.0, %v5200
    %v5202 = vmul.f32 %v5199, %v5201
    %v5203 = vadd.f32 %v5199, %v5202
    %vm5204 = vweird.f32 %v5167
    %vm5205 = vweird.f32 %v5199
    %vm5206 = vmor %vm5204, %vm5205
    %v5207 = vsel %vm5206, %v5199, %v5203
    %v5208 = vand.u32 2147483647, %v5167
    %vm5209 = vcmp.eq.f32.partialorder %v5208, 8.507059e+37
    %v5210 = vand.u32 %v5167, 2147483648
    %v5211 = vor.u32 1.1754944e-38, %v5210
    %v5212 = vsel %vm5209, %v5211, %v5207
    %v5213 = vmul.f32 1.0, %v5212
    %v5214 = vrcp.pop %v5168
    %v5215 = vmul.f32 %v5168, %v5214
    %v5216 = vsub.f32 1.0, %v5215
    %v5217 = vmul.f32 %v5214, %v5216
    %v5218 = vadd.f32 %v5214, %v5217
    %vm5219 = vweird.f32 %v5168
    %vm5220 = vweird.f32 %v5214
    %vm5221 = vmor %vm5219, %vm5220
    %v5222 = vsel %vm5221, %v5214, %v5218
    %v5223 = vand.u32 2147483647, %v5168
    %vm5224 = vcmp.eq.f32.partialorder %v5223, 8.507059e+37
    %v5225 = vand.u32 %v5168, 2147483648
    %v5226 = vor.u32 1.1754944e-38, %v5225
    %v5227 = vsel %vm5224, %v5226, %v5222
    %v5228 = vmul.f32 1.0, %v5227
    %v5229 = vmul.f32 %v5103, %v4518
    %v5230 = vmul.f32 %v5118, %v4519
    %v5231 = vmul.f32 %v5133, %v4520
    %v5232 = vmul.f32 %v5148, %v4521
    %v5233 = vmul.f32 %v5027, %v5149
    %v5234 = vmul.f32 %v5042, %v5150
    %v5235 = vmul.f32 %v5057, %v5151
    %v5236 = vmul.f32 %v5072, %v5152
    %v5237 = vadd.f32 %v5229, %v5233
    %v5238 = vadd.f32 %v5230, %v5234
    %v5239 = vadd.f32 %v5231, %v5235
    %v5240 = vadd.f32 %v5232, %v5236
    %v5241 = vtanh.pop %v5237
    %v5242 = vtanh.pop %v5238
    %v5243 = vtanh.pop %v5239
    %v5244 = vtanh.pop %v5240
    %v5245 = vmul.f32 %v5183, %v5241
    %v5246 = vmul.f32 %v5198, %v5242
    %v5247 = vmul.f32 %v5213, %v5243
    %v5248 = vmul.f32 %v5228, %v5244
    %v5249 = vpack.c.bf16 %v4897, %v4896
    %v5250 = vpack.c.bf16 %v4899, %v4898
    %v5251 = vpack.c.bf16 %v5246, %v5245
    %v5252 = vpack.c.bf16 %v5248, %v5247
    %5253 = vmatpush.bf16.msra.mxu0 0
    %5254 = vmatpush.bf16.msra.mxu0 0
    %5255 = vmatpush.bf16.msra.mxu0 0
    %5256 = vmatpush.bf16.msra.mxu0 0
    %5257 = vmatpush.bf16.msra.mxu0 0
    %5258 = vmatpush.bf16.msra.mxu0 0
    %5259 = vmatpush.bf16.msra.mxu0 %v5252
    %5260 = vmatpush.bf16.msra.mxu0 %v5251
    %5261 = vmatmul.bf16.gmra.mxu0 %v756
    %v5262 = vpop.f32.mrf.mxu0
    %v5263 = vadd.f32 0.0, %v5262
    %v5264 = vpop.f32.mrf.mxu0
    %v5265 = vadd.f32 0.0, %v5264
    %5266 = vmatmul.bf16.gmra.mxu0 %v759
    %v5267 = vpop.f32.mrf.mxu0
    %v5268 = vadd.f32 0.0, %v5267
    %v5269 = vpop.f32.mrf.mxu0
    %v5270 = vadd.f32 0.0, %v5269
    %5271 = vmatmul.bf16.gmra.mxu0 %v762
    %v5272 = vpop.f32.mrf.mxu0
    %v5273 = vadd.f32 0.0, %v5272
    %v5274 = vpop.f32.mrf.mxu0
    %v5275 = vadd.f32 0.0, %v5274
    %5276 = vmatmul.bf16.gmra.mxu0 %v765
    %v5277 = vpop.f32.mrf.mxu0
    %v5278 = vadd.f32 0.0, %v5277
    %v5279 = vpop.f32.mrf.mxu0
    %v5280 = vadd.f32 0.0, %v5279
    %5281 = vmatmul.bf16.gmra.mxu0 %v768
    %v5282 = vpop.f32.mrf.mxu0
    %v5283 = vadd.f32 0.0, %v5282
    %v5284 = vpop.f32.mrf.mxu0
    %v5285 = vadd.f32 0.0, %v5284
    %5286 = vmatmul.bf16.gmra.mxu0 %v771
    %v5287 = vpop.f32.mrf.mxu0
    %v5288 = vadd.f32 0.0, %v5287
    %v5289 = vpop.f32.mrf.mxu0
    %v5290 = vadd.f32 0.0, %v5289
    %5291 = vmatmul.bf16.gmra.mxu0 %v774
    %v5292 = vpop.f32.mrf.mxu0
    %v5293 = vadd.f32 0.0, %v5292
    %v5294 = vpop.f32.mrf.mxu0
    %v5295 = vadd.f32 0.0, %v5294
    %5296 = vmatmul.bf16.gmra.mxu0 %v777
    %v5297 = vpop.f32.mrf.mxu0
    %v5298 = vadd.f32 0.0, %v5297
    %v5299 = vpop.f32.mrf.mxu0
    %v5300 = vadd.f32 0.0, %v5299
    %5301 = vdwg.mxu0
    %5302 = vmatpush.bf16.msra.mxu0 0
    %5303 = vmatpush.bf16.msra.mxu0 0
    %5304 = vmatpush.bf16.msra.mxu0 0
    %5305 = vmatpush.bf16.msra.mxu0 0
    %5306 = vmatpush.bf16.msra.mxu0 0
    %5307 = vmatpush.bf16.msra.mxu0 0
    %5308 = vmatpush.bf16.msra.mxu0 %v5250
    %5309 = vmatpush.bf16.msra.mxu0 %v5249
    %5310 = vmatmul.bf16.gmra.mxu0 %v869
    %v5311 = vpop.f32.mrf.mxu0
    %v5312 = vadd.f32 %v5263, %v5311
    %v5313 = vpop.f32.mrf.mxu0
    %v5314 = vadd.f32 %v5265, %v5313
    %5315 = vmatmul.bf16.gmra.mxu0 %v872
    %v5316 = vpop.f32.mrf.mxu0
    %v5317 = vadd.f32 %v5268, %v5316
    %v5318 = vpop.f32.mrf.mxu0
    %v5319 = vadd.f32 %v5270, %v5318
    %5320 = vmatmul.bf16.gmra.mxu0 %v875
    %v5321 = vpop.f32.mrf.mxu0
    %v5322 = vadd.f32 %v5273, %v5321
    %v5323 = vpop.f32.mrf.mxu0
    %v5324 = vadd.f32 %v5275, %v5323
    %5325 = vmatmul.bf16.gmra.mxu0 %v878
    %v5326 = vpop.f32.mrf.mxu0
    %v5327 = vadd.f32 %v5278, %v5326
    %v5328 = vpop.f32.mrf.mxu0
    %v5329 = vadd.f32 %v5280, %v5328
    %5330 = vmatmul.bf16.gmra.mxu0 %v881
    %v5331 = vpop.f32.mrf.mxu0
    %v5332 = vadd.f32 %v5283, %v5331
    %v5333 = vpop.f32.mrf.mxu0
    %v5334 = vadd.f32 %v5285, %v5333
    %5335 = vmatmul.bf16.gmra.mxu0 %v884
    %v5336 = vpop.f32.mrf.mxu0
    %v5337 = vadd.f32 %v5288, %v5336
    %v5338 = vpop.f32.mrf.mxu0
    %v5339 = vadd.f32 %v5290, %v5338
    %5340 = vmatmul.bf16.gmra.mxu0 %v887
    %v5341 = vpop.f32.mrf.mxu0
    %v5342 = vadd.f32 %v5293, %v5341
    %v5343 = vpop.f32.mrf.mxu0
    %v5344 = vadd.f32 %v5295, %v5343
    %5345 = vmatmul.bf16.gmra.mxu0 %v890
    %v5346 = vpop.f32.mrf.mxu0
    %v5347 = vadd.f32 %v5298, %v5346
    %v5348 = vpop.f32.mrf.mxu0
    %v5349 = vadd.f32 %v5300, %v5348
    %5350 = vdwg.mxu0
    %v5351 = vadd.f32 %v5312, %v944
    %v5352 = vadd.f32 %v5314, %v949
    %v5353 = vadd.f32 %v5317, %v954
    %v5354 = vadd.f32 %v5319, %v959
    %v5355 = vadd.f32 %v5322, %v964
    %v5356 = vadd.f32 %v5324, %v969
    %v5357 = vadd.f32 %v5327, %v974
    %v5358 = vadd.f32 %v5329, %v979
    %v5359 = vadd.f32 %v5332, %v984
    %v5360 = vadd.f32 %v5334, %v989
    %v5361 = vadd.f32 %v5337, %v994
    %v5362 = vadd.f32 %v5339, %v999
    %v5363 = vadd.f32 %v5342, %v1004
    %v5364 = vadd.f32 %v5344, %v1009
    %v5365 = vadd.f32 %v5347, %v1014
    %v5366 = vadd.f32 %v5349, %v1019
    %v5367 = vxor.u32 %v5351, 2147483648
    %v5368 = vxor.u32 %v5352, 2147483648
    %v5369 = vxor.u32 %v5353, 2147483648
    %v5370 = vxor.u32 %v5354, 2147483648
    %v5371 = vmul.f32 %v5367, 1.442695
    %v5372 = vpow.pop %v5371
    %v5373 = vmul.f32 %v5368, 1.442695
    %v5374 = vpow.pop %v5373
    %v5375 = vmul.f32 %v5369, 1.442695
    %v5376 = vpow.pop %v5375
    %v5377 = vmul.f32 %v5370, 1.442695
    %v5378 = vpow.pop %v5377
    %v5379 = vadd.f32 %v5372, 1.0
    %v5380 = vadd.f32 %v5374, 1.0
    %v5381 = vadd.f32 %v5376, 1.0
    %v5382 = vadd.f32 %v5378, 1.0
    %v5383 = vrcp.pop %v5379
    %v5384 = vmul.f32 %v5379, %v5383
    %v5385 = vsub.f32 1.0, %v5384
    %v5386 = vmul.f32 %v5383, %v5385
    %v5387 = vadd.f32 %v5383, %v5386
    %vm5388 = vweird.f32 %v5379
    %vm5389 = vweird.f32 %v5383
    %vm5390 = vmor %vm5388, %vm5389
    %v5391 = vsel %vm5390, %v5383, %v5387
    %v5392 = vand.u32 2147483647, %v5379
    %vm5393 = vcmp.eq.f32.partialorder %v5392, 8.507059e+37
    %v5394 = vand.u32 %v5379, 2147483648
    %v5395 = vor.u32 1.1754944e-38, %v5394
    %v5396 = vsel %vm5393, %v5395, %v5391
    %v5397 = vmul.f32 1.0, %v5396
    %v5398 = vrcp.pop %v5380
    %v5399 = vmul.f32 %v5380, %v5398
    %v5400 = vsub.f32 1.0, %v5399
    %v5401 = vmul.f32 %v5398, %v5400
    %v5402 = vadd.f32 %v5398, %v5401
    %vm5403 = vweird.f32 %v5380
    %vm5404 = vweird.f32 %v5398
    %vm5405 = vmor %vm5403, %vm5404
    %v5406 = vsel %vm5405, %v5398, %v5402
    %v5407 = vand.u32 2147483647, %v5380
    %vm5408 = vcmp.eq.f32.partialorder %v5407, 8.507059e+37
    %v5409 = vand.u32 %v5380, 2147483648
    %v5410 = vor.u32 1.1754944e-38, %v5409
    %v5411 = vsel %vm5408, %v5410, %v5406
    %v5412 = vmul.f32 1.0, %v5411
    %v5413 = vrcp.pop %v5381
    %v5414 = vmul.f32 %v5381, %v5413
    %v5415 = vsub.f32 1.0, %v5414
    %v5416 = vmul.f32 %v5413, %v5415
    %v5417 = vadd.f32 %v5413, %v5416
    %vm5418 = vweird.f32 %v5381
    %vm5419 = vweird.f32 %v5413
    %vm5420 = vmor %vm5418, %vm5419
    %v5421 = vsel %vm5420, %v5413, %v5417
    %v5422 = vand.u32 2147483647, %v5381
    %vm5423 = vcmp.eq.f32.partialorder %v5422, 8.507059e+37
    %v5424 = vand.u32 %v5381, 2147483648
    %v5425 = vor.u32 1.1754944e-38, %v5424
    %v5426 = vsel %vm5423, %v5425, %v5421
    %v5427 = vmul.f32 1.0, %v5426
    %v5428 = vrcp.pop %v5382
    %v5429 = vmul.f32 %v5382, %v5428
    %v5430 = vsub.f32 1.0, %v5429
    %v5431 = vmul.f32 %v5428, %v5430
    %v5432 = vadd.f32 %v5428, %v5431
    %vm5433 = vweird.f32 %v5382
    %vm5434 = vweird.f32 %v5428
    %vm5435 = vmor %vm5433, %vm5434
    %v5436 = vsel %vm5435, %v5428, %v5432
    %v5437 = vand.u32 2147483647, %v5382
    %vm5438 = vcmp.eq.f32.partialorder %v5437, 8.507059e+37
    %v5439 = vand.u32 %v5382, 2147483648
    %v5440 = vor.u32 1.1754944e-38, %v5439
    %v5441 = vsel %vm5438, %v5440, %v5436
    %v5442 = vmul.f32 1.0, %v5441
    %v5443 = vxor.u32 %v5355, 2147483648
    %v5444 = vxor.u32 %v5356, 2147483648
    %v5445 = vxor.u32 %v5357, 2147483648
    %v5446 = vxor.u32 %v5358, 2147483648
    %v5447 = vmul.f32 %v5443, 1.442695
    %v5448 = vpow.pop %v5447
    %v5449 = vmul.f32 %v5444, 1.442695
    %v5450 = vpow.pop %v5449
    %v5451 = vmul.f32 %v5445, 1.442695
    %v5452 = vpow.pop %v5451
    %v5453 = vmul.f32 %v5446, 1.442695
    %v5454 = vpow.pop %v5453
    %v5455 = vadd.f32 %v5448, 1.0
    %v5456 = vadd.f32 %v5450, 1.0
    %v5457 = vadd.f32 %v5452, 1.0
    %v5458 = vadd.f32 %v5454, 1.0
    %v5459 = vrcp.pop %v5455
    %v5460 = vmul.f32 %v5455, %v5459
    %v5461 = vsub.f32 1.0, %v5460
    %v5462 = vmul.f32 %v5459, %v5461
    %v5463 = vadd.f32 %v5459, %v5462
    %vm5464 = vweird.f32 %v5455
    %vm5465 = vweird.f32 %v5459
    %vm5466 = vmor %vm5464, %vm5465
    %v5467 = vsel %vm5466, %v5459, %v5463
    %v5468 = vand.u32 2147483647, %v5455
    %vm5469 = vcmp.eq.f32.partialorder %v5468, 8.507059e+37
    %v5470 = vand.u32 %v5455, 2147483648
    %v5471 = vor.u32 1.1754944e-38, %v5470
    %v5472 = vsel %vm5469, %v5471, %v5467
    %v5473 = vmul.f32 1.0, %v5472
    %v5474 = vrcp.pop %v5456
    %v5475 = vmul.f32 %v5456, %v5474
    %v5476 = vsub.f32 1.0, %v5475
    %v5477 = vmul.f32 %v5474, %v5476
    %v5478 = vadd.f32 %v5474, %v5477
    %vm5479 = vweird.f32 %v5456
    %vm5480 = vweird.f32 %v5474
    %vm5481 = vmor %vm5479, %vm5480
    %v5482 = vsel %vm5481, %v5474, %v5478
    %v5483 = vand.u32 2147483647, %v5456
    %vm5484 = vcmp.eq.f32.partialorder %v5483, 8.507059e+37
    %v5485 = vand.u32 %v5456, 2147483648
    %v5486 = vor.u32 1.1754944e-38, %v5485
    %v5487 = vsel %vm5484, %v5486, %v5482
    %v5488 = vmul.f32 1.0, %v5487
    %v5489 = vrcp.pop %v5457
    %v5490 = vmul.f32 %v5457, %v5489
    %v5491 = vsub.f32 1.0, %v5490
    %v5492 = vmul.f32 %v5489, %v5491
    %v5493 = vadd.f32 %v5489, %v5492
    %vm5494 = vweird.f32 %v5457
    %vm5495 = vweird.f32 %v5489
    %vm5496 = vmor %vm5494, %vm5495
    %v5497 = vsel %vm5496, %v5489, %v5493
    %v5498 = vand.u32 2147483647, %v5457
    %vm5499 = vcmp.eq.f32.partialorder %v5498, 8.507059e+37
    %v5500 = vand.u32 %v5457, 2147483648
    %v5501 = vor.u32 1.1754944e-38, %v5500
    %v5502 = vsel %vm5499, %v5501, %v5497
    %v5503 = vmul.f32 1.0, %v5502
    %v5504 = vrcp.pop %v5458
    %v5505 = vmul.f32 %v5458, %v5504
    %v5506 = vsub.f32 1.0, %v5505
    %v5507 = vmul.f32 %v5504, %v5506
    %v5508 = vadd.f32 %v5504, %v5507
    %vm5509 = vweird.f32 %v5458
    %vm5510 = vweird.f32 %v5504
    %vm5511 = vmor %vm5509, %vm5510
    %v5512 = vsel %vm5511, %v5504, %v5508
    %v5513 = vand.u32 2147483647, %v5458
    %vm5514 = vcmp.eq.f32.partialorder %v5513, 8.507059e+37
    %v5515 = vand.u32 %v5458, 2147483648
    %v5516 = vor.u32 1.1754944e-38, %v5515
    %v5517 = vsel %vm5514, %v5516, %v5512
    %v5518 = vmul.f32 1.0, %v5517
    %v5519 = vtanh.pop %v5359
    %v5520 = vtanh.pop %v5360
    %v5521 = vtanh.pop %v5361
    %v5522 = vtanh.pop %v5362
    %v5523 = vxor.u32 %v5363, 2147483648
    %v5524 = vxor.u32 %v5364, 2147483648
    %v5525 = vxor.u32 %v5365, 2147483648
    %v5526 = vxor.u32 %v5366, 2147483648
    %v5527 = vmul.f32 %v5523, 1.442695
    %v5528 = vpow.pop %v5527
    %v5529 = vmul.f32 %v5524, 1.442695
    %v5530 = vpow.pop %v5529
    %v5531 = vmul.f32 %v5525, 1.442695
    %v5532 = vpow.pop %v5531
    %v5533 = vmul.f32 %v5526, 1.442695
    %v5534 = vpow.pop %v5533
    %v5535 = vadd.f32 %v5528, 1.0
    %v5536 = vadd.f32 %v5530, 1.0
    %v5537 = vadd.f32 %v5532, 1.0
    %v5538 = vadd.f32 %v5534, 1.0
    %v5539 = vrcp.pop %v5535
    %v5540 = vmul.f32 %v5535, %v5539
    %v5541 = vsub.f32 1.0, %v5540
    %v5542 = vmul.f32 %v5539, %v5541
    %v5543 = vadd.f32 %v5539, %v5542
    %vm5544 = vweird.f32 %v5535
    %vm5545 = vweird.f32 %v5539
    %vm5546 = vmor %vm5544, %vm5545
    %v5547 = vsel %vm5546, %v5539, %v5543
    %v5548 = vand.u32 2147483647, %v5535
    %vm5549 = vcmp.eq.f32.partialorder %v5548, 8.507059e+37
    %v5550 = vand.u32 %v5535, 2147483648
    %v5551 = vor.u32 1.1754944e-38, %v5550
    %v5552 = vsel %vm5549, %v5551, %v5547
    %v5553 = vmul.f32 1.0, %v5552
    %v5554 = vrcp.pop %v5536
    %v5555 = vmul.f32 %v5536, %v5554
    %v5556 = vsub.f32 1.0, %v5555
    %v5557 = vmul.f32 %v5554, %v5556
    %v5558 = vadd.f32 %v5554, %v5557
    %vm5559 = vweird.f32 %v5536
    %vm5560 = vweird.f32 %v5554
    %vm5561 = vmor %vm5559, %vm5560
    %v5562 = vsel %vm5561, %v5554, %v5558
    %v5563 = vand.u32 2147483647, %v5536
    %vm5564 = vcmp.eq.f32.partialorder %v5563, 8.507059e+37
    %v5565 = vand.u32 %v5536, 2147483648
    %v5566 = vor.u32 1.1754944e-38, %v5565
    %v5567 = vsel %vm5564, %v5566, %v5562
    %v5568 = vmul.f32 1.0, %v5567
    %v5569 = vrcp.pop %v5537
    %v5570 = vmul.f32 %v5537, %v5569
    %v5571 = vsub.f32 1.0, %v5570
    %v5572 = vmul.f32 %v5569, %v5571
    %v5573 = vadd.f32 %v5569, %v5572
    %vm5574 = vweird.f32 %v5537
    %vm5575 = vweird.f32 %v5569
    %vm5576 = vmor %vm5574, %vm5575
    %v5577 = vsel %vm5576, %v5569, %v5573
    %v5578 = vand.u32 2147483647, %v5537
    %vm5579 = vcmp.eq.f32.partialorder %v5578, 8.507059e+37
    %v5580 = vand.u32 %v5537, 2147483648
    %v5581 = vor.u32 1.1754944e-38, %v5580
    %v5582 = vsel %vm5579, %v5581, %v5577
    %v5583 = vmul.f32 1.0, %v5582
    %v5584 = vrcp.pop %v5538
    %v5585 = vmul.f32 %v5538, %v5584
    %v5586 = vsub.f32 1.0, %v5585
    %v5587 = vmul.f32 %v5584, %v5586
    %v5588 = vadd.f32 %v5584, %v5587
    %vm5589 = vweird.f32 %v5538
    %vm5590 = vweird.f32 %v5584
    %vm5591 = vmor %vm5589, %vm5590
    %v5592 = vsel %vm5591, %v5584, %v5588
    %v5593 = vand.u32 2147483647, %v5538
    %vm5594 = vcmp.eq.f32.partialorder %v5593, 8.507059e+37
    %v5595 = vand.u32 %v5538, 2147483648
    %v5596 = vor.u32 1.1754944e-38, %v5595
    %v5597 = vsel %vm5594, %v5596, %v5592
    %v5598 = vmul.f32 1.0, %v5597
    %v5599 = vmul.f32 %v5473, %v4888
    %v5600 = vmul.f32 %v5488, %v4889
    %v5601 = vmul.f32 %v5503, %v4890
    %v5602 = vmul.f32 %v5518, %v4891
    %v5603 = vmul.f32 %v5397, %v5519
    %v5604 = vmul.f32 %v5412, %v5520
    %v5605 = vmul.f32 %v5427, %v5521
    %v5606 = vmul.f32 %v5442, %v5522
    %v5607 = vadd.f32 %v5599, %v5603
    %v5608 = vadd.f32 %v5600, %v5604
    %v5609 = vadd.f32 %v5601, %v5605
    %v5610 = vadd.f32 %v5602, %v5606
    %v5611 = vtanh.pop %v5607
    %v5612 = vtanh.pop %v5608
    %v5613 = vtanh.pop %v5609
    %v5614 = vtanh.pop %v5610
    %v5615 = vmul.f32 %v5553, %v5611
    %v5616 = vmul.f32 %v5568, %v5612
    %v5617 = vmul.f32 %v5583, %v5613
    %v5618 = vmul.f32 %v5598, %v5614
    %5619 = vrot.lane.b32.xlu0 %v308, 16
    %v5620 = vpop.permute.xlu0 %5619
    %5621 = vrot.lane.b32.xlu0 %v310, 16
    %v5622 = vpop.permute.xlu0 %5621
    %5623 = vrot.lane.b32.xlu0 %v313, 16
    %v5624 = vpop.permute.xlu0 %5623
    %5625 = vrot.lane.b32.xlu0 %v315, 16
    %v5626 = vpop.permute.xlu0 %5625
    %5627 = vrot.lane.b32.xlu0 %v318, 16
    %v5628 = vpop.permute.xlu0 %5627
    %5629 = vrot.lane.b32.xlu0 %v320, 16
    %v5630 = vpop.permute.xlu0 %5629
    %5631 = vrot.lane.b32.xlu0 %v323, 16
    %v5632 = vpop.permute.xlu0 %5631
    %5633 = vrot.lane.b32.xlu0 %v325, 16
    %v5634 = vpop.permute.xlu0 %5633
    %5635 = vrot.lane.b32.xlu0 %v328, 16
    %v5636 = vpop.permute.xlu0 %5635
    %5637 = vrot.lane.b32.xlu0 %v330, 16
    %v5638 = vpop.permute.xlu0 %5637
    %5639 = vrot.lane.b32.xlu0 %v333, 16
    %v5640 = vpop.permute.xlu0 %5639
    %5641 = vrot.lane.b32.xlu0 %v335, 16
    %v5642 = vpop.permute.xlu0 %5641
    %5643 = vrot.lane.b32.xlu0 %v338, 16
    %v5644 = vpop.permute.xlu0 %5643
    %5645 = vrot.lane.b32.xlu0 %v340, 16
    %v5646 = vpop.permute.xlu0 %5645
    %5647 = vrot.lane.b32.xlu0 %v343, 16
    %v5648 = vpop.permute.xlu0 %5647
    %5649 = vrot.lane.b32.xlu0 %v345, 16
    %v5650 = vpop.permute.xlu0 %5649
    %5667 = vmatpush.bf16.msra.mxu0 0
    %5668 = vmatpush.bf16.msra.mxu0 0
    %5669 = vmatpush.bf16.msra.mxu0 0
    %5670 = vmatpush.bf16.msra.mxu0 0
    %5671 = vmatpush.bf16.msra.mxu0 0
    %5672 = vmatpush.bf16.msra.mxu0 0
    %5673 = vmatpush.bf16.msra.mxu0 %v5252
    %5674 = vmatpush.bf16.msra.mxu0 %v5251
    %5675 = vmatmul.bf16.gmra.mxu0 %v389
    %v5676 = vpop.f32.mrf.mxu0
    %v5677 = vadd.f32 %v5620, %v5676
    %v5678 = vpop.f32.mrf.mxu0
    %v5679 = vadd.f32 %v5622, %v5678
    %5680 = vmatmul.bf16.gmra.mxu0 %v392
    %v5681 = vpop.f32.mrf.mxu0
    %v5682 = vadd.f32 %v5624, %v5681
    %v5683 = vpop.f32.mrf.mxu0
    %v5684 = vadd.f32 %v5626, %v5683
    %5685 = vmatmul.bf16.gmra.mxu0 %v395
    %v5686 = vpop.f32.mrf.mxu0
    %v5687 = vadd.f32 %v5628, %v5686
    %v5688 = vpop.f32.mrf.mxu0
    %v5689 = vadd.f32 %v5630, %v5688
    %5690 = vmatmul.bf16.gmra.mxu0 %v398
    %v5691 = vpop.f32.mrf.mxu0
    %v5692 = vadd.f32 %v5632, %v5691
    %v5693 = vpop.f32.mrf.mxu0
    %v5694 = vadd.f32 %v5634, %v5693
    %5695 = vmatmul.bf16.gmra.mxu0 %v401
    %v5696 = vpop.f32.mrf.mxu0
    %v5697 = vadd.f32 %v5636, %v5696
    %v5698 = vpop.f32.mrf.mxu0
    %v5699 = vadd.f32 %v5638, %v5698
    %5700 = vmatmul.bf16.gmra.mxu0 %v404
    %v5701 = vpop.f32.mrf.mxu0
    %v5702 = vadd.f32 %v5640, %v5701
    %v5703 = vpop.f32.mrf.mxu0
    %v5704 = vadd.f32 %v5642, %v5703
    %5705 = vmatmul.bf16.gmra.mxu0 %v407
    %v5706 = vpop.f32.mrf.mxu0
    %v5707 = vadd.f32 %v5644, %v5706
    %v5708 = vpop.f32.mrf.mxu0
    %v5709 = vadd.f32 %v5646, %v5708
    %5710 = vmatmul.bf16.gmra.mxu0 %v410
    %v5711 = vpop.f32.mrf.mxu0
    %v5712 = vadd.f32 %v5648, %v5711
    %v5713 = vpop.f32.mrf.mxu0
    %v5714 = vadd.f32 %v5650, %v5713
    %5715 = vdwg.mxu0
    %v5716 = vxor.u32 %v5677, 2147483648
    %v5717 = vxor.u32 %v5679, 2147483648
    %v5718 = vxor.u32 %v5682, 2147483648
    %v5719 = vxor.u32 %v5684, 2147483648
    %v5720 = vmul.f32 %v5716, 1.442695
    %v5721 = vpow.pop %v5720
    %v5722 = vmul.f32 %v5717, 1.442695
    %v5723 = vpow.pop %v5722
    %v5724 = vmul.f32 %v5718, 1.442695
    %v5725 = vpow.pop %v5724
    %v5726 = vmul.f32 %v5719, 1.442695
    %v5727 = vpow.pop %v5726
    %v5728 = vadd.f32 %v5721, 1.0
    %v5729 = vadd.f32 %v5723, 1.0
    %v5730 = vadd.f32 %v5725, 1.0
    %v5731 = vadd.f32 %v5727, 1.0
    %v5732 = vrcp.pop %v5728
    %v5733 = vmul.f32 %v5728, %v5732
    %v5734 = vsub.f32 1.0, %v5733
    %v5735 = vmul.f32 %v5732, %v5734
    %v5736 = vadd.f32 %v5732, %v5735
    %vm5737 = vweird.f32 %v5728
    %vm5738 = vweird.f32 %v5732
    %vm5739 = vmor %vm5737, %vm5738
    %v5740 = vsel %vm5739, %v5732, %v5736
    %v5741 = vand.u32 2147483647, %v5728
    %vm5742 = vcmp.eq.f32.partialorder %v5741, 8.507059e+37
    %v5743 = vand.u32 %v5728, 2147483648
    %v5744 = vor.u32 1.1754944e-38, %v5743
    %v5745 = vsel %vm5742, %v5744, %v5740
    %v5746 = vmul.f32 1.0, %v5745
    %v5747 = vrcp.pop %v5729
    %v5748 = vmul.f32 %v5729, %v5747
    %v5749 = vsub.f32 1.0, %v5748
    %v5750 = vmul.f32 %v5747, %v5749
    %v5751 = vadd.f32 %v5747, %v5750
    %vm5752 = vweird.f32 %v5729
    %vm5753 = vweird.f32 %v5747
    %vm5754 = vmor %vm5752, %vm5753
    %v5755 = vsel %vm5754, %v5747, %v5751
    %v5756 = vand.u32 2147483647, %v5729
    %vm5757 = vcmp.eq.f32.partialorder %v5756, 8.507059e+37
    %v5758 = vand.u32 %v5729, 2147483648
    %v5759 = vor.u32 1.1754944e-38, %v5758
    %v5760 = vsel %vm5757, %v5759, %v5755
    %v5761 = vmul.f32 1.0, %v5760
    %v5762 = vrcp.pop %v5730
    %v5763 = vmul.f32 %v5730, %v5762
    %v5764 = vsub.f32 1.0, %v5763
    %v5765 = vmul.f32 %v5762, %v5764
    %v5766 = vadd.f32 %v5762, %v5765
    %vm5767 = vweird.f32 %v5730
    %vm5768 = vweird.f32 %v5762
    %vm5769 = vmor %vm5767, %vm5768
    %v5770 = vsel %vm5769, %v5762, %v5766
    %v5771 = vand.u32 2147483647, %v5730
    %vm5772 = vcmp.eq.f32.partialorder %v5771, 8.507059e+37
    %v5773 = vand.u32 %v5730, 2147483648
    %v5774 = vor.u32 1.1754944e-38, %v5773
    %v5775 = vsel %vm5772, %v5774, %v5770
    %v5776 = vmul.f32 1.0, %v5775
    %v5777 = vrcp.pop %v5731
    %v5778 = vmul.f32 %v5731, %v5777
    %v5779 = vsub.f32 1.0, %v5778
    %v5780 = vmul.f32 %v5777, %v5779
    %v5781 = vadd.f32 %v5777, %v5780
    %vm5782 = vweird.f32 %v5731
    %vm5783 = vweird.f32 %v5777
    %vm5784 = vmor %vm5782, %vm5783
    %v5785 = vsel %vm5784, %v5777, %v5781
    %v5786 = vand.u32 2147483647, %v5731
    %vm5787 = vcmp.eq.f32.partialorder %v5786, 8.507059e+37
    %v5788 = vand.u32 %v5731, 2147483648
    %v5789 = vor.u32 1.1754944e-38, %v5788
    %v5790 = vsel %vm5787, %v5789, %v5785
    %v5791 = vmul.f32 1.0, %v5790
    %v5792 = vxor.u32 %v5687, 2147483648
    %v5793 = vxor.u32 %v5689, 2147483648
    %v5794 = vxor.u32 %v5692, 2147483648
    %v5795 = vxor.u32 %v5694, 2147483648
    %v5796 = vmul.f32 %v5792, 1.442695
    %v5797 = vpow.pop %v5796
    %v5798 = vmul.f32 %v5793, 1.442695
    %v5799 = vpow.pop %v5798
    %v5800 = vmul.f32 %v5794, 1.442695
    %v5801 = vpow.pop %v5800
    %v5802 = vmul.f32 %v5795, 1.442695
    %v5803 = vpow.pop %v5802
    %v5804 = vadd.f32 %v5797, 1.0
    %v5805 = vadd.f32 %v5799, 1.0
    %v5806 = vadd.f32 %v5801, 1.0
    %v5807 = vadd.f32 %v5803, 1.0
    %v5808 = vrcp.pop %v5804
    %v5809 = vmul.f32 %v5804, %v5808
    %v5810 = vsub.f32 1.0, %v5809
    %v5811 = vmul.f32 %v5808, %v5810
    %v5812 = vadd.f32 %v5808, %v5811
    %vm5813 = vweird.f32 %v5804
    %vm5814 = vweird.f32 %v5808
    %vm5815 = vmor %vm5813, %vm5814
    %v5816 = vsel %vm5815, %v5808, %v5812
    %v5817 = vand.u32 2147483647, %v5804
    %vm5818 = vcmp.eq.f32.partialorder %v5817, 8.507059e+37
    %v5819 = vand.u32 %v5804, 2147483648
    %v5820 = vor.u32 1.1754944e-38, %v5819
    %v5821 = vsel %vm5818, %v5820, %v5816
    %v5822 = vmul.f32 1.0, %v5821
    %v5823 = vrcp.pop %v5805
    %v5824 = vmul.f32 %v5805, %v5823
    %v5825 = vsub.f32 1.0, %v5824
    %v5826 = vmul.f32 %v5823, %v5825
    %v5827 = vadd.f32 %v5823, %v5826
    %vm5828 = vweird.f32 %v5805
    %vm5829 = vweird.f32 %v5823
    %vm5830 = vmor %vm5828, %vm5829
    %v5831 = vsel %vm5830, %v5823, %v5827
    %v5832 = vand.u32 2147483647, %v5805
    %vm5833 = vcmp.eq.f32.partialorder %v5832, 8.507059e+37
    %v5834 = vand.u32 %v5805, 2147483648
    %v5835 = vor.u32 1.1754944e-38, %v5834
    %v5836 = vsel %vm5833, %v5835, %v5831
    %v5837 = vmul.f32 1.0, %v5836
    %v5838 = vrcp.pop %v5806
    %v5839 = vmul.f32 %v5806, %v5838
    %v5840 = vsub.f32 1.0, %v5839
    %v5841 = vmul.f32 %v5838, %v5840
    %v5842 = vadd.f32 %v5838, %v5841
    %vm5843 = vweird.f32 %v5806
    %vm5844 = vweird.f32 %v5838
    %vm5845 = vmor %vm5843, %vm5844
    %v5846 = vsel %vm5845, %v5838, %v5842
    %v5847 = vand.u32 2147483647, %v5806
    %vm5848 = vcmp.eq.f32.partialorder %v5847, 8.507059e+37
    %v5849 = vand.u32 %v5806, 2147483648
    %v5850 = vor.u32 1.1754944e-38, %v5849
    %v5851 = vsel %vm5848, %v5850, %v5846
    %v5852 = vmul.f32 1.0, %v5851
    %v5853 = vrcp.pop %v5807
    %v5854 = vmul.f32 %v5807, %v5853
    %v5855 = vsub.f32 1.0, %v5854
    %v5856 = vmul.f32 %v5853, %v5855
    %v5857 = vadd.f32 %v5853, %v5856
    %vm5858 = vweird.f32 %v5807
    %vm5859 = vweird.f32 %v5853
    %vm5860 = vmor %vm5858, %vm5859
    %v5861 = vsel %vm5860, %v5853, %v5857
    %v5862 = vand.u32 2147483647, %v5807
    %vm5863 = vcmp.eq.f32.partialorder %v5862, 8.507059e+37
    %v5864 = vand.u32 %v5807, 2147483648
    %v5865 = vor.u32 1.1754944e-38, %v5864
    %v5866 = vsel %vm5863, %v5865, %v5861
    %v5867 = vmul.f32 1.0, %v5866
    %v5868 = vtanh.pop %v5697
    %v5869 = vtanh.pop %v5699
    %v5870 = vtanh.pop %v5702
    %v5871 = vtanh.pop %v5704
    %v5872 = vxor.u32 %v5707, 2147483648
    %v5873 = vxor.u32 %v5709, 2147483648
    %v5874 = vxor.u32 %v5712, 2147483648
    %v5875 = vxor.u32 %v5714, 2147483648
    %v5876 = vmul.f32 %v5872, 1.442695
    %v5877 = vpow.pop %v5876
    %v5878 = vmul.f32 %v5873, 1.442695
    %v5879 = vpow.pop %v5878
    %v5880 = vmul.f32 %v5874, 1.442695
    %v5881 = vpow.pop %v5880
    %v5882 = vmul.f32 %v5875, 1.442695
    %v5883 = vpow.pop %v5882
    %v5884 = vadd.f32 %v5877, 1.0
    %v5885 = vadd.f32 %v5879, 1.0
    %v5886 = vadd.f32 %v5881, 1.0
    %v5887 = vadd.f32 %v5883, 1.0
    %v5888 = vrcp.pop %v5884
    %v5889 = vmul.f32 %v5884, %v5888
    %v5890 = vsub.f32 1.0, %v5889
    %v5891 = vmul.f32 %v5888, %v5890
    %v5892 = vadd.f32 %v5888, %v5891
    %vm5893 = vweird.f32 %v5884
    %vm5894 = vweird.f32 %v5888
    %vm5895 = vmor %vm5893, %vm5894
    %v5896 = vsel %vm5895, %v5888, %v5892
    %v5897 = vand.u32 2147483647, %v5884
    %vm5898 = vcmp.eq.f32.partialorder %v5897, 8.507059e+37
    %v5899 = vand.u32 %v5884, 2147483648
    %v5900 = vor.u32 1.1754944e-38, %v5899
    %v5901 = vsel %vm5898, %v5900, %v5896
    %v5902 = vmul.f32 1.0, %v5901
    %v5903 = vrcp.pop %v5885
    %v5904 = vmul.f32 %v5885, %v5903
    %v5905 = vsub.f32 1.0, %v5904
    %v5906 = vmul.f32 %v5903, %v5905
    %v5907 = vadd.f32 %v5903, %v5906
    %vm5908 = vweird.f32 %v5885
    %vm5909 = vweird.f32 %v5903
    %vm5910 = vmor %vm5908, %vm5909
    %v5911 = vsel %vm5910, %v5903, %v5907
    %v5912 = vand.u32 2147483647, %v5885
    %vm5913 = vcmp.eq.f32.partialorder %v5912, 8.507059e+37
    %v5914 = vand.u32 %v5885, 2147483648
    %v5915 = vor.u32 1.1754944e-38, %v5914
    %v5916 = vsel %vm5913, %v5915, %v5911
    %v5917 = vmul.f32 1.0, %v5916
    %v5918 = vrcp.pop %v5886
    %v5919 = vmul.f32 %v5886, %v5918
    %v5920 = vsub.f32 1.0, %v5919
    %v5921 = vmul.f32 %v5918, %v5920
    %v5922 = vadd.f32 %v5918, %v5921
    %vm5923 = vweird.f32 %v5886
    %vm5924 = vweird.f32 %v5918
    %vm5925 = vmor %vm5923, %vm5924
    %v5926 = vsel %vm5925, %v5918, %v5922
    %v5927 = vand.u32 2147483647, %v5886
    %vm5928 = vcmp.eq.f32.partialorder %v5927, 8.507059e+37
    %v5929 = vand.u32 %v5886, 2147483648
    %v5930 = vor.u32 1.1754944e-38, %v5929
    %v5931 = vsel %vm5928, %v5930, %v5926
    %v5932 = vmul.f32 1.0, %v5931
    %v5933 = vrcp.pop %v5887
    %v5934 = vmul.f32 %v5887, %v5933
    %v5935 = vsub.f32 1.0, %v5934
    %v5936 = vmul.f32 %v5933, %v5935
    %v5937 = vadd.f32 %v5933, %v5936
    %vm5938 = vweird.f32 %v5887
    %vm5939 = vweird.f32 %v5933
    %vm5940 = vmor %vm5938, %vm5939
    %v5941 = vsel %vm5940, %v5933, %v5937
    %v5942 = vand.u32 2147483647, %v5887
    %vm5943 = vcmp.eq.f32.partialorder %v5942, 8.507059e+37
    %v5944 = vand.u32 %v5887, 2147483648
    %v5945 = vor.u32 1.1754944e-38, %v5944
    %v5946 = vsel %vm5943, %v5945, %v5941
    %v5947 = vmul.f32 1.0, %v5946
    %v5948 = vmul.f32 %v5822, %v5237
    %v5949 = vmul.f32 %v5837, %v5238
    %v5950 = vmul.f32 %v5852, %v5239
    %v5951 = vmul.f32 %v5867, %v5240
    %v5952 = vmul.f32 %v5746, %v5868
    %v5953 = vmul.f32 %v5761, %v5869
    %v5954 = vmul.f32 %v5776, %v5870
    %v5955 = vmul.f32 %v5791, %v5871
    %v5956 = vadd.f32 %v5948, %v5952
    %v5957 = vadd.f32 %v5949, %v5953
    %v5958 = vadd.f32 %v5950, %v5954
    %v5959 = vadd.f32 %v5951, %v5955
    %v5960 = vtanh.pop %v5956
    %v5961 = vtanh.pop %v5957
    %v5962 = vtanh.pop %v5958
    %v5963 = vtanh.pop %v5959
    %v5964 = vmul.f32 %v5902, %v5960
    %v5965 = vmul.f32 %v5917, %v5961
    %v5966 = vmul.f32 %v5932, %v5962
    %v5967 = vmul.f32 %v5947, %v5963
    %v5968 = vpack.c.bf16 %v5616, %v5615
    %v5969 = vpack.c.bf16 %v5618, %v5617
    %v5970 = vpack.c.bf16 %v5965, %v5964
    %v5971 = vpack.c.bf16 %v5967, %v5966
    %5972 = vmatpush.bf16.msra.mxu0 0
    %5973 = vmatpush.bf16.msra.mxu0 0
    %5974 = vmatpush.bf16.msra.mxu0 0
    %5975 = vmatpush.bf16.msra.mxu0 0
    %5976 = vmatpush.bf16.msra.mxu0 0
    %5977 = vmatpush.bf16.msra.mxu0 0
    %5978 = vmatpush.bf16.msra.mxu0 %v5971
    %5979 = vmatpush.bf16.msra.mxu0 %v5970
    %5980 = vmatmul.bf16.gmra.mxu0 %v756
    %v5981 = vpop.f32.mrf.mxu0
    %v5982 = vadd.f32 0.0, %v5981
    %v5983 = vpop.f32.mrf.mxu0
    %v5984 = vadd.f32 0.0, %v5983
    %5985 = vmatmul.bf16.gmra.mxu0 %v759
    %v5986 = vpop.f32.mrf.mxu0
    %v5987 = vadd.f32 0.0, %v5986
    %v5988 = vpop.f32.mrf.mxu0
    %v5989 = vadd.f32 0.0, %v5988
    %5990 = vmatmul.bf16.gmra.mxu0 %v762
    %v5991 = vpop.f32.mrf.mxu0
    %v5992 = vadd.f32 0.0, %v5991
    %v5993 = vpop.f32.mrf.mxu0
    %v5994 = vadd.f32 0.0, %v5993
    %5995 = vmatmul.bf16.gmra.mxu0 %v765
    %v5996 = vpop.f32.mrf.mxu0
    %v5997 = vadd.f32 0.0, %v5996
    %v5998 = vpop.f32.mrf.mxu0
    %v5999 = vadd.f32 0.0, %v5998
    %6000 = vmatmul.bf16.gmra.mxu0 %v768
    %v6001 = vpop.f32.mrf.mxu0
    %v6002 = vadd.f32 0.0, %v6001
    %v6003 = vpop.f32.mrf.mxu0
    %v6004 = vadd.f32 0.0, %v6003
    %6005 = vmatmul.bf16.gmra.mxu0 %v771
    %v6006 = vpop.f32.mrf.mxu0
    %v6007 = vadd.f32 0.0, %v6006
    %v6008 = vpop.f32.mrf.mxu0
    %v6009 = vadd.f32 0.0, %v6008
    %6010 = vmatmul.bf16.gmra.mxu0 %v774
    %v6011 = vpop.f32.mrf.mxu0
    %v6012 = vadd.f32 0.0, %v6011
    %v6013 = vpop.f32.mrf.mxu0
    %v6014 = vadd.f32 0.0, %v6013
    %6015 = vmatmul.bf16.gmra.mxu0 %v777
    %v6016 = vpop.f32.mrf.mxu0
    %v6017 = vadd.f32 0.0, %v6016
    %v6018 = vpop.f32.mrf.mxu0
    %v6019 = vadd.f32 0.0, %v6018
    %6020 = vdwg.mxu0
    %6021 = vmatpush.bf16.msra.mxu0 0
    %6022 = vmatpush.bf16.msra.mxu0 0
    %6023 = vmatpush.bf16.msra.mxu0 0
    %6024 = vmatpush.bf16.msra.mxu0 0
    %6025 = vmatpush.bf16.msra.mxu0 0
    %6026 = vmatpush.bf16.msra.mxu0 0
    %6027 = vmatpush.bf16.msra.mxu0 %v5969
    %6028 = vmatpush.bf16.msra.mxu0 %v5968
    %6029 = vmatmul.bf16.gmra.mxu0 %v869
    %v6030 = vpop.f32.mrf.mxu0
    %v6031 = vadd.f32 %v5982, %v6030
    %v6032 = vpop.f32.mrf.mxu0
    %v6033 = vadd.f32 %v5984, %v6032
    %6034 = vmatmul.bf16.gmra.mxu0 %v872
    %v6035 = vpop.f32.mrf.mxu0
    %v6036 = vadd.f32 %v5987, %v6035
    %v6037 = vpop.f32.mrf.mxu0
    %v6038 = vadd.f32 %v5989, %v6037
    %6039 = vmatmul.bf16.gmra.mxu0 %v875
    %v6040 = vpop.f32.mrf.mxu0
    %v6041 = vadd.f32 %v5992, %v6040
    %v6042 = vpop.f32.mrf.mxu0
    %v6043 = vadd.f32 %v5994, %v6042
    %6044 = vmatmul.bf16.gmra.mxu0 %v878
    %v6045 = vpop.f32.mrf.mxu0
    %v6046 = vadd.f32 %v5997, %v6045
    %v6047 = vpop.f32.mrf.mxu0
    %v6048 = vadd.f32 %v5999, %v6047
    %6049 = vmatmul.bf16.gmra.mxu0 %v881
    %v6050 = vpop.f32.mrf.mxu0
    %v6051 = vadd.f32 %v6002, %v6050
    %v6052 = vpop.f32.mrf.mxu0
    %v6053 = vadd.f32 %v6004, %v6052
    %6054 = vmatmul.bf16.gmra.mxu0 %v884
    %v6055 = vpop.f32.mrf.mxu0
    %v6056 = vadd.f32 %v6007, %v6055
    %v6057 = vpop.f32.mrf.mxu0
    %v6058 = vadd.f32 %v6009, %v6057
    %6059 = vmatmul.bf16.gmra.mxu0 %v887
    %v6060 = vpop.f32.mrf.mxu0
    %v6061 = vadd.f32 %v6012, %v6060
    %v6062 = vpop.f32.mrf.mxu0
    %v6063 = vadd.f32 %v6014, %v6062
    %6064 = vmatmul.bf16.gmra.mxu0 %v890
    %v6065 = vpop.f32.mrf.mxu0
    %v6066 = vadd.f32 %v6017, %v6065
    %v6067 = vpop.f32.mrf.mxu0
    %v6068 = vadd.f32 %v6019, %v6067
    %6069 = vdwg.mxu0
    %v6070 = vadd.f32 %v6031, %v944
    %v6071 = vadd.f32 %v6033, %v949
    %v6072 = vadd.f32 %v6036, %v954
    %v6073 = vadd.f32 %v6038, %v959
    %v6074 = vadd.f32 %v6041, %v964
    %v6075 = vadd.f32 %v6043, %v969
    %v6076 = vadd.f32 %v6046, %v974
    %v6077 = vadd.f32 %v6048, %v979
    %v6078 = vadd.f32 %v6051, %v984
    %v6079 = vadd.f32 %v6053, %v989
    %v6080 = vadd.f32 %v6056, %v994
    %v6081 = vadd.f32 %v6058, %v999
    %v6082 = vadd.f32 %v6061, %v1004
    %v6083 = vadd.f32 %v6063, %v1009
    %v6084 = vadd.f32 %v6066, %v1014
    %v6085 = vadd.f32 %v6068, %v1019
    %v6086 = vxor.u32 %v6070, 2147483648
    %v6087 = vxor.u32 %v6071, 2147483648
    %v6088 = vxor.u32 %v6072, 2147483648
    %v6089 = vxor.u32 %v6073, 2147483648
    %v6090 = vmul.f32 %v6086, 1.442695
    %v6091 = vpow.pop %v6090
    %v6092 = vmul.f32 %v6087, 1.442695
    %v6093 = vpow.pop %v6092
    %v6094 = vmul.f32 %v6088, 1.442695
    %v6095 = vpow.pop %v6094
    %v6096 = vmul.f32 %v6089, 1.442695
    %v6097 = vpow.pop %v6096
    %v6098 = vadd.f32 %v6091, 1.0
    %v6099 = vadd.f32 %v6093, 1.0
    %v6100 = vadd.f32 %v6095, 1.0
    %v6101 = vadd.f32 %v6097, 1.0
    %v6102 = vrcp.pop %v6098
    %v6103 = vmul.f32 %v6098, %v6102
    %v6104 = vsub.f32 1.0, %v6103
    %v6105 = vmul.f32 %v6102, %v6104
    %v6106 = vadd.f32 %v6102, %v6105
    %vm6107 = vweird.f32 %v6098
    %vm6108 = vweird.f32 %v6102
    %vm6109 = vmor %vm6107, %vm6108
    %v6110 = vsel %vm6109, %v6102, %v6106
    %v6111 = vand.u32 2147483647, %v6098
    %vm6112 = vcmp.eq.f32.partialorder %v6111, 8.507059e+37
    %v6113 = vand.u32 %v6098, 2147483648
    %v6114 = vor.u32 1.1754944e-38, %v6113
    %v6115 = vsel %vm6112, %v6114, %v6110
    %v6116 = vmul.f32 1.0, %v6115
    %v6117 = vrcp.pop %v6099
    %v6118 = vmul.f32 %v6099, %v6117
    %v6119 = vsub.f32 1.0, %v6118
    %v6120 = vmul.f32 %v6117, %v6119
    %v6121 = vadd.f32 %v6117, %v6120
    %vm6122 = vweird.f32 %v6099
    %vm6123 = vweird.f32 %v6117
    %vm6124 = vmor %vm6122, %vm6123
    %v6125 = vsel %vm6124, %v6117, %v6121
    %v6126 = vand.u32 2147483647, %v6099
    %vm6127 = vcmp.eq.f32.partialorder %v6126, 8.507059e+37
    %v6128 = vand.u32 %v6099, 2147483648
    %v6129 = vor.u32 1.1754944e-38, %v6128
    %v6130 = vsel %vm6127, %v6129, %v6125
    %v6131 = vmul.f32 1.0, %v6130
    %v6132 = vrcp.pop %v6100
    %v6133 = vmul.f32 %v6100, %v6132
    %v6134 = vsub.f32 1.0, %v6133
    %v6135 = vmul.f32 %v6132, %v6134
    %v6136 = vadd.f32 %v6132, %v6135
    %vm6137 = vweird.f32 %v6100
    %vm6138 = vweird.f32 %v6132
    %vm6139 = vmor %vm6137, %vm6138
    %v6140 = vsel %vm6139, %v6132, %v6136
    %v6141 = vand.u32 2147483647, %v6100
    %vm6142 = vcmp.eq.f32.partialorder %v6141, 8.507059e+37
    %v6143 = vand.u32 %v6100, 2147483648
    %v6144 = vor.u32 1.1754944e-38, %v6143
    %v6145 = vsel %vm6142, %v6144, %v6140
    %v6146 = vmul.f32 1.0, %v6145
    %v6147 = vrcp.pop %v6101
    %v6148 = vmul.f32 %v6101, %v6147
    %v6149 = vsub.f32 1.0, %v6148
    %v6150 = vmul.f32 %v6147, %v6149
    %v6151 = vadd.f32 %v6147, %v6150
    %vm6152 = vweird.f32 %v6101
    %vm6153 = vweird.f32 %v6147
    %vm6154 = vmor %vm6152, %vm6153
    %v6155 = vsel %vm6154, %v6147, %v6151
    %v6156 = vand.u32 2147483647, %v6101
    %vm6157 = vcmp.eq.f32.partialorder %v6156, 8.507059e+37
    %v6158 = vand.u32 %v6101, 2147483648
    %v6159 = vor.u32 1.1754944e-38, %v6158
    %v6160 = vsel %vm6157, %v6159, %v6155
    %v6161 = vmul.f32 1.0, %v6160
    %v6162 = vxor.u32 %v6074, 2147483648
    %v6163 = vxor.u32 %v6075, 2147483648
    %v6164 = vxor.u32 %v6076, 2147483648
    %v6165 = vxor.u32 %v6077, 2147483648
    %v6166 = vmul.f32 %v6162, 1.442695
    %v6167 = vpow.pop %v6166
    %v6168 = vmul.f32 %v6163, 1.442695
    %v6169 = vpow.pop %v6168
    %v6170 = vmul.f32 %v6164, 1.442695
    %v6171 = vpow.pop %v6170
    %v6172 = vmul.f32 %v6165, 1.442695
    %v6173 = vpow.pop %v6172
    %v6174 = vadd.f32 %v6167, 1.0
    %v6175 = vadd.f32 %v6169, 1.0
    %v6176 = vadd.f32 %v6171, 1.0
    %v6177 = vadd.f32 %v6173, 1.0
    %v6178 = vrcp.pop %v6174
    %v6179 = vmul.f32 %v6174, %v6178
    %v6180 = vsub.f32 1.0, %v6179
    %v6181 = vmul.f32 %v6178, %v6180
    %v6182 = vadd.f32 %v6178, %v6181
    %vm6183 = vweird.f32 %v6174
    %vm6184 = vweird.f32 %v6178
    %vm6185 = vmor %vm6183, %vm6184
    %v6186 = vsel %vm6185, %v6178, %v6182
    %v6187 = vand.u32 2147483647, %v6174
    %vm6188 = vcmp.eq.f32.partialorder %v6187, 8.507059e+37
    %v6189 = vand.u32 %v6174, 2147483648
    %v6190 = vor.u32 1.1754944e-38, %v6189
    %v6191 = vsel %vm6188, %v6190, %v6186
    %v6192 = vmul.f32 1.0, %v6191
    %v6193 = vrcp.pop %v6175
    %v6194 = vmul.f32 %v6175, %v6193
    %v6195 = vsub.f32 1.0, %v6194
    %v6196 = vmul.f32 %v6193, %v6195
    %v6197 = vadd.f32 %v6193, %v6196
    %vm6198 = vweird.f32 %v6175
    %vm6199 = vweird.f32 %v6193
    %vm6200 = vmor %vm6198, %vm6199
    %v6201 = vsel %vm6200, %v6193, %v6197
    %v6202 = vand.u32 2147483647, %v6175
    %vm6203 = vcmp.eq.f32.partialorder %v6202, 8.507059e+37
    %v6204 = vand.u32 %v6175, 2147483648
    %v6205 = vor.u32 1.1754944e-38, %v6204
    %v6206 = vsel %vm6203, %v6205, %v6201
    %v6207 = vmul.f32 1.0, %v6206
    %v6208 = vrcp.pop %v6176
    %v6209 = vmul.f32 %v6176, %v6208
    %v6210 = vsub.f32 1.0, %v6209
    %v6211 = vmul.f32 %v6208, %v6210
    %v6212 = vadd.f32 %v6208, %v6211
    %vm6213 = vweird.f32 %v6176
    %vm6214 = vweird.f32 %v6208
    %vm6215 = vmor %vm6213, %vm6214
    %v6216 = vsel %vm6215, %v6208, %v6212
    %v6217 = vand.u32 2147483647, %v6176
    %vm6218 = vcmp.eq.f32.partialorder %v6217, 8.507059e+37
    %v6219 = vand.u32 %v6176, 2147483648
    %v6220 = vor.u32 1.1754944e-38, %v6219
    %v6221 = vsel %vm6218, %v6220, %v6216
    %v6222 = vmul.f32 1.0, %v6221
    %v6223 = vrcp.pop %v6177
    %v6224 = vmul.f32 %v6177, %v6223
    %v6225 = vsub.f32 1.0, %v6224
    %v6226 = vmul.f32 %v6223, %v6225
    %v6227 = vadd.f32 %v6223, %v6226
    %vm6228 = vweird.f32 %v6177
    %vm6229 = vweird.f32 %v6223
    %vm6230 = vmor %vm6228, %vm6229
    %v6231 = vsel %vm6230, %v6223, %v6227
    %v6232 = vand.u32 2147483647, %v6177
    %vm6233 = vcmp.eq.f32.partialorder %v6232, 8.507059e+37
    %v6234 = vand.u32 %v6177, 2147483648
    %v6235 = vor.u32 1.1754944e-38, %v6234
    %v6236 = vsel %vm6233, %v6235, %v6231
    %v6237 = vmul.f32 1.0, %v6236
    %v6238 = vtanh.pop %v6078
    %v6239 = vtanh.pop %v6079
    %v6240 = vtanh.pop %v6080
    %v6241 = vtanh.pop %v6081
    %v6242 = vxor.u32 %v6082, 2147483648
    %v6243 = vxor.u32 %v6083, 2147483648
    %v6244 = vxor.u32 %v6084, 2147483648
    %v6245 = vxor.u32 %v6085, 2147483648
    %v6246 = vmul.f32 %v6242, 1.442695
    %v6247 = vpow.pop %v6246
    %v6248 = vmul.f32 %v6243, 1.442695
    %v6249 = vpow.pop %v6248
    %v6250 = vmul.f32 %v6244, 1.442695
    %v6251 = vpow.pop %v6250
    %v6252 = vmul.f32 %v6245, 1.442695
    %v6253 = vpow.pop %v6252
    %v6254 = vadd.f32 %v6247, 1.0
    %v6255 = vadd.f32 %v6249, 1.0
    %v6256 = vadd.f32 %v6251, 1.0
    %v6257 = vadd.f32 %v6253, 1.0
    %v6258 = vrcp.pop %v6254
    %v6259 = vmul.f32 %v6254, %v6258
    %v6260 = vsub.f32 1.0, %v6259
    %v6261 = vmul.f32 %v6258, %v6260
    %v6262 = vadd.f32 %v6258, %v6261
    %vm6263 = vweird.f32 %v6254
    %vm6264 = vweird.f32 %v6258
    %vm6265 = vmor %vm6263, %vm6264
    %v6266 = vsel %vm6265, %v6258, %v6262
    %v6267 = vand.u32 2147483647, %v6254
    %vm6268 = vcmp.eq.f32.partialorder %v6267, 8.507059e+37
    %v6269 = vand.u32 %v6254, 2147483648
    %v6270 = vor.u32 1.1754944e-38, %v6269
    %v6271 = vsel %vm6268, %v6270, %v6266
    %v6272 = vmul.f32 1.0, %v6271
    %v6273 = vrcp.pop %v6255
    %v6274 = vmul.f32 %v6255, %v6273
    %v6275 = vsub.f32 1.0, %v6274
    %v6276 = vmul.f32 %v6273, %v6275
    %v6277 = vadd.f32 %v6273, %v6276
    %vm6278 = vweird.f32 %v6255
    %vm6279 = vweird.f32 %v6273
    %vm6280 = vmor %vm6278, %vm6279
    %v6281 = vsel %vm6280, %v6273, %v6277
    %v6282 = vand.u32 2147483647, %v6255
    %vm6283 = vcmp.eq.f32.partialorder %v6282, 8.507059e+37
    %v6284 = vand.u32 %v6255, 2147483648
    %v6285 = vor.u32 1.1754944e-38, %v6284
    %v6286 = vsel %vm6283, %v6285, %v6281
    %v6287 = vmul.f32 1.0, %v6286
    %v6288 = vrcp.pop %v6256
    %v6289 = vmul.f32 %v6256, %v6288
    %v6290 = vsub.f32 1.0, %v6289
    %v6291 = vmul.f32 %v6288, %v6290
    %v6292 = vadd.f32 %v6288, %v6291
    %vm6293 = vweird.f32 %v6256
    %vm6294 = vweird.f32 %v6288
    %vm6295 = vmor %vm6293, %vm6294
    %v6296 = vsel %vm6295, %v6288, %v6292
    %v6297 = vand.u32 2147483647, %v6256
    %vm6298 = vcmp.eq.f32.partialorder %v6297, 8.507059e+37
    %v6299 = vand.u32 %v6256, 2147483648
    %v6300 = vor.u32 1.1754944e-38, %v6299
    %v6301 = vsel %vm6298, %v6300, %v6296
    %v6302 = vmul.f32 1.0, %v6301
    %v6303 = vrcp.pop %v6257
    %v6304 = vmul.f32 %v6257, %v6303
    %v6305 = vsub.f32 1.0, %v6304
    %v6306 = vmul.f32 %v6303, %v6305
    %v6307 = vadd.f32 %v6303, %v6306
    %vm6308 = vweird.f32 %v6257
    %vm6309 = vweird.f32 %v6303
    %vm6310 = vmor %vm6308, %vm6309
    %v6311 = vsel %vm6310, %v6303, %v6307
    %v6312 = vand.u32 2147483647, %v6257
    %vm6313 = vcmp.eq.f32.partialorder %v6312, 8.507059e+37
    %v6314 = vand.u32 %v6257, 2147483648
    %v6315 = vor.u32 1.1754944e-38, %v6314
    %v6316 = vsel %vm6313, %v6315, %v6311
    %v6317 = vmul.f32 1.0, %v6316
    %v6318 = vmul.f32 %v6192, %v5607
    %v6319 = vmul.f32 %v6207, %v5608
    %v6320 = vmul.f32 %v6222, %v5609
    %v6321 = vmul.f32 %v6237, %v5610
    %v6322 = vmul.f32 %v6116, %v6238
    %v6323 = vmul.f32 %v6131, %v6239
    %v6324 = vmul.f32 %v6146, %v6240
    %v6325 = vmul.f32 %v6161, %v6241
    %v6326 = vadd.f32 %v6318, %v6322
    %v6327 = vadd.f32 %v6319, %v6323
    %v6328 = vadd.f32 %v6320, %v6324
    %v6329 = vadd.f32 %v6321, %v6325
    %v6330 = vtanh.pop %v6326
    %v6331 = vtanh.pop %v6327
    %v6332 = vtanh.pop %v6328
    %v6333 = vtanh.pop %v6329
    %v6334 = vmul.f32 %v6272, %v6330
    %v6335 = vmul.f32 %v6287, %v6331
    %v6336 = vmul.f32 %v6302, %v6332
    %v6337 = vmul.f32 %v6317, %v6333
    %v6338 = vld [vmem:[%s9] sm:$0xf]
    %v6339 = vld [vmem:[%s9 + $0x4] sm:$0xf]
    %v6340 = vpack.c.bf16 %v6335, %v6334
    %v6341 = vpack.c.bf16 %v6337, %v6336
    %v6344 = vunpack.c.l.b16 %v6338
    %v6345 = vunpack.c.l.b16 %v6339
    %v6346 = vpack.c.b16 %v6345, %v6344
    %v6348 = vsel %vm387, %v6346, 0
    %6350 = vmatpush.bf16.msra.mxu0 0
    %6351 = vmatpush.bf16.msra.mxu0 0
    %6352 = vmatpush.bf16.msra.mxu0 0
    %6353 = vmatpush.bf16.msra.mxu0 0
    %6354 = vmatpush.bf16.msra.mxu0 0
    %6355 = vmatpush.bf16.msra.mxu0 0
    %6356 = vmatpush.bf16.msra.mxu0 %v6341
    %6357 = vmatpush.bf16.msra.mxu0 %v6340
    %6358 = vmatmul.bf16.gmra.mxu0 %v6348
    %v6359 = vpop.f32.mrf.mxu0
    %v6360 = vadd.f32 0.0, %v6359
    %v6361 = vpop.f32.mrf.mxu0
    %v6362 = vadd.f32 0.0, %v6361
    %6363 = vdwg.mxu0
    %v6364 = vld [vmem:[%s10] sm:$0xff]
    %v6365 = vld [vmem:[%s10 + $0x8] sm:$0xff]
    %6366 = vxpose.xlu0.b32.start [1/16] %v6360, 128
    %6367 = vxpose.xlu0.b32.cont [2/16] %v6362, 128
    %6368 = vxpose.xlu0.b32.cont [3/16] 0.0, 128
    %6369 = vxpose.xlu0.b32.cont [4/16] 0.0, 128
    %6370 = vxpose.xlu0.b32.cont [5/16] 0.0, 128
    %6371 = vxpose.xlu0.b32.cont [6/16] 0.0, 128
    %6372 = vxpose.xlu0.b32.cont [7/16] 0.0, 128
    %6373 = vxpose.xlu0.b32.cont [8/16] 0.0, 128
    %6374 = vxpose.xlu0.b32.cont [9/16] 0.0, 128
    %6375 = vxpose.xlu0.b32.cont [10/16] 0.0, 128
    %6376 = vxpose.xlu0.b32.cont [11/16] 0.0, 128
    %6377 = vxpose.xlu0.b32.cont [12/16] 0.0, 128
    %6378 = vxpose.xlu0.b32.cont [13/16] 0.0, 128
    %6379 = vxpose.xlu0.b32.cont [14/16] 0.0, 128
    %6380 = vxpose.xlu0.b32.cont [15/16] 0.0, 128
    %6381 = vxpose.xlu0.b32.end [16/16] 0.0, 128
    %v6382 = vpop.trf.xlu0
    %v6383 = vpop.trf.xlu0
    %v6384 = vpop.trf.xlu0
    %v6385 = vpop.trf.xlu0
    %v6386 = vpop.trf.xlu0
    %v6387 = vpop.trf.xlu0
    %v6388 = vpop.trf.xlu0
    %v6389 = vpop.trf.xlu0
    %v6390 = vpop.trf.xlu0
    %v6391 = vpop.trf.xlu0
    %v6392 = vpop.trf.xlu0
    %v6393 = vpop.trf.xlu0
    %v6394 = vpop.trf.xlu0
    %v6395 = vpop.trf.xlu0
    %v6396 = vpop.trf.xlu0
    %v6397 = vpop.trf.xlu0
    %vm6398 = vcmask 130048
    %v6400 = vsel %vm6398, %v6382, 0
    %v6403 = vsel %vm6398, %v6383, 0
    %6405 = vmatpush.msra.mxu0 0.0
    %6406 = vmatpush.msra.mxu0 0.0
    %6407 = vmatpush.msra.mxu0 0.0
    %6408 = vmatpush.msra.mxu0 0.0
    %6409 = vmatpush.msra.mxu0 0.0
    %6410 = vmatpush.msra.mxu0 0.0
    %6411 = vmatpush.msra.mxu0 0.0
    %6412 = vmatpush.msra.mxu0 0.0
    %6413 = vmatpush.msra.mxu0 0.0
    %6414 = vmatpush.msra.mxu0 0.0
    %6415 = vmatpush.msra.mxu0 0.0
    %6416 = vmatpush.msra.mxu0 0.0
    %6417 = vmatpush.msra.mxu0 0.0
    %6418 = vmatpush.msra.mxu0 0.0
    %6419 = vmatpush.msra.mxu0 %v6365
    %6420 = vmatpush.msra.mxu0 %v6364
    %6421 = vmatmul.f32.gmra.mxu0 %v6400
    %v6422 = vpop.f32.mrf.mxu0
    %v6423 = vadd.f32 0.0, %v6422
    %6424 = vmatmul.f32.gmra.mxu0 %v6403
    %v6425 = vpop.f32.mrf.mxu0
    %v6426 = vadd.f32 0.0, %v6425
    %6427 = vdwg.mxu0
    %v6428 = vld [vmem:[%s11] sm:$0x1]
    %v6430 = vsel %vm6398, %v6428, 0
    %6432 = vmatpush.msra.mxu0 0.0
    %6433 = vmatpush.msra.mxu0 0.0
    %6434 = vmatpush.msra.mxu0 0.0
    %6435 = vmatpush.msra.mxu0 0.0
    %6436 = vmatpush.msra.mxu0 0.0
    %6437 = vmatpush.msra.mxu0 0.0
    %6438 = vmatpush.msra.mxu0 0.0
    %6439 = vmatpush.msra.mxu0 0.0
    %6440 = vmatpush.msra.mxu0 0.0
    %6441 = vmatpush.msra.mxu0 0.0
    %6442 = vmatpush.msra.mxu0 0.0
    %6443 = vmatpush.msra.mxu0 0.0
    %6444 = vmatpush.msra.mxu0 0.0
    %6445 = vmatpush.msra.mxu0 0.0
    %6446 = vmatpush.msra.mxu0 %v6362
    %6447 = vmatpush.msra.mxu0 %v6360
    %6448 = vmatmul.f32.gmra.mxu0 %v6430
    %v6449 = vpop.f32.mrf.mxu0
    %v6450 = vadd.f32 0.0, %v6449
    %6451 = vdwg.mxu0
    %v6452 = vld [vmem:[%s1] sm:$0xff]
    %vm6453 = vcmp.gt.f32.partialorder %v6452, 0.0
    %v6454 = vld [vmem:[%s12] sm:$0x3]
    %v6455 = vld [vmem:[%s13] sm:$0x3]
    %v6456 = vld [vmem:[%s14] sm:$0x3]
    %v6457 = vld [vmem:[%s2] sm:$0x1]
    %6459 = vset.pattern.permute.xlu0 0
    %6460 = vperm.xlu0 %6459, %v6423
    %v6461 = vpop.permute.xlu0 %6460
    %v6463 = vperm.slane %v6450, 0
    %v6464 = vadd.f32 %v6461, %v6463
    %vm6465 = vcmp.gt.f32.partialorder %v6464, 0.0
    %v6466 = vmul.f32 %v6464, 0.2
    %v6467 = vsel %vm6465, %v6464, %v6466
    %v6468 = vsel %vm6453, %v6467, -9e+15
    %vm6469 = vcmask 64512
    %v6470 = vsel %vm6469, %v6468, -inf
    %6471 = vmax.xlane.f32.xlu0 %v6470
    %v6472 = vpop.xlane.xlu0 %6471
    %v6473 = vsub.f32 %v6468, %v6472
    %v6474 = vmul.f32 %v6473, 1.442695
    %v6475 = vpow.pop %v6474
    %v6476 = vsel %vm6469, %v6475, 0.0
    %6477 = vadd.xlane.f32.xlu0 %v6476
    %v6478 = vpop.xlane.xlu0 %6477
    %v6479 = vrcp.pop %v6478
    %v6480 = vmul.f32 %v6478, %v6479
    %v6481 = vsub.f32 1.0, %v6480
    %v6482 = vmul.f32 %v6479, %v6481
    %v6483 = vadd.f32 %v6479, %v6482
    %vm6484 = vweird.f32 %v6478
    %vm6485 = vweird.f32 %v6479
    %vm6486 = vmor %vm6484, %vm6485
    %v6487 = vsel %vm6486, %v6479, %v6483
    %v6488 = vand.u32 2147483647, %v6478
    %vm6489 = vcmp.eq.f32.partialorder %v6488, 8.507059e+37
    %v6490 = vand.u32 %v6478, 2147483648
    %v6491 = vor.u32 1.1754944e-38, %v6490
    %v6492 = vsel %vm6489, %v6491, %v6487
    %v6493 = vmul.f32 %v6475, %v6492
    %v6495 = vsel %vm6469, %v6360, 0
    %v6498 = vsel %vm6469, %v6362, 0
    %v6501 = vsel %vm6469, %v6493, 0
    %6503 = vmatpush.xpose.msra.mxu0 0.0
    %6504 = vmatpush.xpose.msra.mxu0 0.0
    %6505 = vmatpush.xpose.msra.mxu0 0.0
    %6506 = vmatpush.xpose.msra.mxu0 0.0
    %6507 = vmatpush.xpose.msra.mxu0 0.0
    %6508 = vmatpush.xpose.msra.mxu0 0.0
    %6509 = vmatpush.xpose.msra.mxu0 0.0
    %6510 = vmatpush.xpose.msra.mxu0 0.0
    %6511 = vmatpush.xpose.msra.mxu0 0.0
    %6512 = vmatpush.xpose.msra.mxu0 0.0
    %6513 = vmatpush.xpose.msra.mxu0 0.0
    %6514 = vmatpush.xpose.msra.mxu0 0.0
    %6515 = vmatpush.xpose.msra.mxu0 0.0
    %6516 = vmatpush.xpose.msra.mxu0 0.0
    %6517 = vmatpush.xpose.msra.mxu0 0.0
    %6518 = vmatpush.xpose.msra.mxu0 %v6501
    %6519 = vmatmul.f32.gmra.mxu0 %v6495
    %v6520 = vpop.f32.mrf.mxu0
    %v6521 = vadd.f32 0.0, %v6520
    %6522 = vmatmul.f32.gmra.mxu0 %v6498
    %v6523 = vpop.f32.mrf.mxu0
    %v6524 = vadd.f32 0.0, %v6523
    %6525 = vdwg.mxu0
    %vm6526 = vcmp.gt.f32.partialorder %v6521, 0.0
    %vm6527 = vcmp.gt.f32.partialorder %v6524, 0.0
    %v6528 = vmin.f32 %v6521, 0.0
    %v6529 = vmin.f32 %v6524, 0.0
    %v6530 = vmul.f32 %v6528, 1.442695
    %v6531 = vpow.pop %v6530
    %v6532 = vmul.f32 %v6529, 1.442695
    %v6533 = vpow.pop %v6532
    %v6534 = vsub.f32 %v6531, 1.0
    %v6535 = vsub.f32 %v6533, 1.0
    %v6536 = vsel %vm6526, %v6521, %v6534
    %v6537 = vsel %vm6527, %v6524, %v6535
    %6539 = vset.pattern.permute.xlu0 0
    %6540 = vperm.xlu0 %6539, %v6455
    %v6541 = vpop.permute.xlu0 %6540
    %v6544 = vperm.slane %v6457, 0
    %v6546 = vmul.f32 %v6541, %v6544
    %v6548 = vsel %vm6398, %v6454, 0
    %6550 = vmatpush.msra.mxu0 0.0
    %6551 = vmatpush.msra.mxu0 0.0
    %6552 = vmatpush.msra.mxu0 0.0
    %6553 = vmatpush.msra.mxu0 0.0
    %6554 = vmatpush.msra.mxu0 0.0
    %6555 = vmatpush.msra.mxu0 0.0
    %6556 = vmatpush.msra.mxu0 0.0
    %6557 = vmatpush.msra.mxu0 0.0
    %6558 = vmatpush.msra.mxu0 0.0
    %6559 = vmatpush.msra.mxu0 0.0
    %6560 = vmatpush.msra.mxu0 0.0
    %6561 = vmatpush.msra.mxu0 0.0
    %6562 = vmatpush.msra.mxu0 0.0
    %6563 = vmatpush.msra.mxu0 0.0
    %6564 = vmatpush.msra.mxu0 %v6537
    %6565 = vmatpush.msra.mxu0 %v6536
    %6566 = vmatmul.f32.gmra.mxu0 %v6548
    %v6567 = vpop.f32.mrf.mxu0
    %v6568 = vadd.f32 %v6546, %v6567
    %6569 = vdwg.mxu0
    %6571 = vset.pattern.permute.xlu0 0
    %6572 = vperm.xlu0 %6571, %v6456
    %v6573 = vpop.permute.xlu0 %6572
    %v6575 = vadd.f32 %v6568, %v6573
    %vm6576 = vcmask 58368
    %v6577 = vsel %vm6576, %v6575, -inf
    %6578 = vmax.xlane.f32.xlu0 %v6577
    %v6579 = vpop.xlane.xlu0 %6578
    %v6580 = vsub.f32 %v6575, %v6579
    %v6581 = vmul.f32 %v6580, 1.442695
    %v6582 = vpow.pop %v6581
    %v6583 = vsel %vm6576, %v6582, 0.0
    %6584 = vadd.xlane.f32.xlu0 %v6583
    %v6585 = vpop.xlane.xlu0 %6584
    %v6586 = vrcp.pop %v6585
    %v6587 = vmul.f32 %v6585, %v6586
    %v6588 = vsub.f32 1.0, %v6587
    %v6589 = vmul.f32 %v6586, %v6588
    %v6590 = vadd.f32 %v6586, %v6589
    %vm6591 = vweird.f32 %v6585
    %vm6592 = vweird.f32 %v6586
    %vm6593 = vmor %vm6591, %vm6592
    %v6594 = vsel %vm6593, %v6586, %v6590
    %v6595 = vand.u32 2147483647, %v6585
    %vm6596 = vcmp.eq.f32.partialorder %v6595, 8.507059e+37
    %v6597 = vand.u32 %v6585, 2147483648
    %v6598 = vor.u32 1.1754944e-38, %v6597
    %v6599 = vsel %vm6596, %v6598, %v6594
    %v6600 = vmul.f32 %v6582, %v6599
    %v6601 = vmul.f32 %v6600, 2.0
    %v6603 = vrot.slane %v6600, 1
    %v6605 = vsub.f32 %v6601, %v6603
    %6607 = vset.pattern.permute.xlu0 0
    %6608 = vperm.xlu0 %6607, %v6426
    %v6609 = vpop.permute.xlu0 %6608
    %v6611 = vadd.f32 %v6609, %v6463
    %vm6612 = vcmp.gt.f32.partialorder %v6611, 0.0
    %v6613 = vmul.f32 %v6611, 0.2
    %v6614 = vsel %vm6612, %v6611, %v6613
    %6616 = vrot.lane.b32.xlu0 %v6614, 120
    %v6617 = vpop.permute.xlu0 %6616
    %v6619 = vsel %vm6453, %v6617, -9e+15
    %v6620 = vsel %vm6469, %v6619, -inf
    %6621 = vmax.xlane.f32.xlu0 %v6620
    %v6622 = vpop.xlane.xlu0 %6621
    %v6623 = vsub.f32 %v6619, %v6622
    %v6624 = vmul.f32 %v6623, 1.442695
    %v6625 = vpow.pop %v6624
    %v6626 = vsel %vm6469, %v6625, 0.0
    %6627 = vadd.xlane.f32.xlu0 %v6626
    %v6628 = vpop.xlane.xlu0 %6627
    %v6629 = vrcp.pop %v6628
    %v6630 = vmul.f32 %v6628, %v6629
    %v6631 = vsub.f32 1.0, %v6630
    %v6632 = vmul.f32 %v6629, %v6631
    %v6633 = vadd.f32 %v6629, %v6632
    %vm6634 = vweird.f32 %v6628
    %vm6635 = vweird.f32 %v6629
    %vm6636 = vmor %vm6634, %vm6635
    %v6637 = vsel %vm6636, %v6629, %v6633
    %v6638 = vand.u32 2147483647, %v6628
    %vm6639 = vcmp.eq.f32.partialorder %v6638, 8.507059e+37
    %v6640 = vand.u32 %v6628, 2147483648
    %v6641 = vor.u32 1.1754944e-38, %v6640
    %v6642 = vsel %vm6639, %v6641, %v6637
    %v6643 = vmul.f32 %v6625, %v6642
    %6644 = vrot.lane.b32.xlu0 %v6360, 120
    %v6645 = vpop.permute.xlu0 %6644
    %6646 = vrot.lane.b32.xlu0 %v6362, 120
    %v6647 = vpop.permute.xlu0 %6646
    %v6648 = vsel %vm6469, %v6645, 0
    %v6650 = vsel %vm6469, %v6647, 0
    %v6653 = vsel %vm6469, %v6643, 0
    %6655 = vmatpush.xpose.msra.mxu0 0.0
    %6656 = vmatpush.xpose.msra.mxu0 0.0
    %6657 = vmatpush.xpose.msra.mxu0 0.0
    %6658 = vmatpush.xpose.msra.mxu0 0.0
    %6659 = vmatpush.xpose.msra.mxu0 0.0
    %6660 = vmatpush.xpose.msra.mxu0 0.0
    %6661 = vmatpush.xpose.msra.mxu0 0.0
    %6662 = vmatpush.xpose.msra.mxu0 0.0
    %6663 = vmatpush.xpose.msra.mxu0 0.0
    %6664 = vmatpush.xpose.msra.mxu0 0.0
    %6665 = vmatpush.xpose.msra.mxu0 0.0
    %6666 = vmatpush.xpose.msra.mxu0 0.0
    %6667 = vmatpush.xpose.msra.mxu0 0.0
    %6668 = vmatpush.xpose.msra.mxu0 0.0
    %6669 = vmatpush.xpose.msra.mxu0 0.0
    %6670 = vmatpush.xpose.msra.mxu0 %v6653
    %6671 = vmatmul.f32.gmra.mxu0 %v6648
    %v6672 = vpop.f32.mrf.mxu0
    %v6673 = vadd.f32 0.0, %v6672
    %6674 = vmatmul.f32.gmra.mxu0 %v6650
    %v6675 = vpop.f32.mrf.mxu0
    %v6676 = vadd.f32 0.0, %v6675
    %6677 = vdwg.mxu0
    %vm6678 = vcmp.gt.f32.partialorder %v6673, 0.0
    %vm6679 = vcmp.gt.f32.partialorder %v6676, 0.0
    %v6680 = vmin.f32 %v6673, 0.0
    %v6681 = vmin.f32 %v6676, 0.0
    %v6682 = vmul.f32 %v6680, 1.442695
    %v6683 = vpow.pop %v6682
    %v6684 = vmul.f32 %v6681, 1.442695
    %v6685 = vpow.pop %v6684
    %v6686 = vsub.f32 %v6683, 1.0
    %v6687 = vsub.f32 %v6685, 1.0
    %v6688 = vsel %vm6678, %v6673, %v6686
    %v6689 = vsel %vm6679, %v6676, %v6687
    %6691 = vrot.lane.b32.xlu0 %v6546, 120
    %v6692 = vpop.permute.xlu0 %6691
    %6694 = vmatpush.msra.mxu0 0.0
    %6695 = vmatpush.msra.mxu0 0.0
    %6696 = vmatpush.msra.mxu0 0.0
    %6697 = vmatpush.msra.mxu0 0.0
    %6698 = vmatpush.msra.mxu0 0.0
    %6699 = vmatpush.msra.mxu0 0.0
    %6700 = vmatpush.msra.mxu0 0.0
    %6701 = vmatpush.msra.mxu0 0.0
    %6702 = vmatpush.msra.mxu0 0.0
    %6703 = vmatpush.msra.mxu0 0.0
    %6704 = vmatpush.msra.mxu0 0.0
    %6705 = vmatpush.msra.mxu0 0.0
    %6706 = vmatpush.msra.mxu0 0.0
    %6707 = vmatpush.msra.mxu0 0.0
    %6708 = vmatpush.msra.mxu0 %v6689
    %6709 = vmatpush.msra.mxu0 %v6688
    %6710 = vmatmul.f32.gmra.mxu0 %v6548
    %v6711 = vpop.f32.mrf.mxu0
    %v6712 = vadd.f32 %v6692, %v6711
    %6713 = vdwg.mxu0
    %v6714 = vadd.f32 %v6712, %v6573
    %v6715 = vsel %vm6576, %v6714, -inf
    %6716 = vmax.xlane.f32.xlu0 %v6715
    %v6717 = vpop.xlane.xlu0 %6716
    %v6718 = vsub.f32 %v6714, %v6717
    %v6719 = vmul.f32 %v6718, 1.442695
    %v6720 = vpow.pop %v6719
    %v6721 = vsel %vm6576, %v6720, 0.0
    %6722 = vadd.xlane.f32.xlu0 %v6721
    %v6723 = vpop.xlane.xlu0 %6722
    %v6724 = vrcp.pop %v6723
    %v6725 = vmul.f32 %v6723, %v6724
    %v6726 = vsub.f32 1.0, %v6725
    %v6727 = vmul.f32 %v6724, %v6726
    %v6728 = vadd.f32 %v6724, %v6727
    %vm6729 = vweird.f32 %v6723
    %vm6730 = vweird.f32 %v6724
    %vm6731 = vmor %vm6729, %vm6730
    %v6732 = vsel %vm6731, %v6724, %v6728
    %v6733 = vand.u32 2147483647, %v6723
    %vm6734 = vcmp.eq.f32.partialorder %v6733, 8.507059e+37
    %v6735 = vand.u32 %v6723, 2147483648
    %v6736 = vor.u32 1.1754944e-38, %v6735
    %v6737 = vsel %vm6734, %v6736, %v6732
    %v6738 = vmul.f32 %v6720, %v6737
    %v6739 = vmul.f32 %v6738, 2.0
    %v6741 = vrot.slane %v6738, 1
    %v6743 = vsub.f32 %v6739, %v6741
    %v6745 = vrot.slane %v6743, 7
    %vm6747 = vcmask 1040384
    %v6748 = vsel %vm6747, %v6605, %v6745
    %6749 = vst.msk [vmem:[#allocation2] sm:$0x3] %vm6576, %v6748
    // Predicated region
    $region62: #{hgam_forward.1} parent=1 // pred_check
      _
    $region63: #{hgam_forward.1} parent=1 // pred_check_branch
      %6751 = sbr.rel (0) target = $region65
    $region64: #{hgam_forward.1} parent=1 // pred_region
      %6753 = vsyncadd [#allocation3], 0
      %s6755 = sshll.u32 [#allocation2], 4
      %s6756 = int_to_ptr.vmem [resolvable:$true] %s6755
      %s6757 = sshll.u32 %s15, 4
      %s6758 = int_to_ptr.hbm [resolvable:$true] %s6757
      %6760 = dma.vmem_to_hbm [thread:$0]  %s6756, 32, %s6758, [#allocation3]
    $region65: #{hgam_forward.1} parent=1 // pred_fallthru
      _
    // Predicated region
    $region66: #{hgam_forward.1} parent=1 // pred_check
      _
    $region67: #{hgam_forward.1} parent=1 // pred_check_branch
      %6762 = sbr.rel (0) target = $region69
    $region68: #{hgam_forward.1} parent=1 // pred_region
      %6764 = dma.done [#allocation3], 32
    $region69: #{hgam_forward.1} parent=1 // pred_fallthru
      _
    %6765 = vsyncpa [#allocation3], 1

</llo_original>
